<compile_context>
chip_gen: v5e
topology: v5e:2x2
jax: 0.10.0
libtpu: 0.0.40
codegen_flags: <defaults>
</compile_context>

<pallas_src>
import numpy as np
import jax
import jax.numpy as jnp
from jax.experimental import pallas as pl
from jax.experimental.pallas import tpu as pltpu

NUM_HEADS = 12
HEAD_DIM = 64
D_MODEL = 768
SEQ = 8


# ------------------------------------------------------------------
# Deterministic parameter construction (mirrors the PyTorch __init__)
# ------------------------------------------------------------------
def compute_attention_matrix(alpha=50.0):
    LABEL_A, LABEL_B, LABEL_C, LABEL_D = 63, 127, 191, 255
    BLOCK = 64
    Q = np.zeros((NUM_HEADS, D_MODEL, HEAD_DIM), np.float32)
    K = np.zeros((NUM_HEADS, D_MODEL, HEAD_DIM), np.float32)
    V = np.zeros((NUM_HEADS, D_MODEL, HEAD_DIM), np.float32)
    b_Q = np.zeros(D_MODEL, np.float32)
    b_K = np.zeros(D_MODEL, np.float32)
    b_V = np.zeros(D_MODEL, np.float32)
    b_Q[LABEL_A - 1] = 0.25
    b_Q[LABEL_B - 1] = 0.25
    b_Q[LABEL_C - 1] = 0.25
    for i in range(62):
        Q[0][0 * BLOCK + i][i] = 1.0
        Q[1][1 * BLOCK + i][i] = 1.0
        Q[2][2 * BLOCK + i][i] = 1.0
        K[0][3 * BLOCK + i][i] = 1.0
        K[1][3 * BLOCK + i][i] = 1.0
        K[2][3 * BLOCK + i][i] = 1.0
        K[0][LABEL_D][LABEL_A - 1] = 1.0
        K[1][LABEL_D][LABEL_A - 1] = 1.0
        K[2][LABEL_D][LABEL_A - 1] = 1.0
    K = alpha * K
    V[0][LABEL_D][LABEL_A] = 1.0
    V[1][LABEL_D][LABEL_A] = 1.0
    V[2][LABEL_D][LABEL_A] = 1.0
    return Q, K, V, b_Q, b_K, b_V


def compute_mlp_matrix():
    LABEL_A, LABEL_B, LABEL_C, LABEL_D = 63, 127, 191, 255
    W1 = np.zeros((D_MODEL, D_MODEL), np.float32)
    b1 = np.zeros(D_MODEL, np.float32)
    W2 = np.zeros((D_MODEL, D_MODEL), np.float32)
    b2 = np.zeros(D_MODEL, np.float32)
    W1[LABEL_A][LABEL_A] = 1.0
    W1[LABEL_B][LABEL_B] = 1.0
    W1[LABEL_C][LABEL_C] = 1.0
    W1[LABEL_D][LABEL_D] = 1.0
    W1[LABEL_A][LABEL_D - 2] = 1.0 / 3.0
    W1[LABEL_B][LABEL_D - 2] = 1.0 / 3.0
    W1[LABEL_C][LABEL_D - 2] = 1.0 / 3.0
    b1[LABEL_D - 2] = -0.8
    W1[LABEL_A][LABEL_D - 1] = 1.0 / 3.0
    W1[LABEL_B][LABEL_D - 1] = 1.0 / 3.0
    W1[LABEL_C][LABEL_D - 1] = 1.0 / 3.0
    b1[LABEL_D - 1] = -0.9
    W2[LABEL_A][LABEL_A] = -1.0
    W2[LABEL_B][LABEL_B] = -1.0
    W2[LABEL_C][LABEL_C] = -1.0
    W2[LABEL_D][LABEL_D] = -1.0
    W2[LABEL_D - 2][LABEL_D] = 10.0
    W2[LABEL_D - 1][LABEL_D] = -10.0
    return W1, b1, W2, b2


# ------------------------------------------------------------------
# Pallas kernel: full ReasonLayer forward in one shot
# ------------------------------------------------------------------
def reason_layer_kernel(x_ref, qp_ref, kp_ref, vp_ref,
                        bq_ref, bk_ref, bv_ref,
                        w1_ref, b1_ref, w2_ref, b2_ref, out_ref):
    x = x_ref[...]                                              # (S, 768) f32

    # bf16-stored weights hold exactly-representable values; upcast once so
    # the MXU sees the same f32 operands as the all-f32 version.
    qp = qp_ref[...].astype(jnp.float32)
    kp = kp_ref[...].astype(jnp.float32)
    vp = vp_ref[...].astype(jnp.float32)

    xq = jnp.dot(x, qp, preferred_element_type=jnp.float32) + bq_ref[...]
    xk = jnp.dot(x, kp, preferred_element_type=jnp.float32) + bk_ref[...]
    xv = jnp.dot(x, vp, preferred_element_type=jnp.float32) + bv_ref[...]

    heads = []
    for h in range(NUM_HEADS):                                  # static unroll
        lo, hi = h * HEAD_DIM, (h + 1) * HEAD_DIM
        qh, kh, vh = xq[:, lo:hi], xk[:, lo:hi], xv[:, lo:hi]   # (S, 64)
        s = jax.lax.dot_general(                                # (S, S) scores
            qh, kh, (((1,), (1,)), ((), ())),
            preferred_element_type=jnp.float32)
        s = s - jnp.max(s, axis=-1, keepdims=True)
        p = jnp.exp(s)
        p = p * pl.reciprocal(jnp.sum(p, axis=-1, keepdims=True), approx=True)
        heads.append(jnp.dot(p, vh, preferred_element_type=jnp.float32))
    mid = jnp.concatenate(heads, axis=-1) + x                   # residual

    hid = jnp.maximum(
        jnp.dot(mid, w1_ref[...], preferred_element_type=jnp.float32)
        + b1_ref[...], 0.0)                                     # (S, 768)
    w2 = w2_ref[...].astype(jnp.float32)
    out_ref[...] = (jnp.dot(hid, w2, preferred_element_type=jnp.float32)
                    + b2_ref[...] + mid)


def pack_params(Q, K, V, b_Q, b_K, b_V, W1, b1, W2, b2):
    """One-time weight packing: head-major flatten + bf16 for exact weights."""
    QP = jnp.transpose(Q, (1, 0, 2)).reshape(D_MODEL, D_MODEL).astype(jnp.bfloat16)
    KP = jnp.transpose(K, (1, 0, 2)).reshape(D_MODEL, D_MODEL).astype(jnp.bfloat16)
    VP = jnp.transpose(V, (1, 0, 2)).reshape(D_MODEL, D_MODEL).astype(jnp.bfloat16)
    return (QP, KP, VP,
            b_Q.reshape(1, D_MODEL).astype(jnp.float32),
            b_K.reshape(1, D_MODEL).astype(jnp.float32),
            b_V.reshape(1, D_MODEL).astype(jnp.float32),
            W1.astype(jnp.float32),       # 1/3 entries -> keep f32 for exactness
            b1.reshape(1, D_MODEL).astype(jnp.float32),
            W2.astype(jnp.bfloat16),      # {0, ±1, ±10} exact in bf16
            b2.reshape(1, D_MODEL).astype(jnp.float32))


@jax.jit
def reason_layer_forward(x, QP, KP, VP, bq, bk, bv, W1, b1, W2, b2):
    S = x.shape[0]

    def full2d(r, c):
        return pl.BlockSpec((r, c), lambda k: (0, 0))

    return pl.pallas_call(
        reason_layer_kernel,
        out_shape=jax.ShapeDtypeStruct((S, D_MODEL), jnp.float32),
        grid_spec=pltpu.PrefetchScalarGridSpec(
            num_scalar_prefetch=0,
            grid=(1,),   # all weights fit VMEM single-shot -> no tiling grid
            in_specs=[
                full2d(S, D_MODEL),            # x
                full2d(D_MODEL, D_MODEL),      # QP (bf16)
                full2d(D_MODEL, D_MODEL),      # KP (bf16)
                full2d(D_MODEL, D_MODEL),      # VP (bf16)
                full2d(1, D_MODEL),            # b_Q
                full2d(1, D_MODEL),            # b_K
                full2d(1, D_MODEL),            # b_V
                full2d(D_MODEL, D_MODEL),      # W1 (f32)
                full2d(1, D_MODEL),            # b1
                full2d(D_MODEL, D_MODEL),      # W2 (bf16)
                full2d(1, D_MODEL),            # b2
            ],
            out_specs=full2d(S, D_MODEL),
        ),
        compiler_params=pltpu.CompilerParams(
            dimension_semantics=("arbitrary",),
            vmem_limit_bytes=32 << 20,   # ~7 MiB resident; headroom on v7x 64 MiB
        ),
    )(x, QP, KP, VP, bq, bk, bv, W1, b1, W2, b2)


# Pure-JAX reference (mirrors the PyTorch forward exactly) for validation.
def reason_layer_ref(x, Q, K, V, b_Q, b_K, b_V, W1, b1, W2, b2):
    S = x.shape[0]
    QP = jnp.transpose(Q, (1, 0, 2)).reshape(D_MODEL, -1)
    KP = jnp.transpose(K, (1, 0, 2)).reshape(D_MODEL, -1)
    VP = jnp.transpose(V, (1, 0, 2)).reshape(D_MODEL, -1)
    q = (x @ QP + b_Q).reshape(S, NUM_HEADS, HEAD_DIM).transpose(1, 0, 2)
    kT = (x @ KP + b_K).reshape(S, NUM_HEADS, HEAD_DIM).transpose(1, 2, 0)
    v = (x @ VP + b_V).reshape(S, NUM_HEADS, HEAD_DIM).transpose(1, 0, 2)
    attn = jax.nn.softmax(jnp.einsum('hsd,hdt->hst', q, kT), axis=-1)
    mid = jnp.einsum('hst,htd->hsd', attn, v).transpose(1, 0, 2).reshape(S, D_MODEL) + x
    hid = jax.nn.relu(mid @ W1 + b1)
    return hid @ W2 + b2 + mid


if __name__ == "__main__":
    key = jax.random.PRNGKey(0)
    x = jax.random.normal(key, (SEQ, D_MODEL), dtype=jnp.float32)

    Q_np, K_np, V_np, bQ_np, bK_np, bV_np = compute_attention_matrix(alpha=50.0)
    W1_np, b1_np, W2_np, b2_np = compute_mlp_matrix()

    Q = jnp.asarray(Q_np); K = jnp.asarray(K_np); V = jnp.asarray(V_np)
    bQ = jnp.asarray(bQ_np); bK = jnp.asarray(bK_np); bV = jnp.asarray(bV_np)
    W1 = jnp.asarray(W1_np); b1 = jnp.asarray(b1_np)
    W2 = jnp.asarray(W2_np); b2 = jnp.asarray(b2_np)

    packed = pack_params(Q, K, V, bQ, bK, bV, W1, b1, W2, b2)
    packed = jax.block_until_ready(packed)      # one-time weight packing

    out = reason_layer_forward(x, *packed)
    out = jax.block_until_ready(out)

    ref = jax.block_until_ready(
        reason_layer_ref(x, Q, K, V, bQ, bK, bV, W1, b1, W2, b2))
    np.testing.assert_allclose(np.asarray(out), np.asarray(ref),
                               rtol=2e-2, atol=2e-2)
    print("KERNEL_OK")
</pallas_src>

<mosaic_0001>
module attributes {stable_mosaic.version = 11 : i64} {
  func.func @reason_layer_kernel(%arg0: i32, %arg1: memref<8x768xf32, #tpu.memory_space<vmem>>, %arg2: memref<768x768xbf16, #tpu.memory_space<vmem>>, %arg3: memref<768x768xbf16, #tpu.memory_space<vmem>>, %arg4: memref<768x768xbf16, #tpu.memory_space<vmem>>, %arg5: memref<1x768xf32, #tpu.memory_space<vmem>>, %arg6: memref<1x768xf32, #tpu.memory_space<vmem>>, %arg7: memref<1x768xf32, #tpu.memory_space<vmem>>, %arg8: memref<768x768xf32, #tpu.memory_space<vmem>>, %arg9: memref<1x768xf32, #tpu.memory_space<vmem>>, %arg10: memref<768x768xbf16, #tpu.memory_space<vmem>>, %arg11: memref<1x768xf32, #tpu.memory_space<vmem>>, %arg12: memref<8x768xf32, #tpu.memory_space<vmem>>) attributes {dimension_semantics = [#tpu.dimension_semantics<arbitrary>], iteration_bounds = array<i64: 1>, scalar_prefetch = 0 : i64, scratch_operands = 0 : i64, tpu.core_type = #tpu.core_type<tc>, window_params = [{pipeline_mode = #tpu.pipeline_mode<synchronous>, transform_indices = @transform_0, window_bounds = array<i64: 8, 768>}, {pipeline_mode = #tpu.pipeline_mode<synchronous>, transform_indices = @transform_1, window_bounds = array<i64: 768, 768>}, {pipeline_mode = #tpu.pipeline_mode<synchronous>, transform_indices = @transform_2, window_bounds = array<i64: 768, 768>}, {pipeline_mode = #tpu.pipeline_mode<synchronous>, transform_indices = @transform_3, window_bounds = array<i64: 768, 768>}, {pipeline_mode = #tpu.pipeline_mode<synchronous>, transform_indices = @transform_4, window_bounds = array<i64: 1, 768>}, {pipeline_mode = #tpu.pipeline_mode<synchronous>, transform_indices = @transform_5, window_bounds = array<i64: 1, 768>}, {pipeline_mode = #tpu.pipeline_mode<synchronous>, transform_indices = @transform_6, window_bounds = array<i64: 1, 768>}, {pipeline_mode = #tpu.pipeline_mode<synchronous>, transform_indices = @transform_7, window_bounds = array<i64: 768, 768>}, {pipeline_mode = #tpu.pipeline_mode<synchronous>, transform_indices = @transform_8, window_bounds = array<i64: 1, 768>}, {pipeline_mode = #tpu.pipeline_mode<synchronous>, transform_indices = @transform_9, window_bounds = array<i64: 768, 768>}, {pipeline_mode = #tpu.pipeline_mode<synchronous>, transform_indices = @transform_10, window_bounds = array<i64: 1, 768>}, {pipeline_mode = #tpu.pipeline_mode<synchronous>, transform_indices = @transform_11, window_bounds = array<i64: 8, 768>}]} {
    %c0 = arith.constant 0 : index
    %c0_0 = arith.constant 0 : index
    %0 = vector.load %arg1[%c0, %c0_0] : memref<8x768xf32, #tpu.memory_space<vmem>>, vector<8x768xf32>
    %c0_1 = arith.constant 0 : index
    %c0_2 = arith.constant 0 : index
    %1 = vector.load %arg2[%c0_1, %c0_2] : memref<768x768xbf16, #tpu.memory_space<vmem>>, vector<768x768xbf16>
    %2 = arith.extf %1 : vector<768x768xbf16> to vector<768x768xf32>
    %c0_3 = arith.constant 0 : index
    %c0_4 = arith.constant 0 : index
    %3 = vector.load %arg3[%c0_3, %c0_4] : memref<768x768xbf16, #tpu.memory_space<vmem>>, vector<768x768xbf16>
    %4 = arith.extf %3 : vector<768x768xbf16> to vector<768x768xf32>
    %c0_5 = arith.constant 0 : index
    %c0_6 = arith.constant 0 : index
    %5 = vector.load %arg4[%c0_5, %c0_6] : memref<768x768xbf16, #tpu.memory_space<vmem>>, vector<768x768xbf16>
    %6 = arith.extf %5 : vector<768x768xbf16> to vector<768x768xf32>
    %cst = arith.constant dense<0.000000e+00> : vector<8x768xf32>
    %7 = tpu.matmul %0, %2, %cst {dimension_numbers = #tpu.dot_dimension_numbers<[1], [0], [0], [1], [0, 0, 1, 1], [], []>} : vector<8x768xf32>, vector<768x768xf32>, vector<8x768xf32> -> vector<8x768xf32>
    %c0_7 = arith.constant 0 : index
    %c0_8 = arith.constant 0 : index
    %8 = vector.load %arg5[%c0_7, %c0_8] : memref<1x768xf32, #tpu.memory_space<vmem>>, vector<1x768xf32>
    %9 = vector.broadcast %8 : vector<1x768xf32> to vector<8x768xf32>
    %10 = arith.addf %7, %9 : vector<8x768xf32>
    %cst_9 = arith.constant dense<0.000000e+00> : vector<8x768xf32>
    %11 = tpu.matmul %0, %4, %cst_9 {dimension_numbers = #tpu.dot_dimension_numbers<[1], [0], [0], [1], [0, 0, 1, 1], [], []>} : vector<8x768xf32>, vector<768x768xf32>, vector<8x768xf32> -> vector<8x768xf32>
    %c0_10 = arith.constant 0 : index
    %c0_11 = arith.constant 0 : index
    %12 = vector.load %arg6[%c0_10, %c0_11] : memref<1x768xf32, #tpu.memory_space<vmem>>, vector<1x768xf32>
    %13 = vector.broadcast %12 : vector<1x768xf32> to vector<8x768xf32>
    %14 = arith.addf %11, %13 : vector<8x768xf32>
    %cst_12 = arith.constant dense<0.000000e+00> : vector<8x768xf32>
    %15 = tpu.matmul %0, %6, %cst_12 {dimension_numbers = #tpu.dot_dimension_numbers<[1], [0], [0], [1], [0, 0, 1, 1], [], []>} : vector<8x768xf32>, vector<768x768xf32>, vector<8x768xf32> -> vector<8x768xf32>
    %c0_13 = arith.constant 0 : index
    %c0_14 = arith.constant 0 : index
    %16 = vector.load %arg7[%c0_13, %c0_14] : memref<1x768xf32, #tpu.memory_space<vmem>>, vector<1x768xf32>
    %17 = vector.broadcast %16 : vector<1x768xf32> to vector<8x768xf32>
    %18 = arith.addf %15, %17 : vector<8x768xf32>
    %19 = vector.extract_strided_slice %10 {offsets = [0, 0], sizes = [8, 64], strides = [1, 1]} : vector<8x768xf32> to vector<8x64xf32>
    %20 = vector.extract_strided_slice %14 {offsets = [0, 0], sizes = [8, 64], strides = [1, 1]} : vector<8x768xf32> to vector<8x64xf32>
    %21 = vector.extract_strided_slice %18 {offsets = [0, 0], sizes = [8, 64], strides = [1, 1]} : vector<8x768xf32> to vector<8x64xf32>
    %cst_15 = arith.constant dense<0.000000e+00> : vector<8x8xf32>
    %22 = tpu.matmul %19, %20, %cst_15 {dimension_numbers = #tpu.dot_dimension_numbers<[1], [1], [0], [0], [0, 0, 1, 0], [], []>} : vector<8x64xf32>, vector<8x64xf32>, vector<8x8xf32> -> vector<8x8xf32>
    %cst_16 = arith.constant dense<0xFF800000> : vector<8xf32>
    %23 = vector.multi_reduction <maximumf>, %22, %cst_16 [1] : vector<8x8xf32> to vector<8xf32>
    %24 = vector.shape_cast %23 : vector<8xf32> to vector<8x1xf32>
    %25 = vector.broadcast %24 : vector<8x1xf32> to vector<8x8xf32>
    %26 = arith.subf %22, %25 : vector<8x8xf32>
    %27 = math.exp %26 : vector<8x8xf32>
    %cst_17 = arith.constant dense<0.000000e+00> : vector<8xf32>
    %28 = vector.multi_reduction <add>, %27, %cst_17 [1] : vector<8x8xf32> to vector<8xf32>
    %29 = vector.shape_cast %28 : vector<8xf32> to vector<8x1xf32>
    %30 = tpu.reciprocal %29 {approx = true} : vector<8x1xf32> -> vector<8x1xf32>
    %31 = vector.broadcast %30 : vector<8x1xf32> to vector<8x8xf32>
    %32 = arith.mulf %27, %31 : vector<8x8xf32>
    %cst_18 = arith.constant dense<0.000000e+00> : vector<8x64xf32>
    %33 = tpu.matmul %32, %21, %cst_18 {dimension_numbers = #tpu.dot_dimension_numbers<[1], [0], [0], [1], [0, 0, 1, 1], [], []>} : vector<8x8xf32>, vector<8x64xf32>, vector<8x64xf32> -> vector<8x64xf32>
    %34 = vector.extract_strided_slice %10 {offsets = [0, 64], sizes = [8, 64], strides = [1, 1]} : vector<8x768xf32> to vector<8x64xf32>
    %35 = vector.extract_strided_slice %14 {offsets = [0, 64], sizes = [8, 64], strides = [1, 1]} : vector<8x768xf32> to vector<8x64xf32>
    %36 = vector.extract_strided_slice %18 {offsets = [0, 64], sizes = [8, 64], strides = [1, 1]} : vector<8x768xf32> to vector<8x64xf32>
    %cst_19 = arith.constant dense<0.000000e+00> : vector<8x8xf32>
    %37 = tpu.matmul %34, %35, %cst_19 {dimension_numbers = #tpu.dot_dimension_numbers<[1], [1], [0], [0], [0, 0, 1, 0], [], []>} : vector<8x64xf32>, vector<8x64xf32>, vector<8x8xf32> -> vector<8x8xf32>
    %cst_20 = arith.constant dense<0xFF800000> : vector<8xf32>
    %38 = vector.multi_reduction <maximumf>, %37, %cst_20 [1] : vector<8x8xf32> to vector<8xf32>
    %39 = vector.shape_cast %38 : vector<8xf32> to vector<8x1xf32>
    %40 = vector.broadcast %39 : vector<8x1xf32> to vector<8x8xf32>
    %41 = arith.subf %37, %40 : vector<8x8xf32>
    %42 = math.exp %41 : vector<8x8xf32>
    %cst_21 = arith.constant dense<0.000000e+00> : vector<8xf32>
    %43 = vector.multi_reduction <add>, %42, %cst_21 [1] : vector<8x8xf32> to vector<8xf32>
    %44 = vector.shape_cast %43 : vector<8xf32> to vector<8x1xf32>
    %45 = tpu.reciprocal %44 {approx = true} : vector<8x1xf32> -> vector<8x1xf32>
    %46 = vector.broadcast %45 : vector<8x1xf32> to vector<8x8xf32>
    %47 = arith.mulf %42, %46 : vector<8x8xf32>
    %cst_22 = arith.constant dense<0.000000e+00> : vector<8x64xf32>
    %48 = tpu.matmul %47, %36, %cst_22 {dimension_numbers = #tpu.dot_dimension_numbers<[1], [0], [0], [1], [0, 0, 1, 1], [], []>} : vector<8x8xf32>, vector<8x64xf32>, vector<8x64xf32> -> vector<8x64xf32>
    %49 = vector.extract_strided_slice %10 {offsets = [0, 128], sizes = [8, 64], strides = [1, 1]} : vector<8x768xf32> to vector<8x64xf32>
    %50 = vector.extract_strided_slice %14 {offsets = [0, 128], sizes = [8, 64], strides = [1, 1]} : vector<8x768xf32> to vector<8x64xf32>
    %51 = vector.extract_strided_slice %18 {offsets = [0, 128], sizes = [8, 64], strides = [1, 1]} : vector<8x768xf32> to vector<8x64xf32>
    %cst_23 = arith.constant dense<0.000000e+00> : vector<8x8xf32>
    %52 = tpu.matmul %49, %50, %cst_23 {dimension_numbers = #tpu.dot_dimension_numbers<[1], [1], [0], [0], [0, 0, 1, 0], [], []>} : vector<8x64xf32>, vector<8x64xf32>, vector<8x8xf32> -> vector<8x8xf32>
    %cst_24 = arith.constant dense<0xFF800000> : vector<8xf32>
    %53 = vector.multi_reduction <maximumf>, %52, %cst_24 [1] : vector<8x8xf32> to vector<8xf32>
    %54 = vector.shape_cast %53 : vector<8xf32> to vector<8x1xf32>
    %55 = vector.broadcast %54 : vector<8x1xf32> to vector<8x8xf32>
    %56 = arith.subf %52, %55 : vector<8x8xf32>
    %57 = math.exp %56 : vector<8x8xf32>
    %cst_25 = arith.constant dense<0.000000e+00> : vector<8xf32>
    %58 = vector.multi_reduction <add>, %57, %cst_25 [1] : vector<8x8xf32> to vector<8xf32>
    %59 = vector.shape_cast %58 : vector<8xf32> to vector<8x1xf32>
    %60 = tpu.reciprocal %59 {approx = true} : vector<8x1xf32> -> vector<8x1xf32>
    %61 = vector.broadcast %60 : vector<8x1xf32> to vector<8x8xf32>
    %62 = arith.mulf %57, %61 : vector<8x8xf32>
    %cst_26 = arith.constant dense<0.000000e+00> : vector<8x64xf32>
    %63 = tpu.matmul %62, %51, %cst_26 {dimension_numbers = #tpu.dot_dimension_numbers<[1], [0], [0], [1], [0, 0, 1, 1], [], []>} : vector<8x8xf32>, vector<8x64xf32>, vector<8x64xf32> -> vector<8x64xf32>
    %64 = vector.extract_strided_slice %10 {offsets = [0, 192], sizes = [8, 64], strides = [1, 1]} : vector<8x768xf32> to vector<8x64xf32>
    %65 = vector.extract_strided_slice %14 {offsets = [0, 192], sizes = [8, 64], strides = [1, 1]} : vector<8x768xf32> to vector<8x64xf32>
    %66 = vector.extract_strided_slice %18 {offsets = [0, 192], sizes = [8, 64], strides = [1, 1]} : vector<8x768xf32> to vector<8x64xf32>
    %cst_27 = arith.constant dense<0.000000e+00> : vector<8x8xf32>
    %67 = tpu.matmul %64, %65, %cst_27 {dimension_numbers = #tpu.dot_dimension_numbers<[1], [1], [0], [0], [0, 0, 1, 0], [], []>} : vector<8x64xf32>, vector<8x64xf32>, vector<8x8xf32> -> vector<8x8xf32>
    %cst_28 = arith.constant dense<0xFF800000> : vector<8xf32>
    %68 = vector.multi_reduction <maximumf>, %67, %cst_28 [1] : vector<8x8xf32> to vector<8xf32>
    %69 = vector.shape_cast %68 : vector<8xf32> to vector<8x1xf32>
    %70 = vector.broadcast %69 : vector<8x1xf32> to vector<8x8xf32>
    %71 = arith.subf %67, %70 : vector<8x8xf32>
    %72 = math.exp %71 : vector<8x8xf32>
    %cst_29 = arith.constant dense<0.000000e+00> : vector<8xf32>
    %73 = vector.multi_reduction <add>, %72, %cst_29 [1] : vector<8x8xf32> to vector<8xf32>
    %74 = vector.shape_cast %73 : vector<8xf32> to vector<8x1xf32>
    %75 = tpu.reciprocal %74 {approx = true} : vector<8x1xf32> -> vector<8x1xf32>
    %76 = vector.broadcast %75 : vector<8x1xf32> to vector<8x8xf32>
    %77 = arith.mulf %72, %76 : vector<8x8xf32>
    %cst_30 = arith.constant dense<0.000000e+00> : vector<8x64xf32>
    %78 = tpu.matmul %77, %66, %cst_30 {dimension_numbers = #tpu.dot_dimension_numbers<[1], [0], [0], [1], [0, 0, 1, 1], [], []>} : vector<8x8xf32>, vector<8x64xf32>, vector<8x64xf32> -> vector<8x64xf32>
    %79 = vector.extract_strided_slice %10 {offsets = [0, 256], sizes = [8, 64], strides = [1, 1]} : vector<8x768xf32> to vector<8x64xf32>
    %80 = vector.extract_strided_slice %14 {offsets = [0, 256], sizes = [8, 64], strides = [1, 1]} : vector<8x768xf32> to vector<8x64xf32>
    %81 = vector.extract_strided_slice %18 {offsets = [0, 256], sizes = [8, 64], strides = [1, 1]} : vector<8x768xf32> to vector<8x64xf32>
    %cst_31 = arith.constant dense<0.000000e+00> : vector<8x8xf32>
    %82 = tpu.matmul %79, %80, %cst_31 {dimension_numbers = #tpu.dot_dimension_numbers<[1], [1], [0], [0], [0, 0, 1, 0], [], []>} : vector<8x64xf32>, vector<8x64xf32>, vector<8x8xf32> -> vector<8x8xf32>
    %cst_32 = arith.constant dense<0xFF800000> : vector<8xf32>
    %83 = vector.multi_reduction <maximumf>, %82, %cst_32 [1] : vector<8x8xf32> to vector<8xf32>
    %84 = vector.shape_cast %83 : vector<8xf32> to vector<8x1xf32>
    %85 = vector.broadcast %84 : vector<8x1xf32> to vector<8x8xf32>
    %86 = arith.subf %82, %85 : vector<8x8xf32>
    %87 = math.exp %86 : vector<8x8xf32>
    %cst_33 = arith.constant dense<0.000000e+00> : vector<8xf32>
    %88 = vector.multi_reduction <add>, %87, %cst_33 [1] : vector<8x8xf32> to vector<8xf32>
    %89 = vector.shape_cast %88 : vector<8xf32> to vector<8x1xf32>
    %90 = tpu.reciprocal %89 {approx = true} : vector<8x1xf32> -> vector<8x1xf32>
    %91 = vector.broadcast %90 : vector<8x1xf32> to vector<8x8xf32>
    %92 = arith.mulf %87, %91 : vector<8x8xf32>
    %cst_34 = arith.constant dense<0.000000e+00> : vector<8x64xf32>
    %93 = tpu.matmul %92, %81, %cst_34 {dimension_numbers = #tpu.dot_dimension_numbers<[1], [0], [0], [1], [0, 0, 1, 1], [], []>} : vector<8x8xf32>, vector<8x64xf32>, vector<8x64xf32> -> vector<8x64xf32>
    %94 = vector.extract_strided_slice %10 {offsets = [0, 320], sizes = [8, 64], strides = [1, 1]} : vector<8x768xf32> to vector<8x64xf32>
    %95 = vector.extract_strided_slice %14 {offsets = [0, 320], sizes = [8, 64], strides = [1, 1]} : vector<8x768xf32> to vector<8x64xf32>
    %96 = vector.extract_strided_slice %18 {offsets = [0, 320], sizes = [8, 64], strides = [1, 1]} : vector<8x768xf32> to vector<8x64xf32>
    %cst_35 = arith.constant dense<0.000000e+00> : vector<8x8xf32>
    %97 = tpu.matmul %94, %95, %cst_35 {dimension_numbers = #tpu.dot_dimension_numbers<[1], [1], [0], [0], [0, 0, 1, 0], [], []>} : vector<8x64xf32>, vector<8x64xf32>, vector<8x8xf32> -> vector<8x8xf32>
    %cst_36 = arith.constant dense<0xFF800000> : vector<8xf32>
    %98 = vector.multi_reduction <maximumf>, %97, %cst_36 [1] : vector<8x8xf32> to vector<8xf32>
    %99 = vector.shape_cast %98 : vector<8xf32> to vector<8x1xf32>
    %100 = vector.broadcast %99 : vector<8x1xf32> to vector<8x8xf32>
    %101 = arith.subf %97, %100 : vector<8x8xf32>
    %102 = math.exp %101 : vector<8x8xf32>
    %cst_37 = arith.constant dense<0.000000e+00> : vector<8xf32>
    %103 = vector.multi_reduction <add>, %102, %cst_37 [1] : vector<8x8xf32> to vector<8xf32>
    %104 = vector.shape_cast %103 : vector<8xf32> to vector<8x1xf32>
    %105 = tpu.reciprocal %104 {approx = true} : vector<8x1xf32> -> vector<8x1xf32>
    %106 = vector.broadcast %105 : vector<8x1xf32> to vector<8x8xf32>
    %107 = arith.mulf %102, %106 : vector<8x8xf32>
    %cst_38 = arith.constant dense<0.000000e+00> : vector<8x64xf32>
    %108 = tpu.matmul %107, %96, %cst_38 {dimension_numbers = #tpu.dot_dimension_numbers<[1], [0], [0], [1], [0, 0, 1, 1], [], []>} : vector<8x8xf32>, vector<8x64xf32>, vector<8x64xf32> -> vector<8x64xf32>
    %109 = vector.extract_strided_slice %10 {offsets = [0, 384], sizes = [8, 64], strides = [1, 1]} : vector<8x768xf32> to vector<8x64xf32>
    %110 = vector.extract_strided_slice %14 {offsets = [0, 384], sizes = [8, 64], strides = [1, 1]} : vector<8x768xf32> to vector<8x64xf32>
    %111 = vector.extract_strided_slice %18 {offsets = [0, 384], sizes = [8, 64], strides = [1, 1]} : vector<8x768xf32> to vector<8x64xf32>
    %cst_39 = arith.constant dense<0.000000e+00> : vector<8x8xf32>
    %112 = tpu.matmul %109, %110, %cst_39 {dimension_numbers = #tpu.dot_dimension_numbers<[1], [1], [0], [0], [0, 0, 1, 0], [], []>} : vector<8x64xf32>, vector<8x64xf32>, vector<8x8xf32> -> vector<8x8xf32>
    %cst_40 = arith.constant dense<0xFF800000> : vector<8xf32>
    %113 = vector.multi_reduction <maximumf>, %112, %cst_40 [1] : vector<8x8xf32> to vector<8xf32>
    %114 = vector.shape_cast %113 : vector<8xf32> to vector<8x1xf32>
    %115 = vector.broadcast %114 : vector<8x1xf32> to vector<8x8xf32>
    %116 = arith.subf %112, %115 : vector<8x8xf32>
    %117 = math.exp %116 : vector<8x8xf32>
    %cst_41 = arith.constant dense<0.000000e+00> : vector<8xf32>
    %118 = vector.multi_reduction <add>, %117, %cst_41 [1] : vector<8x8xf32> to vector<8xf32>
    %119 = vector.shape_cast %118 : vector<8xf32> to vector<8x1xf32>
    %120 = tpu.reciprocal %119 {approx = true} : vector<8x1xf32> -> vector<8x1xf32>
    %121 = vector.broadcast %120 : vector<8x1xf32> to vector<8x8xf32>
    %122 = arith.mulf %117, %121 : vector<8x8xf32>
    %cst_42 = arith.constant dense<0.000000e+00> : vector<8x64xf32>
    %123 = tpu.matmul %122, %111, %cst_42 {dimension_numbers = #tpu.dot_dimension_numbers<[1], [0], [0], [1], [0, 0, 1, 1], [], []>} : vector<8x8xf32>, vector<8x64xf32>, vector<8x64xf32> -> vector<8x64xf32>
    %124 = vector.extract_strided_slice %10 {offsets = [0, 448], sizes = [8, 64], strides = [1, 1]} : vector<8x768xf32> to vector<8x64xf32>
    %125 = vector.extract_strided_slice %14 {offsets = [0, 448], sizes = [8, 64], strides = [1, 1]} : vector<8x768xf32> to vector<8x64xf32>
    %126 = vector.extract_strided_slice %18 {offsets = [0, 448], sizes = [8, 64], strides = [1, 1]} : vector<8x768xf32> to vector<8x64xf32>
    %cst_43 = arith.constant dense<0.000000e+00> : vector<8x8xf32>
    %127 = tpu.matmul %124, %125, %cst_43 {dimension_numbers = #tpu.dot_dimension_numbers<[1], [1], [0], [0], [0, 0, 1, 0], [], []>} : vector<8x64xf32>, vector<8x64xf32>, vector<8x8xf32> -> vector<8x8xf32>
    %cst_44 = arith.constant dense<0xFF800000> : vector<8xf32>
    %128 = vector.multi_reduction <maximumf>, %127, %cst_44 [1] : vector<8x8xf32> to vector<8xf32>
    %129 = vector.shape_cast %128 : vector<8xf32> to vector<8x1xf32>
    %130 = vector.broadcast %129 : vector<8x1xf32> to vector<8x8xf32>
    %131 = arith.subf %127, %130 : vector<8x8xf32>
    %132 = math.exp %131 : vector<8x8xf32>
    %cst_45 = arith.constant dense<0.000000e+00> : vector<8xf32>
    %133 = vector.multi_reduction <add>, %132, %cst_45 [1] : vector<8x8xf32> to vector<8xf32>
    %134 = vector.shape_cast %133 : vector<8xf32> to vector<8x1xf32>
    %135 = tpu.reciprocal %134 {approx = true} : vector<8x1xf32> -> vector<8x1xf32>
    %136 = vector.broadcast %135 : vector<8x1xf32> to vector<8x8xf32>
    %137 = arith.mulf %132, %136 : vector<8x8xf32>
    %cst_46 = arith.constant dense<0.000000e+00> : vector<8x64xf32>
    %138 = tpu.matmul %137, %126, %cst_46 {dimension_numbers = #tpu.dot_dimension_numbers<[1], [0], [0], [1], [0, 0, 1, 1], [], []>} : vector<8x8xf32>, vector<8x64xf32>, vector<8x64xf32> -> vector<8x64xf32>
    %139 = vector.extract_strided_slice %10 {offsets = [0, 512], sizes = [8, 64], strides = [1, 1]} : vector<8x768xf32> to vector<8x64xf32>
    %140 = vector.extract_strided_slice %14 {offsets = [0, 512], sizes = [8, 64], strides = [1, 1]} : vector<8x768xf32> to vector<8x64xf32>
    %141 = vector.extract_strided_slice %18 {offsets = [0, 512], sizes = [8, 64], strides = [1, 1]} : vector<8x768xf32> to vector<8x64xf32>
    %cst_47 = arith.constant dense<0.000000e+00> : vector<8x8xf32>
    %142 = tpu.matmul %139, %140, %cst_47 {dimension_numbers = #tpu.dot_dimension_numbers<[1], [1], [0], [0], [0, 0, 1, 0], [], []>} : vector<8x64xf32>, vector<8x64xf32>, vector<8x8xf32> -> vector<8x8xf32>
    %cst_48 = arith.constant dense<0xFF800000> : vector<8xf32>
    %143 = vector.multi_reduction <maximumf>, %142, %cst_48 [1] : vector<8x8xf32> to vector<8xf32>
    %144 = vector.shape_cast %143 : vector<8xf32> to vector<8x1xf32>
    %145 = vector.broadcast %144 : vector<8x1xf32> to vector<8x8xf32>
    %146 = arith.subf %142, %145 : vector<8x8xf32>
    %147 = math.exp %146 : vector<8x8xf32>
    %cst_49 = arith.constant dense<0.000000e+00> : vector<8xf32>
    %148 = vector.multi_reduction <add>, %147, %cst_49 [1] : vector<8x8xf32> to vector<8xf32>
    %149 = vector.shape_cast %148 : vector<8xf32> to vector<8x1xf32>
    %150 = tpu.reciprocal %149 {approx = true} : vector<8x1xf32> -> vector<8x1xf32>
    %151 = vector.broadcast %150 : vector<8x1xf32> to vector<8x8xf32>
    %152 = arith.mulf %147, %151 : vector<8x8xf32>
    %cst_50 = arith.constant dense<0.000000e+00> : vector<8x64xf32>
    %153 = tpu.matmul %152, %141, %cst_50 {dimension_numbers = #tpu.dot_dimension_numbers<[1], [0], [0], [1], [0, 0, 1, 1], [], []>} : vector<8x8xf32>, vector<8x64xf32>, vector<8x64xf32> -> vector<8x64xf32>
    %154 = vector.extract_strided_slice %10 {offsets = [0, 576], sizes = [8, 64], strides = [1, 1]} : vector<8x768xf32> to vector<8x64xf32>
    %155 = vector.extract_strided_slice %14 {offsets = [0, 576], sizes = [8, 64], strides = [1, 1]} : vector<8x768xf32> to vector<8x64xf32>
    %156 = vector.extract_strided_slice %18 {offsets = [0, 576], sizes = [8, 64], strides = [1, 1]} : vector<8x768xf32> to vector<8x64xf32>
    %cst_51 = arith.constant dense<0.000000e+00> : vector<8x8xf32>
    %157 = tpu.matmul %154, %155, %cst_51 {dimension_numbers = #tpu.dot_dimension_numbers<[1], [1], [0], [0], [0, 0, 1, 0], [], []>} : vector<8x64xf32>, vector<8x64xf32>, vector<8x8xf32> -> vector<8x8xf32>
    %cst_52 = arith.constant dense<0xFF800000> : vector<8xf32>
    %158 = vector.multi_reduction <maximumf>, %157, %cst_52 [1] : vector<8x8xf32> to vector<8xf32>
    %159 = vector.shape_cast %158 : vector<8xf32> to vector<8x1xf32>
    %160 = vector.broadcast %159 : vector<8x1xf32> to vector<8x8xf32>
    %161 = arith.subf %157, %160 : vector<8x8xf32>
    %162 = math.exp %161 : vector<8x8xf32>
    %cst_53 = arith.constant dense<0.000000e+00> : vector<8xf32>
    %163 = vector.multi_reduction <add>, %162, %cst_53 [1] : vector<8x8xf32> to vector<8xf32>
    %164 = vector.shape_cast %163 : vector<8xf32> to vector<8x1xf32>
    %165 = tpu.reciprocal %164 {approx = true} : vector<8x1xf32> -> vector<8x1xf32>
    %166 = vector.broadcast %165 : vector<8x1xf32> to vector<8x8xf32>
    %167 = arith.mulf %162, %166 : vector<8x8xf32>
    %cst_54 = arith.constant dense<0.000000e+00> : vector<8x64xf32>
    %168 = tpu.matmul %167, %156, %cst_54 {dimension_numbers = #tpu.dot_dimension_numbers<[1], [0], [0], [1], [0, 0, 1, 1], [], []>} : vector<8x8xf32>, vector<8x64xf32>, vector<8x64xf32> -> vector<8x64xf32>
    %169 = vector.extract_strided_slice %10 {offsets = [0, 640], sizes = [8, 64], strides = [1, 1]} : vector<8x768xf32> to vector<8x64xf32>
    %170 = vector.extract_strided_slice %14 {offsets = [0, 640], sizes = [8, 64], strides = [1, 1]} : vector<8x768xf32> to vector<8x64xf32>
    %171 = vector.extract_strided_slice %18 {offsets = [0, 640], sizes = [8, 64], strides = [1, 1]} : vector<8x768xf32> to vector<8x64xf32>
    %cst_55 = arith.constant dense<0.000000e+00> : vector<8x8xf32>
    %172 = tpu.matmul %169, %170, %cst_55 {dimension_numbers = #tpu.dot_dimension_numbers<[1], [1], [0], [0], [0, 0, 1, 0], [], []>} : vector<8x64xf32>, vector<8x64xf32>, vector<8x8xf32> -> vector<8x8xf32>
    %cst_56 = arith.constant dense<0xFF800000> : vector<8xf32>
    %173 = vector.multi_reduction <maximumf>, %172, %cst_56 [1] : vector<8x8xf32> to vector<8xf32>
    %174 = vector.shape_cast %173 : vector<8xf32> to vector<8x1xf32>
    %175 = vector.broadcast %174 : vector<8x1xf32> to vector<8x8xf32>
    %176 = arith.subf %172, %175 : vector<8x8xf32>
    %177 = math.exp %176 : vector<8x8xf32>
    %cst_57 = arith.constant dense<0.000000e+00> : vector<8xf32>
    %178 = vector.multi_reduction <add>, %177, %cst_57 [1] : vector<8x8xf32> to vector<8xf32>
    %179 = vector.shape_cast %178 : vector<8xf32> to vector<8x1xf32>
    %180 = tpu.reciprocal %179 {approx = true} : vector<8x1xf32> -> vector<8x1xf32>
    %181 = vector.broadcast %180 : vector<8x1xf32> to vector<8x8xf32>
    %182 = arith.mulf %177, %181 : vector<8x8xf32>
    %cst_58 = arith.constant dense<0.000000e+00> : vector<8x64xf32>
    %183 = tpu.matmul %182, %171, %cst_58 {dimension_numbers = #tpu.dot_dimension_numbers<[1], [0], [0], [1], [0, 0, 1, 1], [], []>} : vector<8x8xf32>, vector<8x64xf32>, vector<8x64xf32> -> vector<8x64xf32>
    %184 = vector.extract_strided_slice %10 {offsets = [0, 704], sizes = [8, 64], strides = [1, 1]} : vector<8x768xf32> to vector<8x64xf32>
    %185 = vector.extract_strided_slice %14 {offsets = [0, 704], sizes = [8, 64], strides = [1, 1]} : vector<8x768xf32> to vector<8x64xf32>
    %186 = vector.extract_strided_slice %18 {offsets = [0, 704], sizes = [8, 64], strides = [1, 1]} : vector<8x768xf32> to vector<8x64xf32>
    %cst_59 = arith.constant dense<0.000000e+00> : vector<8x8xf32>
    %187 = tpu.matmul %184, %185, %cst_59 {dimension_numbers = #tpu.dot_dimension_numbers<[1], [1], [0], [0], [0, 0, 1, 0], [], []>} : vector<8x64xf32>, vector<8x64xf32>, vector<8x8xf32> -> vector<8x8xf32>
    %cst_60 = arith.constant dense<0xFF800000> : vector<8xf32>
    %188 = vector.multi_reduction <maximumf>, %187, %cst_60 [1] : vector<8x8xf32> to vector<8xf32>
    %189 = vector.shape_cast %188 : vector<8xf32> to vector<8x1xf32>
    %190 = vector.broadcast %189 : vector<8x1xf32> to vector<8x8xf32>
    %191 = arith.subf %187, %190 : vector<8x8xf32>
    %192 = math.exp %191 : vector<8x8xf32>
    %cst_61 = arith.constant dense<0.000000e+00> : vector<8xf32>
    %193 = vector.multi_reduction <add>, %192, %cst_61 [1] : vector<8x8xf32> to vector<8xf32>
    %194 = vector.shape_cast %193 : vector<8xf32> to vector<8x1xf32>
    %195 = tpu.reciprocal %194 {approx = true} : vector<8x1xf32> -> vector<8x1xf32>
    %196 = vector.broadcast %195 : vector<8x1xf32> to vector<8x8xf32>
    %197 = arith.mulf %192, %196 : vector<8x8xf32>
    %cst_62 = arith.constant dense<0.000000e+00> : vector<8x64xf32>
    %198 = tpu.matmul %197, %186, %cst_62 {dimension_numbers = #tpu.dot_dimension_numbers<[1], [0], [0], [1], [0, 0, 1, 1], [], []>} : vector<8x8xf32>, vector<8x64xf32>, vector<8x64xf32> -> vector<8x64xf32>
    %199 = tpu.concatenate %33, %48, %63, %78, %93, %108, %123, %138, %153, %168, %183, %198 in 1 : vector<8x64xf32>, vector<8x64xf32>, vector<8x64xf32>, vector<8x64xf32>, vector<8x64xf32>, vector<8x64xf32>, vector<8x64xf32>, vector<8x64xf32>, vector<8x64xf32>, vector<8x64xf32>, vector<8x64xf32>, vector<8x64xf32> -> vector<8x768xf32>
    %200 = arith.addf %199, %0 : vector<8x768xf32>
    %c0_63 = arith.constant 0 : index
    %c0_64 = arith.constant 0 : index
    %201 = vector.load %arg8[%c0_63, %c0_64] : memref<768x768xf32, #tpu.memory_space<vmem>>, vector<768x768xf32>
    %cst_65 = arith.constant dense<0.000000e+00> : vector<8x768xf32>
    %202 = tpu.matmul %200, %201, %cst_65 {dimension_numbers = #tpu.dot_dimension_numbers<[1], [0], [0], [1], [0, 0, 1, 1], [], []>} : vector<8x768xf32>, vector<768x768xf32>, vector<8x768xf32> -> vector<8x768xf32>
    %c0_66 = arith.constant 0 : index
    %c0_67 = arith.constant 0 : index
    %203 = vector.load %arg9[%c0_66, %c0_67] : memref<1x768xf32, #tpu.memory_space<vmem>>, vector<1x768xf32>
    %204 = vector.broadcast %203 : vector<1x768xf32> to vector<8x768xf32>
    %205 = arith.addf %202, %204 : vector<8x768xf32>
    %cst_68 = arith.constant 0.000000e+00 : f32
    %206 = vector.broadcast %cst_68 : f32 to vector<8x768xf32>
    %207 = arith.maximumf %205, %206 : vector<8x768xf32>
    %c0_69 = arith.constant 0 : index
    %c0_70 = arith.constant 0 : index
    %208 = vector.load %arg10[%c0_69, %c0_70] : memref<768x768xbf16, #tpu.memory_space<vmem>>, vector<768x768xbf16>
    %209 = arith.extf %208 : vector<768x768xbf16> to vector<768x768xf32>
    %cst_71 = arith.constant dense<0.000000e+00> : vector<8x768xf32>
    %210 = tpu.matmul %207, %209, %cst_71 {dimension_numbers = #tpu.dot_dimension_numbers<[1], [0], [0], [1], [0, 0, 1, 1], [], []>} : vector<8x768xf32>, vector<768x768xf32>, vector<8x768xf32> -> vector<8x768xf32>
    %c0_72 = arith.constant 0 : index
    %c0_73 = arith.constant 0 : index
    %211 = vector.load %arg11[%c0_72, %c0_73] : memref<1x768xf32, #tpu.memory_space<vmem>>, vector<1x768xf32>
    %212 = vector.broadcast %211 : vector<1x768xf32> to vector<8x768xf32>
    %213 = arith.addf %210, %212 : vector<8x768xf32>
    %214 = arith.addf %213, %200 : vector<8x768xf32>
    %c0_74 = arith.constant 0 : index
    %c0_75 = arith.constant 0 : index
    %215 = vector.load %arg12[%c0_74, %c0_75] : memref<8x768xf32, #tpu.memory_space<vmem>>, vector<8x768xf32>
    tpu.vector_store %arg12[%c0_74, %c0_75], %214 {strides = array<i32>} : memref<8x768xf32, #tpu.memory_space<vmem>>, vector<8x768xf32>,
    return
  }
  func.func @transform_0(%arg0: i32) -> (i32, i32) {
    %c0_i32 = arith.constant 0 : i32
    %c0_i32_0 = arith.constant 0 : i32
    %c0_i32_1 = arith.constant 0 : i32
    return %c0_i32, %c0_i32_0 : i32, i32
  }
  func.func @transform_1(%arg0: i32) -> (i32, i32) {
    %c0_i32 = arith.constant 0 : i32
    %c0_i32_0 = arith.constant 0 : i32
    %c0_i32_1 = arith.constant 0 : i32
    return %c0_i32, %c0_i32_0 : i32, i32
  }
  func.func @transform_2(%arg0: i32) -> (i32, i32) {
    %c0_i32 = arith.constant 0 : i32
    %c0_i32_0 = arith.constant 0 : i32
    %c0_i32_1 = arith.constant 0 : i32
    return %c0_i32, %c0_i32_0 : i32, i32
  }
  func.func @transform_3(%arg0: i32) -> (i32, i32) {
    %c0_i32 = arith.constant 0 : i32
    %c0_i32_0 = arith.constant 0 : i32
    %c0_i32_1 = arith.constant 0 : i32
    return %c0_i32, %c0_i32_0 : i32, i32
  }
  func.func @transform_4(%arg0: i32) -> (i32, i32) {
    %c0_i32 = arith.constant 0 : i32
    %c0_i32_0 = arith.constant 0 : i32
    %c0_i32_1 = arith.constant 0 : i32
    return %c0_i32, %c0_i32_0 : i32, i32
  }
  func.func @transform_5(%arg0: i32) -> (i32, i32) {
    %c0_i32 = arith.constant 0 : i32
    %c0_i32_0 = arith.constant 0 : i32
    %c0_i32_1 = arith.constant 0 : i32
    return %c0_i32, %c0_i32_0 : i32, i32
  }
  func.func @transform_6(%arg0: i32) -> (i32, i32) {
    %c0_i32 = arith.constant 0 : i32
    %c0_i32_0 = arith.constant 0 : i32
    %c0_i32_1 = arith.constant 0 : i32
    return %c0_i32, %c0_i32_0 : i32, i32
  }
  func.func @transform_7(%arg0: i32) -> (i32, i32) {
    %c0_i32 = arith.constant 0 : i32
    %c0_i32_0 = arith.constant 0 : i32
    %c0_i32_1 = arith.constant 0 : i32
    return %c0_i32, %c0_i32_0 : i32, i32
  }
  func.func @transform_8(%arg0: i32) -> (i32, i32) {
    %c0_i32 = arith.constant 0 : i32
    %c0_i32_0 = arith.constant 0 : i32
    %c0_i32_1 = arith.constant 0 : i32
    return %c0_i32, %c0_i32_0 : i32, i32
  }
  func.func @transform_9(%arg0: i32) -> (i32, i32) {
    %c0_i32 = arith.constant 0 : i32
    %c0_i32_0 = arith.constant 0 : i32
    %c0_i32_1 = arith.constant 0 : i32
    return %c0_i32, %c0_i32_0 : i32, i32
  }
  func.func @transform_10(%arg0: i32) -> (i32, i32) {
    %c0_i32 = arith.constant 0 : i32
    %c0_i32_0 = arith.constant 0 : i32
    %c0_i32_1 = arith.constant 0 : i32
    return %c0_i32, %c0_i32_0 : i32, i32
  }
  func.func @transform_11(%arg0: i32) -> (i32, i32) {
    %c0_i32 = arith.constant 0 : i32
    %c0_i32_0 = arith.constant 0 : i32
    %c0_i32_1 = arith.constant 0 : i32
    return %c0_i32, %c0_i32_0 : i32, i32
  }
}

</mosaic_0001>

<llo_original>
// kernel: reason_layer_forward.1
$region0: #{reason_layer_forward.1}
  #allocation0 [shape = 'u32[]', space=smem, size = 0x4, offset = 0x4, fixed_abs, tag = 'smem constant byte address 0x4 - core index']
  #allocation1 [shape = 'u32[72,128]{1,0:T(1,128)}', space=vmem, size = 0x9000, scoped, tag = 'internal scratch']
  %s0 = inlined_call_operand.hbm [shape: f32[8,768], index: 0, kind: input, shape index: {}]
  %s1 = inlined_call_operand.hbm [shape: bf16[768,768], index: 1, kind: input, shape index: {}]
  %s2 = inlined_call_operand.hbm [shape: bf16[768,768], index: 2, kind: input, shape index: {}]
  %s3 = inlined_call_operand.hbm [shape: bf16[768,768], index: 3, kind: input, shape index: {}]
  %s4 = inlined_call_operand.hbm [shape: f32[1,768], index: 4, kind: input, shape index: {}]
  %s5 = inlined_call_operand.hbm [shape: f32[1,768], index: 5, kind: input, shape index: {}]
  %s6 = inlined_call_operand.hbm [shape: f32[1,768], index: 6, kind: input, shape index: {}]
  %s7 = inlined_call_operand.hbm [shape: f32[768,768], index: 7, kind: input, shape index: {}]
  %s8 = inlined_call_operand.hbm [shape: f32[1,768], index: 8, kind: input, shape index: {}]
  %s9 = inlined_call_operand.hbm [shape: bf16[768,768], index: 9, kind: input, shape index: {}]
  %s10 = inlined_call_operand.hbm [shape: f32[1,768], index: 10, kind: input, shape index: {}]
  %s11 = inlined_call_operand.hbm [shape: f32[8,768], index: 11, kind: output, shape index: {}]
  %s12 = sld [smem:[#allocation0]]
  $region98: #{reason_layer_forward.1} parent=0
    _
  %s14 = ssub.s32 1, %s12
  %s15 = scalar_select 0, %s14, %s12
  $region1: #{reason_layer_forward.1} parent=0
    #allocation2 [shape = 'u8[24576]{0}', space=vmem, size = 0x6000, scoped, tag = 'input window, operand 0, single buffered']
    #allocation3 [shape = 's32[1]{0}', space=sflag, size = 0x4, scoped, tag = 'scoped memory for reason_layer_forward.1']
    #allocation4 [shape = 's32[1]{0}', space=sflag, size = 0x4, scoped, tag = 'scoped memory for reason_layer_forward.1']
    #allocation5 [shape = 'u8[1179648]{0}', space=vmem, size = 0x120000, scoped, tag = 'input window, operand 1, single buffered']
    #allocation6 [shape = 's32[1]{0}', space=sflag, size = 0x4, scoped, tag = 'scoped memory for reason_layer_forward.1']
    #allocation7 [shape = 'u8[1179648]{0}', space=vmem, size = 0x120000, scoped, tag = 'input window, operand 2, single buffered']
    #allocation8 [shape = 'u8[1179648]{0}', space=vmem, size = 0x120000, scoped, tag = 'input window, operand 3, single buffered']
    #allocation9 [shape = 's32[1]{0}', space=sflag, size = 0x4, scoped, tag = 'scoped memory for reason_layer_forward.1']
    #allocation10 [shape = 'u8[3072]{0}', space=vmem, size = 0xc00, scoped, tag = 'input window, operand 4, single buffered']
    #allocation11 [shape = 'u8[3072]{0}', space=vmem, size = 0xc00, scoped, tag = 'input window, operand 5, single buffered']
    #allocation12 [shape = 's32[1]{0}', space=sflag, size = 0x4, scoped, tag = 'scoped memory for reason_layer_forward.1']
    #allocation13 [shape = 'u8[3072]{0}', space=vmem, size = 0xc00, scoped, tag = 'input window, operand 6, single buffered']
    #allocation14 [shape = 'u8[2359296]{0}', space=vmem, size = 0x240000, scoped, tag = 'input window, operand 7, single buffered']
    #allocation15 [shape = 's32[1]{0}', space=sflag, size = 0x4, scoped, tag = 'scoped memory for reason_layer_forward.1']
    #allocation16 [shape = 'u8[3072]{0}', space=vmem, size = 0xc00, scoped, tag = 'input window, operand 8, single buffered']
    #allocation17 [shape = 'u8[1179648]{0}', space=vmem, size = 0x120000, scoped, tag = 'input window, operand 9, single buffered']
    #allocation18 [shape = 's32[1]{0}', space=sflag, size = 0x4, scoped, tag = 'scoped memory for reason_layer_forward.1']
    #allocation19 [shape = 'u8[3072]{0}', space=vmem, size = 0xc00, scoped, tag = 'input window, operand 10, single buffered']
    #allocation20 [shape = 'u8[24576]{0}', space=vmem, size = 0x6000, scoped, tag = 'output window, operand 0, single buffered']
    %16 = vsyncpa [#allocation3], 0
    %17 = vsyncpa [#allocation6], 0
    %18 = vsyncpa [#allocation9], 0
    %19 = vsyncpa [#allocation12], 0
    %20 = vsyncpa [#allocation15], 0
    %21 = vsyncpa [#allocation18], 0
    %22 = vsyncpa [#allocation4], 0
    // Predicated region
    $region2: #{reason_layer_forward.1} parent=1 // pred_check
      _
    $region3: #{reason_layer_forward.1} parent=1 // pred_check_branch
      %24 = sbr.rel (0) target = $region5
    $region4: #{reason_layer_forward.1} parent=1 // pred_region
      %26 = vsyncadd [#allocation3], 0
      %s28 = sshll.u32 %s0, 4
      %s29 = int_to_ptr.hbm [resolvable:$true] %s28
      %s30 = sshll.u32 [#allocation2], 4
      %s31 = int_to_ptr.vmem [resolvable:$true] %s30
      %33 = dma.hbm_to_vmem [thread:$0]  %s29, 768, %s31, [#allocation3]
    $region5: #{reason_layer_forward.1} parent=1 // pred_fallthru
      _
    // Predicated region
    $region6: #{reason_layer_forward.1} parent=1 // pred_check
      _
    $region7: #{reason_layer_forward.1} parent=1 // pred_check_branch
      %35 = sbr.rel (0) target = $region9
    $region8: #{reason_layer_forward.1} parent=1 // pred_region
      %37 = vsyncadd [#allocation6], 0
      %s38 = sshll.u32 %s1, 4
      %s39 = int_to_ptr.hbm [resolvable:$true] %s38
      %s40 = sshll.u32 [#allocation5], 4
      %s41 = int_to_ptr.vmem [resolvable:$true] %s40
      %46 = dma.hbm_to_vmem [thread:$0]  %s39, 36864, %s41, [#allocation6], 384, 384, 24
    $region9: #{reason_layer_forward.1} parent=1 // pred_fallthru
      _
    // Predicated region
    $region10: #{reason_layer_forward.1} parent=1 // pred_check
      _
    $region11: #{reason_layer_forward.1} parent=1 // pred_check_branch
      %48 = sbr.rel (0) target = $region13
    $region12: #{reason_layer_forward.1} parent=1 // pred_region
      %50 = vsyncadd [#allocation6], 0
      %s51 = sshll.u32 %s2, 4
      %s52 = int_to_ptr.hbm [resolvable:$true] %s51
      %s53 = sshll.u32 [#allocation7], 4
      %s54 = int_to_ptr.vmem [resolvable:$true] %s53
      %59 = dma.hbm_to_vmem [thread:$0]  %s52, 36864, %s54, [#allocation6], 384, 384, 24
    $region13: #{reason_layer_forward.1} parent=1 // pred_fallthru
      _
    // Predicated region
    $region14: #{reason_layer_forward.1} parent=1 // pred_check
      _
    $region15: #{reason_layer_forward.1} parent=1 // pred_check_branch
      %61 = sbr.rel (0) target = $region17
    $region16: #{reason_layer_forward.1} parent=1 // pred_region
      %63 = vsyncadd [#allocation9], 0
      %s64 = sshll.u32 %s3, 4
      %s65 = int_to_ptr.hbm [resolvable:$true] %s64
      %s66 = sshll.u32 [#allocation8], 4
      %s67 = int_to_ptr.vmem [resolvable:$true] %s66
      %72 = dma.hbm_to_vmem [thread:$0]  %s65, 36864, %s67, [#allocation9], 384, 384, 24
    $region17: #{reason_layer_forward.1} parent=1 // pred_fallthru
      _
    // Predicated region
    $region18: #{reason_layer_forward.1} parent=1 // pred_check
      _
    $region19: #{reason_layer_forward.1} parent=1 // pred_check_branch
      %74 = sbr.rel (0) target = $region21
    $region20: #{reason_layer_forward.1} parent=1 // pred_region
      %76 = vsyncadd [#allocation9], 0
      %s78 = sshll.u32 %s4, 4
      %s79 = int_to_ptr.hbm [resolvable:$true] %s78
      %s80 = sshll.u32 [#allocation10], 4
      %s81 = int_to_ptr.vmem [resolvable:$true] %s80
      %83 = dma.hbm_to_vmem [thread:$0]  %s79, 96, %s81, [#allocation9]
    $region21: #{reason_layer_forward.1} parent=1 // pred_fallthru
      _
    // Predicated region
    $region22: #{reason_layer_forward.1} parent=1 // pred_check
      _
    $region23: #{reason_layer_forward.1} parent=1 // pred_check_branch
      %85 = sbr.rel (0) target = $region25
    $region24: #{reason_layer_forward.1} parent=1 // pred_region
      %87 = vsyncadd [#allocation12], 0
      %s89 = sshll.u32 %s5, 4
      %s90 = int_to_ptr.hbm [resolvable:$true] %s89
      %s91 = sshll.u32 [#allocation11], 4
      %s92 = int_to_ptr.vmem [resolvable:$true] %s91
      %94 = dma.hbm_to_vmem [thread:$0]  %s90, 96, %s92, [#allocation12]
    $region25: #{reason_layer_forward.1} parent=1 // pred_fallthru
      _
    // Predicated region
    $region26: #{reason_layer_forward.1} parent=1 // pred_check
      _
    $region27: #{reason_layer_forward.1} parent=1 // pred_check_branch
      %96 = sbr.rel (0) target = $region29
    $region28: #{reason_layer_forward.1} parent=1 // pred_region
      %98 = vsyncadd [#allocation12], 0
      %s100 = sshll.u32 %s6, 4
      %s101 = int_to_ptr.hbm [resolvable:$true] %s100
      %s102 = sshll.u32 [#allocation13], 4
      %s103 = int_to_ptr.vmem [resolvable:$true] %s102
      %105 = dma.hbm_to_vmem [thread:$0]  %s101, 96, %s103, [#allocation12]
    $region29: #{reason_layer_forward.1} parent=1 // pred_fallthru
      _
    // Predicated region
    $region30: #{reason_layer_forward.1} parent=1 // pred_check
      _
    $region31: #{reason_layer_forward.1} parent=1 // pred_check_branch
      %107 = sbr.rel (0) target = $region33
    $region32: #{reason_layer_forward.1} parent=1 // pred_region
      %109 = vsyncadd [#allocation15], 0
      %s110 = sshll.u32 %s7, 4
      %s111 = int_to_ptr.hbm [resolvable:$true] %s110
      %s112 = sshll.u32 [#allocation14], 4
      %s113 = int_to_ptr.vmem [resolvable:$true] %s112
      %118 = dma.hbm_to_vmem [thread:$0]  %s111, 73728, %s113, [#allocation15], 768, 768, 48
    $region33: #{reason_layer_forward.1} parent=1 // pred_fallthru
      _
    // Predicated region
    $region34: #{reason_layer_forward.1} parent=1 // pred_check
      _
    $region35: #{reason_layer_forward.1} parent=1 // pred_check_branch
      %120 = sbr.rel (0) target = $region37
    $region36: #{reason_layer_forward.1} parent=1 // pred_region
      %122 = vsyncadd [#allocation15], 0
      %s124 = sshll.u32 %s8, 4
      %s125 = int_to_ptr.hbm [resolvable:$true] %s124
      %s126 = sshll.u32 [#allocation16], 4
      %s127 = int_to_ptr.vmem [resolvable:$true] %s126
      %129 = dma.hbm_to_vmem [thread:$0]  %s125, 96, %s127, [#allocation15]
    $region37: #{reason_layer_forward.1} parent=1 // pred_fallthru
      _
    // Predicated region
    $region38: #{reason_layer_forward.1} parent=1 // pred_check
      _
    $region39: #{reason_layer_forward.1} parent=1 // pred_check_branch
      %131 = sbr.rel (0) target = $region41
    $region40: #{reason_layer_forward.1} parent=1 // pred_region
      %133 = vsyncadd [#allocation18], 0
      %s134 = sshll.u32 %s9, 4
      %s135 = int_to_ptr.hbm [resolvable:$true] %s134
      %s136 = sshll.u32 [#allocation17], 4
      %s137 = int_to_ptr.vmem [resolvable:$true] %s136
      %142 = dma.hbm_to_vmem [thread:$0]  %s135, 36864, %s137, [#allocation18], 384, 384, 24
    $region41: #{reason_layer_forward.1} parent=1 // pred_fallthru
      _
    // Predicated region
    $region42: #{reason_layer_forward.1} parent=1 // pred_check
      _
    $region43: #{reason_layer_forward.1} parent=1 // pred_check_branch
      %144 = sbr.rel (0) target = $region45
    $region44: #{reason_layer_forward.1} parent=1 // pred_region
      %146 = vsyncadd [#allocation18], 0
      %s148 = sshll.u32 %s10, 4
      %s149 = int_to_ptr.hbm [resolvable:$true] %s148
      %s150 = sshll.u32 [#allocation19], 4
      %s151 = int_to_ptr.vmem [resolvable:$true] %s150
      %153 = dma.hbm_to_vmem [thread:$0]  %s149, 96, %s151, [#allocation18]
    $region45: #{reason_layer_forward.1} parent=1 // pred_fallthru
      _
    // Predicated region
    $region46: #{reason_layer_forward.1} parent=1 // pred_check
      _
    $region47: #{reason_layer_forward.1} parent=1 // pred_check_branch
      %155 = sbr.rel (0) target = $region49
    $region48: #{reason_layer_forward.1} parent=1 // pred_region
      %157 = dma.done [#allocation3], 768
    $region49: #{reason_layer_forward.1} parent=1 // pred_fallthru
      _
    // Predicated region
    $region50: #{reason_layer_forward.1} parent=1 // pred_check
      _
    $region51: #{reason_layer_forward.1} parent=1 // pred_check_branch
      %159 = sbr.rel (0) target = $region53
    $region52: #{reason_layer_forward.1} parent=1 // pred_region
      %161 = dma.done [#allocation6], 36864
    $region53: #{reason_layer_forward.1} parent=1 // pred_fallthru
      _
    // Predicated region
    $region54: #{reason_layer_forward.1} parent=1 // pred_check
      _
    $region55: #{reason_layer_forward.1} parent=1 // pred_check_branch
      %163 = sbr.rel (0) target = $region57
    $region56: #{reason_layer_forward.1} parent=1 // pred_region
      %165 = dma.done [#allocation6], 36864
    $region57: #{reason_layer_forward.1} parent=1 // pred_fallthru
      _
    // Predicated region
    $region58: #{reason_layer_forward.1} parent=1 // pred_check
      _
    $region59: #{reason_layer_forward.1} parent=1 // pred_check_branch
      %167 = sbr.rel (0) target = $region61
    $region60: #{reason_layer_forward.1} parent=1 // pred_region
      %169 = dma.done [#allocation9], 36864
    $region61: #{reason_layer_forward.1} parent=1 // pred_fallthru
      _
    // Predicated region
    $region62: #{reason_layer_forward.1} parent=1 // pred_check
      _
    $region63: #{reason_layer_forward.1} parent=1 // pred_check_branch
      %171 = sbr.rel (0) target = $region65
    $region64: #{reason_layer_forward.1} parent=1 // pred_region
      %173 = dma.done [#allocation9], 96
    $region65: #{reason_layer_forward.1} parent=1 // pred_fallthru
      _
    // Predicated region
    $region66: #{reason_layer_forward.1} parent=1 // pred_check
      _
    $region67: #{reason_layer_forward.1} parent=1 // pred_check_branch
      %175 = sbr.rel (0) target = $region69
    $region68: #{reason_layer_forward.1} parent=1 // pred_region
      %177 = dma.done [#allocation12], 96
    $region69: #{reason_layer_forward.1} parent=1 // pred_fallthru
      _
    // Predicated region
    $region70: #{reason_layer_forward.1} parent=1 // pred_check
      _
    $region71: #{reason_layer_forward.1} parent=1 // pred_check_branch
      %179 = sbr.rel (0) target = $region73
    $region72: #{reason_layer_forward.1} parent=1 // pred_region
      %181 = dma.done [#allocation12], 96
    $region73: #{reason_layer_forward.1} parent=1 // pred_fallthru
      _
    // Predicated region
    $region74: #{reason_layer_forward.1} parent=1 // pred_check
      _
    $region75: #{reason_layer_forward.1} parent=1 // pred_check_branch
      %183 = sbr.rel (0) target = $region77
    $region76: #{reason_layer_forward.1} parent=1 // pred_region
      %185 = dma.done [#allocation15], 73728
    $region77: #{reason_layer_forward.1} parent=1 // pred_fallthru
      _
    // Predicated region
    $region78: #{reason_layer_forward.1} parent=1 // pred_check
      _
    $region79: #{reason_layer_forward.1} parent=1 // pred_check_branch
      %187 = sbr.rel (0) target = $region81
    $region80: #{reason_layer_forward.1} parent=1 // pred_region
      %189 = dma.done [#allocation15], 96
    $region81: #{reason_layer_forward.1} parent=1 // pred_fallthru
      _
    // Predicated region
    $region82: #{reason_layer_forward.1} parent=1 // pred_check
      _
    $region83: #{reason_layer_forward.1} parent=1 // pred_check_branch
      %191 = sbr.rel (0) target = $region85
    $region84: #{reason_layer_forward.1} parent=1 // pred_region
      %193 = dma.done [#allocation18], 36864
    $region85: #{reason_layer_forward.1} parent=1 // pred_fallthru
      _
    // Predicated region
    $region86: #{reason_layer_forward.1} parent=1 // pred_check
      _
    $region87: #{reason_layer_forward.1} parent=1 // pred_check_branch
      %195 = sbr.rel (0) target = $region89
    $region88: #{reason_layer_forward.1} parent=1 // pred_region
      %197 = dma.done [#allocation18], 96
    $region89: #{reason_layer_forward.1} parent=1 // pred_fallthru
      _
    %v198 = vld [vmem:[#allocation2] sm:$0xff]
    %v199 = vld [vmem:[#allocation2 + $0x8] sm:$0xff]
    %v200 = vld [vmem:[#allocation2 + $0x10] sm:$0xff]
    %v201 = vld [vmem:[#allocation2 + $0x18] sm:$0xff]
    %v202 = vld [vmem:[#allocation2 + $0x20] sm:$0xff]
    %v203 = vld [vmem:[#allocation2 + $0x28] sm:$0xff]
    %v204 = vld [vmem:[#allocation5] sm:$0xff]
    %v205 = vld [vmem:[#allocation5 + $0x8] sm:$0xff]
    %v206 = vld [vmem:[#allocation5 + $0x10] sm:$0xff]
    %v207 = vld [vmem:[#allocation5 + $0x18] sm:$0xff]
    %v208 = vld [vmem:[#allocation5 + $0x20] sm:$0xff]
    %v209 = vld [vmem:[#allocation5 + $0x28] sm:$0xff]
    %v210 = vld [vmem:[#allocation5 + $0x30] sm:$0xff]
    %v211 = vld [vmem:[#allocation5 + $0x38] sm:$0xff]
    %v212 = vld [vmem:[#allocation5 + $0x40] sm:$0xff]
    %v213 = vld [vmem:[#allocation5 + $0x48] sm:$0xff]
    %v214 = vld [vmem:[#allocation5 + $0x50] sm:$0xff]
    %v215 = vld [vmem:[#allocation5 + $0x58] sm:$0xff]
    %v216 = vld [vmem:[#allocation5 + $0x60] sm:$0xff]
    %v217 = vld [vmem:[#allocation5 + $0x68] sm:$0xff]
    %v218 = vld [vmem:[#allocation5 + $0x70] sm:$0xff]
    %v219 = vld [vmem:[#allocation5 + $0x78] sm:$0xff]
    %v220 = vld [vmem:[#allocation5 + $0x80] sm:$0xff]
    %v221 = vld [vmem:[#allocation5 + $0x88] sm:$0xff]
    %v222 = vld [vmem:[#allocation5 + $0x90] sm:$0xff]
    %v223 = vld [vmem:[#allocation5 + $0x98] sm:$0xff]
    %v224 = vld [vmem:[#allocation5 + $0xa0] sm:$0xff]
    %v225 = vld [vmem:[#allocation5 + $0xa8] sm:$0xff]
    %v226 = vld [vmem:[#allocation5 + $0xb0] sm:$0xff]
    %v227 = vld [vmem:[#allocation5 + $0xb8] sm:$0xff]
    %v228 = vld [vmem:[#allocation5 + $0xc0] sm:$0xff]
    %v229 = vld [vmem:[#allocation5 + $0xc8] sm:$0xff]
    %v230 = vld [vmem:[#allocation5 + $0xd0] sm:$0xff]
    %v231 = vld [vmem:[#allocation5 + $0xd8] sm:$0xff]
    %v232 = vld [vmem:[#allocation5 + $0xe0] sm:$0xff]
    %v233 = vld [vmem:[#allocation5 + $0xe8] sm:$0xff]
    %v234 = vld [vmem:[#allocation5 + $0xf0] sm:$0xff]
    %v235 = vld [vmem:[#allocation5 + $0xf8] sm:$0xff]
    %v236 = vld [vmem:[#allocation5 + $0x100] sm:$0xff]
    %v237 = vld [vmem:[#allocation5 + $0x108] sm:$0xff]
    %v238 = vld [vmem:[#allocation5 + $0x110] sm:$0xff]
    %v239 = vld [vmem:[#allocation5 + $0x118] sm:$0xff]
    %v240 = vld [vmem:[#allocation5 + $0x120] sm:$0xff]
    %v241 = vld [vmem:[#allocation5 + $0x128] sm:$0xff]
    %v242 = vld [vmem:[#allocation5 + $0x130] sm:$0xff]
    %v243 = vld [vmem:[#allocation5 + $0x138] sm:$0xff]
    %v244 = vld [vmem:[#allocation5 + $0x140] sm:$0xff]
    %v245 = vld [vmem:[#allocation5 + $0x148] sm:$0xff]
    %v246 = vld [vmem:[#allocation5 + $0x150] sm:$0xff]
    %v247 = vld [vmem:[#allocation5 + $0x158] sm:$0xff]
    %v248 = vld [vmem:[#allocation5 + $0x160] sm:$0xff]
    %v249 = vld [vmem:[#allocation5 + $0x168] sm:$0xff]
    %v250 = vld [vmem:[#allocation5 + $0x170] sm:$0xff]
    %v251 = vld [vmem:[#allocation5 + $0x178] sm:$0xff]
    %v252 = vld [vmem:[#allocation5 + $0x180] sm:$0xff]
    %v253 = vld [vmem:[#allocation5 + $0x188] sm:$0xff]
    %v254 = vld [vmem:[#allocation5 + $0x190] sm:$0xff]
    %v255 = vld [vmem:[#allocation5 + $0x198] sm:$0xff]
    %v256 = vld [vmem:[#allocation5 + $0x1a0] sm:$0xff]
    %v257 = vld [vmem:[#allocation5 + $0x1a8] sm:$0xff]
    %v258 = vld [vmem:[#allocation5 + $0x1b0] sm:$0xff]
    %v259 = vld [vmem:[#allocation5 + $0x1b8] sm:$0xff]
    %v260 = vld [vmem:[#allocation5 + $0x1c0] sm:$0xff]
    %v261 = vld [vmem:[#allocation5 + $0x1c8] sm:$0xff]
    %v262 = vld [vmem:[#allocation5 + $0x1d0] sm:$0xff]
    %v263 = vld [vmem:[#allocation5 + $0x1d8] sm:$0xff]
    %v264 = vld [vmem:[#allocation5 + $0x1e0] sm:$0xff]
    %v265 = vld [vmem:[#allocation5 + $0x1e8] sm:$0xff]
    %v266 = vld [vmem:[#allocation5 + $0x1f0] sm:$0xff]
    %v267 = vld [vmem:[#allocation5 + $0x1f8] sm:$0xff]
    %v268 = vld [vmem:[#allocation5 + $0x200] sm:$0xff]
    %v269 = vld [vmem:[#allocation5 + $0x208] sm:$0xff]
    %v270 = vld [vmem:[#allocation5 + $0x210] sm:$0xff]
    %v271 = vld [vmem:[#allocation5 + $0x218] sm:$0xff]
    %v272 = vld [vmem:[#allocation5 + $0x220] sm:$0xff]
    %v273 = vld [vmem:[#allocation5 + $0x228] sm:$0xff]
    %v274 = vld [vmem:[#allocation5 + $0x230] sm:$0xff]
    %v275 = vld [vmem:[#allocation5 + $0x238] sm:$0xff]
    %v276 = vld [vmem:[#allocation5 + $0x240] sm:$0xff]
    %v277 = vld [vmem:[#allocation5 + $0x248] sm:$0xff]
    %v278 = vld [vmem:[#allocation5 + $0x250] sm:$0xff]
    %v279 = vld [vmem:[#allocation5 + $0x258] sm:$0xff]
    %v280 = vld [vmem:[#allocation5 + $0x260] sm:$0xff]
    %v281 = vld [vmem:[#allocation5 + $0x268] sm:$0xff]
    %v282 = vld [vmem:[#allocation5 + $0x270] sm:$0xff]
    %v283 = vld [vmem:[#allocation5 + $0x278] sm:$0xff]
    %v284 = vld [vmem:[#allocation5 + $0x280] sm:$0xff]
    %v285 = vld [vmem:[#allocation5 + $0x288] sm:$0xff]
    %v286 = vld [vmem:[#allocation5 + $0x290] sm:$0xff]
    %v287 = vld [vmem:[#allocation5 + $0x298] sm:$0xff]
    %v288 = vld [vmem:[#allocation5 + $0x2a0] sm:$0xff]
    %v289 = vld [vmem:[#allocation5 + $0x2a8] sm:$0xff]
    %v290 = vld [vmem:[#allocation5 + $0x2b0] sm:$0xff]
    %v291 = vld [vmem:[#allocation5 + $0x2b8] sm:$0xff]
    %v292 = vld [vmem:[#allocation5 + $0x2c0] sm:$0xff]
    %v293 = vld [vmem:[#allocation5 + $0x2c8] sm:$0xff]
    %v294 = vld [vmem:[#allocation5 + $0x2d0] sm:$0xff]
    %v295 = vld [vmem:[#allocation5 + $0x2d8] sm:$0xff]
    %v296 = vld [vmem:[#allocation5 + $0x2e0] sm:$0xff]
    %v297 = vld [vmem:[#allocation5 + $0x2e8] sm:$0xff]
    %v298 = vld [vmem:[#allocation5 + $0x2f0] sm:$0xff]
    %v299 = vld [vmem:[#allocation5 + $0x2f8] sm:$0xff]
    %v300 = vld [vmem:[#allocation5 + $0x300] sm:$0xff]
    %v301 = vld [vmem:[#allocation5 + $0x308] sm:$0xff]
    %v302 = vld [vmem:[#allocation5 + $0x310] sm:$0xff]
    %v303 = vld [vmem:[#allocation5 + $0x318] sm:$0xff]
    %v304 = vld [vmem:[#allocation5 + $0x320] sm:$0xff]
    %v305 = vld [vmem:[#allocation5 + $0x328] sm:$0xff]
    %v306 = vld [vmem:[#allocation5 + $0x330] sm:$0xff]
    %v307 = vld [vmem:[#allocation5 + $0x338] sm:$0xff]
    %v308 = vld [vmem:[#allocation5 + $0x340] sm:$0xff]
    %v309 = vld [vmem:[#allocation5 + $0x348] sm:$0xff]
    %v310 = vld [vmem:[#allocation5 + $0x350] sm:$0xff]
    %v311 = vld [vmem:[#allocation5 + $0x358] sm:$0xff]
    %v312 = vld [vmem:[#allocation5 + $0x360] sm:$0xff]
    %v313 = vld [vmem:[#allocation5 + $0x368] sm:$0xff]
    %v314 = vld [vmem:[#allocation5 + $0x370] sm:$0xff]
    %v315 = vld [vmem:[#allocation5 + $0x378] sm:$0xff]
    %v316 = vld [vmem:[#allocation5 + $0x380] sm:$0xff]
    %v317 = vld [vmem:[#allocation5 + $0x388] sm:$0xff]
    %v318 = vld [vmem:[#allocation5 + $0x390] sm:$0xff]
    %v319 = vld [vmem:[#allocation5 + $0x398] sm:$0xff]
    %v320 = vld [vmem:[#allocation5 + $0x3a0] sm:$0xff]
    %v321 = vld [vmem:[#allocation5 + $0x3a8] sm:$0xff]
    %v322 = vld [vmem:[#allocation5 + $0x3b0] sm:$0xff]
    %v323 = vld [vmem:[#allocation5 + $0x3b8] sm:$0xff]
    %v324 = vld [vmem:[#allocation5 + $0x3c0] sm:$0xff]
    %v325 = vld [vmem:[#allocation5 + $0x3c8] sm:$0xff]
    %v326 = vld [vmem:[#allocation5 + $0x3d0] sm:$0xff]
    %v327 = vld [vmem:[#allocation5 + $0x3d8] sm:$0xff]
    %v328 = vld [vmem:[#allocation5 + $0x3e0] sm:$0xff]
    %v329 = vld [vmem:[#allocation5 + $0x3e8] sm:$0xff]
    %v330 = vld [vmem:[#allocation5 + $0x3f0] sm:$0xff]
    %v331 = vld [vmem:[#allocation5 + $0x3f8] sm:$0xff]
    %v332 = vld [vmem:[#allocation5 + $0x400] sm:$0xff]
    %v333 = vld [vmem:[#allocation5 + $0x408] sm:$0xff]
    %v334 = vld [vmem:[#allocation5 + $0x410] sm:$0xff]
    %v335 = vld [vmem:[#allocation5 + $0x418] sm:$0xff]
    %v336 = vld [vmem:[#allocation5 + $0x420] sm:$0xff]
    %v337 = vld [vmem:[#allocation5 + $0x428] sm:$0xff]
    %v338 = vld [vmem:[#allocation5 + $0x430] sm:$0xff]
    %v339 = vld [vmem:[#allocation5 + $0x438] sm:$0xff]
    %v340 = vld [vmem:[#allocation5 + $0x440] sm:$0xff]
    %v341 = vld [vmem:[#allocation5 + $0x448] sm:$0xff]
    %v342 = vld [vmem:[#allocation5 + $0x450] sm:$0xff]
    %v343 = vld [vmem:[#allocation5 + $0x458] sm:$0xff]
    %v344 = vld [vmem:[#allocation5 + $0x460] sm:$0xff]
    %v345 = vld [vmem:[#allocation5 + $0x468] sm:$0xff]
    %v346 = vld [vmem:[#allocation5 + $0x470] sm:$0xff]
    %v347 = vld [vmem:[#allocation5 + $0x478] sm:$0xff]
    %v348 = vld [vmem:[#allocation5 + $0x480] sm:$0xff]
    %v349 = vld [vmem:[#allocation5 + $0x488] sm:$0xff]
    %v350 = vld [vmem:[#allocation5 + $0x490] sm:$0xff]
    %v351 = vld [vmem:[#allocation5 + $0x498] sm:$0xff]
    %v352 = vld [vmem:[#allocation5 + $0x4a0] sm:$0xff]
    %v353 = vld [vmem:[#allocation5 + $0x4a8] sm:$0xff]
    %v354 = vld [vmem:[#allocation5 + $0x4b0] sm:$0xff]
    %v355 = vld [vmem:[#allocation5 + $0x4b8] sm:$0xff]
    %v356 = vld [vmem:[#allocation5 + $0x4c0] sm:$0xff]
    %v357 = vld [vmem:[#allocation5 + $0x4c8] sm:$0xff]
    %v358 = vld [vmem:[#allocation5 + $0x4d0] sm:$0xff]
    %v359 = vld [vmem:[#allocation5 + $0x4d8] sm:$0xff]
    %v360 = vld [vmem:[#allocation5 + $0x4e0] sm:$0xff]
    %v361 = vld [vmem:[#allocation5 + $0x4e8] sm:$0xff]
    %v362 = vld [vmem:[#allocation5 + $0x4f0] sm:$0xff]
    %v363 = vld [vmem:[#allocation5 + $0x4f8] sm:$0xff]
    %v364 = vld [vmem:[#allocation5 + $0x500] sm:$0xff]
    %v365 = vld [vmem:[#allocation5 + $0x508] sm:$0xff]
    %v366 = vld [vmem:[#allocation5 + $0x510] sm:$0xff]
    %v367 = vld [vmem:[#allocation5 + $0x518] sm:$0xff]
    %v368 = vld [vmem:[#allocation5 + $0x520] sm:$0xff]
    %v369 = vld [vmem:[#allocation5 + $0x528] sm:$0xff]
    %v370 = vld [vmem:[#allocation5 + $0x530] sm:$0xff]
    %v371 = vld [vmem:[#allocation5 + $0x538] sm:$0xff]
    %v372 = vld [vmem:[#allocation5 + $0x540] sm:$0xff]
    %v373 = vld [vmem:[#allocation5 + $0x548] sm:$0xff]
    %v374 = vld [vmem:[#allocation5 + $0x550] sm:$0xff]
    %v375 = vld [vmem:[#allocation5 + $0x558] sm:$0xff]
    %v376 = vld [vmem:[#allocation5 + $0x560] sm:$0xff]
    %v377 = vld [vmem:[#allocation5 + $0x568] sm:$0xff]
    %v378 = vld [vmem:[#allocation5 + $0x570] sm:$0xff]
    %v379 = vld [vmem:[#allocation5 + $0x578] sm:$0xff]
    %v380 = vld [vmem:[#allocation5 + $0x580] sm:$0xff]
    %v381 = vld [vmem:[#allocation5 + $0x588] sm:$0xff]
    %v382 = vld [vmem:[#allocation5 + $0x590] sm:$0xff]
    %v383 = vld [vmem:[#allocation5 + $0x598] sm:$0xff]
    %v384 = vld [vmem:[#allocation5 + $0x5a0] sm:$0xff]
    %v385 = vld [vmem:[#allocation5 + $0x5a8] sm:$0xff]
    %v386 = vld [vmem:[#allocation5 + $0x5b0] sm:$0xff]
    %v387 = vld [vmem:[#allocation5 + $0x5b8] sm:$0xff]
    %v388 = vld [vmem:[#allocation5 + $0x5c0] sm:$0xff]
    %v389 = vld [vmem:[#allocation5 + $0x5c8] sm:$0xff]
    %v390 = vld [vmem:[#allocation5 + $0x5d0] sm:$0xff]
    %v391 = vld [vmem:[#allocation5 + $0x5d8] sm:$0xff]
    %v392 = vld [vmem:[#allocation5 + $0x5e0] sm:$0xff]
    %v393 = vld [vmem:[#allocation5 + $0x5e8] sm:$0xff]
    %v394 = vld [vmem:[#allocation5 + $0x5f0] sm:$0xff]
    %v395 = vld [vmem:[#allocation5 + $0x5f8] sm:$0xff]
    %v396 = vld [vmem:[#allocation5 + $0x600] sm:$0xff]
    %v397 = vld [vmem:[#allocation5 + $0x608] sm:$0xff]
    %v398 = vld [vmem:[#allocation5 + $0x610] sm:$0xff]
    %v399 = vld [vmem:[#allocation5 + $0x618] sm:$0xff]
    %v400 = vld [vmem:[#allocation5 + $0x620] sm:$0xff]
    %v401 = vld [vmem:[#allocation5 + $0x628] sm:$0xff]
    %v402 = vld [vmem:[#allocation5 + $0x630] sm:$0xff]
    %v403 = vld [vmem:[#allocation5 + $0x638] sm:$0xff]
    %v404 = vld [vmem:[#allocation5 + $0x640] sm:$0xff]
    %v405 = vld [vmem:[#allocation5 + $0x648] sm:$0xff]
    %v406 = vld [vmem:[#allocation5 + $0x650] sm:$0xff]
    %v407 = vld [vmem:[#allocation5 + $0x658] sm:$0xff]
    %v408 = vld [vmem:[#allocation5 + $0x660] sm:$0xff]
    %v409 = vld [vmem:[#allocation5 + $0x668] sm:$0xff]
    %v410 = vld [vmem:[#allocation5 + $0x670] sm:$0xff]
    %v411 = vld [vmem:[#allocation5 + $0x678] sm:$0xff]
    %v412 = vld [vmem:[#allocation5 + $0x680] sm:$0xff]
    %v413 = vld [vmem:[#allocation5 + $0x688] sm:$0xff]
    %v414 = vld [vmem:[#allocation5 + $0x690] sm:$0xff]
    %v415 = vld [vmem:[#allocation5 + $0x698] sm:$0xff]
    %v416 = vld [vmem:[#allocation5 + $0x6a0] sm:$0xff]
    %v417 = vld [vmem:[#allocation5 + $0x6a8] sm:$0xff]
    %v418 = vld [vmem:[#allocation5 + $0x6b0] sm:$0xff]
    %v419 = vld [vmem:[#allocation5 + $0x6b8] sm:$0xff]
    %v420 = vld [vmem:[#allocation5 + $0x6c0] sm:$0xff]
    %v421 = vld [vmem:[#allocation5 + $0x6c8] sm:$0xff]
    %v422 = vld [vmem:[#allocation5 + $0x6d0] sm:$0xff]
    %v423 = vld [vmem:[#allocation5 + $0x6d8] sm:$0xff]
    %v424 = vld [vmem:[#allocation5 + $0x6e0] sm:$0xff]
    %v425 = vld [vmem:[#allocation5 + $0x6e8] sm:$0xff]
    %v426 = vld [vmem:[#allocation5 + $0x6f0] sm:$0xff]
    %v427 = vld [vmem:[#allocation5 + $0x6f8] sm:$0xff]
    %v428 = vld [vmem:[#allocation5 + $0x700] sm:$0xff]
    %v429 = vld [vmem:[#allocation5 + $0x708] sm:$0xff]
    %v430 = vld [vmem:[#allocation5 + $0x710] sm:$0xff]
    %v431 = vld [vmem:[#allocation5 + $0x718] sm:$0xff]
    %v432 = vld [vmem:[#allocation5 + $0x720] sm:$0xff]
    %v433 = vld [vmem:[#allocation5 + $0x728] sm:$0xff]
    %v434 = vld [vmem:[#allocation5 + $0x730] sm:$0xff]
    %v435 = vld [vmem:[#allocation5 + $0x738] sm:$0xff]
    %v436 = vld [vmem:[#allocation5 + $0x740] sm:$0xff]
    %v437 = vld [vmem:[#allocation5 + $0x748] sm:$0xff]
    %v438 = vld [vmem:[#allocation5 + $0x750] sm:$0xff]
    %v439 = vld [vmem:[#allocation5 + $0x758] sm:$0xff]
    %v440 = vld [vmem:[#allocation5 + $0x760] sm:$0xff]
    %v441 = vld [vmem:[#allocation5 + $0x768] sm:$0xff]
    %v442 = vld [vmem:[#allocation5 + $0x770] sm:$0xff]
    %v443 = vld [vmem:[#allocation5 + $0x778] sm:$0xff]
    %v444 = vld [vmem:[#allocation5 + $0x780] sm:$0xff]
    %v445 = vld [vmem:[#allocation5 + $0x788] sm:$0xff]
    %v446 = vld [vmem:[#allocation5 + $0x790] sm:$0xff]
    %v447 = vld [vmem:[#allocation5 + $0x798] sm:$0xff]
    %v448 = vld [vmem:[#allocation5 + $0x7a0] sm:$0xff]
    %v449 = vld [vmem:[#allocation5 + $0x7a8] sm:$0xff]
    %v450 = vld [vmem:[#allocation5 + $0x7b0] sm:$0xff]
    %v451 = vld [vmem:[#allocation5 + $0x7b8] sm:$0xff]
    %v452 = vld [vmem:[#allocation5 + $0x7c0] sm:$0xff]
    %v453 = vld [vmem:[#allocation5 + $0x7c8] sm:$0xff]
    %v454 = vld [vmem:[#allocation5 + $0x7d0] sm:$0xff]
    %v455 = vld [vmem:[#allocation5 + $0x7d8] sm:$0xff]
    %v456 = vld [vmem:[#allocation5 + $0x7e0] sm:$0xff]
    %v457 = vld [vmem:[#allocation5 + $0x7e8] sm:$0xff]
    %v458 = vld [vmem:[#allocation5 + $0x7f0] sm:$0xff]
    %v459 = vld [vmem:[#allocation5 + $0x7f8] sm:$0xff]
    %v460 = vld [vmem:[#allocation5 + $0x800] sm:$0xff]
    %v461 = vld [vmem:[#allocation5 + $0x808] sm:$0xff]
    %v462 = vld [vmem:[#allocation5 + $0x810] sm:$0xff]
    %v463 = vld [vmem:[#allocation5 + $0x818] sm:$0xff]
    %v464 = vld [vmem:[#allocation5 + $0x820] sm:$0xff]
    %v465 = vld [vmem:[#allocation5 + $0x828] sm:$0xff]
    %v466 = vld [vmem:[#allocation5 + $0x830] sm:$0xff]
    %v467 = vld [vmem:[#allocation5 + $0x838] sm:$0xff]
    %v468 = vld [vmem:[#allocation5 + $0x840] sm:$0xff]
    %v469 = vld [vmem:[#allocation5 + $0x848] sm:$0xff]
    %v470 = vld [vmem:[#allocation5 + $0x850] sm:$0xff]
    %v471 = vld [vmem:[#allocation5 + $0x858] sm:$0xff]
    %v472 = vld [vmem:[#allocation5 + $0x860] sm:$0xff]
    %v473 = vld [vmem:[#allocation5 + $0x868] sm:$0xff]
    %v474 = vld [vmem:[#allocation5 + $0x870] sm:$0xff]
    %v475 = vld [vmem:[#allocation5 + $0x878] sm:$0xff]
    %v476 = vld [vmem:[#allocation5 + $0x880] sm:$0xff]
    %v477 = vld [vmem:[#allocation5 + $0x888] sm:$0xff]
    %v478 = vld [vmem:[#allocation5 + $0x890] sm:$0xff]
    %v479 = vld [vmem:[#allocation5 + $0x898] sm:$0xff]
    %v480 = vld [vmem:[#allocation5 + $0x8a0] sm:$0xff]
    %v481 = vld [vmem:[#allocation5 + $0x8a8] sm:$0xff]
    %v482 = vld [vmem:[#allocation5 + $0x8b0] sm:$0xff]
    %v483 = vld [vmem:[#allocation5 + $0x8b8] sm:$0xff]
    %v484 = vld [vmem:[#allocation5 + $0x8c0] sm:$0xff]
    %v485 = vld [vmem:[#allocation5 + $0x8c8] sm:$0xff]
    %v486 = vld [vmem:[#allocation5 + $0x8d0] sm:$0xff]
    %v487 = vld [vmem:[#allocation5 + $0x8d8] sm:$0xff]
    %v488 = vld [vmem:[#allocation5 + $0x8e0] sm:$0xff]
    %v489 = vld [vmem:[#allocation5 + $0x8e8] sm:$0xff]
    %v490 = vld [vmem:[#allocation5 + $0x8f0] sm:$0xff]
    %v491 = vld [vmem:[#allocation5 + $0x8f8] sm:$0xff]
    %v492 = vunpack.c.l.bf16 %v204
    %v493 = vunpack.c.h.bf16 %v204
    %v494 = vunpack.c.l.bf16 %v205
    %v495 = vunpack.c.h.bf16 %v205
    %v496 = vunpack.c.l.bf16 %v206
    %v497 = vunpack.c.h.bf16 %v206
    %v498 = vunpack.c.l.bf16 %v207
    %v499 = vunpack.c.h.bf16 %v207
    %v500 = vunpack.c.l.bf16 %v208
    %v501 = vunpack.c.h.bf16 %v208
    %v502 = vunpack.c.l.bf16 %v209
    %v503 = vunpack.c.h.bf16 %v209
    %v504 = vunpack.c.l.bf16 %v210
    %v505 = vunpack.c.h.bf16 %v210
    %v506 = vunpack.c.l.bf16 %v211
    %v507 = vunpack.c.h.bf16 %v211
    %v508 = vunpack.c.l.bf16 %v212
    %v509 = vunpack.c.h.bf16 %v212
    %v510 = vunpack.c.l.bf16 %v213
    %v511 = vunpack.c.h.bf16 %v213
    %v512 = vunpack.c.l.bf16 %v214
    %v513 = vunpack.c.h.bf16 %v214
    %v514 = vunpack.c.l.bf16 %v215
    %v515 = vunpack.c.h.bf16 %v215
    %v516 = vunpack.c.l.bf16 %v216
    %v517 = vunpack.c.h.bf16 %v216
    %v518 = vunpack.c.l.bf16 %v217
    %v519 = vunpack.c.h.bf16 %v217
    %v520 = vunpack.c.l.bf16 %v218
    %v521 = vunpack.c.h.bf16 %v218
    %v522 = vunpack.c.l.bf16 %v219
    %v523 = vunpack.c.h.bf16 %v219
    %v524 = vunpack.c.l.bf16 %v220
    %v525 = vunpack.c.h.bf16 %v220
    %v526 = vunpack.c.l.bf16 %v221
    %v527 = vunpack.c.h.bf16 %v221
    %v528 = vunpack.c.l.bf16 %v222
    %v529 = vunpack.c.h.bf16 %v222
    %v530 = vunpack.c.l.bf16 %v223
    %v531 = vunpack.c.h.bf16 %v223
    %v532 = vunpack.c.l.bf16 %v224
    %v533 = vunpack.c.h.bf16 %v224
    %v534 = vunpack.c.l.bf16 %v225
    %v535 = vunpack.c.h.bf16 %v225
    %v536 = vunpack.c.l.bf16 %v226
    %v537 = vunpack.c.h.bf16 %v226
    %v538 = vunpack.c.l.bf16 %v227
    %v539 = vunpack.c.h.bf16 %v227
    %v540 = vunpack.c.l.bf16 %v228
    %v541 = vunpack.c.h.bf16 %v228
    %v542 = vunpack.c.l.bf16 %v229
    %v543 = vunpack.c.h.bf16 %v229
    %v544 = vunpack.c.l.bf16 %v230
    %v545 = vunpack.c.h.bf16 %v230
    %v546 = vunpack.c.l.bf16 %v231
    %v547 = vunpack.c.h.bf16 %v231
    %v548 = vunpack.c.l.bf16 %v232
    %v549 = vunpack.c.h.bf16 %v232
    %v550 = vunpack.c.l.bf16 %v233
    %v551 = vunpack.c.h.bf16 %v233
    %v552 = vunpack.c.l.bf16 %v234
    %v553 = vunpack.c.h.bf16 %v234
    %v554 = vunpack.c.l.bf16 %v235
    %v555 = vunpack.c.h.bf16 %v235
    %v556 = vunpack.c.l.bf16 %v236
    %v557 = vunpack.c.h.bf16 %v236
    %v558 = vunpack.c.l.bf16 %v237
    %v559 = vunpack.c.h.bf16 %v237
    %v560 = vunpack.c.l.bf16 %v238
    %v561 = vunpack.c.h.bf16 %v238
    %v562 = vunpack.c.l.bf16 %v239
    %v563 = vunpack.c.h.bf16 %v239
    %v564 = vunpack.c.l.bf16 %v240
    %v565 = vunpack.c.h.bf16 %v240
    %v566 = vunpack.c.l.bf16 %v241
    %v567 = vunpack.c.h.bf16 %v241
    %v568 = vunpack.c.l.bf16 %v242
    %v569 = vunpack.c.h.bf16 %v242
    %v570 = vunpack.c.l.bf16 %v243
    %v571 = vunpack.c.h.bf16 %v243
    %v572 = vunpack.c.l.bf16 %v244
    %v573 = vunpack.c.h.bf16 %v244
    %v574 = vunpack.c.l.bf16 %v245
    %v575 = vunpack.c.h.bf16 %v245
    %v576 = vunpack.c.l.bf16 %v246
    %v577 = vunpack.c.h.bf16 %v246
    %v578 = vunpack.c.l.bf16 %v247
    %v579 = vunpack.c.h.bf16 %v247
    %v580 = vunpack.c.l.bf16 %v248
    %v581 = vunpack.c.h.bf16 %v248
    %v582 = vunpack.c.l.bf16 %v249
    %v583 = vunpack.c.h.bf16 %v249
    %v584 = vunpack.c.l.bf16 %v250
    %v585 = vunpack.c.h.bf16 %v250
    %v586 = vunpack.c.l.bf16 %v251
    %v587 = vunpack.c.h.bf16 %v251
    %v588 = vunpack.c.l.bf16 %v252
    %v589 = vunpack.c.h.bf16 %v252
    %v590 = vunpack.c.l.bf16 %v253
    %v591 = vunpack.c.h.bf16 %v253
    %v592 = vunpack.c.l.bf16 %v254
    %v593 = vunpack.c.h.bf16 %v254
    %v594 = vunpack.c.l.bf16 %v255
    %v595 = vunpack.c.h.bf16 %v255
    %v596 = vunpack.c.l.bf16 %v256
    %v597 = vunpack.c.h.bf16 %v256
    %v598 = vunpack.c.l.bf16 %v257
    %v599 = vunpack.c.h.bf16 %v257
    %v600 = vunpack.c.l.bf16 %v258
    %v601 = vunpack.c.h.bf16 %v258
    %v602 = vunpack.c.l.bf16 %v259
    %v603 = vunpack.c.h.bf16 %v259
    %v604 = vunpack.c.l.bf16 %v260
    %v605 = vunpack.c.h.bf16 %v260
    %v606 = vunpack.c.l.bf16 %v261
    %v607 = vunpack.c.h.bf16 %v261
    %v608 = vunpack.c.l.bf16 %v262
    %v609 = vunpack.c.h.bf16 %v262
    %v610 = vunpack.c.l.bf16 %v263
    %v611 = vunpack.c.h.bf16 %v263
    %v612 = vunpack.c.l.bf16 %v264
    %v613 = vunpack.c.h.bf16 %v264
    %v614 = vunpack.c.l.bf16 %v265
    %v615 = vunpack.c.h.bf16 %v265
    %v616 = vunpack.c.l.bf16 %v266
    %v617 = vunpack.c.h.bf16 %v266
    %v618 = vunpack.c.l.bf16 %v267
    %v619 = vunpack.c.h.bf16 %v267
    %v620 = vunpack.c.l.bf16 %v268
    %v621 = vunpack.c.h.bf16 %v268
    %v622 = vunpack.c.l.bf16 %v269
    %v623 = vunpack.c.h.bf16 %v269
    %v624 = vunpack.c.l.bf16 %v270
    %v625 = vunpack.c.h.bf16 %v270
    %v626 = vunpack.c.l.bf16 %v271
    %v627 = vunpack.c.h.bf16 %v271
    %v628 = vunpack.c.l.bf16 %v272
    %v629 = vunpack.c.h.bf16 %v272
    %v630 = vunpack.c.l.bf16 %v273
    %v631 = vunpack.c.h.bf16 %v273
    %v632 = vunpack.c.l.bf16 %v274
    %v633 = vunpack.c.h.bf16 %v274
    %v634 = vunpack.c.l.bf16 %v275
    %v635 = vunpack.c.h.bf16 %v275
    %v636 = vunpack.c.l.bf16 %v276
    %v637 = vunpack.c.h.bf16 %v276
    %v638 = vunpack.c.l.bf16 %v277
    %v639 = vunpack.c.h.bf16 %v277
    %v640 = vunpack.c.l.bf16 %v278
    %v641 = vunpack.c.h.bf16 %v278
    %v642 = vunpack.c.l.bf16 %v279
    %v643 = vunpack.c.h.bf16 %v279
    %v644 = vunpack.c.l.bf16 %v280
    %v645 = vunpack.c.h.bf16 %v280
    %v646 = vunpack.c.l.bf16 %v281
    %v647 = vunpack.c.h.bf16 %v281
    %v648 = vunpack.c.l.bf16 %v282
    %v649 = vunpack.c.h.bf16 %v282
    %v650 = vunpack.c.l.bf16 %v283
    %v651 = vunpack.c.h.bf16 %v283
    %v652 = vunpack.c.l.bf16 %v284
    %v653 = vunpack.c.h.bf16 %v284
    %v654 = vunpack.c.l.bf16 %v285
    %v655 = vunpack.c.h.bf16 %v285
    %v656 = vunpack.c.l.bf16 %v286
    %v657 = vunpack.c.h.bf16 %v286
    %v658 = vunpack.c.l.bf16 %v287
    %v659 = vunpack.c.h.bf16 %v287
    %v660 = vunpack.c.l.bf16 %v288
    %v661 = vunpack.c.h.bf16 %v288
    %v662 = vunpack.c.l.bf16 %v289
    %v663 = vunpack.c.h.bf16 %v289
    %v664 = vunpack.c.l.bf16 %v290
    %v665 = vunpack.c.h.bf16 %v290
    %v666 = vunpack.c.l.bf16 %v291
    %v667 = vunpack.c.h.bf16 %v291
    %v668 = vunpack.c.l.bf16 %v292
    %v669 = vunpack.c.h.bf16 %v292
    %v670 = vunpack.c.l.bf16 %v293
    %v671 = vunpack.c.h.bf16 %v293
    %v672 = vunpack.c.l.bf16 %v294
    %v673 = vunpack.c.h.bf16 %v294
    %v674 = vunpack.c.l.bf16 %v295
    %v675 = vunpack.c.h.bf16 %v295
    %v676 = vunpack.c.l.bf16 %v296
    %v677 = vunpack.c.h.bf16 %v296
    %v678 = vunpack.c.l.bf16 %v297
    %v679 = vunpack.c.h.bf16 %v297
    %v680 = vunpack.c.l.bf16 %v298
    %v681 = vunpack.c.h.bf16 %v298
    %v682 = vunpack.c.l.bf16 %v299
    %v683 = vunpack.c.h.bf16 %v299
    %v684 = vunpack.c.l.bf16 %v300
    %v685 = vunpack.c.h.bf16 %v300
    %v686 = vunpack.c.l.bf16 %v301
    %v687 = vunpack.c.h.bf16 %v301
    %v688 = vunpack.c.l.bf16 %v302
    %v689 = vunpack.c.h.bf16 %v302
    %v690 = vunpack.c.l.bf16 %v303
    %v691 = vunpack.c.h.bf16 %v303
    %v692 = vunpack.c.l.bf16 %v304
    %v693 = vunpack.c.h.bf16 %v304
    %v694 = vunpack.c.l.bf16 %v305
    %v695 = vunpack.c.h.bf16 %v305
    %v696 = vunpack.c.l.bf16 %v306
    %v697 = vunpack.c.h.bf16 %v306
    %v698 = vunpack.c.l.bf16 %v307
    %v699 = vunpack.c.h.bf16 %v307
    %v700 = vunpack.c.l.bf16 %v308
    %v701 = vunpack.c.h.bf16 %v308
    %v702 = vunpack.c.l.bf16 %v309
    %v703 = vunpack.c.h.bf16 %v309
    %v704 = vunpack.c.l.bf16 %v310
    %v705 = vunpack.c.h.bf16 %v310
    %v706 = vunpack.c.l.bf16 %v311
    %v707 = vunpack.c.h.bf16 %v311
    %v708 = vunpack.c.l.bf16 %v312
    %v709 = vunpack.c.h.bf16 %v312
    %v710 = vunpack.c.l.bf16 %v313
    %v711 = vunpack.c.h.bf16 %v313
    %v712 = vunpack.c.l.bf16 %v314
    %v713 = vunpack.c.h.bf16 %v314
    %v714 = vunpack.c.l.bf16 %v315
    %v715 = vunpack.c.h.bf16 %v315
    %v716 = vunpack.c.l.bf16 %v316
    %v717 = vunpack.c.h.bf16 %v316
    %v718 = vunpack.c.l.bf16 %v317
    %v719 = vunpack.c.h.bf16 %v317
    %v720 = vunpack.c.l.bf16 %v318
    %v721 = vunpack.c.h.bf16 %v318
    %v722 = vunpack.c.l.bf16 %v319
    %v723 = vunpack.c.h.bf16 %v319
    %v724 = vunpack.c.l.bf16 %v320
    %v725 = vunpack.c.h.bf16 %v320
    %v726 = vunpack.c.l.bf16 %v321
    %v727 = vunpack.c.h.bf16 %v321
    %v728 = vunpack.c.l.bf16 %v322
    %v729 = vunpack.c.h.bf16 %v322
    %v730 = vunpack.c.l.bf16 %v323
    %v731 = vunpack.c.h.bf16 %v323
    %v732 = vunpack.c.l.bf16 %v324
    %v733 = vunpack.c.h.bf16 %v324
    %v734 = vunpack.c.l.bf16 %v325
    %v735 = vunpack.c.h.bf16 %v325
    %v736 = vunpack.c.l.bf16 %v326
    %v737 = vunpack.c.h.bf16 %v326
    %v738 = vunpack.c.l.bf16 %v327
    %v739 = vunpack.c.h.bf16 %v327
    %v740 = vunpack.c.l.bf16 %v328
    %v741 = vunpack.c.h.bf16 %v328
    %v742 = vunpack.c.l.bf16 %v329
    %v743 = vunpack.c.h.bf16 %v329
    %v744 = vunpack.c.l.bf16 %v330
    %v745 = vunpack.c.h.bf16 %v330
    %v746 = vunpack.c.l.bf16 %v331
    %v747 = vunpack.c.h.bf16 %v331
    %v748 = vunpack.c.l.bf16 %v332
    %v749 = vunpack.c.h.bf16 %v332
    %v750 = vunpack.c.l.bf16 %v333
    %v751 = vunpack.c.h.bf16 %v333
    %v752 = vunpack.c.l.bf16 %v334
    %v753 = vunpack.c.h.bf16 %v334
    %v754 = vunpack.c.l.bf16 %v335
    %v755 = vunpack.c.h.bf16 %v335
    %v756 = vunpack.c.l.bf16 %v336
    %v757 = vunpack.c.h.bf16 %v336
    %v758 = vunpack.c.l.bf16 %v337
    %v759 = vunpack.c.h.bf16 %v337
    %v760 = vunpack.c.l.bf16 %v338
    %v761 = vunpack.c.h.bf16 %v338
    %v762 = vunpack.c.l.bf16 %v339
    %v763 = vunpack.c.h.bf16 %v339
    %v764 = vunpack.c.l.bf16 %v340
    %v765 = vunpack.c.h.bf16 %v340
    %v766 = vunpack.c.l.bf16 %v341
    %v767 = vunpack.c.h.bf16 %v341
    %v768 = vunpack.c.l.bf16 %v342
    %v769 = vunpack.c.h.bf16 %v342
    %v770 = vunpack.c.l.bf16 %v343
    %v771 = vunpack.c.h.bf16 %v343
    %v772 = vunpack.c.l.bf16 %v344
    %v773 = vunpack.c.h.bf16 %v344
    %v774 = vunpack.c.l.bf16 %v345
    %v775 = vunpack.c.h.bf16 %v345
    %v776 = vunpack.c.l.bf16 %v346
    %v777 = vunpack.c.h.bf16 %v346
    %v778 = vunpack.c.l.bf16 %v347
    %v779 = vunpack.c.h.bf16 %v347
    %v780 = vunpack.c.l.bf16 %v348
    %v781 = vunpack.c.h.bf16 %v348
    %v782 = vunpack.c.l.bf16 %v349
    %v783 = vunpack.c.h.bf16 %v349
    %v784 = vunpack.c.l.bf16 %v350
    %v785 = vunpack.c.h.bf16 %v350
    %v786 = vunpack.c.l.bf16 %v351
    %v787 = vunpack.c.h.bf16 %v351
    %v788 = vunpack.c.l.bf16 %v352
    %v789 = vunpack.c.h.bf16 %v352
    %v790 = vunpack.c.l.bf16 %v353
    %v791 = vunpack.c.h.bf16 %v353
    %v792 = vunpack.c.l.bf16 %v354
    %v793 = vunpack.c.h.bf16 %v354
    %v794 = vunpack.c.l.bf16 %v355
    %v795 = vunpack.c.h.bf16 %v355
    %v796 = vunpack.c.l.bf16 %v356
    %v797 = vunpack.c.h.bf16 %v356
    %v798 = vunpack.c.l.bf16 %v357
    %v799 = vunpack.c.h.bf16 %v357
    %v800 = vunpack.c.l.bf16 %v358
    %v801 = vunpack.c.h.bf16 %v358
    %v802 = vunpack.c.l.bf16 %v359
    %v803 = vunpack.c.h.bf16 %v359
    %v804 = vunpack.c.l.bf16 %v360
    %v805 = vunpack.c.h.bf16 %v360
    %v806 = vunpack.c.l.bf16 %v361
    %v807 = vunpack.c.h.bf16 %v361
    %v808 = vunpack.c.l.bf16 %v362
    %v809 = vunpack.c.h.bf16 %v362
    %v810 = vunpack.c.l.bf16 %v363
    %v811 = vunpack.c.h.bf16 %v363
    %v812 = vunpack.c.l.bf16 %v364
    %v813 = vunpack.c.h.bf16 %v364
    %v814 = vunpack.c.l.bf16 %v365
    %v815 = vunpack.c.h.bf16 %v365
    %v816 = vunpack.c.l.bf16 %v366
    %v817 = vunpack.c.h.bf16 %v366
    %v818 = vunpack.c.l.bf16 %v367
    %v819 = vunpack.c.h.bf16 %v367
    %v820 = vunpack.c.l.bf16 %v368
    %v821 = vunpack.c.h.bf16 %v368
    %v822 = vunpack.c.l.bf16 %v369
    %v823 = vunpack.c.h.bf16 %v369
    %v824 = vunpack.c.l.bf16 %v370
    %v825 = vunpack.c.h.bf16 %v370
    %v826 = vunpack.c.l.bf16 %v371
    %v827 = vunpack.c.h.bf16 %v371
    %v828 = vunpack.c.l.bf16 %v372
    %v829 = vunpack.c.h.bf16 %v372
    %v830 = vunpack.c.l.bf16 %v373
    %v831 = vunpack.c.h.bf16 %v373
    %v832 = vunpack.c.l.bf16 %v374
    %v833 = vunpack.c.h.bf16 %v374
    %v834 = vunpack.c.l.bf16 %v375
    %v835 = vunpack.c.h.bf16 %v375
    %v836 = vunpack.c.l.bf16 %v376
    %v837 = vunpack.c.h.bf16 %v376
    %v838 = vunpack.c.l.bf16 %v377
    %v839 = vunpack.c.h.bf16 %v377
    %v840 = vunpack.c.l.bf16 %v378
    %v841 = vunpack.c.h.bf16 %v378
    %v842 = vunpack.c.l.bf16 %v379
    %v843 = vunpack.c.h.bf16 %v379
    %v844 = vunpack.c.l.bf16 %v380
    %v845 = vunpack.c.h.bf16 %v380
    %v846 = vunpack.c.l.bf16 %v381
    %v847 = vunpack.c.h.bf16 %v381
    %v848 = vunpack.c.l.bf16 %v382
    %v849 = vunpack.c.h.bf16 %v382
    %v850 = vunpack.c.l.bf16 %v383
    %v851 = vunpack.c.h.bf16 %v383
    %v852 = vunpack.c.l.bf16 %v384
    %v853 = vunpack.c.h.bf16 %v384
    %v854 = vunpack.c.l.bf16 %v385
    %v855 = vunpack.c.h.bf16 %v385
    %v856 = vunpack.c.l.bf16 %v386
    %v857 = vunpack.c.h.bf16 %v386
    %v858 = vunpack.c.l.bf16 %v387
    %v859 = vunpack.c.h.bf16 %v387
    %v860 = vunpack.c.l.bf16 %v388
    %v861 = vunpack.c.h.bf16 %v388
    %v862 = vunpack.c.l.bf16 %v389
    %v863 = vunpack.c.h.bf16 %v389
    %v864 = vunpack.c.l.bf16 %v390
    %v865 = vunpack.c.h.bf16 %v390
    %v866 = vunpack.c.l.bf16 %v391
    %v867 = vunpack.c.h.bf16 %v391
    %v868 = vunpack.c.l.bf16 %v392
    %v869 = vunpack.c.h.bf16 %v392
    %v870 = vunpack.c.l.bf16 %v393
    %v871 = vunpack.c.h.bf16 %v393
    %v872 = vunpack.c.l.bf16 %v394
    %v873 = vunpack.c.h.bf16 %v394
    %v874 = vunpack.c.l.bf16 %v395
    %v875 = vunpack.c.h.bf16 %v395
    %v876 = vunpack.c.l.bf16 %v396
    %v877 = vunpack.c.h.bf16 %v396
    %v878 = vunpack.c.l.bf16 %v397
    %v879 = vunpack.c.h.bf16 %v397
    %v880 = vunpack.c.l.bf16 %v398
    %v881 = vunpack.c.h.bf16 %v398
    %v882 = vunpack.c.l.bf16 %v399
    %v883 = vunpack.c.h.bf16 %v399
    %v884 = vunpack.c.l.bf16 %v400
    %v885 = vunpack.c.h.bf16 %v400
    %v886 = vunpack.c.l.bf16 %v401
    %v887 = vunpack.c.h.bf16 %v401
    %v888 = vunpack.c.l.bf16 %v402
    %v889 = vunpack.c.h.bf16 %v402
    %v890 = vunpack.c.l.bf16 %v403
    %v891 = vunpack.c.h.bf16 %v403
    %v892 = vunpack.c.l.bf16 %v404
    %v893 = vunpack.c.h.bf16 %v404
    %v894 = vunpack.c.l.bf16 %v405
    %v895 = vunpack.c.h.bf16 %v405
    %v896 = vunpack.c.l.bf16 %v406
    %v897 = vunpack.c.h.bf16 %v406
    %v898 = vunpack.c.l.bf16 %v407
    %v899 = vunpack.c.h.bf16 %v407
    %v900 = vunpack.c.l.bf16 %v408
    %v901 = vunpack.c.h.bf16 %v408
    %v902 = vunpack.c.l.bf16 %v409
    %v903 = vunpack.c.h.bf16 %v409
    %v904 = vunpack.c.l.bf16 %v410
    %v905 = vunpack.c.h.bf16 %v410
    %v906 = vunpack.c.l.bf16 %v411
    %v907 = vunpack.c.h.bf16 %v411
    %v908 = vunpack.c.l.bf16 %v412
    %v909 = vunpack.c.h.bf16 %v412
    %v910 = vunpack.c.l.bf16 %v413
    %v911 = vunpack.c.h.bf16 %v413
    %v912 = vunpack.c.l.bf16 %v414
    %v913 = vunpack.c.h.bf16 %v414
    %v914 = vunpack.c.l.bf16 %v415
    %v915 = vunpack.c.h.bf16 %v415
    %v916 = vunpack.c.l.bf16 %v416
    %v917 = vunpack.c.h.bf16 %v416
    %v918 = vunpack.c.l.bf16 %v417
    %v919 = vunpack.c.h.bf16 %v417
    %v920 = vunpack.c.l.bf16 %v418
    %v921 = vunpack.c.h.bf16 %v418
    %v922 = vunpack.c.l.bf16 %v419
    %v923 = vunpack.c.h.bf16 %v419
    %v924 = vunpack.c.l.bf16 %v420
    %v925 = vunpack.c.h.bf16 %v420
    %v926 = vunpack.c.l.bf16 %v421
    %v927 = vunpack.c.h.bf16 %v421
    %v928 = vunpack.c.l.bf16 %v422
    %v929 = vunpack.c.h.bf16 %v422
    %v930 = vunpack.c.l.bf16 %v423
    %v931 = vunpack.c.h.bf16 %v423
    %v932 = vunpack.c.l.bf16 %v424
    %v933 = vunpack.c.h.bf16 %v424
    %v934 = vunpack.c.l.bf16 %v425
    %v935 = vunpack.c.h.bf16 %v425
    %v936 = vunpack.c.l.bf16 %v426
    %v937 = vunpack.c.h.bf16 %v426
    %v938 = vunpack.c.l.bf16 %v427
    %v939 = vunpack.c.h.bf16 %v427
    %v940 = vunpack.c.l.bf16 %v428
    %v941 = vunpack.c.h.bf16 %v428
    %v942 = vunpack.c.l.bf16 %v429
    %v943 = vunpack.c.h.bf16 %v429
    %v944 = vunpack.c.l.bf16 %v430
    %v945 = vunpack.c.h.bf16 %v430
    %v946 = vunpack.c.l.bf16 %v431
    %v947 = vunpack.c.h.bf16 %v431
    %v948 = vunpack.c.l.bf16 %v432
    %v949 = vunpack.c.h.bf16 %v432
    %v950 = vunpack.c.l.bf16 %v433
    %v951 = vunpack.c.h.bf16 %v433
    %v952 = vunpack.c.l.bf16 %v434
    %v953 = vunpack.c.h.bf16 %v434
    %v954 = vunpack.c.l.bf16 %v435
    %v955 = vunpack.c.h.bf16 %v435
    %v956 = vunpack.c.l.bf16 %v436
    %v957 = vunpack.c.h.bf16 %v436
    %v958 = vunpack.c.l.bf16 %v437
    %v959 = vunpack.c.h.bf16 %v437
    %v960 = vunpack.c.l.bf16 %v438
    %v961 = vunpack.c.h.bf16 %v438
    %v962 = vunpack.c.l.bf16 %v439
    %v963 = vunpack.c.h.bf16 %v439
    %v964 = vunpack.c.l.bf16 %v440
    %v965 = vunpack.c.h.bf16 %v440
    %v966 = vunpack.c.l.bf16 %v441
    %v967 = vunpack.c.h.bf16 %v441
    %v968 = vunpack.c.l.bf16 %v442
    %v969 = vunpack.c.h.bf16 %v442
    %v970 = vunpack.c.l.bf16 %v443
    %v971 = vunpack.c.h.bf16 %v443
    %v972 = vunpack.c.l.bf16 %v444
    %v973 = vunpack.c.h.bf16 %v444
    %v974 = vunpack.c.l.bf16 %v445
    %v975 = vunpack.c.h.bf16 %v445
    %v976 = vunpack.c.l.bf16 %v446
    %v977 = vunpack.c.h.bf16 %v446
    %v978 = vunpack.c.l.bf16 %v447
    %v979 = vunpack.c.h.bf16 %v447
    %v980 = vunpack.c.l.bf16 %v448
    %v981 = vunpack.c.h.bf16 %v448
    %v982 = vunpack.c.l.bf16 %v449
    %v983 = vunpack.c.h.bf16 %v449
    %v984 = vunpack.c.l.bf16 %v450
    %v985 = vunpack.c.h.bf16 %v450
    %v986 = vunpack.c.l.bf16 %v451
    %v987 = vunpack.c.h.bf16 %v451
    %v988 = vunpack.c.l.bf16 %v452
    %v989 = vunpack.c.h.bf16 %v452
    %v990 = vunpack.c.l.bf16 %v453
    %v991 = vunpack.c.h.bf16 %v453
    %v992 = vunpack.c.l.bf16 %v454
    %v993 = vunpack.c.h.bf16 %v454
    %v994 = vunpack.c.l.bf16 %v455
    %v995 = vunpack.c.h.bf16 %v455
    %v996 = vunpack.c.l.bf16 %v456
    %v997 = vunpack.c.h.bf16 %v456
    %v998 = vunpack.c.l.bf16 %v457
    %v999 = vunpack.c.h.bf16 %v457
    %v1000 = vunpack.c.l.bf16 %v458
    %v1001 = vunpack.c.h.bf16 %v458
    %v1002 = vunpack.c.l.bf16 %v459
    %v1003 = vunpack.c.h.bf16 %v459
    %v1004 = vunpack.c.l.bf16 %v460
    %v1005 = vunpack.c.h.bf16 %v460
    %v1006 = vunpack.c.l.bf16 %v461
    %v1007 = vunpack.c.h.bf16 %v461
    %v1008 = vunpack.c.l.bf16 %v462
    %v1009 = vunpack.c.h.bf16 %v462
    %v1010 = vunpack.c.l.bf16 %v463
    %v1011 = vunpack.c.h.bf16 %v463
    %v1012 = vunpack.c.l.bf16 %v464
    %v1013 = vunpack.c.h.bf16 %v464
    %v1014 = vunpack.c.l.bf16 %v465
    %v1015 = vunpack.c.h.bf16 %v465
    %v1016 = vunpack.c.l.bf16 %v466
    %v1017 = vunpack.c.h.bf16 %v466
    %v1018 = vunpack.c.l.bf16 %v467
    %v1019 = vunpack.c.h.bf16 %v467
    %v1020 = vunpack.c.l.bf16 %v468
    %v1021 = vunpack.c.h.bf16 %v468
    %v1022 = vunpack.c.l.bf16 %v469
    %v1023 = vunpack.c.h.bf16 %v469
    %v1024 = vunpack.c.l.bf16 %v470
    %v1025 = vunpack.c.h.bf16 %v470
    %v1026 = vunpack.c.l.bf16 %v471
    %v1027 = vunpack.c.h.bf16 %v471
    %v1028 = vunpack.c.l.bf16 %v472
    %v1029 = vunpack.c.h.bf16 %v472
    %v1030 = vunpack.c.l.bf16 %v473
    %v1031 = vunpack.c.h.bf16 %v473
    %v1032 = vunpack.c.l.bf16 %v474
    %v1033 = vunpack.c.h.bf16 %v474
    %v1034 = vunpack.c.l.bf16 %v475
    %v1035 = vunpack.c.h.bf16 %v475
    %v1036 = vunpack.c.l.bf16 %v476
    %v1037 = vunpack.c.h.bf16 %v476
    %v1038 = vunpack.c.l.bf16 %v477
    %v1039 = vunpack.c.h.bf16 %v477
    %v1040 = vunpack.c.l.bf16 %v478
    %v1041 = vunpack.c.h.bf16 %v478
    %v1042 = vunpack.c.l.bf16 %v479
    %v1043 = vunpack.c.h.bf16 %v479
    %v1044 = vunpack.c.l.bf16 %v480
    %v1045 = vunpack.c.h.bf16 %v480
    %v1046 = vunpack.c.l.bf16 %v481
    %v1047 = vunpack.c.h.bf16 %v481
    %v1048 = vunpack.c.l.bf16 %v482
    %v1049 = vunpack.c.h.bf16 %v482
    %v1050 = vunpack.c.l.bf16 %v483
    %v1051 = vunpack.c.h.bf16 %v483
    %v1052 = vunpack.c.l.bf16 %v484
    %v1053 = vunpack.c.h.bf16 %v484
    %v1054 = vunpack.c.l.bf16 %v485
    %v1055 = vunpack.c.h.bf16 %v485
    %v1056 = vunpack.c.l.bf16 %v486
    %v1057 = vunpack.c.h.bf16 %v486
    %v1058 = vunpack.c.l.bf16 %v487
    %v1059 = vunpack.c.h.bf16 %v487
    %v1060 = vunpack.c.l.bf16 %v488
    %v1061 = vunpack.c.h.bf16 %v488
    %v1062 = vunpack.c.l.bf16 %v489
    %v1063 = vunpack.c.h.bf16 %v489
    %v1064 = vunpack.c.l.bf16 %v490
    %v1065 = vunpack.c.h.bf16 %v490
    %v1066 = vunpack.c.l.bf16 %v491
    %v1067 = vunpack.c.h.bf16 %v491
    %v1068 = vld [vmem:[#allocation7] sm:$0xff]
    %v1069 = vld [vmem:[#allocation7 + $0x8] sm:$0xff]
    %v1070 = vld [vmem:[#allocation7 + $0x10] sm:$0xff]
    %v1071 = vld [vmem:[#allocation7 + $0x18] sm:$0xff]
    %v1072 = vld [vmem:[#allocation7 + $0x20] sm:$0xff]
    %v1073 = vld [vmem:[#allocation7 + $0x28] sm:$0xff]
    %v1074 = vld [vmem:[#allocation7 + $0x30] sm:$0xff]
    %v1075 = vld [vmem:[#allocation7 + $0x38] sm:$0xff]
    %v1076 = vld [vmem:[#allocation7 + $0x40] sm:$0xff]
    %v1077 = vld [vmem:[#allocation7 + $0x48] sm:$0xff]
    %v1078 = vld [vmem:[#allocation7 + $0x50] sm:$0xff]
    %v1079 = vld [vmem:[#allocation7 + $0x58] sm:$0xff]
    %v1080 = vld [vmem:[#allocation7 + $0x60] sm:$0xff]
    %v1081 = vld [vmem:[#allocation7 + $0x68] sm:$0xff]
    %v1082 = vld [vmem:[#allocation7 + $0x70] sm:$0xff]
    %v1083 = vld [vmem:[#allocation7 + $0x78] sm:$0xff]
    %v1084 = vld [vmem:[#allocation7 + $0x80] sm:$0xff]
    %v1085 = vld [vmem:[#allocation7 + $0x88] sm:$0xff]
    %v1086 = vld [vmem:[#allocation7 + $0x90] sm:$0xff]
    %v1087 = vld [vmem:[#allocation7 + $0x98] sm:$0xff]
    %v1088 = vld [vmem:[#allocation7 + $0xa0] sm:$0xff]
    %v1089 = vld [vmem:[#allocation7 + $0xa8] sm:$0xff]
    %v1090 = vld [vmem:[#allocation7 + $0xb0] sm:$0xff]
    %v1091 = vld [vmem:[#allocation7 + $0xb8] sm:$0xff]
    %v1092 = vld [vmem:[#allocation7 + $0xc0] sm:$0xff]
    %v1093 = vld [vmem:[#allocation7 + $0xc8] sm:$0xff]
    %v1094 = vld [vmem:[#allocation7 + $0xd0] sm:$0xff]
    %v1095 = vld [vmem:[#allocation7 + $0xd8] sm:$0xff]
    %v1096 = vld [vmem:[#allocation7 + $0xe0] sm:$0xff]
    %v1097 = vld [vmem:[#allocation7 + $0xe8] sm:$0xff]
    %v1098 = vld [vmem:[#allocation7 + $0xf0] sm:$0xff]
    %v1099 = vld [vmem:[#allocation7 + $0xf8] sm:$0xff]
    %v1100 = vld [vmem:[#allocation7 + $0x100] sm:$0xff]
    %v1101 = vld [vmem:[#allocation7 + $0x108] sm:$0xff]
    %v1102 = vld [vmem:[#allocation7 + $0x110] sm:$0xff]
    %v1103 = vld [vmem:[#allocation7 + $0x118] sm:$0xff]
    %v1104 = vld [vmem:[#allocation7 + $0x120] sm:$0xff]
    %v1105 = vld [vmem:[#allocation7 + $0x128] sm:$0xff]
    %v1106 = vld [vmem:[#allocation7 + $0x130] sm:$0xff]
    %v1107 = vld [vmem:[#allocation7 + $0x138] sm:$0xff]
    %v1108 = vld [vmem:[#allocation7 + $0x140] sm:$0xff]
    %v1109 = vld [vmem:[#allocation7 + $0x148] sm:$0xff]
    %v1110 = vld [vmem:[#allocation7 + $0x150] sm:$0xff]
    %v1111 = vld [vmem:[#allocation7 + $0x158] sm:$0xff]
    %v1112 = vld [vmem:[#allocation7 + $0x160] sm:$0xff]
    %v1113 = vld [vmem:[#allocation7 + $0x168] sm:$0xff]
    %v1114 = vld [vmem:[#allocation7 + $0x170] sm:$0xff]
    %v1115 = vld [vmem:[#allocation7 + $0x178] sm:$0xff]
    %v1116 = vld [vmem:[#allocation7 + $0x180] sm:$0xff]
    %v1117 = vld [vmem:[#allocation7 + $0x188] sm:$0xff]
    %v1118 = vld [vmem:[#allocation7 + $0x190] sm:$0xff]
    %v1119 = vld [vmem:[#allocation7 + $0x198] sm:$0xff]
    %v1120 = vld [vmem:[#allocation7 + $0x1a0] sm:$0xff]
    %v1121 = vld [vmem:[#allocation7 + $0x1a8] sm:$0xff]
    %v1122 = vld [vmem:[#allocation7 + $0x1b0] sm:$0xff]
    %v1123 = vld [vmem:[#allocation7 + $0x1b8] sm:$0xff]
    %v1124 = vld [vmem:[#allocation7 + $0x1c0] sm:$0xff]
    %v1125 = vld [vmem:[#allocation7 + $0x1c8] sm:$0xff]
    %v1126 = vld [vmem:[#allocation7 + $0x1d0] sm:$0xff]
    %v1127 = vld [vmem:[#allocation7 + $0x1d8] sm:$0xff]
    %v1128 = vld [vmem:[#allocation7 + $0x1e0] sm:$0xff]
    %v1129 = vld [vmem:[#allocation7 + $0x1e8] sm:$0xff]
    %v1130 = vld [vmem:[#allocation7 + $0x1f0] sm:$0xff]
    %v1131 = vld [vmem:[#allocation7 + $0x1f8] sm:$0xff]
    %v1132 = vld [vmem:[#allocation7 + $0x200] sm:$0xff]
    %v1133 = vld [vmem:[#allocation7 + $0x208] sm:$0xff]
    %v1134 = vld [vmem:[#allocation7 + $0x210] sm:$0xff]
    %v1135 = vld [vmem:[#allocation7 + $0x218] sm:$0xff]
    %v1136 = vld [vmem:[#allocation7 + $0x220] sm:$0xff]
    %v1137 = vld [vmem:[#allocation7 + $0x228] sm:$0xff]
    %v1138 = vld [vmem:[#allocation7 + $0x230] sm:$0xff]
    %v1139 = vld [vmem:[#allocation7 + $0x238] sm:$0xff]
    %v1140 = vld [vmem:[#allocation7 + $0x240] sm:$0xff]
    %v1141 = vld [vmem:[#allocation7 + $0x248] sm:$0xff]
    %v1142 = vld [vmem:[#allocation7 + $0x250] sm:$0xff]
    %v1143 = vld [vmem:[#allocation7 + $0x258] sm:$0xff]
    %v1144 = vld [vmem:[#allocation7 + $0x260] sm:$0xff]
    %v1145 = vld [vmem:[#allocation7 + $0x268] sm:$0xff]
    %v1146 = vld [vmem:[#allocation7 + $0x270] sm:$0xff]
    %v1147 = vld [vmem:[#allocation7 + $0x278] sm:$0xff]
    %v1148 = vld [vmem:[#allocation7 + $0x280] sm:$0xff]
    %v1149 = vld [vmem:[#allocation7 + $0x288] sm:$0xff]
    %v1150 = vld [vmem:[#allocation7 + $0x290] sm:$0xff]
    %v1151 = vld [vmem:[#allocation7 + $0x298] sm:$0xff]
    %v1152 = vld [vmem:[#allocation7 + $0x2a0] sm:$0xff]
    %v1153 = vld [vmem:[#allocation7 + $0x2a8] sm:$0xff]
    %v1154 = vld [vmem:[#allocation7 + $0x2b0] sm:$0xff]
    %v1155 = vld [vmem:[#allocation7 + $0x2b8] sm:$0xff]
    %v1156 = vld [vmem:[#allocation7 + $0x2c0] sm:$0xff]
    %v1157 = vld [vmem:[#allocation7 + $0x2c8] sm:$0xff]
    %v1158 = vld [vmem:[#allocation7 + $0x2d0] sm:$0xff]
    %v1159 = vld [vmem:[#allocation7 + $0x2d8] sm:$0xff]
    %v1160 = vld [vmem:[#allocation7 + $0x2e0] sm:$0xff]
    %v1161 = vld [vmem:[#allocation7 + $0x2e8] sm:$0xff]
    %v1162 = vld [vmem:[#allocation7 + $0x2f0] sm:$0xff]
    %v1163 = vld [vmem:[#allocation7 + $0x2f8] sm:$0xff]
    %v1164 = vld [vmem:[#allocation7 + $0x300] sm:$0xff]
    %v1165 = vld [vmem:[#allocation7 + $0x308] sm:$0xff]
    %v1166 = vld [vmem:[#allocation7 + $0x310] sm:$0xff]
    %v1167 = vld [vmem:[#allocation7 + $0x318] sm:$0xff]
    %v1168 = vld [vmem:[#allocation7 + $0x320] sm:$0xff]
    %v1169 = vld [vmem:[#allocation7 + $0x328] sm:$0xff]
    %v1170 = vld [vmem:[#allocation7 + $0x330] sm:$0xff]
    %v1171 = vld [vmem:[#allocation7 + $0x338] sm:$0xff]
    %v1172 = vld [vmem:[#allocation7 + $0x340] sm:$0xff]
    %v1173 = vld [vmem:[#allocation7 + $0x348] sm:$0xff]
    %v1174 = vld [vmem:[#allocation7 + $0x350] sm:$0xff]
    %v1175 = vld [vmem:[#allocation7 + $0x358] sm:$0xff]
    %v1176 = vld [vmem:[#allocation7 + $0x360] sm:$0xff]
    %v1177 = vld [vmem:[#allocation7 + $0x368] sm:$0xff]
    %v1178 = vld [vmem:[#allocation7 + $0x370] sm:$0xff]
    %v1179 = vld [vmem:[#allocation7 + $0x378] sm:$0xff]
    %v1180 = vld [vmem:[#allocation7 + $0x380] sm:$0xff]
    %v1181 = vld [vmem:[#allocation7 + $0x388] sm:$0xff]
    %v1182 = vld [vmem:[#allocation7 + $0x390] sm:$0xff]
    %v1183 = vld [vmem:[#allocation7 + $0x398] sm:$0xff]
    %v1184 = vld [vmem:[#allocation7 + $0x3a0] sm:$0xff]
    %v1185 = vld [vmem:[#allocation7 + $0x3a8] sm:$0xff]
    %v1186 = vld [vmem:[#allocation7 + $0x3b0] sm:$0xff]
    %v1187 = vld [vmem:[#allocation7 + $0x3b8] sm:$0xff]
    %v1188 = vld [vmem:[#allocation7 + $0x3c0] sm:$0xff]
    %v1189 = vld [vmem:[#allocation7 + $0x3c8] sm:$0xff]
    %v1190 = vld [vmem:[#allocation7 + $0x3d0] sm:$0xff]
    %v1191 = vld [vmem:[#allocation7 + $0x3d8] sm:$0xff]
    %v1192 = vld [vmem:[#allocation7 + $0x3e0] sm:$0xff]
    %v1193 = vld [vmem:[#allocation7 + $0x3e8] sm:$0xff]
    %v1194 = vld [vmem:[#allocation7 + $0x3f0] sm:$0xff]
    %v1195 = vld [vmem:[#allocation7 + $0x3f8] sm:$0xff]
    %v1196 = vld [vmem:[#allocation7 + $0x400] sm:$0xff]
    %v1197 = vld [vmem:[#allocation7 + $0x408] sm:$0xff]
    %v1198 = vld [vmem:[#allocation7 + $0x410] sm:$0xff]
    %v1199 = vld [vmem:[#allocation7 + $0x418] sm:$0xff]
    %v1200 = vld [vmem:[#allocation7 + $0x420] sm:$0xff]
    %v1201 = vld [vmem:[#allocation7 + $0x428] sm:$0xff]
    %v1202 = vld [vmem:[#allocation7 + $0x430] sm:$0xff]
    %v1203 = vld [vmem:[#allocation7 + $0x438] sm:$0xff]
    %v1204 = vld [vmem:[#allocation7 + $0x440] sm:$0xff]
    %v1205 = vld [vmem:[#allocation7 + $0x448] sm:$0xff]
    %v1206 = vld [vmem:[#allocation7 + $0x450] sm:$0xff]
    %v1207 = vld [vmem:[#allocation7 + $0x458] sm:$0xff]
    %v1208 = vld [vmem:[#allocation7 + $0x460] sm:$0xff]
    %v1209 = vld [vmem:[#allocation7 + $0x468] sm:$0xff]
    %v1210 = vld [vmem:[#allocation7 + $0x470] sm:$0xff]
    %v1211 = vld [vmem:[#allocation7 + $0x478] sm:$0xff]
    %v1212 = vld [vmem:[#allocation7 + $0x480] sm:$0xff]
    %v1213 = vld [vmem:[#allocation7 + $0x488] sm:$0xff]
    %v1214 = vld [vmem:[#allocation7 + $0x490] sm:$0xff]
    %v1215 = vld [vmem:[#allocation7 + $0x498] sm:$0xff]
    %v1216 = vld [vmem:[#allocation7 + $0x4a0] sm:$0xff]
    %v1217 = vld [vmem:[#allocation7 + $0x4a8] sm:$0xff]
    %v1218 = vld [vmem:[#allocation7 + $0x4b0] sm:$0xff]
    %v1219 = vld [vmem:[#allocation7 + $0x4b8] sm:$0xff]
    %v1220 = vld [vmem:[#allocation7 + $0x4c0] sm:$0xff]
    %v1221 = vld [vmem:[#allocation7 + $0x4c8] sm:$0xff]
    %v1222 = vld [vmem:[#allocation7 + $0x4d0] sm:$0xff]
    %v1223 = vld [vmem:[#allocation7 + $0x4d8] sm:$0xff]
    %v1224 = vld [vmem:[#allocation7 + $0x4e0] sm:$0xff]
    %v1225 = vld [vmem:[#allocation7 + $0x4e8] sm:$0xff]
    %v1226 = vld [vmem:[#allocation7 + $0x4f0] sm:$0xff]
    %v1227 = vld [vmem:[#allocation7 + $0x4f8] sm:$0xff]
    %v1228 = vld [vmem:[#allocation7 + $0x500] sm:$0xff]
    %v1229 = vld [vmem:[#allocation7 + $0x508] sm:$0xff]
    %v1230 = vld [vmem:[#allocation7 + $0x510] sm:$0xff]
    %v1231 = vld [vmem:[#allocation7 + $0x518] sm:$0xff]
    %v1232 = vld [vmem:[#allocation7 + $0x520] sm:$0xff]
    %v1233 = vld [vmem:[#allocation7 + $0x528] sm:$0xff]
    %v1234 = vld [vmem:[#allocation7 + $0x530] sm:$0xff]
    %v1235 = vld [vmem:[#allocation7 + $0x538] sm:$0xff]
    %v1236 = vld [vmem:[#allocation7 + $0x540] sm:$0xff]
    %v1237 = vld [vmem:[#allocation7 + $0x548] sm:$0xff]
    %v1238 = vld [vmem:[#allocation7 + $0x550] sm:$0xff]
    %v1239 = vld [vmem:[#allocation7 + $0x558] sm:$0xff]
    %v1240 = vld [vmem:[#allocation7 + $0x560] sm:$0xff]
    %v1241 = vld [vmem:[#allocation7 + $0x568] sm:$0xff]
    %v1242 = vld [vmem:[#allocation7 + $0x570] sm:$0xff]
    %v1243 = vld [vmem:[#allocation7 + $0x578] sm:$0xff]
    %v1244 = vld [vmem:[#allocation7 + $0x580] sm:$0xff]
    %v1245 = vld [vmem:[#allocation7 + $0x588] sm:$0xff]
    %v1246 = vld [vmem:[#allocation7 + $0x590] sm:$0xff]
    %v1247 = vld [vmem:[#allocation7 + $0x598] sm:$0xff]
    %v1248 = vld [vmem:[#allocation7 + $0x5a0] sm:$0xff]
    %v1249 = vld [vmem:[#allocation7 + $0x5a8] sm:$0xff]
    %v1250 = vld [vmem:[#allocation7 + $0x5b0] sm:$0xff]
    %v1251 = vld [vmem:[#allocation7 + $0x5b8] sm:$0xff]
    %v1252 = vld [vmem:[#allocation7 + $0x5c0] sm:$0xff]
    %v1253 = vld [vmem:[#allocation7 + $0x5c8] sm:$0xff]
    %v1254 = vld [vmem:[#allocation7 + $0x5d0] sm:$0xff]
    %v1255 = vld [vmem:[#allocation7 + $0x5d8] sm:$0xff]
    %v1256 = vld [vmem:[#allocation7 + $0x5e0] sm:$0xff]
    %v1257 = vld [vmem:[#allocation7 + $0x5e8] sm:$0xff]
    %v1258 = vld [vmem:[#allocation7 + $0x5f0] sm:$0xff]
    %v1259 = vld [vmem:[#allocation7 + $0x5f8] sm:$0xff]
    %v1260 = vld [vmem:[#allocation7 + $0x600] sm:$0xff]
    %v1261 = vld [vmem:[#allocation7 + $0x608] sm:$0xff]
    %v1262 = vld [vmem:[#allocation7 + $0x610] sm:$0xff]
    %v1263 = vld [vmem:[#allocation7 + $0x618] sm:$0xff]
    %v1264 = vld [vmem:[#allocation7 + $0x620] sm:$0xff]
    %v1265 = vld [vmem:[#allocation7 + $0x628] sm:$0xff]
    %v1266 = vld [vmem:[#allocation7 + $0x630] sm:$0xff]
    %v1267 = vld [vmem:[#allocation7 + $0x638] sm:$0xff]
    %v1268 = vld [vmem:[#allocation7 + $0x640] sm:$0xff]
    %v1269 = vld [vmem:[#allocation7 + $0x648] sm:$0xff]
    %v1270 = vld [vmem:[#allocation7 + $0x650] sm:$0xff]
    %v1271 = vld [vmem:[#allocation7 + $0x658] sm:$0xff]
    %v1272 = vld [vmem:[#allocation7 + $0x660] sm:$0xff]
    %v1273 = vld [vmem:[#allocation7 + $0x668] sm:$0xff]
    %v1274 = vld [vmem:[#allocation7 + $0x670] sm:$0xff]
    %v1275 = vld [vmem:[#allocation7 + $0x678] sm:$0xff]
    %v1276 = vld [vmem:[#allocation7 + $0x680] sm:$0xff]
    %v1277 = vld [vmem:[#allocation7 + $0x688] sm:$0xff]
    %v1278 = vld [vmem:[#allocation7 + $0x690] sm:$0xff]
    %v1279 = vld [vmem:[#allocation7 + $0x698] sm:$0xff]
    %v1280 = vld [vmem:[#allocation7 + $0x6a0] sm:$0xff]
    %v1281 = vld [vmem:[#allocation7 + $0x6a8] sm:$0xff]
    %v1282 = vld [vmem:[#allocation7 + $0x6b0] sm:$0xff]
    %v1283 = vld [vmem:[#allocation7 + $0x6b8] sm:$0xff]
    %v1284 = vld [vmem:[#allocation7 + $0x6c0] sm:$0xff]
    %v1285 = vld [vmem:[#allocation7 + $0x6c8] sm:$0xff]
    %v1286 = vld [vmem:[#allocation7 + $0x6d0] sm:$0xff]
    %v1287 = vld [vmem:[#allocation7 + $0x6d8] sm:$0xff]
    %v1288 = vld [vmem:[#allocation7 + $0x6e0] sm:$0xff]
    %v1289 = vld [vmem:[#allocation7 + $0x6e8] sm:$0xff]
    %v1290 = vld [vmem:[#allocation7 + $0x6f0] sm:$0xff]
    %v1291 = vld [vmem:[#allocation7 + $0x6f8] sm:$0xff]
    %v1292 = vld [vmem:[#allocation7 + $0x700] sm:$0xff]
    %v1293 = vld [vmem:[#allocation7 + $0x708] sm:$0xff]
    %v1294 = vld [vmem:[#allocation7 + $0x710] sm:$0xff]
    %v1295 = vld [vmem:[#allocation7 + $0x718] sm:$0xff]
    %v1296 = vld [vmem:[#allocation7 + $0x720] sm:$0xff]
    %v1297 = vld [vmem:[#allocation7 + $0x728] sm:$0xff]
    %v1298 = vld [vmem:[#allocation7 + $0x730] sm:$0xff]
    %v1299 = vld [vmem:[#allocation7 + $0x738] sm:$0xff]
    %v1300 = vld [vmem:[#allocation7 + $0x740] sm:$0xff]
    %v1301 = vld [vmem:[#allocation7 + $0x748] sm:$0xff]
    %v1302 = vld [vmem:[#allocation7 + $0x750] sm:$0xff]
    %v1303 = vld [vmem:[#allocation7 + $0x758] sm:$0xff]
    %v1304 = vld [vmem:[#allocation7 + $0x760] sm:$0xff]
    %v1305 = vld [vmem:[#allocation7 + $0x768] sm:$0xff]
    %v1306 = vld [vmem:[#allocation7 + $0x770] sm:$0xff]
    %v1307 = vld [vmem:[#allocation7 + $0x778] sm:$0xff]
    %v1308 = vld [vmem:[#allocation7 + $0x780] sm:$0xff]
    %v1309 = vld [vmem:[#allocation7 + $0x788] sm:$0xff]
    %v1310 = vld [vmem:[#allocation7 + $0x790] sm:$0xff]
    %v1311 = vld [vmem:[#allocation7 + $0x798] sm:$0xff]
    %v1312 = vld [vmem:[#allocation7 + $0x7a0] sm:$0xff]
    %v1313 = vld [vmem:[#allocation7 + $0x7a8] sm:$0xff]
    %v1314 = vld [vmem:[#allocation7 + $0x7b0] sm:$0xff]
    %v1315 = vld [vmem:[#allocation7 + $0x7b8] sm:$0xff]
    %v1316 = vld [vmem:[#allocation7 + $0x7c0] sm:$0xff]
    %v1317 = vld [vmem:[#allocation7 + $0x7c8] sm:$0xff]
    %v1318 = vld [vmem:[#allocation7 + $0x7d0] sm:$0xff]
    %v1319 = vld [vmem:[#allocation7 + $0x7d8] sm:$0xff]
    %v1320 = vld [vmem:[#allocation7 + $0x7e0] sm:$0xff]
    %v1321 = vld [vmem:[#allocation7 + $0x7e8] sm:$0xff]
    %v1322 = vld [vmem:[#allocation7 + $0x7f0] sm:$0xff]
    %v1323 = vld [vmem:[#allocation7 + $0x7f8] sm:$0xff]
    %v1324 = vld [vmem:[#allocation7 + $0x800] sm:$0xff]
    %v1325 = vld [vmem:[#allocation7 + $0x808] sm:$0xff]
    %v1326 = vld [vmem:[#allocation7 + $0x810] sm:$0xff]
    %v1327 = vld [vmem:[#allocation7 + $0x818] sm:$0xff]
    %v1328 = vld [vmem:[#allocation7 + $0x820] sm:$0xff]
    %v1329 = vld [vmem:[#allocation7 + $0x828] sm:$0xff]
    %v1330 = vld [vmem:[#allocation7 + $0x830] sm:$0xff]
    %v1331 = vld [vmem:[#allocation7 + $0x838] sm:$0xff]
    %v1332 = vld [vmem:[#allocation7 + $0x840] sm:$0xff]
    %v1333 = vld [vmem:[#allocation7 + $0x848] sm:$0xff]
    %v1334 = vld [vmem:[#allocation7 + $0x850] sm:$0xff]
    %v1335 = vld [vmem:[#allocation7 + $0x858] sm:$0xff]
    %v1336 = vld [vmem:[#allocation7 + $0x860] sm:$0xff]
    %v1337 = vld [vmem:[#allocation7 + $0x868] sm:$0xff]
    %v1338 = vld [vmem:[#allocation7 + $0x870] sm:$0xff]
    %v1339 = vld [vmem:[#allocation7 + $0x878] sm:$0xff]
    %v1340 = vld [vmem:[#allocation7 + $0x880] sm:$0xff]
    %v1341 = vld [vmem:[#allocation7 + $0x888] sm:$0xff]
    %v1342 = vld [vmem:[#allocation7 + $0x890] sm:$0xff]
    %v1343 = vld [vmem:[#allocation7 + $0x898] sm:$0xff]
    %v1344 = vld [vmem:[#allocation7 + $0x8a0] sm:$0xff]
    %v1345 = vld [vmem:[#allocation7 + $0x8a8] sm:$0xff]
    %v1346 = vld [vmem:[#allocation7 + $0x8b0] sm:$0xff]
    %v1347 = vld [vmem:[#allocation7 + $0x8b8] sm:$0xff]
    %v1348 = vld [vmem:[#allocation7 + $0x8c0] sm:$0xff]
    %v1349 = vld [vmem:[#allocation7 + $0x8c8] sm:$0xff]
    %v1350 = vld [vmem:[#allocation7 + $0x8d0] sm:$0xff]
    %v1351 = vld [vmem:[#allocation7 + $0x8d8] sm:$0xff]
    %v1352 = vld [vmem:[#allocation7 + $0x8e0] sm:$0xff]
    %v1353 = vld [vmem:[#allocation7 + $0x8e8] sm:$0xff]
    %v1354 = vld [vmem:[#allocation7 + $0x8f0] sm:$0xff]
    %v1355 = vld [vmem:[#allocation7 + $0x8f8] sm:$0xff]
    %v1356 = vunpack.c.l.bf16 %v1068
    %v1357 = vunpack.c.h.bf16 %v1068
    %v1358 = vunpack.c.l.bf16 %v1069
    %v1359 = vunpack.c.h.bf16 %v1069
    %v1360 = vunpack.c.l.bf16 %v1070
    %v1361 = vunpack.c.h.bf16 %v1070
    %v1362 = vunpack.c.l.bf16 %v1071
    %v1363 = vunpack.c.h.bf16 %v1071
    %v1364 = vunpack.c.l.bf16 %v1072
    %v1365 = vunpack.c.h.bf16 %v1072
    %v1366 = vunpack.c.l.bf16 %v1073
    %v1367 = vunpack.c.h.bf16 %v1073
    %v1368 = vunpack.c.l.bf16 %v1074
    %v1369 = vunpack.c.h.bf16 %v1074
    %v1370 = vunpack.c.l.bf16 %v1075
    %v1371 = vunpack.c.h.bf16 %v1075
    %v1372 = vunpack.c.l.bf16 %v1076
    %v1373 = vunpack.c.h.bf16 %v1076
    %v1374 = vunpack.c.l.bf16 %v1077
    %v1375 = vunpack.c.h.bf16 %v1077
    %v1376 = vunpack.c.l.bf16 %v1078
    %v1377 = vunpack.c.h.bf16 %v1078
    %v1378 = vunpack.c.l.bf16 %v1079
    %v1379 = vunpack.c.h.bf16 %v1079
    %v1380 = vunpack.c.l.bf16 %v1080
    %v1381 = vunpack.c.h.bf16 %v1080
    %v1382 = vunpack.c.l.bf16 %v1081
    %v1383 = vunpack.c.h.bf16 %v1081
    %v1384 = vunpack.c.l.bf16 %v1082
    %v1385 = vunpack.c.h.bf16 %v1082
    %v1386 = vunpack.c.l.bf16 %v1083
    %v1387 = vunpack.c.h.bf16 %v1083
    %v1388 = vunpack.c.l.bf16 %v1084
    %v1389 = vunpack.c.h.bf16 %v1084
    %v1390 = vunpack.c.l.bf16 %v1085
    %v1391 = vunpack.c.h.bf16 %v1085
    %v1392 = vunpack.c.l.bf16 %v1086
    %v1393 = vunpack.c.h.bf16 %v1086
    %v1394 = vunpack.c.l.bf16 %v1087
    %v1395 = vunpack.c.h.bf16 %v1087
    %v1396 = vunpack.c.l.bf16 %v1088
    %v1397 = vunpack.c.h.bf16 %v1088
    %v1398 = vunpack.c.l.bf16 %v1089
    %v1399 = vunpack.c.h.bf16 %v1089
    %v1400 = vunpack.c.l.bf16 %v1090
    %v1401 = vunpack.c.h.bf16 %v1090
    %v1402 = vunpack.c.l.bf16 %v1091
    %v1403 = vunpack.c.h.bf16 %v1091
    %v1404 = vunpack.c.l.bf16 %v1092
    %v1405 = vunpack.c.h.bf16 %v1092
    %v1406 = vunpack.c.l.bf16 %v1093
    %v1407 = vunpack.c.h.bf16 %v1093
    %v1408 = vunpack.c.l.bf16 %v1094
    %v1409 = vunpack.c.h.bf16 %v1094
    %v1410 = vunpack.c.l.bf16 %v1095
    %v1411 = vunpack.c.h.bf16 %v1095
    %v1412 = vunpack.c.l.bf16 %v1096
    %v1413 = vunpack.c.h.bf16 %v1096
    %v1414 = vunpack.c.l.bf16 %v1097
    %v1415 = vunpack.c.h.bf16 %v1097
    %v1416 = vunpack.c.l.bf16 %v1098
    %v1417 = vunpack.c.h.bf16 %v1098
    %v1418 = vunpack.c.l.bf16 %v1099
    %v1419 = vunpack.c.h.bf16 %v1099
    %v1420 = vunpack.c.l.bf16 %v1100
    %v1421 = vunpack.c.h.bf16 %v1100
    %v1422 = vunpack.c.l.bf16 %v1101
    %v1423 = vunpack.c.h.bf16 %v1101
    %v1424 = vunpack.c.l.bf16 %v1102
    %v1425 = vunpack.c.h.bf16 %v1102
    %v1426 = vunpack.c.l.bf16 %v1103
    %v1427 = vunpack.c.h.bf16 %v1103
    %v1428 = vunpack.c.l.bf16 %v1104
    %v1429 = vunpack.c.h.bf16 %v1104
    %v1430 = vunpack.c.l.bf16 %v1105
    %v1431 = vunpack.c.h.bf16 %v1105
    %v1432 = vunpack.c.l.bf16 %v1106
    %v1433 = vunpack.c.h.bf16 %v1106
    %v1434 = vunpack.c.l.bf16 %v1107
    %v1435 = vunpack.c.h.bf16 %v1107
    %v1436 = vunpack.c.l.bf16 %v1108
    %v1437 = vunpack.c.h.bf16 %v1108
    %v1438 = vunpack.c.l.bf16 %v1109
    %v1439 = vunpack.c.h.bf16 %v1109
    %v1440 = vunpack.c.l.bf16 %v1110
    %v1441 = vunpack.c.h.bf16 %v1110
    %v1442 = vunpack.c.l.bf16 %v1111
    %v1443 = vunpack.c.h.bf16 %v1111
    %v1444 = vunpack.c.l.bf16 %v1112
    %v1445 = vunpack.c.h.bf16 %v1112
    %v1446 = vunpack.c.l.bf16 %v1113
    %v1447 = vunpack.c.h.bf16 %v1113
    %v1448 = vunpack.c.l.bf16 %v1114
    %v1449 = vunpack.c.h.bf16 %v1114
    %v1450 = vunpack.c.l.bf16 %v1115
    %v1451 = vunpack.c.h.bf16 %v1115
    %v1452 = vunpack.c.l.bf16 %v1116
    %v1453 = vunpack.c.h.bf16 %v1116
    %v1454 = vunpack.c.l.bf16 %v1117
    %v1455 = vunpack.c.h.bf16 %v1117
    %v1456 = vunpack.c.l.bf16 %v1118
    %v1457 = vunpack.c.h.bf16 %v1118
    %v1458 = vunpack.c.l.bf16 %v1119
    %v1459 = vunpack.c.h.bf16 %v1119
    %v1460 = vunpack.c.l.bf16 %v1120
    %v1461 = vunpack.c.h.bf16 %v1120
    %v1462 = vunpack.c.l.bf16 %v1121
    %v1463 = vunpack.c.h.bf16 %v1121
    %v1464 = vunpack.c.l.bf16 %v1122
    %v1465 = vunpack.c.h.bf16 %v1122
    %v1466 = vunpack.c.l.bf16 %v1123
    %v1467 = vunpack.c.h.bf16 %v1123
    %v1468 = vunpack.c.l.bf16 %v1124
    %v1469 = vunpack.c.h.bf16 %v1124
    %v1470 = vunpack.c.l.bf16 %v1125
    %v1471 = vunpack.c.h.bf16 %v1125
    %v1472 = vunpack.c.l.bf16 %v1126
    %v1473 = vunpack.c.h.bf16 %v1126
    %v1474 = vunpack.c.l.bf16 %v1127
    %v1475 = vunpack.c.h.bf16 %v1127
    %v1476 = vunpack.c.l.bf16 %v1128
    %v1477 = vunpack.c.h.bf16 %v1128
    %v1478 = vunpack.c.l.bf16 %v1129
    %v1479 = vunpack.c.h.bf16 %v1129
    %v1480 = vunpack.c.l.bf16 %v1130
    %v1481 = vunpack.c.h.bf16 %v1130
    %v1482 = vunpack.c.l.bf16 %v1131
    %v1483 = vunpack.c.h.bf16 %v1131
    %v1484 = vunpack.c.l.bf16 %v1132
    %v1485 = vunpack.c.h.bf16 %v1132
    %v1486 = vunpack.c.l.bf16 %v1133
    %v1487 = vunpack.c.h.bf16 %v1133
    %v1488 = vunpack.c.l.bf16 %v1134
    %v1489 = vunpack.c.h.bf16 %v1134
    %v1490 = vunpack.c.l.bf16 %v1135
    %v1491 = vunpack.c.h.bf16 %v1135
    %v1492 = vunpack.c.l.bf16 %v1136
    %v1493 = vunpack.c.h.bf16 %v1136
    %v1494 = vunpack.c.l.bf16 %v1137
    %v1495 = vunpack.c.h.bf16 %v1137
    %v1496 = vunpack.c.l.bf16 %v1138
    %v1497 = vunpack.c.h.bf16 %v1138
    %v1498 = vunpack.c.l.bf16 %v1139
    %v1499 = vunpack.c.h.bf16 %v1139
    %v1500 = vunpack.c.l.bf16 %v1140
    %v1501 = vunpack.c.h.bf16 %v1140
    %v1502 = vunpack.c.l.bf16 %v1141
    %v1503 = vunpack.c.h.bf16 %v1141
    %v1504 = vunpack.c.l.bf16 %v1142
    %v1505 = vunpack.c.h.bf16 %v1142
    %v1506 = vunpack.c.l.bf16 %v1143
    %v1507 = vunpack.c.h.bf16 %v1143
    %v1508 = vunpack.c.l.bf16 %v1144
    %v1509 = vunpack.c.h.bf16 %v1144
    %v1510 = vunpack.c.l.bf16 %v1145
    %v1511 = vunpack.c.h.bf16 %v1145
    %v1512 = vunpack.c.l.bf16 %v1146
    %v1513 = vunpack.c.h.bf16 %v1146
    %v1514 = vunpack.c.l.bf16 %v1147
    %v1515 = vunpack.c.h.bf16 %v1147
    %v1516 = vunpack.c.l.bf16 %v1148
    %v1517 = vunpack.c.h.bf16 %v1148
    %v1518 = vunpack.c.l.bf16 %v1149
    %v1519 = vunpack.c.h.bf16 %v1149
    %v1520 = vunpack.c.l.bf16 %v1150
    %v1521 = vunpack.c.h.bf16 %v1150
    %v1522 = vunpack.c.l.bf16 %v1151
    %v1523 = vunpack.c.h.bf16 %v1151
    %v1524 = vunpack.c.l.bf16 %v1152
    %v1525 = vunpack.c.h.bf16 %v1152
    %v1526 = vunpack.c.l.bf16 %v1153
    %v1527 = vunpack.c.h.bf16 %v1153
    %v1528 = vunpack.c.l.bf16 %v1154
    %v1529 = vunpack.c.h.bf16 %v1154
    %v1530 = vunpack.c.l.bf16 %v1155
    %v1531 = vunpack.c.h.bf16 %v1155
    %v1532 = vunpack.c.l.bf16 %v1156
    %v1533 = vunpack.c.h.bf16 %v1156
    %v1534 = vunpack.c.l.bf16 %v1157
    %v1535 = vunpack.c.h.bf16 %v1157
    %v1536 = vunpack.c.l.bf16 %v1158
    %v1537 = vunpack.c.h.bf16 %v1158
    %v1538 = vunpack.c.l.bf16 %v1159
    %v1539 = vunpack.c.h.bf16 %v1159
    %v1540 = vunpack.c.l.bf16 %v1160
    %v1541 = vunpack.c.h.bf16 %v1160
    %v1542 = vunpack.c.l.bf16 %v1161
    %v1543 = vunpack.c.h.bf16 %v1161
    %v1544 = vunpack.c.l.bf16 %v1162
    %v1545 = vunpack.c.h.bf16 %v1162
    %v1546 = vunpack.c.l.bf16 %v1163
    %v1547 = vunpack.c.h.bf16 %v1163
    %v1548 = vunpack.c.l.bf16 %v1164
    %v1549 = vunpack.c.h.bf16 %v1164
    %v1550 = vunpack.c.l.bf16 %v1165
    %v1551 = vunpack.c.h.bf16 %v1165
    %v1552 = vunpack.c.l.bf16 %v1166
    %v1553 = vunpack.c.h.bf16 %v1166
    %v1554 = vunpack.c.l.bf16 %v1167
    %v1555 = vunpack.c.h.bf16 %v1167
    %v1556 = vunpack.c.l.bf16 %v1168
    %v1557 = vunpack.c.h.bf16 %v1168
    %v1558 = vunpack.c.l.bf16 %v1169
    %v1559 = vunpack.c.h.bf16 %v1169
    %v1560 = vunpack.c.l.bf16 %v1170
    %v1561 = vunpack.c.h.bf16 %v1170
    %v1562 = vunpack.c.l.bf16 %v1171
    %v1563 = vunpack.c.h.bf16 %v1171
    %v1564 = vunpack.c.l.bf16 %v1172
    %v1565 = vunpack.c.h.bf16 %v1172
    %v1566 = vunpack.c.l.bf16 %v1173
    %v1567 = vunpack.c.h.bf16 %v1173
    %v1568 = vunpack.c.l.bf16 %v1174
    %v1569 = vunpack.c.h.bf16 %v1174
    %v1570 = vunpack.c.l.bf16 %v1175
    %v1571 = vunpack.c.h.bf16 %v1175
    %v1572 = vunpack.c.l.bf16 %v1176
    %v1573 = vunpack.c.h.bf16 %v1176
    %v1574 = vunpack.c.l.bf16 %v1177
    %v1575 = vunpack.c.h.bf16 %v1177
    %v1576 = vunpack.c.l.bf16 %v1178
    %v1577 = vunpack.c.h.bf16 %v1178
    %v1578 = vunpack.c.l.bf16 %v1179
    %v1579 = vunpack.c.h.bf16 %v1179
    %v1580 = vunpack.c.l.bf16 %v1180
    %v1581 = vunpack.c.h.bf16 %v1180
    %v1582 = vunpack.c.l.bf16 %v1181
    %v1583 = vunpack.c.h.bf16 %v1181
    %v1584 = vunpack.c.l.bf16 %v1182
    %v1585 = vunpack.c.h.bf16 %v1182
    %v1586 = vunpack.c.l.bf16 %v1183
    %v1587 = vunpack.c.h.bf16 %v1183
    %v1588 = vunpack.c.l.bf16 %v1184
    %v1589 = vunpack.c.h.bf16 %v1184
    %v1590 = vunpack.c.l.bf16 %v1185
    %v1591 = vunpack.c.h.bf16 %v1185
    %v1592 = vunpack.c.l.bf16 %v1186
    %v1593 = vunpack.c.h.bf16 %v1186
    %v1594 = vunpack.c.l.bf16 %v1187
    %v1595 = vunpack.c.h.bf16 %v1187
    %v1596 = vunpack.c.l.bf16 %v1188
    %v1597 = vunpack.c.h.bf16 %v1188
    %v1598 = vunpack.c.l.bf16 %v1189
    %v1599 = vunpack.c.h.bf16 %v1189
    %v1600 = vunpack.c.l.bf16 %v1190
    %v1601 = vunpack.c.h.bf16 %v1190
    %v1602 = vunpack.c.l.bf16 %v1191
    %v1603 = vunpack.c.h.bf16 %v1191
    %v1604 = vunpack.c.l.bf16 %v1192
    %v1605 = vunpack.c.h.bf16 %v1192
    %v1606 = vunpack.c.l.bf16 %v1193
    %v1607 = vunpack.c.h.bf16 %v1193
    %v1608 = vunpack.c.l.bf16 %v1194
    %v1609 = vunpack.c.h.bf16 %v1194
    %v1610 = vunpack.c.l.bf16 %v1195
    %v1611 = vunpack.c.h.bf16 %v1195
    %v1612 = vunpack.c.l.bf16 %v1196
    %v1613 = vunpack.c.h.bf16 %v1196
    %v1614 = vunpack.c.l.bf16 %v1197
    %v1615 = vunpack.c.h.bf16 %v1197
    %v1616 = vunpack.c.l.bf16 %v1198
    %v1617 = vunpack.c.h.bf16 %v1198
    %v1618 = vunpack.c.l.bf16 %v1199
    %v1619 = vunpack.c.h.bf16 %v1199
    %v1620 = vunpack.c.l.bf16 %v1200
    %v1621 = vunpack.c.h.bf16 %v1200
    %v1622 = vunpack.c.l.bf16 %v1201
    %v1623 = vunpack.c.h.bf16 %v1201
    %v1624 = vunpack.c.l.bf16 %v1202
    %v1625 = vunpack.c.h.bf16 %v1202
    %v1626 = vunpack.c.l.bf16 %v1203
    %v1627 = vunpack.c.h.bf16 %v1203
    %v1628 = vunpack.c.l.bf16 %v1204
    %v1629 = vunpack.c.h.bf16 %v1204
    %v1630 = vunpack.c.l.bf16 %v1205
    %v1631 = vunpack.c.h.bf16 %v1205
    %v1632 = vunpack.c.l.bf16 %v1206
    %v1633 = vunpack.c.h.bf16 %v1206
    %v1634 = vunpack.c.l.bf16 %v1207
    %v1635 = vunpack.c.h.bf16 %v1207
    %v1636 = vunpack.c.l.bf16 %v1208
    %v1637 = vunpack.c.h.bf16 %v1208
    %v1638 = vunpack.c.l.bf16 %v1209
    %v1639 = vunpack.c.h.bf16 %v1209
    %v1640 = vunpack.c.l.bf16 %v1210
    %v1641 = vunpack.c.h.bf16 %v1210
    %v1642 = vunpack.c.l.bf16 %v1211
    %v1643 = vunpack.c.h.bf16 %v1211
    %v1644 = vunpack.c.l.bf16 %v1212
    %v1645 = vunpack.c.h.bf16 %v1212
    %v1646 = vunpack.c.l.bf16 %v1213
    %v1647 = vunpack.c.h.bf16 %v1213
    %v1648 = vunpack.c.l.bf16 %v1214
    %v1649 = vunpack.c.h.bf16 %v1214
    %v1650 = vunpack.c.l.bf16 %v1215
    %v1651 = vunpack.c.h.bf16 %v1215
    %v1652 = vunpack.c.l.bf16 %v1216
    %v1653 = vunpack.c.h.bf16 %v1216
    %v1654 = vunpack.c.l.bf16 %v1217
    %v1655 = vunpack.c.h.bf16 %v1217
    %v1656 = vunpack.c.l.bf16 %v1218
    %v1657 = vunpack.c.h.bf16 %v1218
    %v1658 = vunpack.c.l.bf16 %v1219
    %v1659 = vunpack.c.h.bf16 %v1219
    %v1660 = vunpack.c.l.bf16 %v1220
    %v1661 = vunpack.c.h.bf16 %v1220
    %v1662 = vunpack.c.l.bf16 %v1221
    %v1663 = vunpack.c.h.bf16 %v1221
    %v1664 = vunpack.c.l.bf16 %v1222
    %v1665 = vunpack.c.h.bf16 %v1222
    %v1666 = vunpack.c.l.bf16 %v1223
    %v1667 = vunpack.c.h.bf16 %v1223
    %v1668 = vunpack.c.l.bf16 %v1224
    %v1669 = vunpack.c.h.bf16 %v1224
    %v1670 = vunpack.c.l.bf16 %v1225
    %v1671 = vunpack.c.h.bf16 %v1225
    %v1672 = vunpack.c.l.bf16 %v1226
    %v1673 = vunpack.c.h.bf16 %v1226
    %v1674 = vunpack.c.l.bf16 %v1227
    %v1675 = vunpack.c.h.bf16 %v1227
    %v1676 = vunpack.c.l.bf16 %v1228
    %v1677 = vunpack.c.h.bf16 %v1228
    %v1678 = vunpack.c.l.bf16 %v1229
    %v1679 = vunpack.c.h.bf16 %v1229
    %v1680 = vunpack.c.l.bf16 %v1230
    %v1681 = vunpack.c.h.bf16 %v1230
    %v1682 = vunpack.c.l.bf16 %v1231
    %v1683 = vunpack.c.h.bf16 %v1231
    %v1684 = vunpack.c.l.bf16 %v1232
    %v1685 = vunpack.c.h.bf16 %v1232
    %v1686 = vunpack.c.l.bf16 %v1233
    %v1687 = vunpack.c.h.bf16 %v1233
    %v1688 = vunpack.c.l.bf16 %v1234
    %v1689 = vunpack.c.h.bf16 %v1234
    %v1690 = vunpack.c.l.bf16 %v1235
    %v1691 = vunpack.c.h.bf16 %v1235
    %v1692 = vunpack.c.l.bf16 %v1236
    %v1693 = vunpack.c.h.bf16 %v1236
    %v1694 = vunpack.c.l.bf16 %v1237
    %v1695 = vunpack.c.h.bf16 %v1237
    %v1696 = vunpack.c.l.bf16 %v1238
    %v1697 = vunpack.c.h.bf16 %v1238
    %v1698 = vunpack.c.l.bf16 %v1239
    %v1699 = vunpack.c.h.bf16 %v1239
    %v1700 = vunpack.c.l.bf16 %v1240
    %v1701 = vunpack.c.h.bf16 %v1240
    %v1702 = vunpack.c.l.bf16 %v1241
    %v1703 = vunpack.c.h.bf16 %v1241
    %v1704 = vunpack.c.l.bf16 %v1242
    %v1705 = vunpack.c.h.bf16 %v1242
    %v1706 = vunpack.c.l.bf16 %v1243
    %v1707 = vunpack.c.h.bf16 %v1243
    %v1708 = vunpack.c.l.bf16 %v1244
    %v1709 = vunpack.c.h.bf16 %v1244
    %v1710 = vunpack.c.l.bf16 %v1245
    %v1711 = vunpack.c.h.bf16 %v1245
    %v1712 = vunpack.c.l.bf16 %v1246
    %v1713 = vunpack.c.h.bf16 %v1246
    %v1714 = vunpack.c.l.bf16 %v1247
    %v1715 = vunpack.c.h.bf16 %v1247
    %v1716 = vunpack.c.l.bf16 %v1248
    %v1717 = vunpack.c.h.bf16 %v1248
    %v1718 = vunpack.c.l.bf16 %v1249
    %v1719 = vunpack.c.h.bf16 %v1249
    %v1720 = vunpack.c.l.bf16 %v1250
    %v1721 = vunpack.c.h.bf16 %v1250
    %v1722 = vunpack.c.l.bf16 %v1251
    %v1723 = vunpack.c.h.bf16 %v1251
    %v1724 = vunpack.c.l.bf16 %v1252
    %v1725 = vunpack.c.h.bf16 %v1252
    %v1726 = vunpack.c.l.bf16 %v1253
    %v1727 = vunpack.c.h.bf16 %v1253
    %v1728 = vunpack.c.l.bf16 %v1254
    %v1729 = vunpack.c.h.bf16 %v1254
    %v1730 = vunpack.c.l.bf16 %v1255
    %v1731 = vunpack.c.h.bf16 %v1255
    %v1732 = vunpack.c.l.bf16 %v1256
    %v1733 = vunpack.c.h.bf16 %v1256
    %v1734 = vunpack.c.l.bf16 %v1257
    %v1735 = vunpack.c.h.bf16 %v1257
    %v1736 = vunpack.c.l.bf16 %v1258
    %v1737 = vunpack.c.h.bf16 %v1258
    %v1738 = vunpack.c.l.bf16 %v1259
    %v1739 = vunpack.c.h.bf16 %v1259
    %v1740 = vunpack.c.l.bf16 %v1260
    %v1741 = vunpack.c.h.bf16 %v1260
    %v1742 = vunpack.c.l.bf16 %v1261
    %v1743 = vunpack.c.h.bf16 %v1261
    %v1744 = vunpack.c.l.bf16 %v1262
    %v1745 = vunpack.c.h.bf16 %v1262
    %v1746 = vunpack.c.l.bf16 %v1263
    %v1747 = vunpack.c.h.bf16 %v1263
    %v1748 = vunpack.c.l.bf16 %v1264
    %v1749 = vunpack.c.h.bf16 %v1264
    %v1750 = vunpack.c.l.bf16 %v1265
    %v1751 = vunpack.c.h.bf16 %v1265
    %v1752 = vunpack.c.l.bf16 %v1266
    %v1753 = vunpack.c.h.bf16 %v1266
    %v1754 = vunpack.c.l.bf16 %v1267
    %v1755 = vunpack.c.h.bf16 %v1267
    %v1756 = vunpack.c.l.bf16 %v1268
    %v1757 = vunpack.c.h.bf16 %v1268
    %v1758 = vunpack.c.l.bf16 %v1269
    %v1759 = vunpack.c.h.bf16 %v1269
    %v1760 = vunpack.c.l.bf16 %v1270
    %v1761 = vunpack.c.h.bf16 %v1270
    %v1762 = vunpack.c.l.bf16 %v1271
    %v1763 = vunpack.c.h.bf16 %v1271
    %v1764 = vunpack.c.l.bf16 %v1272
    %v1765 = vunpack.c.h.bf16 %v1272
    %v1766 = vunpack.c.l.bf16 %v1273
    %v1767 = vunpack.c.h.bf16 %v1273
    %v1768 = vunpack.c.l.bf16 %v1274
    %v1769 = vunpack.c.h.bf16 %v1274
    %v1770 = vunpack.c.l.bf16 %v1275
    %v1771 = vunpack.c.h.bf16 %v1275
    %v1772 = vunpack.c.l.bf16 %v1276
    %v1773 = vunpack.c.h.bf16 %v1276
    %v1774 = vunpack.c.l.bf16 %v1277
    %v1775 = vunpack.c.h.bf16 %v1277
    %v1776 = vunpack.c.l.bf16 %v1278
    %v1777 = vunpack.c.h.bf16 %v1278
    %v1778 = vunpack.c.l.bf16 %v1279
    %v1779 = vunpack.c.h.bf16 %v1279
    %v1780 = vunpack.c.l.bf16 %v1280
    %v1781 = vunpack.c.h.bf16 %v1280
    %v1782 = vunpack.c.l.bf16 %v1281
    %v1783 = vunpack.c.h.bf16 %v1281
    %v1784 = vunpack.c.l.bf16 %v1282
    %v1785 = vunpack.c.h.bf16 %v1282
    %v1786 = vunpack.c.l.bf16 %v1283
    %v1787 = vunpack.c.h.bf16 %v1283
    %v1788 = vunpack.c.l.bf16 %v1284
    %v1789 = vunpack.c.h.bf16 %v1284
    %v1790 = vunpack.c.l.bf16 %v1285
    %v1791 = vunpack.c.h.bf16 %v1285
    %v1792 = vunpack.c.l.bf16 %v1286
    %v1793 = vunpack.c.h.bf16 %v1286
    %v1794 = vunpack.c.l.bf16 %v1287
    %v1795 = vunpack.c.h.bf16 %v1287
    %v1796 = vunpack.c.l.bf16 %v1288
    %v1797 = vunpack.c.h.bf16 %v1288
    %v1798 = vunpack.c.l.bf16 %v1289
    %v1799 = vunpack.c.h.bf16 %v1289
    %v1800 = vunpack.c.l.bf16 %v1290
    %v1801 = vunpack.c.h.bf16 %v1290
    %v1802 = vunpack.c.l.bf16 %v1291
    %v1803 = vunpack.c.h.bf16 %v1291
    %v1804 = vunpack.c.l.bf16 %v1292
    %v1805 = vunpack.c.h.bf16 %v1292
    %v1806 = vunpack.c.l.bf16 %v1293
    %v1807 = vunpack.c.h.bf16 %v1293
    %v1808 = vunpack.c.l.bf16 %v1294
    %v1809 = vunpack.c.h.bf16 %v1294
    %v1810 = vunpack.c.l.bf16 %v1295
    %v1811 = vunpack.c.h.bf16 %v1295
    %v1812 = vunpack.c.l.bf16 %v1296
    %v1813 = vunpack.c.h.bf16 %v1296
    %v1814 = vunpack.c.l.bf16 %v1297
    %v1815 = vunpack.c.h.bf16 %v1297
    %v1816 = vunpack.c.l.bf16 %v1298
    %v1817 = vunpack.c.h.bf16 %v1298
    %v1818 = vunpack.c.l.bf16 %v1299
    %v1819 = vunpack.c.h.bf16 %v1299
    %v1820 = vunpack.c.l.bf16 %v1300
    %v1821 = vunpack.c.h.bf16 %v1300
    %v1822 = vunpack.c.l.bf16 %v1301
    %v1823 = vunpack.c.h.bf16 %v1301
    %v1824 = vunpack.c.l.bf16 %v1302
    %v1825 = vunpack.c.h.bf16 %v1302
    %v1826 = vunpack.c.l.bf16 %v1303
    %v1827 = vunpack.c.h.bf16 %v1303
    %v1828 = vunpack.c.l.bf16 %v1304
    %v1829 = vunpack.c.h.bf16 %v1304
    %v1830 = vunpack.c.l.bf16 %v1305
    %v1831 = vunpack.c.h.bf16 %v1305
    %v1832 = vunpack.c.l.bf16 %v1306
    %v1833 = vunpack.c.h.bf16 %v1306
    %v1834 = vunpack.c.l.bf16 %v1307
    %v1835 = vunpack.c.h.bf16 %v1307
    %v1836 = vunpack.c.l.bf16 %v1308
    %v1837 = vunpack.c.h.bf16 %v1308
    %v1838 = vunpack.c.l.bf16 %v1309
    %v1839 = vunpack.c.h.bf16 %v1309
    %v1840 = vunpack.c.l.bf16 %v1310
    %v1841 = vunpack.c.h.bf16 %v1310
    %v1842 = vunpack.c.l.bf16 %v1311
    %v1843 = vunpack.c.h.bf16 %v1311
    %v1844 = vunpack.c.l.bf16 %v1312
    %v1845 = vunpack.c.h.bf16 %v1312
    %v1846 = vunpack.c.l.bf16 %v1313
    %v1847 = vunpack.c.h.bf16 %v1313
    %v1848 = vunpack.c.l.bf16 %v1314
    %v1849 = vunpack.c.h.bf16 %v1314
    %v1850 = vunpack.c.l.bf16 %v1315
    %v1851 = vunpack.c.h.bf16 %v1315
    %v1852 = vunpack.c.l.bf16 %v1316
    %v1853 = vunpack.c.h.bf16 %v1316
    %v1854 = vunpack.c.l.bf16 %v1317
    %v1855 = vunpack.c.h.bf16 %v1317
    %v1856 = vunpack.c.l.bf16 %v1318
    %v1857 = vunpack.c.h.bf16 %v1318
    %v1858 = vunpack.c.l.bf16 %v1319
    %v1859 = vunpack.c.h.bf16 %v1319
    %v1860 = vunpack.c.l.bf16 %v1320
    %v1861 = vunpack.c.h.bf16 %v1320
    %v1862 = vunpack.c.l.bf16 %v1321
    %v1863 = vunpack.c.h.bf16 %v1321
    %v1864 = vunpack.c.l.bf16 %v1322
    %v1865 = vunpack.c.h.bf16 %v1322
    %v1866 = vunpack.c.l.bf16 %v1323
    %v1867 = vunpack.c.h.bf16 %v1323
    %v1868 = vunpack.c.l.bf16 %v1324
    %v1869 = vunpack.c.h.bf16 %v1324
    %v1870 = vunpack.c.l.bf16 %v1325
    %v1871 = vunpack.c.h.bf16 %v1325
    %v1872 = vunpack.c.l.bf16 %v1326
    %v1873 = vunpack.c.h.bf16 %v1326
    %v1874 = vunpack.c.l.bf16 %v1327
    %v1875 = vunpack.c.h.bf16 %v1327
    %v1876 = vunpack.c.l.bf16 %v1328
    %v1877 = vunpack.c.h.bf16 %v1328
    %v1878 = vunpack.c.l.bf16 %v1329
    %v1879 = vunpack.c.h.bf16 %v1329
    %v1880 = vunpack.c.l.bf16 %v1330
    %v1881 = vunpack.c.h.bf16 %v1330
    %v1882 = vunpack.c.l.bf16 %v1331
    %v1883 = vunpack.c.h.bf16 %v1331
    %v1884 = vunpack.c.l.bf16 %v1332
    %v1885 = vunpack.c.h.bf16 %v1332
    %v1886 = vunpack.c.l.bf16 %v1333
    %v1887 = vunpack.c.h.bf16 %v1333
    %v1888 = vunpack.c.l.bf16 %v1334
    %v1889 = vunpack.c.h.bf16 %v1334
    %v1890 = vunpack.c.l.bf16 %v1335
    %v1891 = vunpack.c.h.bf16 %v1335
    %v1892 = vunpack.c.l.bf16 %v1336
    %v1893 = vunpack.c.h.bf16 %v1336
    %v1894 = vunpack.c.l.bf16 %v1337
    %v1895 = vunpack.c.h.bf16 %v1337
    %v1896 = vunpack.c.l.bf16 %v1338
    %v1897 = vunpack.c.h.bf16 %v1338
    %v1898 = vunpack.c.l.bf16 %v1339
    %v1899 = vunpack.c.h.bf16 %v1339
    %v1900 = vunpack.c.l.bf16 %v1340
    %v1901 = vunpack.c.h.bf16 %v1340
    %v1902 = vunpack.c.l.bf16 %v1341
    %v1903 = vunpack.c.h.bf16 %v1341
    %v1904 = vunpack.c.l.bf16 %v1342
    %v1905 = vunpack.c.h.bf16 %v1342
    %v1906 = vunpack.c.l.bf16 %v1343
    %v1907 = vunpack.c.h.bf16 %v1343
    %v1908 = vunpack.c.l.bf16 %v1344
    %v1909 = vunpack.c.h.bf16 %v1344
    %v1910 = vunpack.c.l.bf16 %v1345
    %v1911 = vunpack.c.h.bf16 %v1345
    %v1912 = vunpack.c.l.bf16 %v1346
    %v1913 = vunpack.c.h.bf16 %v1346
    %v1914 = vunpack.c.l.bf16 %v1347
    %v1915 = vunpack.c.h.bf16 %v1347
    %v1916 = vunpack.c.l.bf16 %v1348
    %v1917 = vunpack.c.h.bf16 %v1348
    %v1918 = vunpack.c.l.bf16 %v1349
    %v1919 = vunpack.c.h.bf16 %v1349
    %v1920 = vunpack.c.l.bf16 %v1350
    %v1921 = vunpack.c.h.bf16 %v1350
    %v1922 = vunpack.c.l.bf16 %v1351
    %v1923 = vunpack.c.h.bf16 %v1351
    %v1924 = vunpack.c.l.bf16 %v1352
    %v1925 = vunpack.c.h.bf16 %v1352
    %v1926 = vunpack.c.l.bf16 %v1353
    %v1927 = vunpack.c.h.bf16 %v1353
    %v1928 = vunpack.c.l.bf16 %v1354
    %v1929 = vunpack.c.h.bf16 %v1354
    %v1930 = vunpack.c.l.bf16 %v1355
    %v1931 = vunpack.c.h.bf16 %v1355
    %v1932 = vld [vmem:[#allocation8] sm:$0xff]
    %v1933 = vld [vmem:[#allocation8 + $0x8] sm:$0xff]
    %v1934 = vld [vmem:[#allocation8 + $0x10] sm:$0xff]
    %v1935 = vld [vmem:[#allocation8 + $0x18] sm:$0xff]
    %v1936 = vld [vmem:[#allocation8 + $0x20] sm:$0xff]
    %v1937 = vld [vmem:[#allocation8 + $0x28] sm:$0xff]
    %v1938 = vld [vmem:[#allocation8 + $0x30] sm:$0xff]
    %v1939 = vld [vmem:[#allocation8 + $0x38] sm:$0xff]
    %v1940 = vld [vmem:[#allocation8 + $0x40] sm:$0xff]
    %v1941 = vld [vmem:[#allocation8 + $0x48] sm:$0xff]
    %v1942 = vld [vmem:[#allocation8 + $0x50] sm:$0xff]
    %v1943 = vld [vmem:[#allocation8 + $0x58] sm:$0xff]
    %v1944 = vld [vmem:[#allocation8 + $0x60] sm:$0xff]
    %v1945 = vld [vmem:[#allocation8 + $0x68] sm:$0xff]
    %v1946 = vld [vmem:[#allocation8 + $0x70] sm:$0xff]
    %v1947 = vld [vmem:[#allocation8 + $0x78] sm:$0xff]
    %v1948 = vld [vmem:[#allocation8 + $0x80] sm:$0xff]
    %v1949 = vld [vmem:[#allocation8 + $0x88] sm:$0xff]
    %v1950 = vld [vmem:[#allocation8 + $0x90] sm:$0xff]
    %v1951 = vld [vmem:[#allocation8 + $0x98] sm:$0xff]
    %v1952 = vld [vmem:[#allocation8 + $0xa0] sm:$0xff]
    %v1953 = vld [vmem:[#allocation8 + $0xa8] sm:$0xff]
    %v1954 = vld [vmem:[#allocation8 + $0xb0] sm:$0xff]
    %v1955 = vld [vmem:[#allocation8 + $0xb8] sm:$0xff]
    %v1956 = vld [vmem:[#allocation8 + $0xc0] sm:$0xff]
    %v1957 = vld [vmem:[#allocation8 + $0xc8] sm:$0xff]
    %v1958 = vld [vmem:[#allocation8 + $0xd0] sm:$0xff]
    %v1959 = vld [vmem:[#allocation8 + $0xd8] sm:$0xff]
    %v1960 = vld [vmem:[#allocation8 + $0xe0] sm:$0xff]
    %v1961 = vld [vmem:[#allocation8 + $0xe8] sm:$0xff]
    %v1962 = vld [vmem:[#allocation8 + $0xf0] sm:$0xff]
    %v1963 = vld [vmem:[#allocation8 + $0xf8] sm:$0xff]
    %v1964 = vld [vmem:[#allocation8 + $0x100] sm:$0xff]
    %v1965 = vld [vmem:[#allocation8 + $0x108] sm:$0xff]
    %v1966 = vld [vmem:[#allocation8 + $0x110] sm:$0xff]
    %v1967 = vld [vmem:[#allocation8 + $0x118] sm:$0xff]
    %v1968 = vld [vmem:[#allocation8 + $0x120] sm:$0xff]
    %v1969 = vld [vmem:[#allocation8 + $0x128] sm:$0xff]
    %v1970 = vld [vmem:[#allocation8 + $0x130] sm:$0xff]
    %v1971 = vld [vmem:[#allocation8 + $0x138] sm:$0xff]
    %v1972 = vld [vmem:[#allocation8 + $0x140] sm:$0xff]
    %v1973 = vld [vmem:[#allocation8 + $0x148] sm:$0xff]
    %v1974 = vld [vmem:[#allocation8 + $0x150] sm:$0xff]
    %v1975 = vld [vmem:[#allocation8 + $0x158] sm:$0xff]
    %v1976 = vld [vmem:[#allocation8 + $0x160] sm:$0xff]
    %v1977 = vld [vmem:[#allocation8 + $0x168] sm:$0xff]
    %v1978 = vld [vmem:[#allocation8 + $0x170] sm:$0xff]
    %v1979 = vld [vmem:[#allocation8 + $0x178] sm:$0xff]
    %v1980 = vld [vmem:[#allocation8 + $0x180] sm:$0xff]
    %v1981 = vld [vmem:[#allocation8 + $0x188] sm:$0xff]
    %v1982 = vld [vmem:[#allocation8 + $0x190] sm:$0xff]
    %v1983 = vld [vmem:[#allocation8 + $0x198] sm:$0xff]
    %v1984 = vld [vmem:[#allocation8 + $0x1a0] sm:$0xff]
    %v1985 = vld [vmem:[#allocation8 + $0x1a8] sm:$0xff]
    %v1986 = vld [vmem:[#allocation8 + $0x1b0] sm:$0xff]
    %v1987 = vld [vmem:[#allocation8 + $0x1b8] sm:$0xff]
    %v1988 = vld [vmem:[#allocation8 + $0x1c0] sm:$0xff]
    %v1989 = vld [vmem:[#allocation8 + $0x1c8] sm:$0xff]
    %v1990 = vld [vmem:[#allocation8 + $0x1d0] sm:$0xff]
    %v1991 = vld [vmem:[#allocation8 + $0x1d8] sm:$0xff]
    %v1992 = vld [vmem:[#allocation8 + $0x1e0] sm:$0xff]
    %v1993 = vld [vmem:[#allocation8 + $0x1e8] sm:$0xff]
    %v1994 = vld [vmem:[#allocation8 + $0x1f0] sm:$0xff]
    %v1995 = vld [vmem:[#allocation8 + $0x1f8] sm:$0xff]
    %v1996 = vld [vmem:[#allocation8 + $0x200] sm:$0xff]
    %v1997 = vld [vmem:[#allocation8 + $0x208] sm:$0xff]
    %v1998 = vld [vmem:[#allocation8 + $0x210] sm:$0xff]
    %v1999 = vld [vmem:[#allocation8 + $0x218] sm:$0xff]
    %v2000 = vld [vmem:[#allocation8 + $0x220] sm:$0xff]
    %v2001 = vld [vmem:[#allocation8 + $0x228] sm:$0xff]
    %v2002 = vld [vmem:[#allocation8 + $0x230] sm:$0xff]
    %v2003 = vld [vmem:[#allocation8 + $0x238] sm:$0xff]
    %v2004 = vld [vmem:[#allocation8 + $0x240] sm:$0xff]
    %v2005 = vld [vmem:[#allocation8 + $0x248] sm:$0xff]
    %v2006 = vld [vmem:[#allocation8 + $0x250] sm:$0xff]
    %v2007 = vld [vmem:[#allocation8 + $0x258] sm:$0xff]
    %v2008 = vld [vmem:[#allocation8 + $0x260] sm:$0xff]
    %v2009 = vld [vmem:[#allocation8 + $0x268] sm:$0xff]
    %v2010 = vld [vmem:[#allocation8 + $0x270] sm:$0xff]
    %v2011 = vld [vmem:[#allocation8 + $0x278] sm:$0xff]
    %v2012 = vld [vmem:[#allocation8 + $0x280] sm:$0xff]
    %v2013 = vld [vmem:[#allocation8 + $0x288] sm:$0xff]
    %v2014 = vld [vmem:[#allocation8 + $0x290] sm:$0xff]
    %v2015 = vld [vmem:[#allocation8 + $0x298] sm:$0xff]
    %v2016 = vld [vmem:[#allocation8 + $0x2a0] sm:$0xff]
    %v2017 = vld [vmem:[#allocation8 + $0x2a8] sm:$0xff]
    %v2018 = vld [vmem:[#allocation8 + $0x2b0] sm:$0xff]
    %v2019 = vld [vmem:[#allocation8 + $0x2b8] sm:$0xff]
    %v2020 = vld [vmem:[#allocation8 + $0x2c0] sm:$0xff]
    %v2021 = vld [vmem:[#allocation8 + $0x2c8] sm:$0xff]
    %v2022 = vld [vmem:[#allocation8 + $0x2d0] sm:$0xff]
    %v2023 = vld [vmem:[#allocation8 + $0x2d8] sm:$0xff]
    %v2024 = vld [vmem:[#allocation8 + $0x2e0] sm:$0xff]
    %v2025 = vld [vmem:[#allocation8 + $0x2e8] sm:$0xff]
    %v2026 = vld [vmem:[#allocation8 + $0x2f0] sm:$0xff]
    %v2027 = vld [vmem:[#allocation8 + $0x2f8] sm:$0xff]
    %v2028 = vld [vmem:[#allocation8 + $0x300] sm:$0xff]
    %v2029 = vld [vmem:[#allocation8 + $0x308] sm:$0xff]
    %v2030 = vld [vmem:[#allocation8 + $0x310] sm:$0xff]
    %v2031 = vld [vmem:[#allocation8 + $0x318] sm:$0xff]
    %v2032 = vld [vmem:[#allocation8 + $0x320] sm:$0xff]
    %v2033 = vld [vmem:[#allocation8 + $0x328] sm:$0xff]
    %v2034 = vld [vmem:[#allocation8 + $0x330] sm:$0xff]
    %v2035 = vld [vmem:[#allocation8 + $0x338] sm:$0xff]
    %v2036 = vld [vmem:[#allocation8 + $0x340] sm:$0xff]
    %v2037 = vld [vmem:[#allocation8 + $0x348] sm:$0xff]
    %v2038 = vld [vmem:[#allocation8 + $0x350] sm:$0xff]
    %v2039 = vld [vmem:[#allocation8 + $0x358] sm:$0xff]
    %v2040 = vld [vmem:[#allocation8 + $0x360] sm:$0xff]
    %v2041 = vld [vmem:[#allocation8 + $0x368] sm:$0xff]
    %v2042 = vld [vmem:[#allocation8 + $0x370] sm:$0xff]
    %v2043 = vld [vmem:[#allocation8 + $0x378] sm:$0xff]
    %v2044 = vld [vmem:[#allocation8 + $0x380] sm:$0xff]
    %v2045 = vld [vmem:[#allocation8 + $0x388] sm:$0xff]
    %v2046 = vld [vmem:[#allocation8 + $0x390] sm:$0xff]
    %v2047 = vld [vmem:[#allocation8 + $0x398] sm:$0xff]
    %v2048 = vld [vmem:[#allocation8 + $0x3a0] sm:$0xff]
    %v2049 = vld [vmem:[#allocation8 + $0x3a8] sm:$0xff]
    %v2050 = vld [vmem:[#allocation8 + $0x3b0] sm:$0xff]
    %v2051 = vld [vmem:[#allocation8 + $0x3b8] sm:$0xff]
    %v2052 = vld [vmem:[#allocation8 + $0x3c0] sm:$0xff]
    %v2053 = vld [vmem:[#allocation8 + $0x3c8] sm:$0xff]
    %v2054 = vld [vmem:[#allocation8 + $0x3d0] sm:$0xff]
    %v2055 = vld [vmem:[#allocation8 + $0x3d8] sm:$0xff]
    %v2056 = vld [vmem:[#allocation8 + $0x3e0] sm:$0xff]
    %v2057 = vld [vmem:[#allocation8 + $0x3e8] sm:$0xff]
    %v2058 = vld [vmem:[#allocation8 + $0x3f0] sm:$0xff]
    %v2059 = vld [vmem:[#allocation8 + $0x3f8] sm:$0xff]
    %v2060 = vld [vmem:[#allocation8 + $0x400] sm:$0xff]
    %v2061 = vld [vmem:[#allocation8 + $0x408] sm:$0xff]
    %v2062 = vld [vmem:[#allocation8 + $0x410] sm:$0xff]
    %v2063 = vld [vmem:[#allocation8 + $0x418] sm:$0xff]
    %v2064 = vld [vmem:[#allocation8 + $0x420] sm:$0xff]
    %v2065 = vld [vmem:[#allocation8 + $0x428] sm:$0xff]
    %v2066 = vld [vmem:[#allocation8 + $0x430] sm:$0xff]
    %v2067 = vld [vmem:[#allocation8 + $0x438] sm:$0xff]
    %v2068 = vld [vmem:[#allocation8 + $0x440] sm:$0xff]
    %v2069 = vld [vmem:[#allocation8 + $0x448] sm:$0xff]
    %v2070 = vld [vmem:[#allocation8 + $0x450] sm:$0xff]
    %v2071 = vld [vmem:[#allocation8 + $0x458] sm:$0xff]
    %v2072 = vld [vmem:[#allocation8 + $0x460] sm:$0xff]
    %v2073 = vld [vmem:[#allocation8 + $0x468] sm:$0xff]
    %v2074 = vld [vmem:[#allocation8 + $0x470] sm:$0xff]
    %v2075 = vld [vmem:[#allocation8 + $0x478] sm:$0xff]
    %v2076 = vld [vmem:[#allocation8 + $0x480] sm:$0xff]
    %v2077 = vld [vmem:[#allocation8 + $0x488] sm:$0xff]
    %v2078 = vld [vmem:[#allocation8 + $0x490] sm:$0xff]
    %v2079 = vld [vmem:[#allocation8 + $0x498] sm:$0xff]
    %v2080 = vld [vmem:[#allocation8 + $0x4a0] sm:$0xff]
    %v2081 = vld [vmem:[#allocation8 + $0x4a8] sm:$0xff]
    %v2082 = vld [vmem:[#allocation8 + $0x4b0] sm:$0xff]
    %v2083 = vld [vmem:[#allocation8 + $0x4b8] sm:$0xff]
    %v2084 = vld [vmem:[#allocation8 + $0x4c0] sm:$0xff]
    %v2085 = vld [vmem:[#allocation8 + $0x4c8] sm:$0xff]
    %v2086 = vld [vmem:[#allocation8 + $0x4d0] sm:$0xff]
    %v2087 = vld [vmem:[#allocation8 + $0x4d8] sm:$0xff]
    %v2088 = vld [vmem:[#allocation8 + $0x4e0] sm:$0xff]
    %v2089 = vld [vmem:[#allocation8 + $0x4e8] sm:$0xff]
    %v2090 = vld [vmem:[#allocation8 + $0x4f0] sm:$0xff]
    %v2091 = vld [vmem:[#allocation8 + $0x4f8] sm:$0xff]
    %v2092 = vld [vmem:[#allocation8 + $0x500] sm:$0xff]
    %v2093 = vld [vmem:[#allocation8 + $0x508] sm:$0xff]
    %v2094 = vld [vmem:[#allocation8 + $0x510] sm:$0xff]
    %v2095 = vld [vmem:[#allocation8 + $0x518] sm:$0xff]
    %v2096 = vld [vmem:[#allocation8 + $0x520] sm:$0xff]
    %v2097 = vld [vmem:[#allocation8 + $0x528] sm:$0xff]
    %v2098 = vld [vmem:[#allocation8 + $0x530] sm:$0xff]
    %v2099 = vld [vmem:[#allocation8 + $0x538] sm:$0xff]
    %v2100 = vld [vmem:[#allocation8 + $0x540] sm:$0xff]
    %v2101 = vld [vmem:[#allocation8 + $0x548] sm:$0xff]
    %v2102 = vld [vmem:[#allocation8 + $0x550] sm:$0xff]
    %v2103 = vld [vmem:[#allocation8 + $0x558] sm:$0xff]
    %v2104 = vld [vmem:[#allocation8 + $0x560] sm:$0xff]
    %v2105 = vld [vmem:[#allocation8 + $0x568] sm:$0xff]
    %v2106 = vld [vmem:[#allocation8 + $0x570] sm:$0xff]
    %v2107 = vld [vmem:[#allocation8 + $0x578] sm:$0xff]
    %v2108 = vld [vmem:[#allocation8 + $0x580] sm:$0xff]
    %v2109 = vld [vmem:[#allocation8 + $0x588] sm:$0xff]
    %v2110 = vld [vmem:[#allocation8 + $0x590] sm:$0xff]
    %v2111 = vld [vmem:[#allocation8 + $0x598] sm:$0xff]
    %v2112 = vld [vmem:[#allocation8 + $0x5a0] sm:$0xff]
    %v2113 = vld [vmem:[#allocation8 + $0x5a8] sm:$0xff]
    %v2114 = vld [vmem:[#allocation8 + $0x5b0] sm:$0xff]
    %v2115 = vld [vmem:[#allocation8 + $0x5b8] sm:$0xff]
    %v2116 = vld [vmem:[#allocation8 + $0x5c0] sm:$0xff]
    %v2117 = vld [vmem:[#allocation8 + $0x5c8] sm:$0xff]
    %v2118 = vld [vmem:[#allocation8 + $0x5d0] sm:$0xff]
    %v2119 = vld [vmem:[#allocation8 + $0x5d8] sm:$0xff]
    %v2120 = vld [vmem:[#allocation8 + $0x5e0] sm:$0xff]
    %v2121 = vld [vmem:[#allocation8 + $0x5e8] sm:$0xff]
    %v2122 = vld [vmem:[#allocation8 + $0x5f0] sm:$0xff]
    %v2123 = vld [vmem:[#allocation8 + $0x5f8] sm:$0xff]
    %v2124 = vld [vmem:[#allocation8 + $0x600] sm:$0xff]
    %v2125 = vld [vmem:[#allocation8 + $0x608] sm:$0xff]
    %v2126 = vld [vmem:[#allocation8 + $0x610] sm:$0xff]
    %v2127 = vld [vmem:[#allocation8 + $0x618] sm:$0xff]
    %v2128 = vld [vmem:[#allocation8 + $0x620] sm:$0xff]
    %v2129 = vld [vmem:[#allocation8 + $0x628] sm:$0xff]
    %v2130 = vld [vmem:[#allocation8 + $0x630] sm:$0xff]
    %v2131 = vld [vmem:[#allocation8 + $0x638] sm:$0xff]
    %v2132 = vld [vmem:[#allocation8 + $0x640] sm:$0xff]
    %v2133 = vld [vmem:[#allocation8 + $0x648] sm:$0xff]
    %v2134 = vld [vmem:[#allocation8 + $0x650] sm:$0xff]
    %v2135 = vld [vmem:[#allocation8 + $0x658] sm:$0xff]
    %v2136 = vld [vmem:[#allocation8 + $0x660] sm:$0xff]
    %v2137 = vld [vmem:[#allocation8 + $0x668] sm:$0xff]
    %v2138 = vld [vmem:[#allocation8 + $0x670] sm:$0xff]
    %v2139 = vld [vmem:[#allocation8 + $0x678] sm:$0xff]
    %v2140 = vld [vmem:[#allocation8 + $0x680] sm:$0xff]
    %v2141 = vld [vmem:[#allocation8 + $0x688] sm:$0xff]
    %v2142 = vld [vmem:[#allocation8 + $0x690] sm:$0xff]
    %v2143 = vld [vmem:[#allocation8 + $0x698] sm:$0xff]
    %v2144 = vld [vmem:[#allocation8 + $0x6a0] sm:$0xff]
    %v2145 = vld [vmem:[#allocation8 + $0x6a8] sm:$0xff]
    %v2146 = vld [vmem:[#allocation8 + $0x6b0] sm:$0xff]
    %v2147 = vld [vmem:[#allocation8 + $0x6b8] sm:$0xff]
    %v2148 = vld [vmem:[#allocation8 + $0x6c0] sm:$0xff]
    %v2149 = vld [vmem:[#allocation8 + $0x6c8] sm:$0xff]
    %v2150 = vld [vmem:[#allocation8 + $0x6d0] sm:$0xff]
    %v2151 = vld [vmem:[#allocation8 + $0x6d8] sm:$0xff]
    %v2152 = vld [vmem:[#allocation8 + $0x6e0] sm:$0xff]
    %v2153 = vld [vmem:[#allocation8 + $0x6e8] sm:$0xff]
    %v2154 = vld [vmem:[#allocation8 + $0x6f0] sm:$0xff]
    %v2155 = vld [vmem:[#allocation8 + $0x6f8] sm:$0xff]
    %v2156 = vld [vmem:[#allocation8 + $0x700] sm:$0xff]
    %v2157 = vld [vmem:[#allocation8 + $0x708] sm:$0xff]
    %v2158 = vld [vmem:[#allocation8 + $0x710] sm:$0xff]
    %v2159 = vld [vmem:[#allocation8 + $0x718] sm:$0xff]
    %v2160 = vld [vmem:[#allocation8 + $0x720] sm:$0xff]
    %v2161 = vld [vmem:[#allocation8 + $0x728] sm:$0xff]
    %v2162 = vld [vmem:[#allocation8 + $0x730] sm:$0xff]
    %v2163 = vld [vmem:[#allocation8 + $0x738] sm:$0xff]
    %v2164 = vld [vmem:[#allocation8 + $0x740] sm:$0xff]
    %v2165 = vld [vmem:[#allocation8 + $0x748] sm:$0xff]
    %v2166 = vld [vmem:[#allocation8 + $0x750] sm:$0xff]
    %v2167 = vld [vmem:[#allocation8 + $0x758] sm:$0xff]
    %v2168 = vld [vmem:[#allocation8 + $0x760] sm:$0xff]
    %v2169 = vld [vmem:[#allocation8 + $0x768] sm:$0xff]
    %v2170 = vld [vmem:[#allocation8 + $0x770] sm:$0xff]
    %v2171 = vld [vmem:[#allocation8 + $0x778] sm:$0xff]
    %v2172 = vld [vmem:[#allocation8 + $0x780] sm:$0xff]
    %v2173 = vld [vmem:[#allocation8 + $0x788] sm:$0xff]
    %v2174 = vld [vmem:[#allocation8 + $0x790] sm:$0xff]
    %v2175 = vld [vmem:[#allocation8 + $0x798] sm:$0xff]
    %v2176 = vld [vmem:[#allocation8 + $0x7a0] sm:$0xff]
    %v2177 = vld [vmem:[#allocation8 + $0x7a8] sm:$0xff]
    %v2178 = vld [vmem:[#allocation8 + $0x7b0] sm:$0xff]
    %v2179 = vld [vmem:[#allocation8 + $0x7b8] sm:$0xff]
    %v2180 = vld [vmem:[#allocation8 + $0x7c0] sm:$0xff]
    %v2181 = vld [vmem:[#allocation8 + $0x7c8] sm:$0xff]
    %v2182 = vld [vmem:[#allocation8 + $0x7d0] sm:$0xff]
    %v2183 = vld [vmem:[#allocation8 + $0x7d8] sm:$0xff]
    %v2184 = vld [vmem:[#allocation8 + $0x7e0] sm:$0xff]
    %v2185 = vld [vmem:[#allocation8 + $0x7e8] sm:$0xff]
    %v2186 = vld [vmem:[#allocation8 + $0x7f0] sm:$0xff]
    %v2187 = vld [vmem:[#allocation8 + $0x7f8] sm:$0xff]
    %v2188 = vld [vmem:[#allocation8 + $0x800] sm:$0xff]
    %v2189 = vld [vmem:[#allocation8 + $0x808] sm:$0xff]
    %v2190 = vld [vmem:[#allocation8 + $0x810] sm:$0xff]
    %v2191 = vld [vmem:[#allocation8 + $0x818] sm:$0xff]
    %v2192 = vld [vmem:[#allocation8 + $0x820] sm:$0xff]
    %v2193 = vld [vmem:[#allocation8 + $0x828] sm:$0xff]
    %v2194 = vld [vmem:[#allocation8 + $0x830] sm:$0xff]
    %v2195 = vld [vmem:[#allocation8 + $0x838] sm:$0xff]
    %v2196 = vld [vmem:[#allocation8 + $0x840] sm:$0xff]
    %v2197 = vld [vmem:[#allocation8 + $0x848] sm:$0xff]
    %v2198 = vld [vmem:[#allocation8 + $0x850] sm:$0xff]
    %v2199 = vld [vmem:[#allocation8 + $0x858] sm:$0xff]
    %v2200 = vld [vmem:[#allocation8 + $0x860] sm:$0xff]
    %v2201 = vld [vmem:[#allocation8 + $0x868] sm:$0xff]
    %v2202 = vld [vmem:[#allocation8 + $0x870] sm:$0xff]
    %v2203 = vld [vmem:[#allocation8 + $0x878] sm:$0xff]
    %v2204 = vld [vmem:[#allocation8 + $0x880] sm:$0xff]
    %v2205 = vld [vmem:[#allocation8 + $0x888] sm:$0xff]
    %v2206 = vld [vmem:[#allocation8 + $0x890] sm:$0xff]
    %v2207 = vld [vmem:[#allocation8 + $0x898] sm:$0xff]
    %v2208 = vld [vmem:[#allocation8 + $0x8a0] sm:$0xff]
    %v2209 = vld [vmem:[#allocation8 + $0x8a8] sm:$0xff]
    %v2210 = vld [vmem:[#allocation8 + $0x8b0] sm:$0xff]
    %v2211 = vld [vmem:[#allocation8 + $0x8b8] sm:$0xff]
    %v2212 = vld [vmem:[#allocation8 + $0x8c0] sm:$0xff]
    %v2213 = vld [vmem:[#allocation8 + $0x8c8] sm:$0xff]
    %v2214 = vld [vmem:[#allocation8 + $0x8d0] sm:$0xff]
    %v2215 = vld [vmem:[#allocation8 + $0x8d8] sm:$0xff]
    %v2216 = vld [vmem:[#allocation8 + $0x8e0] sm:$0xff]
    %v2217 = vld [vmem:[#allocation8 + $0x8e8] sm:$0xff]
    %v2218 = vld [vmem:[#allocation8 + $0x8f0] sm:$0xff]
    %v2219 = vld [vmem:[#allocation8 + $0x8f8] sm:$0xff]
    %v2220 = vunpack.c.l.bf16 %v1932
    %v2221 = vunpack.c.h.bf16 %v1932
    %v2222 = vunpack.c.l.bf16 %v1933
    %v2223 = vunpack.c.h.bf16 %v1933
    %v2224 = vunpack.c.l.bf16 %v1934
    %v2225 = vunpack.c.h.bf16 %v1934
    %v2226 = vunpack.c.l.bf16 %v1935
    %v2227 = vunpack.c.h.bf16 %v1935
    %v2228 = vunpack.c.l.bf16 %v1936
    %v2229 = vunpack.c.h.bf16 %v1936
    %v2230 = vunpack.c.l.bf16 %v1937
    %v2231 = vunpack.c.h.bf16 %v1937
    %v2232 = vunpack.c.l.bf16 %v1938
    %v2233 = vunpack.c.h.bf16 %v1938
    %v2234 = vunpack.c.l.bf16 %v1939
    %v2235 = vunpack.c.h.bf16 %v1939
    %v2236 = vunpack.c.l.bf16 %v1940
    %v2237 = vunpack.c.h.bf16 %v1940
    %v2238 = vunpack.c.l.bf16 %v1941
    %v2239 = vunpack.c.h.bf16 %v1941
    %v2240 = vunpack.c.l.bf16 %v1942
    %v2241 = vunpack.c.h.bf16 %v1942
    %v2242 = vunpack.c.l.bf16 %v1943
    %v2243 = vunpack.c.h.bf16 %v1943
    %v2244 = vunpack.c.l.bf16 %v1944
    %v2245 = vunpack.c.h.bf16 %v1944
    %v2246 = vunpack.c.l.bf16 %v1945
    %v2247 = vunpack.c.h.bf16 %v1945
    %v2248 = vunpack.c.l.bf16 %v1946
    %v2249 = vunpack.c.h.bf16 %v1946
    %v2250 = vunpack.c.l.bf16 %v1947
    %v2251 = vunpack.c.h.bf16 %v1947
    %v2252 = vunpack.c.l.bf16 %v1948
    %v2253 = vunpack.c.h.bf16 %v1948
    %v2254 = vunpack.c.l.bf16 %v1949
    %v2255 = vunpack.c.h.bf16 %v1949
    %v2256 = vunpack.c.l.bf16 %v1950
    %v2257 = vunpack.c.h.bf16 %v1950
    %v2258 = vunpack.c.l.bf16 %v1951
    %v2259 = vunpack.c.h.bf16 %v1951
    %v2260 = vunpack.c.l.bf16 %v1952
    %v2261 = vunpack.c.h.bf16 %v1952
    %v2262 = vunpack.c.l.bf16 %v1953
    %v2263 = vunpack.c.h.bf16 %v1953
    %v2264 = vunpack.c.l.bf16 %v1954
    %v2265 = vunpack.c.h.bf16 %v1954
    %v2266 = vunpack.c.l.bf16 %v1955
    %v2267 = vunpack.c.h.bf16 %v1955
    %v2268 = vunpack.c.l.bf16 %v1956
    %v2269 = vunpack.c.h.bf16 %v1956
    %v2270 = vunpack.c.l.bf16 %v1957
    %v2271 = vunpack.c.h.bf16 %v1957
    %v2272 = vunpack.c.l.bf16 %v1958
    %v2273 = vunpack.c.h.bf16 %v1958
    %v2274 = vunpack.c.l.bf16 %v1959
    %v2275 = vunpack.c.h.bf16 %v1959
    %v2276 = vunpack.c.l.bf16 %v1960
    %v2277 = vunpack.c.h.bf16 %v1960
    %v2278 = vunpack.c.l.bf16 %v1961
    %v2279 = vunpack.c.h.bf16 %v1961
    %v2280 = vunpack.c.l.bf16 %v1962
    %v2281 = vunpack.c.h.bf16 %v1962
    %v2282 = vunpack.c.l.bf16 %v1963
    %v2283 = vunpack.c.h.bf16 %v1963
    %v2284 = vunpack.c.l.bf16 %v1964
    %v2285 = vunpack.c.h.bf16 %v1964
    %v2286 = vunpack.c.l.bf16 %v1965
    %v2287 = vunpack.c.h.bf16 %v1965
    %v2288 = vunpack.c.l.bf16 %v1966
    %v2289 = vunpack.c.h.bf16 %v1966
    %v2290 = vunpack.c.l.bf16 %v1967
    %v2291 = vunpack.c.h.bf16 %v1967
    %v2292 = vunpack.c.l.bf16 %v1968
    %v2293 = vunpack.c.h.bf16 %v1968
    %v2294 = vunpack.c.l.bf16 %v1969
    %v2295 = vunpack.c.h.bf16 %v1969
    %v2296 = vunpack.c.l.bf16 %v1970
    %v2297 = vunpack.c.h.bf16 %v1970
    %v2298 = vunpack.c.l.bf16 %v1971
    %v2299 = vunpack.c.h.bf16 %v1971
    %v2300 = vunpack.c.l.bf16 %v1972
    %v2301 = vunpack.c.h.bf16 %v1972
    %v2302 = vunpack.c.l.bf16 %v1973
    %v2303 = vunpack.c.h.bf16 %v1973
    %v2304 = vunpack.c.l.bf16 %v1974
    %v2305 = vunpack.c.h.bf16 %v1974
    %v2306 = vunpack.c.l.bf16 %v1975
    %v2307 = vunpack.c.h.bf16 %v1975
    %v2308 = vunpack.c.l.bf16 %v1976
    %v2309 = vunpack.c.h.bf16 %v1976
    %v2310 = vunpack.c.l.bf16 %v1977
    %v2311 = vunpack.c.h.bf16 %v1977
    %v2312 = vunpack.c.l.bf16 %v1978
    %v2313 = vunpack.c.h.bf16 %v1978
    %v2314 = vunpack.c.l.bf16 %v1979
    %v2315 = vunpack.c.h.bf16 %v1979
    %v2316 = vunpack.c.l.bf16 %v1980
    %v2317 = vunpack.c.h.bf16 %v1980
    %v2318 = vunpack.c.l.bf16 %v1981
    %v2319 = vunpack.c.h.bf16 %v1981
    %v2320 = vunpack.c.l.bf16 %v1982
    %v2321 = vunpack.c.h.bf16 %v1982
    %v2322 = vunpack.c.l.bf16 %v1983
    %v2323 = vunpack.c.h.bf16 %v1983
    %v2324 = vunpack.c.l.bf16 %v1984
    %v2325 = vunpack.c.h.bf16 %v1984
    %v2326 = vunpack.c.l.bf16 %v1985
    %v2327 = vunpack.c.h.bf16 %v1985
    %v2328 = vunpack.c.l.bf16 %v1986
    %v2329 = vunpack.c.h.bf16 %v1986
    %v2330 = vunpack.c.l.bf16 %v1987
    %v2331 = vunpack.c.h.bf16 %v1987
    %v2332 = vunpack.c.l.bf16 %v1988
    %v2333 = vunpack.c.h.bf16 %v1988
    %v2334 = vunpack.c.l.bf16 %v1989
    %v2335 = vunpack.c.h.bf16 %v1989
    %v2336 = vunpack.c.l.bf16 %v1990
    %v2337 = vunpack.c.h.bf16 %v1990
    %v2338 = vunpack.c.l.bf16 %v1991
    %v2339 = vunpack.c.h.bf16 %v1991
    %v2340 = vunpack.c.l.bf16 %v1992
    %v2341 = vunpack.c.h.bf16 %v1992
    %v2342 = vunpack.c.l.bf16 %v1993
    %v2343 = vunpack.c.h.bf16 %v1993
    %v2344 = vunpack.c.l.bf16 %v1994
    %v2345 = vunpack.c.h.bf16 %v1994
    %v2346 = vunpack.c.l.bf16 %v1995
    %v2347 = vunpack.c.h.bf16 %v1995
    %v2348 = vunpack.c.l.bf16 %v1996
    %v2349 = vunpack.c.h.bf16 %v1996
    %v2350 = vunpack.c.l.bf16 %v1997
    %v2351 = vunpack.c.h.bf16 %v1997
    %v2352 = vunpack.c.l.bf16 %v1998
    %v2353 = vunpack.c.h.bf16 %v1998
    %v2354 = vunpack.c.l.bf16 %v1999
    %v2355 = vunpack.c.h.bf16 %v1999
    %v2356 = vunpack.c.l.bf16 %v2000
    %v2357 = vunpack.c.h.bf16 %v2000
    %v2358 = vunpack.c.l.bf16 %v2001
    %v2359 = vunpack.c.h.bf16 %v2001
    %v2360 = vunpack.c.l.bf16 %v2002
    %v2361 = vunpack.c.h.bf16 %v2002
    %v2362 = vunpack.c.l.bf16 %v2003
    %v2363 = vunpack.c.h.bf16 %v2003
    %v2364 = vunpack.c.l.bf16 %v2004
    %v2365 = vunpack.c.h.bf16 %v2004
    %v2366 = vunpack.c.l.bf16 %v2005
    %v2367 = vunpack.c.h.bf16 %v2005
    %v2368 = vunpack.c.l.bf16 %v2006
    %v2369 = vunpack.c.h.bf16 %v2006
    %v2370 = vunpack.c.l.bf16 %v2007
    %v2371 = vunpack.c.h.bf16 %v2007
    %v2372 = vunpack.c.l.bf16 %v2008
    %v2373 = vunpack.c.h.bf16 %v2008
    %v2374 = vunpack.c.l.bf16 %v2009
    %v2375 = vunpack.c.h.bf16 %v2009
    %v2376 = vunpack.c.l.bf16 %v2010
    %v2377 = vunpack.c.h.bf16 %v2010
    %v2378 = vunpack.c.l.bf16 %v2011
    %v2379 = vunpack.c.h.bf16 %v2011
    %v2380 = vunpack.c.l.bf16 %v2012
    %v2381 = vunpack.c.h.bf16 %v2012
    %v2382 = vunpack.c.l.bf16 %v2013
    %v2383 = vunpack.c.h.bf16 %v2013
    %v2384 = vunpack.c.l.bf16 %v2014
    %v2385 = vunpack.c.h.bf16 %v2014
    %v2386 = vunpack.c.l.bf16 %v2015
    %v2387 = vunpack.c.h.bf16 %v2015
    %v2388 = vunpack.c.l.bf16 %v2016
    %v2389 = vunpack.c.h.bf16 %v2016
    %v2390 = vunpack.c.l.bf16 %v2017
    %v2391 = vunpack.c.h.bf16 %v2017
    %v2392 = vunpack.c.l.bf16 %v2018
    %v2393 = vunpack.c.h.bf16 %v2018
    %v2394 = vunpack.c.l.bf16 %v2019
    %v2395 = vunpack.c.h.bf16 %v2019
    %v2396 = vunpack.c.l.bf16 %v2020
    %v2397 = vunpack.c.h.bf16 %v2020
    %v2398 = vunpack.c.l.bf16 %v2021
    %v2399 = vunpack.c.h.bf16 %v2021
    %v2400 = vunpack.c.l.bf16 %v2022
    %v2401 = vunpack.c.h.bf16 %v2022
    %v2402 = vunpack.c.l.bf16 %v2023
    %v2403 = vunpack.c.h.bf16 %v2023
    %v2404 = vunpack.c.l.bf16 %v2024
    %v2405 = vunpack.c.h.bf16 %v2024
    %v2406 = vunpack.c.l.bf16 %v2025
    %v2407 = vunpack.c.h.bf16 %v2025
    %v2408 = vunpack.c.l.bf16 %v2026
    %v2409 = vunpack.c.h.bf16 %v2026
    %v2410 = vunpack.c.l.bf16 %v2027
    %v2411 = vunpack.c.h.bf16 %v2027
    %v2412 = vunpack.c.l.bf16 %v2028
    %v2413 = vunpack.c.h.bf16 %v2028
    %v2414 = vunpack.c.l.bf16 %v2029
    %v2415 = vunpack.c.h.bf16 %v2029
    %v2416 = vunpack.c.l.bf16 %v2030
    %v2417 = vunpack.c.h.bf16 %v2030
    %v2418 = vunpack.c.l.bf16 %v2031
    %v2419 = vunpack.c.h.bf16 %v2031
    %v2420 = vunpack.c.l.bf16 %v2032
    %v2421 = vunpack.c.h.bf16 %v2032
    %v2422 = vunpack.c.l.bf16 %v2033
    %v2423 = vunpack.c.h.bf16 %v2033
    %v2424 = vunpack.c.l.bf16 %v2034
    %v2425 = vunpack.c.h.bf16 %v2034
    %v2426 = vunpack.c.l.bf16 %v2035
    %v2427 = vunpack.c.h.bf16 %v2035
    %v2428 = vunpack.c.l.bf16 %v2036
    %v2429 = vunpack.c.h.bf16 %v2036
    %v2430 = vunpack.c.l.bf16 %v2037
    %v2431 = vunpack.c.h.bf16 %v2037
    %v2432 = vunpack.c.l.bf16 %v2038
    %v2433 = vunpack.c.h.bf16 %v2038
    %v2434 = vunpack.c.l.bf16 %v2039
    %v2435 = vunpack.c.h.bf16 %v2039
    %v2436 = vunpack.c.l.bf16 %v2040
    %v2437 = vunpack.c.h.bf16 %v2040
    %v2438 = vunpack.c.l.bf16 %v2041
    %v2439 = vunpack.c.h.bf16 %v2041
    %v2440 = vunpack.c.l.bf16 %v2042
    %v2441 = vunpack.c.h.bf16 %v2042
    %v2442 = vunpack.c.l.bf16 %v2043
    %v2443 = vunpack.c.h.bf16 %v2043
    %v2444 = vunpack.c.l.bf16 %v2044
    %v2445 = vunpack.c.h.bf16 %v2044
    %v2446 = vunpack.c.l.bf16 %v2045
    %v2447 = vunpack.c.h.bf16 %v2045
    %v2448 = vunpack.c.l.bf16 %v2046
    %v2449 = vunpack.c.h.bf16 %v2046
    %v2450 = vunpack.c.l.bf16 %v2047
    %v2451 = vunpack.c.h.bf16 %v2047
    %v2452 = vunpack.c.l.bf16 %v2048
    %v2453 = vunpack.c.h.bf16 %v2048
    %v2454 = vunpack.c.l.bf16 %v2049
    %v2455 = vunpack.c.h.bf16 %v2049
    %v2456 = vunpack.c.l.bf16 %v2050
    %v2457 = vunpack.c.h.bf16 %v2050
    %v2458 = vunpack.c.l.bf16 %v2051
    %v2459 = vunpack.c.h.bf16 %v2051
    %v2460 = vunpack.c.l.bf16 %v2052
    %v2461 = vunpack.c.h.bf16 %v2052
    %v2462 = vunpack.c.l.bf16 %v2053
    %v2463 = vunpack.c.h.bf16 %v2053
    %v2464 = vunpack.c.l.bf16 %v2054
    %v2465 = vunpack.c.h.bf16 %v2054
    %v2466 = vunpack.c.l.bf16 %v2055
    %v2467 = vunpack.c.h.bf16 %v2055
    %v2468 = vunpack.c.l.bf16 %v2056
    %v2469 = vunpack.c.h.bf16 %v2056
    %v2470 = vunpack.c.l.bf16 %v2057
    %v2471 = vunpack.c.h.bf16 %v2057
    %v2472 = vunpack.c.l.bf16 %v2058
    %v2473 = vunpack.c.h.bf16 %v2058
    %v2474 = vunpack.c.l.bf16 %v2059
    %v2475 = vunpack.c.h.bf16 %v2059
    %v2476 = vunpack.c.l.bf16 %v2060
    %v2477 = vunpack.c.h.bf16 %v2060
    %v2478 = vunpack.c.l.bf16 %v2061
    %v2479 = vunpack.c.h.bf16 %v2061
    %v2480 = vunpack.c.l.bf16 %v2062
    %v2481 = vunpack.c.h.bf16 %v2062
    %v2482 = vunpack.c.l.bf16 %v2063
    %v2483 = vunpack.c.h.bf16 %v2063
    %v2484 = vunpack.c.l.bf16 %v2064
    %v2485 = vunpack.c.h.bf16 %v2064
    %v2486 = vunpack.c.l.bf16 %v2065
    %v2487 = vunpack.c.h.bf16 %v2065
    %v2488 = vunpack.c.l.bf16 %v2066
    %v2489 = vunpack.c.h.bf16 %v2066
    %v2490 = vunpack.c.l.bf16 %v2067
    %v2491 = vunpack.c.h.bf16 %v2067
    %v2492 = vunpack.c.l.bf16 %v2068
    %v2493 = vunpack.c.h.bf16 %v2068
    %v2494 = vunpack.c.l.bf16 %v2069
    %v2495 = vunpack.c.h.bf16 %v2069
    %v2496 = vunpack.c.l.bf16 %v2070
    %v2497 = vunpack.c.h.bf16 %v2070
    %v2498 = vunpack.c.l.bf16 %v2071
    %v2499 = vunpack.c.h.bf16 %v2071
    %v2500 = vunpack.c.l.bf16 %v2072
    %v2501 = vunpack.c.h.bf16 %v2072
    %v2502 = vunpack.c.l.bf16 %v2073
    %v2503 = vunpack.c.h.bf16 %v2073
    %v2504 = vunpack.c.l.bf16 %v2074
    %v2505 = vunpack.c.h.bf16 %v2074
    %v2506 = vunpack.c.l.bf16 %v2075
    %v2507 = vunpack.c.h.bf16 %v2075
    %v2508 = vunpack.c.l.bf16 %v2076
    %v2509 = vunpack.c.h.bf16 %v2076
    %v2510 = vunpack.c.l.bf16 %v2077
    %v2511 = vunpack.c.h.bf16 %v2077
    %v2512 = vunpack.c.l.bf16 %v2078
    %v2513 = vunpack.c.h.bf16 %v2078
    %v2514 = vunpack.c.l.bf16 %v2079
    %v2515 = vunpack.c.h.bf16 %v2079
    %v2516 = vunpack.c.l.bf16 %v2080
    %v2517 = vunpack.c.h.bf16 %v2080
    %v2518 = vunpack.c.l.bf16 %v2081
    %v2519 = vunpack.c.h.bf16 %v2081
    %v2520 = vunpack.c.l.bf16 %v2082
    %v2521 = vunpack.c.h.bf16 %v2082
    %v2522 = vunpack.c.l.bf16 %v2083
    %v2523 = vunpack.c.h.bf16 %v2083
    %v2524 = vunpack.c.l.bf16 %v2084
    %v2525 = vunpack.c.h.bf16 %v2084
    %v2526 = vunpack.c.l.bf16 %v2085
    %v2527 = vunpack.c.h.bf16 %v2085
    %v2528 = vunpack.c.l.bf16 %v2086
    %v2529 = vunpack.c.h.bf16 %v2086
    %v2530 = vunpack.c.l.bf16 %v2087
    %v2531 = vunpack.c.h.bf16 %v2087
    %v2532 = vunpack.c.l.bf16 %v2088
    %v2533 = vunpack.c.h.bf16 %v2088
    %v2534 = vunpack.c.l.bf16 %v2089
    %v2535 = vunpack.c.h.bf16 %v2089
    %v2536 = vunpack.c.l.bf16 %v2090
    %v2537 = vunpack.c.h.bf16 %v2090
    %v2538 = vunpack.c.l.bf16 %v2091
    %v2539 = vunpack.c.h.bf16 %v2091
    %v2540 = vunpack.c.l.bf16 %v2092
    %v2541 = vunpack.c.h.bf16 %v2092
    %v2542 = vunpack.c.l.bf16 %v2093
    %v2543 = vunpack.c.h.bf16 %v2093
    %v2544 = vunpack.c.l.bf16 %v2094
    %v2545 = vunpack.c.h.bf16 %v2094
    %v2546 = vunpack.c.l.bf16 %v2095
    %v2547 = vunpack.c.h.bf16 %v2095
    %v2548 = vunpack.c.l.bf16 %v2096
    %v2549 = vunpack.c.h.bf16 %v2096
    %v2550 = vunpack.c.l.bf16 %v2097
    %v2551 = vunpack.c.h.bf16 %v2097
    %v2552 = vunpack.c.l.bf16 %v2098
    %v2553 = vunpack.c.h.bf16 %v2098
    %v2554 = vunpack.c.l.bf16 %v2099
    %v2555 = vunpack.c.h.bf16 %v2099
    %v2556 = vunpack.c.l.bf16 %v2100
    %v2557 = vunpack.c.h.bf16 %v2100
    %v2558 = vunpack.c.l.bf16 %v2101
    %v2559 = vunpack.c.h.bf16 %v2101
    %v2560 = vunpack.c.l.bf16 %v2102
    %v2561 = vunpack.c.h.bf16 %v2102
    %v2562 = vunpack.c.l.bf16 %v2103
    %v2563 = vunpack.c.h.bf16 %v2103
    %v2564 = vunpack.c.l.bf16 %v2104
    %v2565 = vunpack.c.h.bf16 %v2104
    %v2566 = vunpack.c.l.bf16 %v2105
    %v2567 = vunpack.c.h.bf16 %v2105
    %v2568 = vunpack.c.l.bf16 %v2106
    %v2569 = vunpack.c.h.bf16 %v2106
    %v2570 = vunpack.c.l.bf16 %v2107
    %v2571 = vunpack.c.h.bf16 %v2107
    %v2572 = vunpack.c.l.bf16 %v2108
    %v2573 = vunpack.c.h.bf16 %v2108
    %v2574 = vunpack.c.l.bf16 %v2109
    %v2575 = vunpack.c.h.bf16 %v2109
    %v2576 = vunpack.c.l.bf16 %v2110
    %v2577 = vunpack.c.h.bf16 %v2110
    %v2578 = vunpack.c.l.bf16 %v2111
    %v2579 = vunpack.c.h.bf16 %v2111
    %v2580 = vunpack.c.l.bf16 %v2112
    %v2581 = vunpack.c.h.bf16 %v2112
    %v2582 = vunpack.c.l.bf16 %v2113
    %v2583 = vunpack.c.h.bf16 %v2113
    %v2584 = vunpack.c.l.bf16 %v2114
    %v2585 = vunpack.c.h.bf16 %v2114
    %v2586 = vunpack.c.l.bf16 %v2115
    %v2587 = vunpack.c.h.bf16 %v2115
    %v2588 = vunpack.c.l.bf16 %v2116
    %v2589 = vunpack.c.h.bf16 %v2116
    %v2590 = vunpack.c.l.bf16 %v2117
    %v2591 = vunpack.c.h.bf16 %v2117
    %v2592 = vunpack.c.l.bf16 %v2118
    %v2593 = vunpack.c.h.bf16 %v2118
    %v2594 = vunpack.c.l.bf16 %v2119
    %v2595 = vunpack.c.h.bf16 %v2119
    %v2596 = vunpack.c.l.bf16 %v2120
    %v2597 = vunpack.c.h.bf16 %v2120
    %v2598 = vunpack.c.l.bf16 %v2121
    %v2599 = vunpack.c.h.bf16 %v2121
    %v2600 = vunpack.c.l.bf16 %v2122
    %v2601 = vunpack.c.h.bf16 %v2122
    %v2602 = vunpack.c.l.bf16 %v2123
    %v2603 = vunpack.c.h.bf16 %v2123
    %v2604 = vunpack.c.l.bf16 %v2124
    %v2605 = vunpack.c.h.bf16 %v2124
    %v2606 = vunpack.c.l.bf16 %v2125
    %v2607 = vunpack.c.h.bf16 %v2125
    %v2608 = vunpack.c.l.bf16 %v2126
    %v2609 = vunpack.c.h.bf16 %v2126
    %v2610 = vunpack.c.l.bf16 %v2127
    %v2611 = vunpack.c.h.bf16 %v2127
    %v2612 = vunpack.c.l.bf16 %v2128
    %v2613 = vunpack.c.h.bf16 %v2128
    %v2614 = vunpack.c.l.bf16 %v2129
    %v2615 = vunpack.c.h.bf16 %v2129
    %v2616 = vunpack.c.l.bf16 %v2130
    %v2617 = vunpack.c.h.bf16 %v2130
    %v2618 = vunpack.c.l.bf16 %v2131
    %v2619 = vunpack.c.h.bf16 %v2131
    %v2620 = vunpack.c.l.bf16 %v2132
    %v2621 = vunpack.c.h.bf16 %v2132
    %v2622 = vunpack.c.l.bf16 %v2133
    %v2623 = vunpack.c.h.bf16 %v2133
    %v2624 = vunpack.c.l.bf16 %v2134
    %v2625 = vunpack.c.h.bf16 %v2134
    %v2626 = vunpack.c.l.bf16 %v2135
    %v2627 = vunpack.c.h.bf16 %v2135
    %v2628 = vunpack.c.l.bf16 %v2136
    %v2629 = vunpack.c.h.bf16 %v2136
    %v2630 = vunpack.c.l.bf16 %v2137
    %v2631 = vunpack.c.h.bf16 %v2137
    %v2632 = vunpack.c.l.bf16 %v2138
    %v2633 = vunpack.c.h.bf16 %v2138
    %v2634 = vunpack.c.l.bf16 %v2139
    %v2635 = vunpack.c.h.bf16 %v2139
    %v2636 = vunpack.c.l.bf16 %v2140
    %v2637 = vunpack.c.h.bf16 %v2140
    %v2638 = vunpack.c.l.bf16 %v2141
    %v2639 = vunpack.c.h.bf16 %v2141
    %v2640 = vunpack.c.l.bf16 %v2142
    %v2641 = vunpack.c.h.bf16 %v2142
    %v2642 = vunpack.c.l.bf16 %v2143
    %v2643 = vunpack.c.h.bf16 %v2143
    %v2644 = vunpack.c.l.bf16 %v2144
    %v2645 = vunpack.c.h.bf16 %v2144
    %v2646 = vunpack.c.l.bf16 %v2145
    %v2647 = vunpack.c.h.bf16 %v2145
    %v2648 = vunpack.c.l.bf16 %v2146
    %v2649 = vunpack.c.h.bf16 %v2146
    %v2650 = vunpack.c.l.bf16 %v2147
    %v2651 = vunpack.c.h.bf16 %v2147
    %v2652 = vunpack.c.l.bf16 %v2148
    %v2653 = vunpack.c.h.bf16 %v2148
    %v2654 = vunpack.c.l.bf16 %v2149
    %v2655 = vunpack.c.h.bf16 %v2149
    %v2656 = vunpack.c.l.bf16 %v2150
    %v2657 = vunpack.c.h.bf16 %v2150
    %v2658 = vunpack.c.l.bf16 %v2151
    %v2659 = vunpack.c.h.bf16 %v2151
    %v2660 = vunpack.c.l.bf16 %v2152
    %v2661 = vunpack.c.h.bf16 %v2152
    %v2662 = vunpack.c.l.bf16 %v2153
    %v2663 = vunpack.c.h.bf16 %v2153
    %v2664 = vunpack.c.l.bf16 %v2154
    %v2665 = vunpack.c.h.bf16 %v2154
    %v2666 = vunpack.c.l.bf16 %v2155
    %v2667 = vunpack.c.h.bf16 %v2155
    %v2668 = vunpack.c.l.bf16 %v2156
    %v2669 = vunpack.c.h.bf16 %v2156
    %v2670 = vunpack.c.l.bf16 %v2157
    %v2671 = vunpack.c.h.bf16 %v2157
    %v2672 = vunpack.c.l.bf16 %v2158
    %v2673 = vunpack.c.h.bf16 %v2158
    %v2674 = vunpack.c.l.bf16 %v2159
    %v2675 = vunpack.c.h.bf16 %v2159
    %v2676 = vunpack.c.l.bf16 %v2160
    %v2677 = vunpack.c.h.bf16 %v2160
    %v2678 = vunpack.c.l.bf16 %v2161
    %v2679 = vunpack.c.h.bf16 %v2161
    %v2680 = vunpack.c.l.bf16 %v2162
    %v2681 = vunpack.c.h.bf16 %v2162
    %v2682 = vunpack.c.l.bf16 %v2163
    %v2683 = vunpack.c.h.bf16 %v2163
    %v2684 = vunpack.c.l.bf16 %v2164
    %v2685 = vunpack.c.h.bf16 %v2164
    %v2686 = vunpack.c.l.bf16 %v2165
    %v2687 = vunpack.c.h.bf16 %v2165
    %v2688 = vunpack.c.l.bf16 %v2166
    %v2689 = vunpack.c.h.bf16 %v2166
    %v2690 = vunpack.c.l.bf16 %v2167
    %v2691 = vunpack.c.h.bf16 %v2167
    %v2692 = vunpack.c.l.bf16 %v2168
    %v2693 = vunpack.c.h.bf16 %v2168
    %v2694 = vunpack.c.l.bf16 %v2169
    %v2695 = vunpack.c.h.bf16 %v2169
    %v2696 = vunpack.c.l.bf16 %v2170
    %v2697 = vunpack.c.h.bf16 %v2170
    %v2698 = vunpack.c.l.bf16 %v2171
    %v2699 = vunpack.c.h.bf16 %v2171
    %v2700 = vunpack.c.l.bf16 %v2172
    %v2701 = vunpack.c.h.bf16 %v2172
    %v2702 = vunpack.c.l.bf16 %v2173
    %v2703 = vunpack.c.h.bf16 %v2173
    %v2704 = vunpack.c.l.bf16 %v2174
    %v2705 = vunpack.c.h.bf16 %v2174
    %v2706 = vunpack.c.l.bf16 %v2175
    %v2707 = vunpack.c.h.bf16 %v2175
    %v2708 = vunpack.c.l.bf16 %v2176
    %v2709 = vunpack.c.h.bf16 %v2176
    %v2710 = vunpack.c.l.bf16 %v2177
    %v2711 = vunpack.c.h.bf16 %v2177
    %v2712 = vunpack.c.l.bf16 %v2178
    %v2713 = vunpack.c.h.bf16 %v2178
    %v2714 = vunpack.c.l.bf16 %v2179
    %v2715 = vunpack.c.h.bf16 %v2179
    %v2716 = vunpack.c.l.bf16 %v2180
    %v2717 = vunpack.c.h.bf16 %v2180
    %v2718 = vunpack.c.l.bf16 %v2181
    %v2719 = vunpack.c.h.bf16 %v2181
    %v2720 = vunpack.c.l.bf16 %v2182
    %v2721 = vunpack.c.h.bf16 %v2182
    %v2722 = vunpack.c.l.bf16 %v2183
    %v2723 = vunpack.c.h.bf16 %v2183
    %v2724 = vunpack.c.l.bf16 %v2184
    %v2725 = vunpack.c.h.bf16 %v2184
    %v2726 = vunpack.c.l.bf16 %v2185
    %v2727 = vunpack.c.h.bf16 %v2185
    %v2728 = vunpack.c.l.bf16 %v2186
    %v2729 = vunpack.c.h.bf16 %v2186
    %v2730 = vunpack.c.l.bf16 %v2187
    %v2731 = vunpack.c.h.bf16 %v2187
    %v2732 = vunpack.c.l.bf16 %v2188
    %v2733 = vunpack.c.h.bf16 %v2188
    %v2734 = vunpack.c.l.bf16 %v2189
    %v2735 = vunpack.c.h.bf16 %v2189
    %v2736 = vunpack.c.l.bf16 %v2190
    %v2737 = vunpack.c.h.bf16 %v2190
    %v2738 = vunpack.c.l.bf16 %v2191
    %v2739 = vunpack.c.h.bf16 %v2191
    %v2740 = vunpack.c.l.bf16 %v2192
    %v2741 = vunpack.c.h.bf16 %v2192
    %v2742 = vunpack.c.l.bf16 %v2193
    %v2743 = vunpack.c.h.bf16 %v2193
    %v2744 = vunpack.c.l.bf16 %v2194
    %v2745 = vunpack.c.h.bf16 %v2194
    %v2746 = vunpack.c.l.bf16 %v2195
    %v2747 = vunpack.c.h.bf16 %v2195
    %v2748 = vunpack.c.l.bf16 %v2196
    %v2749 = vunpack.c.h.bf16 %v2196
    %v2750 = vunpack.c.l.bf16 %v2197
    %v2751 = vunpack.c.h.bf16 %v2197
    %v2752 = vunpack.c.l.bf16 %v2198
    %v2753 = vunpack.c.h.bf16 %v2198
    %v2754 = vunpack.c.l.bf16 %v2199
    %v2755 = vunpack.c.h.bf16 %v2199
    %v2756 = vunpack.c.l.bf16 %v2200
    %v2757 = vunpack.c.h.bf16 %v2200
    %v2758 = vunpack.c.l.bf16 %v2201
    %v2759 = vunpack.c.h.bf16 %v2201
    %v2760 = vunpack.c.l.bf16 %v2202
    %v2761 = vunpack.c.h.bf16 %v2202
    %v2762 = vunpack.c.l.bf16 %v2203
    %v2763 = vunpack.c.h.bf16 %v2203
    %v2764 = vunpack.c.l.bf16 %v2204
    %v2765 = vunpack.c.h.bf16 %v2204
    %v2766 = vunpack.c.l.bf16 %v2205
    %v2767 = vunpack.c.h.bf16 %v2205
    %v2768 = vunpack.c.l.bf16 %v2206
    %v2769 = vunpack.c.h.bf16 %v2206
    %v2770 = vunpack.c.l.bf16 %v2207
    %v2771 = vunpack.c.h.bf16 %v2207
    %v2772 = vunpack.c.l.bf16 %v2208
    %v2773 = vunpack.c.h.bf16 %v2208
    %v2774 = vunpack.c.l.bf16 %v2209
    %v2775 = vunpack.c.h.bf16 %v2209
    %v2776 = vunpack.c.l.bf16 %v2210
    %v2777 = vunpack.c.h.bf16 %v2210
    %v2778 = vunpack.c.l.bf16 %v2211
    %v2779 = vunpack.c.h.bf16 %v2211
    %v2780 = vunpack.c.l.bf16 %v2212
    %v2781 = vunpack.c.h.bf16 %v2212
    %v2782 = vunpack.c.l.bf16 %v2213
    %v2783 = vunpack.c.h.bf16 %v2213
    %v2784 = vunpack.c.l.bf16 %v2214
    %v2785 = vunpack.c.h.bf16 %v2214
    %v2786 = vunpack.c.l.bf16 %v2215
    %v2787 = vunpack.c.h.bf16 %v2215
    %v2788 = vunpack.c.l.bf16 %v2216
    %v2789 = vunpack.c.h.bf16 %v2216
    %v2790 = vunpack.c.l.bf16 %v2217
    %v2791 = vunpack.c.h.bf16 %v2217
    %v2792 = vunpack.c.l.bf16 %v2218
    %v2793 = vunpack.c.h.bf16 %v2218
    %v2794 = vunpack.c.l.bf16 %v2219
    %v2795 = vunpack.c.h.bf16 %v2219
    %v2796 = vld [vmem:[#allocation10] sm:$0x3f]
    %v2798 = vperm.slane %v2796, 0
    %v2799 = vperm.slane %v2796, 1
    %v2800 = vperm.slane %v2796, 2
    %v2801 = vperm.slane %v2796, 3
    %v2802 = vperm.slane %v2796, 4
    %v2803 = vperm.slane %v2796, 5
    %2810 = vmatpush.msra.mxu0 %v582
    %2811 = vmatpush.msra.mxu0 %v576
    %2812 = vmatpush.msra.mxu0 %v570
    %2813 = vmatpush.msra.mxu0 %v564
    %2814 = vmatpush.msra.mxu0 %v558
    %2815 = vmatpush.msra.mxu0 %v552
    %2816 = vmatpush.msra.mxu0 %v546
    %2817 = vmatpush.msra.mxu0 %v540
    %2818 = vmatpush.msra.mxu0 %v534
    %2819 = vmatpush.msra.mxu0 %v528
    %2820 = vmatpush.msra.mxu0 %v522
    %2821 = vmatpush.msra.mxu0 %v516
    %2822 = vmatpush.msra.mxu0 %v510
    %2823 = vmatpush.msra.mxu0 %v504
    %2824 = vmatpush.msra.mxu0 %v498
    %2825 = vmatpush.msra.mxu0 %v492
    %2826 = vmatmul.f32.gmra.mxu0 %v198
    %v2827 = vpop.f32.mrf.mxu0
    %v2828 = vadd.f32 %v2798, %v2827
    %2829 = vdwg.mxu0
    %2830 = vmatpush.msra.mxu0 %v678
    %2831 = vmatpush.msra.mxu0 %v672
    %2832 = vmatpush.msra.mxu0 %v666
    %2833 = vmatpush.msra.mxu0 %v660
    %2834 = vmatpush.msra.mxu0 %v654
    %2835 = vmatpush.msra.mxu0 %v648
    %2836 = vmatpush.msra.mxu0 %v642
    %2837 = vmatpush.msra.mxu0 %v636
    %2838 = vmatpush.msra.mxu0 %v630
    %2839 = vmatpush.msra.mxu0 %v624
    %2840 = vmatpush.msra.mxu0 %v618
    %2841 = vmatpush.msra.mxu0 %v612
    %2842 = vmatpush.msra.mxu0 %v606
    %2843 = vmatpush.msra.mxu0 %v600
    %2844 = vmatpush.msra.mxu0 %v594
    %2845 = vmatpush.msra.mxu0 %v588
    %2846 = vmatmul.f32.gmra.mxu0 %v199
    %v2847 = vpop.f32.mrf.mxu0
    %v2848 = vadd.f32 %v2828, %v2847
    %2849 = vdwg.mxu0
    %2850 = vmatpush.msra.mxu0 %v774
    %2851 = vmatpush.msra.mxu0 %v768
    %2852 = vmatpush.msra.mxu0 %v762
    %2853 = vmatpush.msra.mxu0 %v756
    %2854 = vmatpush.msra.mxu0 %v750
    %2855 = vmatpush.msra.mxu0 %v744
    %2856 = vmatpush.msra.mxu0 %v738
    %2857 = vmatpush.msra.mxu0 %v732
    %2858 = vmatpush.msra.mxu0 %v726
    %2859 = vmatpush.msra.mxu0 %v720
    %2860 = vmatpush.msra.mxu0 %v714
    %2861 = vmatpush.msra.mxu0 %v708
    %2862 = vmatpush.msra.mxu0 %v702
    %2863 = vmatpush.msra.mxu0 %v696
    %2864 = vmatpush.msra.mxu0 %v690
    %2865 = vmatpush.msra.mxu0 %v684
    %2866 = vmatmul.f32.gmra.mxu0 %v200
    %v2867 = vpop.f32.mrf.mxu0
    %v2868 = vadd.f32 %v2848, %v2867
    %2869 = vdwg.mxu0
    %2870 = vmatpush.msra.mxu0 %v870
    %2871 = vmatpush.msra.mxu0 %v864
    %2872 = vmatpush.msra.mxu0 %v858
    %2873 = vmatpush.msra.mxu0 %v852
    %2874 = vmatpush.msra.mxu0 %v846
    %2875 = vmatpush.msra.mxu0 %v840
    %2876 = vmatpush.msra.mxu0 %v834
    %2877 = vmatpush.msra.mxu0 %v828
    %2878 = vmatpush.msra.mxu0 %v822
    %2879 = vmatpush.msra.mxu0 %v816
    %2880 = vmatpush.msra.mxu0 %v810
    %2881 = vmatpush.msra.mxu0 %v804
    %2882 = vmatpush.msra.mxu0 %v798
    %2883 = vmatpush.msra.mxu0 %v792
    %2884 = vmatpush.msra.mxu0 %v786
    %2885 = vmatpush.msra.mxu0 %v780
    %2886 = vmatmul.f32.gmra.mxu0 %v201
    %v2887 = vpop.f32.mrf.mxu0
    %v2888 = vadd.f32 %v2868, %v2887
    %2889 = vdwg.mxu0
    %2890 = vmatpush.msra.mxu0 %v966
    %2891 = vmatpush.msra.mxu0 %v960
    %2892 = vmatpush.msra.mxu0 %v954
    %2893 = vmatpush.msra.mxu0 %v948
    %2894 = vmatpush.msra.mxu0 %v942
    %2895 = vmatpush.msra.mxu0 %v936
    %2896 = vmatpush.msra.mxu0 %v930
    %2897 = vmatpush.msra.mxu0 %v924
    %2898 = vmatpush.msra.mxu0 %v918
    %2899 = vmatpush.msra.mxu0 %v912
    %2900 = vmatpush.msra.mxu0 %v906
    %2901 = vmatpush.msra.mxu0 %v900
    %2902 = vmatpush.msra.mxu0 %v894
    %2903 = vmatpush.msra.mxu0 %v888
    %2904 = vmatpush.msra.mxu0 %v882
    %2905 = vmatpush.msra.mxu0 %v876
    %2906 = vmatmul.f32.gmra.mxu0 %v202
    %v2907 = vpop.f32.mrf.mxu0
    %v2908 = vadd.f32 %v2888, %v2907
    %2909 = vdwg.mxu0
    %2910 = vmatpush.msra.mxu0 %v1062
    %2911 = vmatpush.msra.mxu0 %v1056
    %2912 = vmatpush.msra.mxu0 %v1050
    %2913 = vmatpush.msra.mxu0 %v1044
    %2914 = vmatpush.msra.mxu0 %v1038
    %2915 = vmatpush.msra.mxu0 %v1032
    %2916 = vmatpush.msra.mxu0 %v1026
    %2917 = vmatpush.msra.mxu0 %v1020
    %2918 = vmatpush.msra.mxu0 %v1014
    %2919 = vmatpush.msra.mxu0 %v1008
    %2920 = vmatpush.msra.mxu0 %v1002
    %2921 = vmatpush.msra.mxu0 %v996
    %2922 = vmatpush.msra.mxu0 %v990
    %2923 = vmatpush.msra.mxu0 %v984
    %2924 = vmatpush.msra.mxu0 %v978
    %2925 = vmatpush.msra.mxu0 %v972
    %2926 = vmatmul.f32.gmra.mxu0 %v203
    %v2927 = vpop.f32.mrf.mxu0
    %v2928 = vadd.f32 %v2908, %v2927
    %2929 = vdwg.mxu0
    %2930 = vmatpush.msra.mxu0 %v583
    %2931 = vmatpush.msra.mxu0 %v577
    %2932 = vmatpush.msra.mxu0 %v571
    %2933 = vmatpush.msra.mxu0 %v565
    %2934 = vmatpush.msra.mxu0 %v559
    %2935 = vmatpush.msra.mxu0 %v553
    %2936 = vmatpush.msra.mxu0 %v547
    %2937 = vmatpush.msra.mxu0 %v541
    %2938 = vmatpush.msra.mxu0 %v535
    %2939 = vmatpush.msra.mxu0 %v529
    %2940 = vmatpush.msra.mxu0 %v523
    %2941 = vmatpush.msra.mxu0 %v517
    %2942 = vmatpush.msra.mxu0 %v511
    %2943 = vmatpush.msra.mxu0 %v505
    %2944 = vmatpush.msra.mxu0 %v499
    %2945 = vmatpush.msra.mxu0 %v493
    %2946 = vmatmul.f32.gmra.mxu0 %v198
    %v2947 = vpop.f32.mrf.mxu0
    %v2948 = vadd.f32 %v2799, %v2947
    %2949 = vdwg.mxu0
    %2950 = vmatpush.msra.mxu0 %v679
    %2951 = vmatpush.msra.mxu0 %v673
    %2952 = vmatpush.msra.mxu0 %v667
    %2953 = vmatpush.msra.mxu0 %v661
    %2954 = vmatpush.msra.mxu0 %v655
    %2955 = vmatpush.msra.mxu0 %v649
    %2956 = vmatpush.msra.mxu0 %v643
    %2957 = vmatpush.msra.mxu0 %v637
    %2958 = vmatpush.msra.mxu0 %v631
    %2959 = vmatpush.msra.mxu0 %v625
    %2960 = vmatpush.msra.mxu0 %v619
    %2961 = vmatpush.msra.mxu0 %v613
    %2962 = vmatpush.msra.mxu0 %v607
    %2963 = vmatpush.msra.mxu0 %v601
    %2964 = vmatpush.msra.mxu0 %v595
    %2965 = vmatpush.msra.mxu0 %v589
    %2966 = vmatmul.f32.gmra.mxu0 %v199
    %v2967 = vpop.f32.mrf.mxu0
    %v2968 = vadd.f32 %v2948, %v2967
    %2969 = vdwg.mxu0
    %2970 = vmatpush.msra.mxu0 %v775
    %2971 = vmatpush.msra.mxu0 %v769
    %2972 = vmatpush.msra.mxu0 %v763
    %2973 = vmatpush.msra.mxu0 %v757
    %2974 = vmatpush.msra.mxu0 %v751
    %2975 = vmatpush.msra.mxu0 %v745
    %2976 = vmatpush.msra.mxu0 %v739
    %2977 = vmatpush.msra.mxu0 %v733
    %2978 = vmatpush.msra.mxu0 %v727
    %2979 = vmatpush.msra.mxu0 %v721
    %2980 = vmatpush.msra.mxu0 %v715
    %2981 = vmatpush.msra.mxu0 %v709
    %2982 = vmatpush.msra.mxu0 %v703
    %2983 = vmatpush.msra.mxu0 %v697
    %2984 = vmatpush.msra.mxu0 %v691
    %2985 = vmatpush.msra.mxu0 %v685
    %2986 = vmatmul.f32.gmra.mxu0 %v200
    %v2987 = vpop.f32.mrf.mxu0
    %v2988 = vadd.f32 %v2968, %v2987
    %2989 = vdwg.mxu0
    %2990 = vmatpush.msra.mxu0 %v871
    %2991 = vmatpush.msra.mxu0 %v865
    %2992 = vmatpush.msra.mxu0 %v859
    %2993 = vmatpush.msra.mxu0 %v853
    %2994 = vmatpush.msra.mxu0 %v847
    %2995 = vmatpush.msra.mxu0 %v841
    %2996 = vmatpush.msra.mxu0 %v835
    %2997 = vmatpush.msra.mxu0 %v829
    %2998 = vmatpush.msra.mxu0 %v823
    %2999 = vmatpush.msra.mxu0 %v817
    %3000 = vmatpush.msra.mxu0 %v811
    %3001 = vmatpush.msra.mxu0 %v805
    %3002 = vmatpush.msra.mxu0 %v799
    %3003 = vmatpush.msra.mxu0 %v793
    %3004 = vmatpush.msra.mxu0 %v787
    %3005 = vmatpush.msra.mxu0 %v781
    %3006 = vmatmul.f32.gmra.mxu0 %v201
    %v3007 = vpop.f32.mrf.mxu0
    %v3008 = vadd.f32 %v2988, %v3007
    %3009 = vdwg.mxu0
    %3010 = vmatpush.msra.mxu0 %v967
    %3011 = vmatpush.msra.mxu0 %v961
    %3012 = vmatpush.msra.mxu0 %v955
    %3013 = vmatpush.msra.mxu0 %v949
    %3014 = vmatpush.msra.mxu0 %v943
    %3015 = vmatpush.msra.mxu0 %v937
    %3016 = vmatpush.msra.mxu0 %v931
    %3017 = vmatpush.msra.mxu0 %v925
    %3018 = vmatpush.msra.mxu0 %v919
    %3019 = vmatpush.msra.mxu0 %v913
    %3020 = vmatpush.msra.mxu0 %v907
    %3021 = vmatpush.msra.mxu0 %v901
    %3022 = vmatpush.msra.mxu0 %v895
    %3023 = vmatpush.msra.mxu0 %v889
    %3024 = vmatpush.msra.mxu0 %v883
    %3025 = vmatpush.msra.mxu0 %v877
    %3026 = vmatmul.f32.gmra.mxu0 %v202
    %v3027 = vpop.f32.mrf.mxu0
    %v3028 = vadd.f32 %v3008, %v3027
    %3029 = vdwg.mxu0
    %3030 = vmatpush.msra.mxu0 %v1063
    %3031 = vmatpush.msra.mxu0 %v1057
    %3032 = vmatpush.msra.mxu0 %v1051
    %3033 = vmatpush.msra.mxu0 %v1045
    %3034 = vmatpush.msra.mxu0 %v1039
    %3035 = vmatpush.msra.mxu0 %v1033
    %3036 = vmatpush.msra.mxu0 %v1027
    %3037 = vmatpush.msra.mxu0 %v1021
    %3038 = vmatpush.msra.mxu0 %v1015
    %3039 = vmatpush.msra.mxu0 %v1009
    %3040 = vmatpush.msra.mxu0 %v1003
    %3041 = vmatpush.msra.mxu0 %v997
    %3042 = vmatpush.msra.mxu0 %v991
    %3043 = vmatpush.msra.mxu0 %v985
    %3044 = vmatpush.msra.mxu0 %v979
    %3045 = vmatpush.msra.mxu0 %v973
    %3046 = vmatmul.f32.gmra.mxu0 %v203
    %v3047 = vpop.f32.mrf.mxu0
    %v3048 = vadd.f32 %v3028, %v3047
    %3049 = vdwg.mxu0
    %3050 = vmatpush.msra.mxu0 %v584
    %3051 = vmatpush.msra.mxu0 %v578
    %3052 = vmatpush.msra.mxu0 %v572
    %3053 = vmatpush.msra.mxu0 %v566
    %3054 = vmatpush.msra.mxu0 %v560
    %3055 = vmatpush.msra.mxu0 %v554
    %3056 = vmatpush.msra.mxu0 %v548
    %3057 = vmatpush.msra.mxu0 %v542
    %3058 = vmatpush.msra.mxu0 %v536
    %3059 = vmatpush.msra.mxu0 %v530
    %3060 = vmatpush.msra.mxu0 %v524
    %3061 = vmatpush.msra.mxu0 %v518
    %3062 = vmatpush.msra.mxu0 %v512
    %3063 = vmatpush.msra.mxu0 %v506
    %3064 = vmatpush.msra.mxu0 %v500
    %3065 = vmatpush.msra.mxu0 %v494
    %3066 = vmatmul.f32.gmra.mxu0 %v198
    %v3067 = vpop.f32.mrf.mxu0
    %v3068 = vadd.f32 %v2800, %v3067
    %3069 = vdwg.mxu0
    %3070 = vmatpush.msra.mxu0 %v680
    %3071 = vmatpush.msra.mxu0 %v674
    %3072 = vmatpush.msra.mxu0 %v668
    %3073 = vmatpush.msra.mxu0 %v662
    %3074 = vmatpush.msra.mxu0 %v656
    %3075 = vmatpush.msra.mxu0 %v650
    %3076 = vmatpush.msra.mxu0 %v644
    %3077 = vmatpush.msra.mxu0 %v638
    %3078 = vmatpush.msra.mxu0 %v632
    %3079 = vmatpush.msra.mxu0 %v626
    %3080 = vmatpush.msra.mxu0 %v620
    %3081 = vmatpush.msra.mxu0 %v614
    %3082 = vmatpush.msra.mxu0 %v608
    %3083 = vmatpush.msra.mxu0 %v602
    %3084 = vmatpush.msra.mxu0 %v596
    %3085 = vmatpush.msra.mxu0 %v590
    %3086 = vmatmul.f32.gmra.mxu0 %v199
    %v3087 = vpop.f32.mrf.mxu0
    %v3088 = vadd.f32 %v3068, %v3087
    %3089 = vdwg.mxu0
    %3090 = vmatpush.msra.mxu0 %v776
    %3091 = vmatpush.msra.mxu0 %v770
    %3092 = vmatpush.msra.mxu0 %v764
    %3093 = vmatpush.msra.mxu0 %v758
    %3094 = vmatpush.msra.mxu0 %v752
    %3095 = vmatpush.msra.mxu0 %v746
    %3096 = vmatpush.msra.mxu0 %v740
    %3097 = vmatpush.msra.mxu0 %v734
    %3098 = vmatpush.msra.mxu0 %v728
    %3099 = vmatpush.msra.mxu0 %v722
    %3100 = vmatpush.msra.mxu0 %v716
    %3101 = vmatpush.msra.mxu0 %v710
    %3102 = vmatpush.msra.mxu0 %v704
    %3103 = vmatpush.msra.mxu0 %v698
    %3104 = vmatpush.msra.mxu0 %v692
    %3105 = vmatpush.msra.mxu0 %v686
    %3106 = vmatmul.f32.gmra.mxu0 %v200
    %v3107 = vpop.f32.mrf.mxu0
    %v3108 = vadd.f32 %v3088, %v3107
    %3109 = vdwg.mxu0
    %3110 = vmatpush.msra.mxu0 %v872
    %3111 = vmatpush.msra.mxu0 %v866
    %3112 = vmatpush.msra.mxu0 %v860
    %3113 = vmatpush.msra.mxu0 %v854
    %3114 = vmatpush.msra.mxu0 %v848
    %3115 = vmatpush.msra.mxu0 %v842
    %3116 = vmatpush.msra.mxu0 %v836
    %3117 = vmatpush.msra.mxu0 %v830
    %3118 = vmatpush.msra.mxu0 %v824
    %3119 = vmatpush.msra.mxu0 %v818
    %3120 = vmatpush.msra.mxu0 %v812
    %3121 = vmatpush.msra.mxu0 %v806
    %3122 = vmatpush.msra.mxu0 %v800
    %3123 = vmatpush.msra.mxu0 %v794
    %3124 = vmatpush.msra.mxu0 %v788
    %3125 = vmatpush.msra.mxu0 %v782
    %3126 = vmatmul.f32.gmra.mxu0 %v201
    %v3127 = vpop.f32.mrf.mxu0
    %v3128 = vadd.f32 %v3108, %v3127
    %3129 = vdwg.mxu0
    %3130 = vmatpush.msra.mxu0 %v968
    %3131 = vmatpush.msra.mxu0 %v962
    %3132 = vmatpush.msra.mxu0 %v956
    %3133 = vmatpush.msra.mxu0 %v950
    %3134 = vmatpush.msra.mxu0 %v944
    %3135 = vmatpush.msra.mxu0 %v938
    %3136 = vmatpush.msra.mxu0 %v932
    %3137 = vmatpush.msra.mxu0 %v926
    %3138 = vmatpush.msra.mxu0 %v920
    %3139 = vmatpush.msra.mxu0 %v914
    %3140 = vmatpush.msra.mxu0 %v908
    %3141 = vmatpush.msra.mxu0 %v902
    %3142 = vmatpush.msra.mxu0 %v896
    %3143 = vmatpush.msra.mxu0 %v890
    %3144 = vmatpush.msra.mxu0 %v884
    %3145 = vmatpush.msra.mxu0 %v878
    %3146 = vmatmul.f32.gmra.mxu0 %v202
    %v3147 = vpop.f32.mrf.mxu0
    %v3148 = vadd.f32 %v3128, %v3147
    %3149 = vdwg.mxu0
    %3150 = vmatpush.msra.mxu0 %v1064
    %3151 = vmatpush.msra.mxu0 %v1058
    %3152 = vmatpush.msra.mxu0 %v1052
    %3153 = vmatpush.msra.mxu0 %v1046
    %3154 = vmatpush.msra.mxu0 %v1040
    %3155 = vmatpush.msra.mxu0 %v1034
    %3156 = vmatpush.msra.mxu0 %v1028
    %3157 = vmatpush.msra.mxu0 %v1022
    %3158 = vmatpush.msra.mxu0 %v1016
    %3159 = vmatpush.msra.mxu0 %v1010
    %3160 = vmatpush.msra.mxu0 %v1004
    %3161 = vmatpush.msra.mxu0 %v998
    %3162 = vmatpush.msra.mxu0 %v992
    %3163 = vmatpush.msra.mxu0 %v986
    %3164 = vmatpush.msra.mxu0 %v980
    %3165 = vmatpush.msra.mxu0 %v974
    %3166 = vmatmul.f32.gmra.mxu0 %v203
    %v3167 = vpop.f32.mrf.mxu0
    %v3168 = vadd.f32 %v3148, %v3167
    %3169 = vdwg.mxu0
    %3170 = vmatpush.msra.mxu0 %v585
    %3171 = vmatpush.msra.mxu0 %v579
    %3172 = vmatpush.msra.mxu0 %v573
    %3173 = vmatpush.msra.mxu0 %v567
    %3174 = vmatpush.msra.mxu0 %v561
    %3175 = vmatpush.msra.mxu0 %v555
    %3176 = vmatpush.msra.mxu0 %v549
    %3177 = vmatpush.msra.mxu0 %v543
    %3178 = vmatpush.msra.mxu0 %v537
    %3179 = vmatpush.msra.mxu0 %v531
    %3180 = vmatpush.msra.mxu0 %v525
    %3181 = vmatpush.msra.mxu0 %v519
    %3182 = vmatpush.msra.mxu0 %v513
    %3183 = vmatpush.msra.mxu0 %v507
    %3184 = vmatpush.msra.mxu0 %v501
    %3185 = vmatpush.msra.mxu0 %v495
    %3186 = vmatmul.f32.gmra.mxu0 %v198
    %v3187 = vpop.f32.mrf.mxu0
    %v3188 = vadd.f32 %v2801, %v3187
    %3189 = vdwg.mxu0
    %3190 = vmatpush.msra.mxu0 %v681
    %3191 = vmatpush.msra.mxu0 %v675
    %3192 = vmatpush.msra.mxu0 %v669
    %3193 = vmatpush.msra.mxu0 %v663
    %3194 = vmatpush.msra.mxu0 %v657
    %3195 = vmatpush.msra.mxu0 %v651
    %3196 = vmatpush.msra.mxu0 %v645
    %3197 = vmatpush.msra.mxu0 %v639
    %3198 = vmatpush.msra.mxu0 %v633
    %3199 = vmatpush.msra.mxu0 %v627
    %3200 = vmatpush.msra.mxu0 %v621
    %3201 = vmatpush.msra.mxu0 %v615
    %3202 = vmatpush.msra.mxu0 %v609
    %3203 = vmatpush.msra.mxu0 %v603
    %3204 = vmatpush.msra.mxu0 %v597
    %3205 = vmatpush.msra.mxu0 %v591
    %3206 = vmatmul.f32.gmra.mxu0 %v199
    %v3207 = vpop.f32.mrf.mxu0
    %v3208 = vadd.f32 %v3188, %v3207
    %3209 = vdwg.mxu0
    %3210 = vmatpush.msra.mxu0 %v777
    %3211 = vmatpush.msra.mxu0 %v771
    %3212 = vmatpush.msra.mxu0 %v765
    %3213 = vmatpush.msra.mxu0 %v759
    %3214 = vmatpush.msra.mxu0 %v753
    %3215 = vmatpush.msra.mxu0 %v747
    %3216 = vmatpush.msra.mxu0 %v741
    %3217 = vmatpush.msra.mxu0 %v735
    %3218 = vmatpush.msra.mxu0 %v729
    %3219 = vmatpush.msra.mxu0 %v723
    %3220 = vmatpush.msra.mxu0 %v717
    %3221 = vmatpush.msra.mxu0 %v711
    %3222 = vmatpush.msra.mxu0 %v705
    %3223 = vmatpush.msra.mxu0 %v699
    %3224 = vmatpush.msra.mxu0 %v693
    %3225 = vmatpush.msra.mxu0 %v687
    %3226 = vmatmul.f32.gmra.mxu0 %v200
    %v3227 = vpop.f32.mrf.mxu0
    %v3228 = vadd.f32 %v3208, %v3227
    %3229 = vdwg.mxu0
    %3230 = vmatpush.msra.mxu0 %v873
    %3231 = vmatpush.msra.mxu0 %v867
    %3232 = vmatpush.msra.mxu0 %v861
    %3233 = vmatpush.msra.mxu0 %v855
    %3234 = vmatpush.msra.mxu0 %v849
    %3235 = vmatpush.msra.mxu0 %v843
    %3236 = vmatpush.msra.mxu0 %v837
    %3237 = vmatpush.msra.mxu0 %v831
    %3238 = vmatpush.msra.mxu0 %v825
    %3239 = vmatpush.msra.mxu0 %v819
    %3240 = vmatpush.msra.mxu0 %v813
    %3241 = vmatpush.msra.mxu0 %v807
    %3242 = vmatpush.msra.mxu0 %v801
    %3243 = vmatpush.msra.mxu0 %v795
    %3244 = vmatpush.msra.mxu0 %v789
    %3245 = vmatpush.msra.mxu0 %v783
    %3246 = vmatmul.f32.gmra.mxu0 %v201
    %v3247 = vpop.f32.mrf.mxu0
    %v3248 = vadd.f32 %v3228, %v3247
    %3249 = vdwg.mxu0
    %3250 = vmatpush.msra.mxu0 %v969
    %3251 = vmatpush.msra.mxu0 %v963
    %3252 = vmatpush.msra.mxu0 %v957
    %3253 = vmatpush.msra.mxu0 %v951
    %3254 = vmatpush.msra.mxu0 %v945
    %3255 = vmatpush.msra.mxu0 %v939
    %3256 = vmatpush.msra.mxu0 %v933
    %3257 = vmatpush.msra.mxu0 %v927
    %3258 = vmatpush.msra.mxu0 %v921
    %3259 = vmatpush.msra.mxu0 %v915
    %3260 = vmatpush.msra.mxu0 %v909
    %3261 = vmatpush.msra.mxu0 %v903
    %3262 = vmatpush.msra.mxu0 %v897
    %3263 = vmatpush.msra.mxu0 %v891
    %3264 = vmatpush.msra.mxu0 %v885
    %3265 = vmatpush.msra.mxu0 %v879
    %3266 = vmatmul.f32.gmra.mxu0 %v202
    %v3267 = vpop.f32.mrf.mxu0
    %v3268 = vadd.f32 %v3248, %v3267
    %3269 = vdwg.mxu0
    %3270 = vmatpush.msra.mxu0 %v1065
    %3271 = vmatpush.msra.mxu0 %v1059
    %3272 = vmatpush.msra.mxu0 %v1053
    %3273 = vmatpush.msra.mxu0 %v1047
    %3274 = vmatpush.msra.mxu0 %v1041
    %3275 = vmatpush.msra.mxu0 %v1035
    %3276 = vmatpush.msra.mxu0 %v1029
    %3277 = vmatpush.msra.mxu0 %v1023
    %3278 = vmatpush.msra.mxu0 %v1017
    %3279 = vmatpush.msra.mxu0 %v1011
    %3280 = vmatpush.msra.mxu0 %v1005
    %3281 = vmatpush.msra.mxu0 %v999
    %3282 = vmatpush.msra.mxu0 %v993
    %3283 = vmatpush.msra.mxu0 %v987
    %3284 = vmatpush.msra.mxu0 %v981
    %3285 = vmatpush.msra.mxu0 %v975
    %3286 = vmatmul.f32.gmra.mxu0 %v203
    %v3287 = vpop.f32.mrf.mxu0
    %v3288 = vadd.f32 %v3268, %v3287
    %3289 = vdwg.mxu0
    %3290 = vmatpush.msra.mxu0 %v586
    %3291 = vmatpush.msra.mxu0 %v580
    %3292 = vmatpush.msra.mxu0 %v574
    %3293 = vmatpush.msra.mxu0 %v568
    %3294 = vmatpush.msra.mxu0 %v562
    %3295 = vmatpush.msra.mxu0 %v556
    %3296 = vmatpush.msra.mxu0 %v550
    %3297 = vmatpush.msra.mxu0 %v544
    %3298 = vmatpush.msra.mxu0 %v538
    %3299 = vmatpush.msra.mxu0 %v532
    %3300 = vmatpush.msra.mxu0 %v526
    %3301 = vmatpush.msra.mxu0 %v520
    %3302 = vmatpush.msra.mxu0 %v514
    %3303 = vmatpush.msra.mxu0 %v508
    %3304 = vmatpush.msra.mxu0 %v502
    %3305 = vmatpush.msra.mxu0 %v496
    %3306 = vmatmul.f32.gmra.mxu0 %v198
    %v3307 = vpop.f32.mrf.mxu0
    %v3308 = vadd.f32 %v2802, %v3307
    %3309 = vdwg.mxu0
    %3310 = vmatpush.msra.mxu0 %v682
    %3311 = vmatpush.msra.mxu0 %v676
    %3312 = vmatpush.msra.mxu0 %v670
    %3313 = vmatpush.msra.mxu0 %v664
    %3314 = vmatpush.msra.mxu0 %v658
    %3315 = vmatpush.msra.mxu0 %v652
    %3316 = vmatpush.msra.mxu0 %v646
    %3317 = vmatpush.msra.mxu0 %v640
    %3318 = vmatpush.msra.mxu0 %v634
    %3319 = vmatpush.msra.mxu0 %v628
    %3320 = vmatpush.msra.mxu0 %v622
    %3321 = vmatpush.msra.mxu0 %v616
    %3322 = vmatpush.msra.mxu0 %v610
    %3323 = vmatpush.msra.mxu0 %v604
    %3324 = vmatpush.msra.mxu0 %v598
    %3325 = vmatpush.msra.mxu0 %v592
    %3326 = vmatmul.f32.gmra.mxu0 %v199
    %v3327 = vpop.f32.mrf.mxu0
    %v3328 = vadd.f32 %v3308, %v3327
    %3329 = vdwg.mxu0
    %3330 = vmatpush.msra.mxu0 %v778
    %3331 = vmatpush.msra.mxu0 %v772
    %3332 = vmatpush.msra.mxu0 %v766
    %3333 = vmatpush.msra.mxu0 %v760
    %3334 = vmatpush.msra.mxu0 %v754
    %3335 = vmatpush.msra.mxu0 %v748
    %3336 = vmatpush.msra.mxu0 %v742
    %3337 = vmatpush.msra.mxu0 %v736
    %3338 = vmatpush.msra.mxu0 %v730
    %3339 = vmatpush.msra.mxu0 %v724
    %3340 = vmatpush.msra.mxu0 %v718
    %3341 = vmatpush.msra.mxu0 %v712
    %3342 = vmatpush.msra.mxu0 %v706
    %3343 = vmatpush.msra.mxu0 %v700
    %3344 = vmatpush.msra.mxu0 %v694
    %3345 = vmatpush.msra.mxu0 %v688
    %3346 = vmatmul.f32.gmra.mxu0 %v200
    %v3347 = vpop.f32.mrf.mxu0
    %v3348 = vadd.f32 %v3328, %v3347
    %3349 = vdwg.mxu0
    %3350 = vmatpush.msra.mxu0 %v874
    %3351 = vmatpush.msra.mxu0 %v868
    %3352 = vmatpush.msra.mxu0 %v862
    %3353 = vmatpush.msra.mxu0 %v856
    %3354 = vmatpush.msra.mxu0 %v850
    %3355 = vmatpush.msra.mxu0 %v844
    %3356 = vmatpush.msra.mxu0 %v838
    %3357 = vmatpush.msra.mxu0 %v832
    %3358 = vmatpush.msra.mxu0 %v826
    %3359 = vmatpush.msra.mxu0 %v820
    %3360 = vmatpush.msra.mxu0 %v814
    %3361 = vmatpush.msra.mxu0 %v808
    %3362 = vmatpush.msra.mxu0 %v802
    %3363 = vmatpush.msra.mxu0 %v796
    %3364 = vmatpush.msra.mxu0 %v790
    %3365 = vmatpush.msra.mxu0 %v784
    %3366 = vmatmul.f32.gmra.mxu0 %v201
    %v3367 = vpop.f32.mrf.mxu0
    %v3368 = vadd.f32 %v3348, %v3367
    %3369 = vdwg.mxu0
    %3370 = vmatpush.msra.mxu0 %v970
    %3371 = vmatpush.msra.mxu0 %v964
    %3372 = vmatpush.msra.mxu0 %v958
    %3373 = vmatpush.msra.mxu0 %v952
    %3374 = vmatpush.msra.mxu0 %v946
    %3375 = vmatpush.msra.mxu0 %v940
    %3376 = vmatpush.msra.mxu0 %v934
    %3377 = vmatpush.msra.mxu0 %v928
    %3378 = vmatpush.msra.mxu0 %v922
    %3379 = vmatpush.msra.mxu0 %v916
    %3380 = vmatpush.msra.mxu0 %v910
    %3381 = vmatpush.msra.mxu0 %v904
    %3382 = vmatpush.msra.mxu0 %v898
    %3383 = vmatpush.msra.mxu0 %v892
    %3384 = vmatpush.msra.mxu0 %v886
    %3385 = vmatpush.msra.mxu0 %v880
    %3386 = vmatmul.f32.gmra.mxu0 %v202
    %v3387 = vpop.f32.mrf.mxu0
    %v3388 = vadd.f32 %v3368, %v3387
    %3389 = vdwg.mxu0
    %3390 = vmatpush.msra.mxu0 %v1066
    %3391 = vmatpush.msra.mxu0 %v1060
    %3392 = vmatpush.msra.mxu0 %v1054
    %3393 = vmatpush.msra.mxu0 %v1048
    %3394 = vmatpush.msra.mxu0 %v1042
    %3395 = vmatpush.msra.mxu0 %v1036
    %3396 = vmatpush.msra.mxu0 %v1030
    %3397 = vmatpush.msra.mxu0 %v1024
    %3398 = vmatpush.msra.mxu0 %v1018
    %3399 = vmatpush.msra.mxu0 %v1012
    %3400 = vmatpush.msra.mxu0 %v1006
    %3401 = vmatpush.msra.mxu0 %v1000
    %3402 = vmatpush.msra.mxu0 %v994
    %3403 = vmatpush.msra.mxu0 %v988
    %3404 = vmatpush.msra.mxu0 %v982
    %3405 = vmatpush.msra.mxu0 %v976
    %3406 = vmatmul.f32.gmra.mxu0 %v203
    %v3407 = vpop.f32.mrf.mxu0
    %v3408 = vadd.f32 %v3388, %v3407
    %3409 = vdwg.mxu0
    %3410 = vmatpush.msra.mxu0 %v587
    %3411 = vmatpush.msra.mxu0 %v581
    %3412 = vmatpush.msra.mxu0 %v575
    %3413 = vmatpush.msra.mxu0 %v569
    %3414 = vmatpush.msra.mxu0 %v563
    %3415 = vmatpush.msra.mxu0 %v557
    %3416 = vmatpush.msra.mxu0 %v551
    %3417 = vmatpush.msra.mxu0 %v545
    %3418 = vmatpush.msra.mxu0 %v539
    %3419 = vmatpush.msra.mxu0 %v533
    %3420 = vmatpush.msra.mxu0 %v527
    %3421 = vmatpush.msra.mxu0 %v521
    %3422 = vmatpush.msra.mxu0 %v515
    %3423 = vmatpush.msra.mxu0 %v509
    %3424 = vmatpush.msra.mxu0 %v503
    %3425 = vmatpush.msra.mxu0 %v497
    %3426 = vmatmul.f32.gmra.mxu0 %v198
    %v3427 = vpop.f32.mrf.mxu0
    %v3428 = vadd.f32 %v2803, %v3427
    %3429 = vdwg.mxu0
    %3430 = vmatpush.msra.mxu0 %v683
    %3431 = vmatpush.msra.mxu0 %v677
    %3432 = vmatpush.msra.mxu0 %v671
    %3433 = vmatpush.msra.mxu0 %v665
    %3434 = vmatpush.msra.mxu0 %v659
    %3435 = vmatpush.msra.mxu0 %v653
    %3436 = vmatpush.msra.mxu0 %v647
    %3437 = vmatpush.msra.mxu0 %v641
    %3438 = vmatpush.msra.mxu0 %v635
    %3439 = vmatpush.msra.mxu0 %v629
    %3440 = vmatpush.msra.mxu0 %v623
    %3441 = vmatpush.msra.mxu0 %v617
    %3442 = vmatpush.msra.mxu0 %v611
    %3443 = vmatpush.msra.mxu0 %v605
    %3444 = vmatpush.msra.mxu0 %v599
    %3445 = vmatpush.msra.mxu0 %v593
    %3446 = vmatmul.f32.gmra.mxu0 %v199
    %v3447 = vpop.f32.mrf.mxu0
    %v3448 = vadd.f32 %v3428, %v3447
    %3449 = vdwg.mxu0
    %3450 = vmatpush.msra.mxu0 %v779
    %3451 = vmatpush.msra.mxu0 %v773
    %3452 = vmatpush.msra.mxu0 %v767
    %3453 = vmatpush.msra.mxu0 %v761
    %3454 = vmatpush.msra.mxu0 %v755
    %3455 = vmatpush.msra.mxu0 %v749
    %3456 = vmatpush.msra.mxu0 %v743
    %3457 = vmatpush.msra.mxu0 %v737
    %3458 = vmatpush.msra.mxu0 %v731
    %3459 = vmatpush.msra.mxu0 %v725
    %3460 = vmatpush.msra.mxu0 %v719
    %3461 = vmatpush.msra.mxu0 %v713
    %3462 = vmatpush.msra.mxu0 %v707
    %3463 = vmatpush.msra.mxu0 %v701
    %3464 = vmatpush.msra.mxu0 %v695
    %3465 = vmatpush.msra.mxu0 %v689
    %3466 = vmatmul.f32.gmra.mxu0 %v200
    %v3467 = vpop.f32.mrf.mxu0
    %v3468 = vadd.f32 %v3448, %v3467
    %3469 = vdwg.mxu0
    %3470 = vmatpush.msra.mxu0 %v875
    %3471 = vmatpush.msra.mxu0 %v869
    %3472 = vmatpush.msra.mxu0 %v863
    %3473 = vmatpush.msra.mxu0 %v857
    %3474 = vmatpush.msra.mxu0 %v851
    %3475 = vmatpush.msra.mxu0 %v845
    %3476 = vmatpush.msra.mxu0 %v839
    %3477 = vmatpush.msra.mxu0 %v833
    %3478 = vmatpush.msra.mxu0 %v827
    %3479 = vmatpush.msra.mxu0 %v821
    %3480 = vmatpush.msra.mxu0 %v815
    %3481 = vmatpush.msra.mxu0 %v809
    %3482 = vmatpush.msra.mxu0 %v803
    %3483 = vmatpush.msra.mxu0 %v797
    %3484 = vmatpush.msra.mxu0 %v791
    %3485 = vmatpush.msra.mxu0 %v785
    %3486 = vmatmul.f32.gmra.mxu0 %v201
    %v3487 = vpop.f32.mrf.mxu0
    %v3488 = vadd.f32 %v3468, %v3487
    %3489 = vdwg.mxu0
    %3490 = vmatpush.msra.mxu0 %v971
    %3491 = vmatpush.msra.mxu0 %v965
    %3492 = vmatpush.msra.mxu0 %v959
    %3493 = vmatpush.msra.mxu0 %v953
    %3494 = vmatpush.msra.mxu0 %v947
    %3495 = vmatpush.msra.mxu0 %v941
    %3496 = vmatpush.msra.mxu0 %v935
    %3497 = vmatpush.msra.mxu0 %v929
    %3498 = vmatpush.msra.mxu0 %v923
    %3499 = vmatpush.msra.mxu0 %v917
    %3500 = vmatpush.msra.mxu0 %v911
    %3501 = vmatpush.msra.mxu0 %v905
    %3502 = vmatpush.msra.mxu0 %v899
    %3503 = vmatpush.msra.mxu0 %v893
    %3504 = vmatpush.msra.mxu0 %v887
    %3505 = vmatpush.msra.mxu0 %v881
    %3506 = vmatmul.f32.gmra.mxu0 %v202
    %v3507 = vpop.f32.mrf.mxu0
    %v3508 = vadd.f32 %v3488, %v3507
    %3509 = vdwg.mxu0
    %3510 = vmatpush.msra.mxu0 %v1067
    %3511 = vmatpush.msra.mxu0 %v1061
    %3512 = vmatpush.msra.mxu0 %v1055
    %3513 = vmatpush.msra.mxu0 %v1049
    %3514 = vmatpush.msra.mxu0 %v1043
    %3515 = vmatpush.msra.mxu0 %v1037
    %3516 = vmatpush.msra.mxu0 %v1031
    %3517 = vmatpush.msra.mxu0 %v1025
    %3518 = vmatpush.msra.mxu0 %v1019
    %3519 = vmatpush.msra.mxu0 %v1013
    %3520 = vmatpush.msra.mxu0 %v1007
    %3521 = vmatpush.msra.mxu0 %v1001
    %3522 = vmatpush.msra.mxu0 %v995
    %3523 = vmatpush.msra.mxu0 %v989
    %3524 = vmatpush.msra.mxu0 %v983
    %3525 = vmatpush.msra.mxu0 %v977
    %3526 = vmatmul.f32.gmra.mxu0 %v203
    %v3527 = vpop.f32.mrf.mxu0
    %v3528 = vadd.f32 %v3508, %v3527
    %3529 = vdwg.mxu0
    %v3530 = vld [vmem:[#allocation11] sm:$0x3f]
    %v3532 = vperm.slane %v3530, 0
    %v3533 = vperm.slane %v3530, 1
    %v3534 = vperm.slane %v3530, 2
    %v3535 = vperm.slane %v3530, 3
    %v3536 = vperm.slane %v3530, 4
    %v3537 = vperm.slane %v3530, 5
    %3544 = vmatpush.msra.mxu0 %v1446
    %3545 = vmatpush.msra.mxu0 %v1440
    %3546 = vmatpush.msra.mxu0 %v1434
    %3547 = vmatpush.msra.mxu0 %v1428
    %3548 = vmatpush.msra.mxu0 %v1422
    %3549 = vmatpush.msra.mxu0 %v1416
    %3550 = vmatpush.msra.mxu0 %v1410
    %3551 = vmatpush.msra.mxu0 %v1404
    %3552 = vmatpush.msra.mxu0 %v1398
    %3553 = vmatpush.msra.mxu0 %v1392
    %3554 = vmatpush.msra.mxu0 %v1386
    %3555 = vmatpush.msra.mxu0 %v1380
    %3556 = vmatpush.msra.mxu0 %v1374
    %3557 = vmatpush.msra.mxu0 %v1368
    %3558 = vmatpush.msra.mxu0 %v1362
    %3559 = vmatpush.msra.mxu0 %v1356
    %3560 = vmatmul.f32.gmra.mxu0 %v198
    %v3561 = vpop.f32.mrf.mxu0
    %v3562 = vadd.f32 %v3532, %v3561
    %3563 = vdwg.mxu0
    %3564 = vmatpush.msra.mxu0 %v1542
    %3565 = vmatpush.msra.mxu0 %v1536
    %3566 = vmatpush.msra.mxu0 %v1530
    %3567 = vmatpush.msra.mxu0 %v1524
    %3568 = vmatpush.msra.mxu0 %v1518
    %3569 = vmatpush.msra.mxu0 %v1512
    %3570 = vmatpush.msra.mxu0 %v1506
    %3571 = vmatpush.msra.mxu0 %v1500
    %3572 = vmatpush.msra.mxu0 %v1494
    %3573 = vmatpush.msra.mxu0 %v1488
    %3574 = vmatpush.msra.mxu0 %v1482
    %3575 = vmatpush.msra.mxu0 %v1476
    %3576 = vmatpush.msra.mxu0 %v1470
    %3577 = vmatpush.msra.mxu0 %v1464
    %3578 = vmatpush.msra.mxu0 %v1458
    %3579 = vmatpush.msra.mxu0 %v1452
    %3580 = vmatmul.f32.gmra.mxu0 %v199
    %v3581 = vpop.f32.mrf.mxu0
    %v3582 = vadd.f32 %v3562, %v3581
    %3583 = vdwg.mxu0
    %3584 = vmatpush.msra.mxu0 %v1638
    %3585 = vmatpush.msra.mxu0 %v1632
    %3586 = vmatpush.msra.mxu0 %v1626
    %3587 = vmatpush.msra.mxu0 %v1620
    %3588 = vmatpush.msra.mxu0 %v1614
    %3589 = vmatpush.msra.mxu0 %v1608
    %3590 = vmatpush.msra.mxu0 %v1602
    %3591 = vmatpush.msra.mxu0 %v1596
    %3592 = vmatpush.msra.mxu0 %v1590
    %3593 = vmatpush.msra.mxu0 %v1584
    %3594 = vmatpush.msra.mxu0 %v1578
    %3595 = vmatpush.msra.mxu0 %v1572
    %3596 = vmatpush.msra.mxu0 %v1566
    %3597 = vmatpush.msra.mxu0 %v1560
    %3598 = vmatpush.msra.mxu0 %v1554
    %3599 = vmatpush.msra.mxu0 %v1548
    %3600 = vmatmul.f32.gmra.mxu0 %v200
    %v3601 = vpop.f32.mrf.mxu0
    %v3602 = vadd.f32 %v3582, %v3601
    %3603 = vdwg.mxu0
    %3604 = vmatpush.msra.mxu0 %v1734
    %3605 = vmatpush.msra.mxu0 %v1728
    %3606 = vmatpush.msra.mxu0 %v1722
    %3607 = vmatpush.msra.mxu0 %v1716
    %3608 = vmatpush.msra.mxu0 %v1710
    %3609 = vmatpush.msra.mxu0 %v1704
    %3610 = vmatpush.msra.mxu0 %v1698
    %3611 = vmatpush.msra.mxu0 %v1692
    %3612 = vmatpush.msra.mxu0 %v1686
    %3613 = vmatpush.msra.mxu0 %v1680
    %3614 = vmatpush.msra.mxu0 %v1674
    %3615 = vmatpush.msra.mxu0 %v1668
    %3616 = vmatpush.msra.mxu0 %v1662
    %3617 = vmatpush.msra.mxu0 %v1656
    %3618 = vmatpush.msra.mxu0 %v1650
    %3619 = vmatpush.msra.mxu0 %v1644
    %3620 = vmatmul.f32.gmra.mxu0 %v201
    %v3621 = vpop.f32.mrf.mxu0
    %v3622 = vadd.f32 %v3602, %v3621
    %3623 = vdwg.mxu0
    %3624 = vmatpush.msra.mxu0 %v1830
    %3625 = vmatpush.msra.mxu0 %v1824
    %3626 = vmatpush.msra.mxu0 %v1818
    %3627 = vmatpush.msra.mxu0 %v1812
    %3628 = vmatpush.msra.mxu0 %v1806
    %3629 = vmatpush.msra.mxu0 %v1800
    %3630 = vmatpush.msra.mxu0 %v1794
    %3631 = vmatpush.msra.mxu0 %v1788
    %3632 = vmatpush.msra.mxu0 %v1782
    %3633 = vmatpush.msra.mxu0 %v1776
    %3634 = vmatpush.msra.mxu0 %v1770
    %3635 = vmatpush.msra.mxu0 %v1764
    %3636 = vmatpush.msra.mxu0 %v1758
    %3637 = vmatpush.msra.mxu0 %v1752
    %3638 = vmatpush.msra.mxu0 %v1746
    %3639 = vmatpush.msra.mxu0 %v1740
    %3640 = vmatmul.f32.gmra.mxu0 %v202
    %v3641 = vpop.f32.mrf.mxu0
    %v3642 = vadd.f32 %v3622, %v3641
    %3643 = vdwg.mxu0
    %3644 = vmatpush.msra.mxu0 %v1926
    %3645 = vmatpush.msra.mxu0 %v1920
    %3646 = vmatpush.msra.mxu0 %v1914
    %3647 = vmatpush.msra.mxu0 %v1908
    %3648 = vmatpush.msra.mxu0 %v1902
    %3649 = vmatpush.msra.mxu0 %v1896
    %3650 = vmatpush.msra.mxu0 %v1890
    %3651 = vmatpush.msra.mxu0 %v1884
    %3652 = vmatpush.msra.mxu0 %v1878
    %3653 = vmatpush.msra.mxu0 %v1872
    %3654 = vmatpush.msra.mxu0 %v1866
    %3655 = vmatpush.msra.mxu0 %v1860
    %3656 = vmatpush.msra.mxu0 %v1854
    %3657 = vmatpush.msra.mxu0 %v1848
    %3658 = vmatpush.msra.mxu0 %v1842
    %3659 = vmatpush.msra.mxu0 %v1836
    %3660 = vmatmul.f32.gmra.mxu0 %v203
    %v3661 = vpop.f32.mrf.mxu0
    %v3662 = vadd.f32 %v3642, %v3661
    %3663 = vdwg.mxu0
    %3664 = vmatpush.msra.mxu0 %v1447
    %3665 = vmatpush.msra.mxu0 %v1441
    %3666 = vmatpush.msra.mxu0 %v1435
    %3667 = vmatpush.msra.mxu0 %v1429
    %3668 = vmatpush.msra.mxu0 %v1423
    %3669 = vmatpush.msra.mxu0 %v1417
    %3670 = vmatpush.msra.mxu0 %v1411
    %3671 = vmatpush.msra.mxu0 %v1405
    %3672 = vmatpush.msra.mxu0 %v1399
    %3673 = vmatpush.msra.mxu0 %v1393
    %3674 = vmatpush.msra.mxu0 %v1387
    %3675 = vmatpush.msra.mxu0 %v1381
    %3676 = vmatpush.msra.mxu0 %v1375
    %3677 = vmatpush.msra.mxu0 %v1369
    %3678 = vmatpush.msra.mxu0 %v1363
    %3679 = vmatpush.msra.mxu0 %v1357
    %3680 = vmatmul.f32.gmra.mxu0 %v198
    %v3681 = vpop.f32.mrf.mxu0
    %v3682 = vadd.f32 %v3533, %v3681
    %3683 = vdwg.mxu0
    %3684 = vmatpush.msra.mxu0 %v1543
    %3685 = vmatpush.msra.mxu0 %v1537
    %3686 = vmatpush.msra.mxu0 %v1531
    %3687 = vmatpush.msra.mxu0 %v1525
    %3688 = vmatpush.msra.mxu0 %v1519
    %3689 = vmatpush.msra.mxu0 %v1513
    %3690 = vmatpush.msra.mxu0 %v1507
    %3691 = vmatpush.msra.mxu0 %v1501
    %3692 = vmatpush.msra.mxu0 %v1495
    %3693 = vmatpush.msra.mxu0 %v1489
    %3694 = vmatpush.msra.mxu0 %v1483
    %3695 = vmatpush.msra.mxu0 %v1477
    %3696 = vmatpush.msra.mxu0 %v1471
    %3697 = vmatpush.msra.mxu0 %v1465
    %3698 = vmatpush.msra.mxu0 %v1459
    %3699 = vmatpush.msra.mxu0 %v1453
    %3700 = vmatmul.f32.gmra.mxu0 %v199
    %v3701 = vpop.f32.mrf.mxu0
    %v3702 = vadd.f32 %v3682, %v3701
    %3703 = vdwg.mxu0
    %3704 = vmatpush.msra.mxu0 %v1639
    %3705 = vmatpush.msra.mxu0 %v1633
    %3706 = vmatpush.msra.mxu0 %v1627
    %3707 = vmatpush.msra.mxu0 %v1621
    %3708 = vmatpush.msra.mxu0 %v1615
    %3709 = vmatpush.msra.mxu0 %v1609
    %3710 = vmatpush.msra.mxu0 %v1603
    %3711 = vmatpush.msra.mxu0 %v1597
    %3712 = vmatpush.msra.mxu0 %v1591
    %3713 = vmatpush.msra.mxu0 %v1585
    %3714 = vmatpush.msra.mxu0 %v1579
    %3715 = vmatpush.msra.mxu0 %v1573
    %3716 = vmatpush.msra.mxu0 %v1567
    %3717 = vmatpush.msra.mxu0 %v1561
    %3718 = vmatpush.msra.mxu0 %v1555
    %3719 = vmatpush.msra.mxu0 %v1549
    %3720 = vmatmul.f32.gmra.mxu0 %v200
    %v3721 = vpop.f32.mrf.mxu0
    %v3722 = vadd.f32 %v3702, %v3721
    %3723 = vdwg.mxu0
    %3724 = vmatpush.msra.mxu0 %v1735
    %3725 = vmatpush.msra.mxu0 %v1729
    %3726 = vmatpush.msra.mxu0 %v1723
    %3727 = vmatpush.msra.mxu0 %v1717
    %3728 = vmatpush.msra.mxu0 %v1711
    %3729 = vmatpush.msra.mxu0 %v1705
    %3730 = vmatpush.msra.mxu0 %v1699
    %3731 = vmatpush.msra.mxu0 %v1693
    %3732 = vmatpush.msra.mxu0 %v1687
    %3733 = vmatpush.msra.mxu0 %v1681
    %3734 = vmatpush.msra.mxu0 %v1675
    %3735 = vmatpush.msra.mxu0 %v1669
    %3736 = vmatpush.msra.mxu0 %v1663
    %3737 = vmatpush.msra.mxu0 %v1657
    %3738 = vmatpush.msra.mxu0 %v1651
    %3739 = vmatpush.msra.mxu0 %v1645
    %3740 = vmatmul.f32.gmra.mxu0 %v201
    %v3741 = vpop.f32.mrf.mxu0
    %v3742 = vadd.f32 %v3722, %v3741
    %3743 = vdwg.mxu0
    %3744 = vmatpush.msra.mxu0 %v1831
    %3745 = vmatpush.msra.mxu0 %v1825
    %3746 = vmatpush.msra.mxu0 %v1819
    %3747 = vmatpush.msra.mxu0 %v1813
    %3748 = vmatpush.msra.mxu0 %v1807
    %3749 = vmatpush.msra.mxu0 %v1801
    %3750 = vmatpush.msra.mxu0 %v1795
    %3751 = vmatpush.msra.mxu0 %v1789
    %3752 = vmatpush.msra.mxu0 %v1783
    %3753 = vmatpush.msra.mxu0 %v1777
    %3754 = vmatpush.msra.mxu0 %v1771
    %3755 = vmatpush.msra.mxu0 %v1765
    %3756 = vmatpush.msra.mxu0 %v1759
    %3757 = vmatpush.msra.mxu0 %v1753
    %3758 = vmatpush.msra.mxu0 %v1747
    %3759 = vmatpush.msra.mxu0 %v1741
    %3760 = vmatmul.f32.gmra.mxu0 %v202
    %v3761 = vpop.f32.mrf.mxu0
    %v3762 = vadd.f32 %v3742, %v3761
    %3763 = vdwg.mxu0
    %3764 = vmatpush.msra.mxu0 %v1927
    %3765 = vmatpush.msra.mxu0 %v1921
    %3766 = vmatpush.msra.mxu0 %v1915
    %3767 = vmatpush.msra.mxu0 %v1909
    %3768 = vmatpush.msra.mxu0 %v1903
    %3769 = vmatpush.msra.mxu0 %v1897
    %3770 = vmatpush.msra.mxu0 %v1891
    %3771 = vmatpush.msra.mxu0 %v1885
    %3772 = vmatpush.msra.mxu0 %v1879
    %3773 = vmatpush.msra.mxu0 %v1873
    %3774 = vmatpush.msra.mxu0 %v1867
    %3775 = vmatpush.msra.mxu0 %v1861
    %3776 = vmatpush.msra.mxu0 %v1855
    %3777 = vmatpush.msra.mxu0 %v1849
    %3778 = vmatpush.msra.mxu0 %v1843
    %3779 = vmatpush.msra.mxu0 %v1837
    %3780 = vmatmul.f32.gmra.mxu0 %v203
    %v3781 = vpop.f32.mrf.mxu0
    %v3782 = vadd.f32 %v3762, %v3781
    %3783 = vdwg.mxu0
    %3784 = vmatpush.msra.mxu0 %v1448
    %3785 = vmatpush.msra.mxu0 %v1442
    %3786 = vmatpush.msra.mxu0 %v1436
    %3787 = vmatpush.msra.mxu0 %v1430
    %3788 = vmatpush.msra.mxu0 %v1424
    %3789 = vmatpush.msra.mxu0 %v1418
    %3790 = vmatpush.msra.mxu0 %v1412
    %3791 = vmatpush.msra.mxu0 %v1406
    %3792 = vmatpush.msra.mxu0 %v1400
    %3793 = vmatpush.msra.mxu0 %v1394
    %3794 = vmatpush.msra.mxu0 %v1388
    %3795 = vmatpush.msra.mxu0 %v1382
    %3796 = vmatpush.msra.mxu0 %v1376
    %3797 = vmatpush.msra.mxu0 %v1370
    %3798 = vmatpush.msra.mxu0 %v1364
    %3799 = vmatpush.msra.mxu0 %v1358
    %3800 = vmatmul.f32.gmra.mxu0 %v198
    %v3801 = vpop.f32.mrf.mxu0
    %v3802 = vadd.f32 %v3534, %v3801
    %3803 = vdwg.mxu0
    %3804 = vmatpush.msra.mxu0 %v1544
    %3805 = vmatpush.msra.mxu0 %v1538
    %3806 = vmatpush.msra.mxu0 %v1532
    %3807 = vmatpush.msra.mxu0 %v1526
    %3808 = vmatpush.msra.mxu0 %v1520
    %3809 = vmatpush.msra.mxu0 %v1514
    %3810 = vmatpush.msra.mxu0 %v1508
    %3811 = vmatpush.msra.mxu0 %v1502
    %3812 = vmatpush.msra.mxu0 %v1496
    %3813 = vmatpush.msra.mxu0 %v1490
    %3814 = vmatpush.msra.mxu0 %v1484
    %3815 = vmatpush.msra.mxu0 %v1478
    %3816 = vmatpush.msra.mxu0 %v1472
    %3817 = vmatpush.msra.mxu0 %v1466
    %3818 = vmatpush.msra.mxu0 %v1460
    %3819 = vmatpush.msra.mxu0 %v1454
    %3820 = vmatmul.f32.gmra.mxu0 %v199
    %v3821 = vpop.f32.mrf.mxu0
    %v3822 = vadd.f32 %v3802, %v3821
    %3823 = vdwg.mxu0
    %3824 = vmatpush.msra.mxu0 %v1640
    %3825 = vmatpush.msra.mxu0 %v1634
    %3826 = vmatpush.msra.mxu0 %v1628
    %3827 = vmatpush.msra.mxu0 %v1622
    %3828 = vmatpush.msra.mxu0 %v1616
    %3829 = vmatpush.msra.mxu0 %v1610
    %3830 = vmatpush.msra.mxu0 %v1604
    %3831 = vmatpush.msra.mxu0 %v1598
    %3832 = vmatpush.msra.mxu0 %v1592
    %3833 = vmatpush.msra.mxu0 %v1586
    %3834 = vmatpush.msra.mxu0 %v1580
    %3835 = vmatpush.msra.mxu0 %v1574
    %3836 = vmatpush.msra.mxu0 %v1568
    %3837 = vmatpush.msra.mxu0 %v1562
    %3838 = vmatpush.msra.mxu0 %v1556
    %3839 = vmatpush.msra.mxu0 %v1550
    %3840 = vmatmul.f32.gmra.mxu0 %v200
    %v3841 = vpop.f32.mrf.mxu0
    %v3842 = vadd.f32 %v3822, %v3841
    %3843 = vdwg.mxu0
    %3844 = vmatpush.msra.mxu0 %v1736
    %3845 = vmatpush.msra.mxu0 %v1730
    %3846 = vmatpush.msra.mxu0 %v1724
    %3847 = vmatpush.msra.mxu0 %v1718
    %3848 = vmatpush.msra.mxu0 %v1712
    %3849 = vmatpush.msra.mxu0 %v1706
    %3850 = vmatpush.msra.mxu0 %v1700
    %3851 = vmatpush.msra.mxu0 %v1694
    %3852 = vmatpush.msra.mxu0 %v1688
    %3853 = vmatpush.msra.mxu0 %v1682
    %3854 = vmatpush.msra.mxu0 %v1676
    %3855 = vmatpush.msra.mxu0 %v1670
    %3856 = vmatpush.msra.mxu0 %v1664
    %3857 = vmatpush.msra.mxu0 %v1658
    %3858 = vmatpush.msra.mxu0 %v1652
    %3859 = vmatpush.msra.mxu0 %v1646
    %3860 = vmatmul.f32.gmra.mxu0 %v201
    %v3861 = vpop.f32.mrf.mxu0
    %v3862 = vadd.f32 %v3842, %v3861
    %3863 = vdwg.mxu0
    %3864 = vmatpush.msra.mxu0 %v1832
    %3865 = vmatpush.msra.mxu0 %v1826
    %3866 = vmatpush.msra.mxu0 %v1820
    %3867 = vmatpush.msra.mxu0 %v1814
    %3868 = vmatpush.msra.mxu0 %v1808
    %3869 = vmatpush.msra.mxu0 %v1802
    %3870 = vmatpush.msra.mxu0 %v1796
    %3871 = vmatpush.msra.mxu0 %v1790
    %3872 = vmatpush.msra.mxu0 %v1784
    %3873 = vmatpush.msra.mxu0 %v1778
    %3874 = vmatpush.msra.mxu0 %v1772
    %3875 = vmatpush.msra.mxu0 %v1766
    %3876 = vmatpush.msra.mxu0 %v1760
    %3877 = vmatpush.msra.mxu0 %v1754
    %3878 = vmatpush.msra.mxu0 %v1748
    %3879 = vmatpush.msra.mxu0 %v1742
    %3880 = vmatmul.f32.gmra.mxu0 %v202
    %v3881 = vpop.f32.mrf.mxu0
    %v3882 = vadd.f32 %v3862, %v3881
    %3883 = vdwg.mxu0
    %3884 = vmatpush.msra.mxu0 %v1928
    %3885 = vmatpush.msra.mxu0 %v1922
    %3886 = vmatpush.msra.mxu0 %v1916
    %3887 = vmatpush.msra.mxu0 %v1910
    %3888 = vmatpush.msra.mxu0 %v1904
    %3889 = vmatpush.msra.mxu0 %v1898
    %3890 = vmatpush.msra.mxu0 %v1892
    %3891 = vmatpush.msra.mxu0 %v1886
    %3892 = vmatpush.msra.mxu0 %v1880
    %3893 = vmatpush.msra.mxu0 %v1874
    %3894 = vmatpush.msra.mxu0 %v1868
    %3895 = vmatpush.msra.mxu0 %v1862
    %3896 = vmatpush.msra.mxu0 %v1856
    %3897 = vmatpush.msra.mxu0 %v1850
    %3898 = vmatpush.msra.mxu0 %v1844
    %3899 = vmatpush.msra.mxu0 %v1838
    %3900 = vmatmul.f32.gmra.mxu0 %v203
    %v3901 = vpop.f32.mrf.mxu0
    %v3902 = vadd.f32 %v3882, %v3901
    %3903 = vdwg.mxu0
    %3904 = vmatpush.msra.mxu0 %v1449
    %3905 = vmatpush.msra.mxu0 %v1443
    %3906 = vmatpush.msra.mxu0 %v1437
    %3907 = vmatpush.msra.mxu0 %v1431
    %3908 = vmatpush.msra.mxu0 %v1425
    %3909 = vmatpush.msra.mxu0 %v1419
    %3910 = vmatpush.msra.mxu0 %v1413
    %3911 = vmatpush.msra.mxu0 %v1407
    %3912 = vmatpush.msra.mxu0 %v1401
    %3913 = vmatpush.msra.mxu0 %v1395
    %3914 = vmatpush.msra.mxu0 %v1389
    %3915 = vmatpush.msra.mxu0 %v1383
    %3916 = vmatpush.msra.mxu0 %v1377
    %3917 = vmatpush.msra.mxu0 %v1371
    %3918 = vmatpush.msra.mxu0 %v1365
    %3919 = vmatpush.msra.mxu0 %v1359
    %3920 = vmatmul.f32.gmra.mxu0 %v198
    %v3921 = vpop.f32.mrf.mxu0
    %v3922 = vadd.f32 %v3535, %v3921
    %3923 = vdwg.mxu0
    %3924 = vmatpush.msra.mxu0 %v1545
    %3925 = vmatpush.msra.mxu0 %v1539
    %3926 = vmatpush.msra.mxu0 %v1533
    %3927 = vmatpush.msra.mxu0 %v1527
    %3928 = vmatpush.msra.mxu0 %v1521
    %3929 = vmatpush.msra.mxu0 %v1515
    %3930 = vmatpush.msra.mxu0 %v1509
    %3931 = vmatpush.msra.mxu0 %v1503
    %3932 = vmatpush.msra.mxu0 %v1497
    %3933 = vmatpush.msra.mxu0 %v1491
    %3934 = vmatpush.msra.mxu0 %v1485
    %3935 = vmatpush.msra.mxu0 %v1479
    %3936 = vmatpush.msra.mxu0 %v1473
    %3937 = vmatpush.msra.mxu0 %v1467
    %3938 = vmatpush.msra.mxu0 %v1461
    %3939 = vmatpush.msra.mxu0 %v1455
    %3940 = vmatmul.f32.gmra.mxu0 %v199
    %v3941 = vpop.f32.mrf.mxu0
    %v3942 = vadd.f32 %v3922, %v3941
    %3943 = vdwg.mxu0
    %3944 = vmatpush.msra.mxu0 %v1641
    %3945 = vmatpush.msra.mxu0 %v1635
    %3946 = vmatpush.msra.mxu0 %v1629
    %3947 = vmatpush.msra.mxu0 %v1623
    %3948 = vmatpush.msra.mxu0 %v1617
    %3949 = vmatpush.msra.mxu0 %v1611
    %3950 = vmatpush.msra.mxu0 %v1605
    %3951 = vmatpush.msra.mxu0 %v1599
    %3952 = vmatpush.msra.mxu0 %v1593
    %3953 = vmatpush.msra.mxu0 %v1587
    %3954 = vmatpush.msra.mxu0 %v1581
    %3955 = vmatpush.msra.mxu0 %v1575
    %3956 = vmatpush.msra.mxu0 %v1569
    %3957 = vmatpush.msra.mxu0 %v1563
    %3958 = vmatpush.msra.mxu0 %v1557
    %3959 = vmatpush.msra.mxu0 %v1551
    %3960 = vmatmul.f32.gmra.mxu0 %v200
    %v3961 = vpop.f32.mrf.mxu0
    %v3962 = vadd.f32 %v3942, %v3961
    %3963 = vdwg.mxu0
    %3964 = vmatpush.msra.mxu0 %v1737
    %3965 = vmatpush.msra.mxu0 %v1731
    %3966 = vmatpush.msra.mxu0 %v1725
    %3967 = vmatpush.msra.mxu0 %v1719
    %3968 = vmatpush.msra.mxu0 %v1713
    %3969 = vmatpush.msra.mxu0 %v1707
    %3970 = vmatpush.msra.mxu0 %v1701
    %3971 = vmatpush.msra.mxu0 %v1695
    %3972 = vmatpush.msra.mxu0 %v1689
    %3973 = vmatpush.msra.mxu0 %v1683
    %3974 = vmatpush.msra.mxu0 %v1677
    %3975 = vmatpush.msra.mxu0 %v1671
    %3976 = vmatpush.msra.mxu0 %v1665
    %3977 = vmatpush.msra.mxu0 %v1659
    %3978 = vmatpush.msra.mxu0 %v1653
    %3979 = vmatpush.msra.mxu0 %v1647
    %3980 = vmatmul.f32.gmra.mxu0 %v201
    %v3981 = vpop.f32.mrf.mxu0
    %v3982 = vadd.f32 %v3962, %v3981
    %3983 = vdwg.mxu0
    %3984 = vmatpush.msra.mxu0 %v1833
    %3985 = vmatpush.msra.mxu0 %v1827
    %3986 = vmatpush.msra.mxu0 %v1821
    %3987 = vmatpush.msra.mxu0 %v1815
    %3988 = vmatpush.msra.mxu0 %v1809
    %3989 = vmatpush.msra.mxu0 %v1803
    %3990 = vmatpush.msra.mxu0 %v1797
    %3991 = vmatpush.msra.mxu0 %v1791
    %3992 = vmatpush.msra.mxu0 %v1785
    %3993 = vmatpush.msra.mxu0 %v1779
    %3994 = vmatpush.msra.mxu0 %v1773
    %3995 = vmatpush.msra.mxu0 %v1767
    %3996 = vmatpush.msra.mxu0 %v1761
    %3997 = vmatpush.msra.mxu0 %v1755
    %3998 = vmatpush.msra.mxu0 %v1749
    %3999 = vmatpush.msra.mxu0 %v1743
    %4000 = vmatmul.f32.gmra.mxu0 %v202
    %v4001 = vpop.f32.mrf.mxu0
    %v4002 = vadd.f32 %v3982, %v4001
    %4003 = vdwg.mxu0
    %4004 = vmatpush.msra.mxu0 %v1929
    %4005 = vmatpush.msra.mxu0 %v1923
    %4006 = vmatpush.msra.mxu0 %v1917
    %4007 = vmatpush.msra.mxu0 %v1911
    %4008 = vmatpush.msra.mxu0 %v1905
    %4009 = vmatpush.msra.mxu0 %v1899
    %4010 = vmatpush.msra.mxu0 %v1893
    %4011 = vmatpush.msra.mxu0 %v1887
    %4012 = vmatpush.msra.mxu0 %v1881
    %4013 = vmatpush.msra.mxu0 %v1875
    %4014 = vmatpush.msra.mxu0 %v1869
    %4015 = vmatpush.msra.mxu0 %v1863
    %4016 = vmatpush.msra.mxu0 %v1857
    %4017 = vmatpush.msra.mxu0 %v1851
    %4018 = vmatpush.msra.mxu0 %v1845
    %4019 = vmatpush.msra.mxu0 %v1839
    %4020 = vmatmul.f32.gmra.mxu0 %v203
    %v4021 = vpop.f32.mrf.mxu0
    %v4022 = vadd.f32 %v4002, %v4021
    %4023 = vdwg.mxu0
    %4024 = vmatpush.msra.mxu0 %v1450
    %4025 = vmatpush.msra.mxu0 %v1444
    %4026 = vmatpush.msra.mxu0 %v1438
    %4027 = vmatpush.msra.mxu0 %v1432
    %4028 = vmatpush.msra.mxu0 %v1426
    %4029 = vmatpush.msra.mxu0 %v1420
    %4030 = vmatpush.msra.mxu0 %v1414
    %4031 = vmatpush.msra.mxu0 %v1408
    %4032 = vmatpush.msra.mxu0 %v1402
    %4033 = vmatpush.msra.mxu0 %v1396
    %4034 = vmatpush.msra.mxu0 %v1390
    %4035 = vmatpush.msra.mxu0 %v1384
    %4036 = vmatpush.msra.mxu0 %v1378
    %4037 = vmatpush.msra.mxu0 %v1372
    %4038 = vmatpush.msra.mxu0 %v1366
    %4039 = vmatpush.msra.mxu0 %v1360
    %4040 = vmatmul.f32.gmra.mxu0 %v198
    %v4041 = vpop.f32.mrf.mxu0
    %v4042 = vadd.f32 %v3536, %v4041
    %4043 = vdwg.mxu0
    %4044 = vmatpush.msra.mxu0 %v1546
    %4045 = vmatpush.msra.mxu0 %v1540
    %4046 = vmatpush.msra.mxu0 %v1534
    %4047 = vmatpush.msra.mxu0 %v1528
    %4048 = vmatpush.msra.mxu0 %v1522
    %4049 = vmatpush.msra.mxu0 %v1516
    %4050 = vmatpush.msra.mxu0 %v1510
    %4051 = vmatpush.msra.mxu0 %v1504
    %4052 = vmatpush.msra.mxu0 %v1498
    %4053 = vmatpush.msra.mxu0 %v1492
    %4054 = vmatpush.msra.mxu0 %v1486
    %4055 = vmatpush.msra.mxu0 %v1480
    %4056 = vmatpush.msra.mxu0 %v1474
    %4057 = vmatpush.msra.mxu0 %v1468
    %4058 = vmatpush.msra.mxu0 %v1462
    %4059 = vmatpush.msra.mxu0 %v1456
    %4060 = vmatmul.f32.gmra.mxu0 %v199
    %v4061 = vpop.f32.mrf.mxu0
    %v4062 = vadd.f32 %v4042, %v4061
    %4063 = vdwg.mxu0
    %4064 = vmatpush.msra.mxu0 %v1642
    %4065 = vmatpush.msra.mxu0 %v1636
    %4066 = vmatpush.msra.mxu0 %v1630
    %4067 = vmatpush.msra.mxu0 %v1624
    %4068 = vmatpush.msra.mxu0 %v1618
    %4069 = vmatpush.msra.mxu0 %v1612
    %4070 = vmatpush.msra.mxu0 %v1606
    %4071 = vmatpush.msra.mxu0 %v1600
    %4072 = vmatpush.msra.mxu0 %v1594
    %4073 = vmatpush.msra.mxu0 %v1588
    %4074 = vmatpush.msra.mxu0 %v1582
    %4075 = vmatpush.msra.mxu0 %v1576
    %4076 = vmatpush.msra.mxu0 %v1570
    %4077 = vmatpush.msra.mxu0 %v1564
    %4078 = vmatpush.msra.mxu0 %v1558
    %4079 = vmatpush.msra.mxu0 %v1552
    %4080 = vmatmul.f32.gmra.mxu0 %v200
    %v4081 = vpop.f32.mrf.mxu0
    %v4082 = vadd.f32 %v4062, %v4081
    %4083 = vdwg.mxu0
    %4084 = vmatpush.msra.mxu0 %v1738
    %4085 = vmatpush.msra.mxu0 %v1732
    %4086 = vmatpush.msra.mxu0 %v1726
    %4087 = vmatpush.msra.mxu0 %v1720
    %4088 = vmatpush.msra.mxu0 %v1714
    %4089 = vmatpush.msra.mxu0 %v1708
    %4090 = vmatpush.msra.mxu0 %v1702
    %4091 = vmatpush.msra.mxu0 %v1696
    %4092 = vmatpush.msra.mxu0 %v1690
    %4093 = vmatpush.msra.mxu0 %v1684
    %4094 = vmatpush.msra.mxu0 %v1678
    %4095 = vmatpush.msra.mxu0 %v1672
    %4096 = vmatpush.msra.mxu0 %v1666
    %4097 = vmatpush.msra.mxu0 %v1660
    %4098 = vmatpush.msra.mxu0 %v1654
    %4099 = vmatpush.msra.mxu0 %v1648
    %4100 = vmatmul.f32.gmra.mxu0 %v201
    %v4101 = vpop.f32.mrf.mxu0
    %v4102 = vadd.f32 %v4082, %v4101
    %4103 = vdwg.mxu0
    %4104 = vmatpush.msra.mxu0 %v1834
    %4105 = vmatpush.msra.mxu0 %v1828
    %4106 = vmatpush.msra.mxu0 %v1822
    %4107 = vmatpush.msra.mxu0 %v1816
    %4108 = vmatpush.msra.mxu0 %v1810
    %4109 = vmatpush.msra.mxu0 %v1804
    %4110 = vmatpush.msra.mxu0 %v1798
    %4111 = vmatpush.msra.mxu0 %v1792
    %4112 = vmatpush.msra.mxu0 %v1786
    %4113 = vmatpush.msra.mxu0 %v1780
    %4114 = vmatpush.msra.mxu0 %v1774
    %4115 = vmatpush.msra.mxu0 %v1768
    %4116 = vmatpush.msra.mxu0 %v1762
    %4117 = vmatpush.msra.mxu0 %v1756
    %4118 = vmatpush.msra.mxu0 %v1750
    %4119 = vmatpush.msra.mxu0 %v1744
    %4120 = vmatmul.f32.gmra.mxu0 %v202
    %v4121 = vpop.f32.mrf.mxu0
    %v4122 = vadd.f32 %v4102, %v4121
    %4123 = vdwg.mxu0
    %4124 = vmatpush.msra.mxu0 %v1930
    %4125 = vmatpush.msra.mxu0 %v1924
    %4126 = vmatpush.msra.mxu0 %v1918
    %4127 = vmatpush.msra.mxu0 %v1912
    %4128 = vmatpush.msra.mxu0 %v1906
    %4129 = vmatpush.msra.mxu0 %v1900
    %4130 = vmatpush.msra.mxu0 %v1894
    %4131 = vmatpush.msra.mxu0 %v1888
    %4132 = vmatpush.msra.mxu0 %v1882
    %4133 = vmatpush.msra.mxu0 %v1876
    %4134 = vmatpush.msra.mxu0 %v1870
    %4135 = vmatpush.msra.mxu0 %v1864
    %4136 = vmatpush.msra.mxu0 %v1858
    %4137 = vmatpush.msra.mxu0 %v1852
    %4138 = vmatpush.msra.mxu0 %v1846
    %4139 = vmatpush.msra.mxu0 %v1840
    %4140 = vmatmul.f32.gmra.mxu0 %v203
    %v4141 = vpop.f32.mrf.mxu0
    %v4142 = vadd.f32 %v4122, %v4141
    %4143 = vdwg.mxu0
    %4144 = vmatpush.msra.mxu0 %v1451
    %4145 = vmatpush.msra.mxu0 %v1445
    %4146 = vmatpush.msra.mxu0 %v1439
    %4147 = vmatpush.msra.mxu0 %v1433
    %4148 = vmatpush.msra.mxu0 %v1427
    %4149 = vmatpush.msra.mxu0 %v1421
    %4150 = vmatpush.msra.mxu0 %v1415
    %4151 = vmatpush.msra.mxu0 %v1409
    %4152 = vmatpush.msra.mxu0 %v1403
    %4153 = vmatpush.msra.mxu0 %v1397
    %4154 = vmatpush.msra.mxu0 %v1391
    %4155 = vmatpush.msra.mxu0 %v1385
    %4156 = vmatpush.msra.mxu0 %v1379
    %4157 = vmatpush.msra.mxu0 %v1373
    %4158 = vmatpush.msra.mxu0 %v1367
    %4159 = vmatpush.msra.mxu0 %v1361
    %4160 = vmatmul.f32.gmra.mxu0 %v198
    %v4161 = vpop.f32.mrf.mxu0
    %v4162 = vadd.f32 %v3537, %v4161
    %4163 = vdwg.mxu0
    %4164 = vmatpush.msra.mxu0 %v1547
    %4165 = vmatpush.msra.mxu0 %v1541
    %4166 = vmatpush.msra.mxu0 %v1535
    %4167 = vmatpush.msra.mxu0 %v1529
    %4168 = vmatpush.msra.mxu0 %v1523
    %4169 = vmatpush.msra.mxu0 %v1517
    %4170 = vmatpush.msra.mxu0 %v1511
    %4171 = vmatpush.msra.mxu0 %v1505
    %4172 = vmatpush.msra.mxu0 %v1499
    %4173 = vmatpush.msra.mxu0 %v1493
    %4174 = vmatpush.msra.mxu0 %v1487
    %4175 = vmatpush.msra.mxu0 %v1481
    %4176 = vmatpush.msra.mxu0 %v1475
    %4177 = vmatpush.msra.mxu0 %v1469
    %4178 = vmatpush.msra.mxu0 %v1463
    %4179 = vmatpush.msra.mxu0 %v1457
    %4180 = vmatmul.f32.gmra.mxu0 %v199
    %v4181 = vpop.f32.mrf.mxu0
    %v4182 = vadd.f32 %v4162, %v4181
    %4183 = vdwg.mxu0
    %4184 = vmatpush.msra.mxu0 %v1643
    %4185 = vmatpush.msra.mxu0 %v1637
    %4186 = vmatpush.msra.mxu0 %v1631
    %4187 = vmatpush.msra.mxu0 %v1625
    %4188 = vmatpush.msra.mxu0 %v1619
    %4189 = vmatpush.msra.mxu0 %v1613
    %4190 = vmatpush.msra.mxu0 %v1607
    %4191 = vmatpush.msra.mxu0 %v1601
    %4192 = vmatpush.msra.mxu0 %v1595
    %4193 = vmatpush.msra.mxu0 %v1589
    %4194 = vmatpush.msra.mxu0 %v1583
    %4195 = vmatpush.msra.mxu0 %v1577
    %4196 = vmatpush.msra.mxu0 %v1571
    %4197 = vmatpush.msra.mxu0 %v1565
    %4198 = vmatpush.msra.mxu0 %v1559
    %4199 = vmatpush.msra.mxu0 %v1553
    %4200 = vmatmul.f32.gmra.mxu0 %v200
    %v4201 = vpop.f32.mrf.mxu0
    %v4202 = vadd.f32 %v4182, %v4201
    %4203 = vdwg.mxu0
    %4204 = vmatpush.msra.mxu0 %v1739
    %4205 = vmatpush.msra.mxu0 %v1733
    %4206 = vmatpush.msra.mxu0 %v1727
    %4207 = vmatpush.msra.mxu0 %v1721
    %4208 = vmatpush.msra.mxu0 %v1715
    %4209 = vmatpush.msra.mxu0 %v1709
    %4210 = vmatpush.msra.mxu0 %v1703
    %4211 = vmatpush.msra.mxu0 %v1697
    %4212 = vmatpush.msra.mxu0 %v1691
    %4213 = vmatpush.msra.mxu0 %v1685
    %4214 = vmatpush.msra.mxu0 %v1679
    %4215 = vmatpush.msra.mxu0 %v1673
    %4216 = vmatpush.msra.mxu0 %v1667
    %4217 = vmatpush.msra.mxu0 %v1661
    %4218 = vmatpush.msra.mxu0 %v1655
    %4219 = vmatpush.msra.mxu0 %v1649
    %4220 = vmatmul.f32.gmra.mxu0 %v201
    %v4221 = vpop.f32.mrf.mxu0
    %v4222 = vadd.f32 %v4202, %v4221
    %4223 = vdwg.mxu0
    %4224 = vmatpush.msra.mxu0 %v1835
    %4225 = vmatpush.msra.mxu0 %v1829
    %4226 = vmatpush.msra.mxu0 %v1823
    %4227 = vmatpush.msra.mxu0 %v1817
    %4228 = vmatpush.msra.mxu0 %v1811
    %4229 = vmatpush.msra.mxu0 %v1805
    %4230 = vmatpush.msra.mxu0 %v1799
    %4231 = vmatpush.msra.mxu0 %v1793
    %4232 = vmatpush.msra.mxu0 %v1787
    %4233 = vmatpush.msra.mxu0 %v1781
    %4234 = vmatpush.msra.mxu0 %v1775
    %4235 = vmatpush.msra.mxu0 %v1769
    %4236 = vmatpush.msra.mxu0 %v1763
    %4237 = vmatpush.msra.mxu0 %v1757
    %4238 = vmatpush.msra.mxu0 %v1751
    %4239 = vmatpush.msra.mxu0 %v1745
    %4240 = vmatmul.f32.gmra.mxu0 %v202
    %v4241 = vpop.f32.mrf.mxu0
    %v4242 = vadd.f32 %v4222, %v4241
    %4243 = vdwg.mxu0
    %4244 = vmatpush.msra.mxu0 %v1931
    %4245 = vmatpush.msra.mxu0 %v1925
    %4246 = vmatpush.msra.mxu0 %v1919
    %4247 = vmatpush.msra.mxu0 %v1913
    %4248 = vmatpush.msra.mxu0 %v1907
    %4249 = vmatpush.msra.mxu0 %v1901
    %4250 = vmatpush.msra.mxu0 %v1895
    %4251 = vmatpush.msra.mxu0 %v1889
    %4252 = vmatpush.msra.mxu0 %v1883
    %4253 = vmatpush.msra.mxu0 %v1877
    %4254 = vmatpush.msra.mxu0 %v1871
    %4255 = vmatpush.msra.mxu0 %v1865
    %4256 = vmatpush.msra.mxu0 %v1859
    %4257 = vmatpush.msra.mxu0 %v1853
    %4258 = vmatpush.msra.mxu0 %v1847
    %4259 = vmatpush.msra.mxu0 %v1841
    %4260 = vmatmul.f32.gmra.mxu0 %v203
    %v4261 = vpop.f32.mrf.mxu0
    %v4262 = vadd.f32 %v4242, %v4261
    %4263 = vdwg.mxu0
    %v4264 = vld [vmem:[#allocation13] sm:$0x3f]
    %v4266 = vperm.slane %v4264, 0
    %v4267 = vperm.slane %v4264, 1
    %v4268 = vperm.slane %v4264, 2
    %v4269 = vperm.slane %v4264, 3
    %v4270 = vperm.slane %v4264, 4
    %v4271 = vperm.slane %v4264, 5
    %4278 = vmatpush.msra.mxu0 %v2310
    %4279 = vmatpush.msra.mxu0 %v2304
    %4280 = vmatpush.msra.mxu0 %v2298
    %4281 = vmatpush.msra.mxu0 %v2292
    %4282 = vmatpush.msra.mxu0 %v2286
    %4283 = vmatpush.msra.mxu0 %v2280
    %4284 = vmatpush.msra.mxu0 %v2274
    %4285 = vmatpush.msra.mxu0 %v2268
    %4286 = vmatpush.msra.mxu0 %v2262
    %4287 = vmatpush.msra.mxu0 %v2256
    %4288 = vmatpush.msra.mxu0 %v2250
    %4289 = vmatpush.msra.mxu0 %v2244
    %4290 = vmatpush.msra.mxu0 %v2238
    %4291 = vmatpush.msra.mxu0 %v2232
    %4292 = vmatpush.msra.mxu0 %v2226
    %4293 = vmatpush.msra.mxu0 %v2220
    %4294 = vmatmul.f32.gmra.mxu0 %v198
    %v4295 = vpop.f32.mrf.mxu0
    %v4296 = vadd.f32 %v4266, %v4295
    %4297 = vdwg.mxu0
    %4298 = vmatpush.msra.mxu0 %v2406
    %4299 = vmatpush.msra.mxu0 %v2400
    %4300 = vmatpush.msra.mxu0 %v2394
    %4301 = vmatpush.msra.mxu0 %v2388
    %4302 = vmatpush.msra.mxu0 %v2382
    %4303 = vmatpush.msra.mxu0 %v2376
    %4304 = vmatpush.msra.mxu0 %v2370
    %4305 = vmatpush.msra.mxu0 %v2364
    %4306 = vmatpush.msra.mxu0 %v2358
    %4307 = vmatpush.msra.mxu0 %v2352
    %4308 = vmatpush.msra.mxu0 %v2346
    %4309 = vmatpush.msra.mxu0 %v2340
    %4310 = vmatpush.msra.mxu0 %v2334
    %4311 = vmatpush.msra.mxu0 %v2328
    %4312 = vmatpush.msra.mxu0 %v2322
    %4313 = vmatpush.msra.mxu0 %v2316
    %4314 = vmatmul.f32.gmra.mxu0 %v199
    %v4315 = vpop.f32.mrf.mxu0
    %v4316 = vadd.f32 %v4296, %v4315
    %4317 = vdwg.mxu0
    %4318 = vmatpush.msra.mxu0 %v2502
    %4319 = vmatpush.msra.mxu0 %v2496
    %4320 = vmatpush.msra.mxu0 %v2490
    %4321 = vmatpush.msra.mxu0 %v2484
    %4322 = vmatpush.msra.mxu0 %v2478
    %4323 = vmatpush.msra.mxu0 %v2472
    %4324 = vmatpush.msra.mxu0 %v2466
    %4325 = vmatpush.msra.mxu0 %v2460
    %4326 = vmatpush.msra.mxu0 %v2454
    %4327 = vmatpush.msra.mxu0 %v2448
    %4328 = vmatpush.msra.mxu0 %v2442
    %4329 = vmatpush.msra.mxu0 %v2436
    %4330 = vmatpush.msra.mxu0 %v2430
    %4331 = vmatpush.msra.mxu0 %v2424
    %4332 = vmatpush.msra.mxu0 %v2418
    %4333 = vmatpush.msra.mxu0 %v2412
    %4334 = vmatmul.f32.gmra.mxu0 %v200
    %v4335 = vpop.f32.mrf.mxu0
    %v4336 = vadd.f32 %v4316, %v4335
    %4337 = vdwg.mxu0
    %4338 = vmatpush.msra.mxu0 %v2598
    %4339 = vmatpush.msra.mxu0 %v2592
    %4340 = vmatpush.msra.mxu0 %v2586
    %4341 = vmatpush.msra.mxu0 %v2580
    %4342 = vmatpush.msra.mxu0 %v2574
    %4343 = vmatpush.msra.mxu0 %v2568
    %4344 = vmatpush.msra.mxu0 %v2562
    %4345 = vmatpush.msra.mxu0 %v2556
    %4346 = vmatpush.msra.mxu0 %v2550
    %4347 = vmatpush.msra.mxu0 %v2544
    %4348 = vmatpush.msra.mxu0 %v2538
    %4349 = vmatpush.msra.mxu0 %v2532
    %4350 = vmatpush.msra.mxu0 %v2526
    %4351 = vmatpush.msra.mxu0 %v2520
    %4352 = vmatpush.msra.mxu0 %v2514
    %4353 = vmatpush.msra.mxu0 %v2508
    %4354 = vmatmul.f32.gmra.mxu0 %v201
    %v4355 = vpop.f32.mrf.mxu0
    %v4356 = vadd.f32 %v4336, %v4355
    %4357 = vdwg.mxu0
    %4358 = vmatpush.msra.mxu0 %v2694
    %4359 = vmatpush.msra.mxu0 %v2688
    %4360 = vmatpush.msra.mxu0 %v2682
    %4361 = vmatpush.msra.mxu0 %v2676
    %4362 = vmatpush.msra.mxu0 %v2670
    %4363 = vmatpush.msra.mxu0 %v2664
    %4364 = vmatpush.msra.mxu0 %v2658
    %4365 = vmatpush.msra.mxu0 %v2652
    %4366 = vmatpush.msra.mxu0 %v2646
    %4367 = vmatpush.msra.mxu0 %v2640
    %4368 = vmatpush.msra.mxu0 %v2634
    %4369 = vmatpush.msra.mxu0 %v2628
    %4370 = vmatpush.msra.mxu0 %v2622
    %4371 = vmatpush.msra.mxu0 %v2616
    %4372 = vmatpush.msra.mxu0 %v2610
    %4373 = vmatpush.msra.mxu0 %v2604
    %4374 = vmatmul.f32.gmra.mxu0 %v202
    %v4375 = vpop.f32.mrf.mxu0
    %v4376 = vadd.f32 %v4356, %v4375
    %4377 = vdwg.mxu0
    %4378 = vmatpush.msra.mxu0 %v2790
    %4379 = vmatpush.msra.mxu0 %v2784
    %4380 = vmatpush.msra.mxu0 %v2778
    %4381 = vmatpush.msra.mxu0 %v2772
    %4382 = vmatpush.msra.mxu0 %v2766
    %4383 = vmatpush.msra.mxu0 %v2760
    %4384 = vmatpush.msra.mxu0 %v2754
    %4385 = vmatpush.msra.mxu0 %v2748
    %4386 = vmatpush.msra.mxu0 %v2742
    %4387 = vmatpush.msra.mxu0 %v2736
    %4388 = vmatpush.msra.mxu0 %v2730
    %4389 = vmatpush.msra.mxu0 %v2724
    %4390 = vmatpush.msra.mxu0 %v2718
    %4391 = vmatpush.msra.mxu0 %v2712
    %4392 = vmatpush.msra.mxu0 %v2706
    %4393 = vmatpush.msra.mxu0 %v2700
    %4394 = vmatmul.f32.gmra.mxu0 %v203
    %v4395 = vpop.f32.mrf.mxu0
    %v4396 = vadd.f32 %v4376, %v4395
    %4397 = vdwg.mxu0
    %4398 = vmatpush.msra.mxu0 %v2311
    %4399 = vmatpush.msra.mxu0 %v2305
    %4400 = vmatpush.msra.mxu0 %v2299
    %4401 = vmatpush.msra.mxu0 %v2293
    %4402 = vmatpush.msra.mxu0 %v2287
    %4403 = vmatpush.msra.mxu0 %v2281
    %4404 = vmatpush.msra.mxu0 %v2275
    %4405 = vmatpush.msra.mxu0 %v2269
    %4406 = vmatpush.msra.mxu0 %v2263
    %4407 = vmatpush.msra.mxu0 %v2257
    %4408 = vmatpush.msra.mxu0 %v2251
    %4409 = vmatpush.msra.mxu0 %v2245
    %4410 = vmatpush.msra.mxu0 %v2239
    %4411 = vmatpush.msra.mxu0 %v2233
    %4412 = vmatpush.msra.mxu0 %v2227
    %4413 = vmatpush.msra.mxu0 %v2221
    %4414 = vmatmul.f32.gmra.mxu0 %v198
    %v4415 = vpop.f32.mrf.mxu0
    %v4416 = vadd.f32 %v4267, %v4415
    %4417 = vdwg.mxu0
    %4418 = vmatpush.msra.mxu0 %v2407
    %4419 = vmatpush.msra.mxu0 %v2401
    %4420 = vmatpush.msra.mxu0 %v2395
    %4421 = vmatpush.msra.mxu0 %v2389
    %4422 = vmatpush.msra.mxu0 %v2383
    %4423 = vmatpush.msra.mxu0 %v2377
    %4424 = vmatpush.msra.mxu0 %v2371
    %4425 = vmatpush.msra.mxu0 %v2365
    %4426 = vmatpush.msra.mxu0 %v2359
    %4427 = vmatpush.msra.mxu0 %v2353
    %4428 = vmatpush.msra.mxu0 %v2347
    %4429 = vmatpush.msra.mxu0 %v2341
    %4430 = vmatpush.msra.mxu0 %v2335
    %4431 = vmatpush.msra.mxu0 %v2329
    %4432 = vmatpush.msra.mxu0 %v2323
    %4433 = vmatpush.msra.mxu0 %v2317
    %4434 = vmatmul.f32.gmra.mxu0 %v199
    %v4435 = vpop.f32.mrf.mxu0
    %v4436 = vadd.f32 %v4416, %v4435
    %4437 = vdwg.mxu0
    %4438 = vmatpush.msra.mxu0 %v2503
    %4439 = vmatpush.msra.mxu0 %v2497
    %4440 = vmatpush.msra.mxu0 %v2491
    %4441 = vmatpush.msra.mxu0 %v2485
    %4442 = vmatpush.msra.mxu0 %v2479
    %4443 = vmatpush.msra.mxu0 %v2473
    %4444 = vmatpush.msra.mxu0 %v2467
    %4445 = vmatpush.msra.mxu0 %v2461
    %4446 = vmatpush.msra.mxu0 %v2455
    %4447 = vmatpush.msra.mxu0 %v2449
    %4448 = vmatpush.msra.mxu0 %v2443
    %4449 = vmatpush.msra.mxu0 %v2437
    %4450 = vmatpush.msra.mxu0 %v2431
    %4451 = vmatpush.msra.mxu0 %v2425
    %4452 = vmatpush.msra.mxu0 %v2419
    %4453 = vmatpush.msra.mxu0 %v2413
    %4454 = vmatmul.f32.gmra.mxu0 %v200
    %v4455 = vpop.f32.mrf.mxu0
    %v4456 = vadd.f32 %v4436, %v4455
    %4457 = vdwg.mxu0
    %4458 = vmatpush.msra.mxu0 %v2599
    %4459 = vmatpush.msra.mxu0 %v2593
    %4460 = vmatpush.msra.mxu0 %v2587
    %4461 = vmatpush.msra.mxu0 %v2581
    %4462 = vmatpush.msra.mxu0 %v2575
    %4463 = vmatpush.msra.mxu0 %v2569
    %4464 = vmatpush.msra.mxu0 %v2563
    %4465 = vmatpush.msra.mxu0 %v2557
    %4466 = vmatpush.msra.mxu0 %v2551
    %4467 = vmatpush.msra.mxu0 %v2545
    %4468 = vmatpush.msra.mxu0 %v2539
    %4469 = vmatpush.msra.mxu0 %v2533
    %4470 = vmatpush.msra.mxu0 %v2527
    %4471 = vmatpush.msra.mxu0 %v2521
    %4472 = vmatpush.msra.mxu0 %v2515
    %4473 = vmatpush.msra.mxu0 %v2509
    %4474 = vmatmul.f32.gmra.mxu0 %v201
    %v4475 = vpop.f32.mrf.mxu0
    %v4476 = vadd.f32 %v4456, %v4475
    %4477 = vdwg.mxu0
    %4478 = vmatpush.msra.mxu0 %v2695
    %4479 = vmatpush.msra.mxu0 %v2689
    %4480 = vmatpush.msra.mxu0 %v2683
    %4481 = vmatpush.msra.mxu0 %v2677
    %4482 = vmatpush.msra.mxu0 %v2671
    %4483 = vmatpush.msra.mxu0 %v2665
    %4484 = vmatpush.msra.mxu0 %v2659
    %4485 = vmatpush.msra.mxu0 %v2653
    %4486 = vmatpush.msra.mxu0 %v2647
    %4487 = vmatpush.msra.mxu0 %v2641
    %4488 = vmatpush.msra.mxu0 %v2635
    %4489 = vmatpush.msra.mxu0 %v2629
    %4490 = vmatpush.msra.mxu0 %v2623
    %4491 = vmatpush.msra.mxu0 %v2617
    %4492 = vmatpush.msra.mxu0 %v2611
    %4493 = vmatpush.msra.mxu0 %v2605
    %4494 = vmatmul.f32.gmra.mxu0 %v202
    %v4495 = vpop.f32.mrf.mxu0
    %v4496 = vadd.f32 %v4476, %v4495
    %4497 = vdwg.mxu0
    %4498 = vmatpush.msra.mxu0 %v2791
    %4499 = vmatpush.msra.mxu0 %v2785
    %4500 = vmatpush.msra.mxu0 %v2779
    %4501 = vmatpush.msra.mxu0 %v2773
    %4502 = vmatpush.msra.mxu0 %v2767
    %4503 = vmatpush.msra.mxu0 %v2761
    %4504 = vmatpush.msra.mxu0 %v2755
    %4505 = vmatpush.msra.mxu0 %v2749
    %4506 = vmatpush.msra.mxu0 %v2743
    %4507 = vmatpush.msra.mxu0 %v2737
    %4508 = vmatpush.msra.mxu0 %v2731
    %4509 = vmatpush.msra.mxu0 %v2725
    %4510 = vmatpush.msra.mxu0 %v2719
    %4511 = vmatpush.msra.mxu0 %v2713
    %4512 = vmatpush.msra.mxu0 %v2707
    %4513 = vmatpush.msra.mxu0 %v2701
    %4514 = vmatmul.f32.gmra.mxu0 %v203
    %v4515 = vpop.f32.mrf.mxu0
    %v4516 = vadd.f32 %v4496, %v4515
    %4517 = vdwg.mxu0
    %4518 = vmatpush.msra.mxu0 %v2312
    %4519 = vmatpush.msra.mxu0 %v2306
    %4520 = vmatpush.msra.mxu0 %v2300
    %4521 = vmatpush.msra.mxu0 %v2294
    %4522 = vmatpush.msra.mxu0 %v2288
    %4523 = vmatpush.msra.mxu0 %v2282
    %4524 = vmatpush.msra.mxu0 %v2276
    %4525 = vmatpush.msra.mxu0 %v2270
    %4526 = vmatpush.msra.mxu0 %v2264
    %4527 = vmatpush.msra.mxu0 %v2258
    %4528 = vmatpush.msra.mxu0 %v2252
    %4529 = vmatpush.msra.mxu0 %v2246
    %4530 = vmatpush.msra.mxu0 %v2240
    %4531 = vmatpush.msra.mxu0 %v2234
    %4532 = vmatpush.msra.mxu0 %v2228
    %4533 = vmatpush.msra.mxu0 %v2222
    %4534 = vmatmul.f32.gmra.mxu0 %v198
    %v4535 = vpop.f32.mrf.mxu0
    %v4536 = vadd.f32 %v4268, %v4535
    %4537 = vdwg.mxu0
    %4538 = vmatpush.msra.mxu0 %v2408
    %4539 = vmatpush.msra.mxu0 %v2402
    %4540 = vmatpush.msra.mxu0 %v2396
    %4541 = vmatpush.msra.mxu0 %v2390
    %4542 = vmatpush.msra.mxu0 %v2384
    %4543 = vmatpush.msra.mxu0 %v2378
    %4544 = vmatpush.msra.mxu0 %v2372
    %4545 = vmatpush.msra.mxu0 %v2366
    %4546 = vmatpush.msra.mxu0 %v2360
    %4547 = vmatpush.msra.mxu0 %v2354
    %4548 = vmatpush.msra.mxu0 %v2348
    %4549 = vmatpush.msra.mxu0 %v2342
    %4550 = vmatpush.msra.mxu0 %v2336
    %4551 = vmatpush.msra.mxu0 %v2330
    %4552 = vmatpush.msra.mxu0 %v2324
    %4553 = vmatpush.msra.mxu0 %v2318
    %4554 = vmatmul.f32.gmra.mxu0 %v199
    %v4555 = vpop.f32.mrf.mxu0
    %v4556 = vadd.f32 %v4536, %v4555
    %4557 = vdwg.mxu0
    %4558 = vmatpush.msra.mxu0 %v2504
    %4559 = vmatpush.msra.mxu0 %v2498
    %4560 = vmatpush.msra.mxu0 %v2492
    %4561 = vmatpush.msra.mxu0 %v2486
    %4562 = vmatpush.msra.mxu0 %v2480
    %4563 = vmatpush.msra.mxu0 %v2474
    %4564 = vmatpush.msra.mxu0 %v2468
    %4565 = vmatpush.msra.mxu0 %v2462
    %4566 = vmatpush.msra.mxu0 %v2456
    %4567 = vmatpush.msra.mxu0 %v2450
    %4568 = vmatpush.msra.mxu0 %v2444
    %4569 = vmatpush.msra.mxu0 %v2438
    %4570 = vmatpush.msra.mxu0 %v2432
    %4571 = vmatpush.msra.mxu0 %v2426
    %4572 = vmatpush.msra.mxu0 %v2420
    %4573 = vmatpush.msra.mxu0 %v2414
    %4574 = vmatmul.f32.gmra.mxu0 %v200
    %v4575 = vpop.f32.mrf.mxu0
    %v4576 = vadd.f32 %v4556, %v4575
    %4577 = vdwg.mxu0
    %4578 = vmatpush.msra.mxu0 %v2600
    %4579 = vmatpush.msra.mxu0 %v2594
    %4580 = vmatpush.msra.mxu0 %v2588
    %4581 = vmatpush.msra.mxu0 %v2582
    %4582 = vmatpush.msra.mxu0 %v2576
    %4583 = vmatpush.msra.mxu0 %v2570
    %4584 = vmatpush.msra.mxu0 %v2564
    %4585 = vmatpush.msra.mxu0 %v2558
    %4586 = vmatpush.msra.mxu0 %v2552
    %4587 = vmatpush.msra.mxu0 %v2546
    %4588 = vmatpush.msra.mxu0 %v2540
    %4589 = vmatpush.msra.mxu0 %v2534
    %4590 = vmatpush.msra.mxu0 %v2528
    %4591 = vmatpush.msra.mxu0 %v2522
    %4592 = vmatpush.msra.mxu0 %v2516
    %4593 = vmatpush.msra.mxu0 %v2510
    %4594 = vmatmul.f32.gmra.mxu0 %v201
    %v4595 = vpop.f32.mrf.mxu0
    %v4596 = vadd.f32 %v4576, %v4595
    %4597 = vdwg.mxu0
    %4598 = vmatpush.msra.mxu0 %v2696
    %4599 = vmatpush.msra.mxu0 %v2690
    %4600 = vmatpush.msra.mxu0 %v2684
    %4601 = vmatpush.msra.mxu0 %v2678
    %4602 = vmatpush.msra.mxu0 %v2672
    %4603 = vmatpush.msra.mxu0 %v2666
    %4604 = vmatpush.msra.mxu0 %v2660
    %4605 = vmatpush.msra.mxu0 %v2654
    %4606 = vmatpush.msra.mxu0 %v2648
    %4607 = vmatpush.msra.mxu0 %v2642
    %4608 = vmatpush.msra.mxu0 %v2636
    %4609 = vmatpush.msra.mxu0 %v2630
    %4610 = vmatpush.msra.mxu0 %v2624
    %4611 = vmatpush.msra.mxu0 %v2618
    %4612 = vmatpush.msra.mxu0 %v2612
    %4613 = vmatpush.msra.mxu0 %v2606
    %4614 = vmatmul.f32.gmra.mxu0 %v202
    %v4615 = vpop.f32.mrf.mxu0
    %v4616 = vadd.f32 %v4596, %v4615
    %4617 = vdwg.mxu0
    %4618 = vmatpush.msra.mxu0 %v2792
    %4619 = vmatpush.msra.mxu0 %v2786
    %4620 = vmatpush.msra.mxu0 %v2780
    %4621 = vmatpush.msra.mxu0 %v2774
    %4622 = vmatpush.msra.mxu0 %v2768
    %4623 = vmatpush.msra.mxu0 %v2762
    %4624 = vmatpush.msra.mxu0 %v2756
    %4625 = vmatpush.msra.mxu0 %v2750
    %4626 = vmatpush.msra.mxu0 %v2744
    %4627 = vmatpush.msra.mxu0 %v2738
    %4628 = vmatpush.msra.mxu0 %v2732
    %4629 = vmatpush.msra.mxu0 %v2726
    %4630 = vmatpush.msra.mxu0 %v2720
    %4631 = vmatpush.msra.mxu0 %v2714
    %4632 = vmatpush.msra.mxu0 %v2708
    %4633 = vmatpush.msra.mxu0 %v2702
    %4634 = vmatmul.f32.gmra.mxu0 %v203
    %v4635 = vpop.f32.mrf.mxu0
    %v4636 = vadd.f32 %v4616, %v4635
    %4637 = vdwg.mxu0
    %4638 = vmatpush.msra.mxu0 %v2313
    %4639 = vmatpush.msra.mxu0 %v2307
    %4640 = vmatpush.msra.mxu0 %v2301
    %4641 = vmatpush.msra.mxu0 %v2295
    %4642 = vmatpush.msra.mxu0 %v2289
    %4643 = vmatpush.msra.mxu0 %v2283
    %4644 = vmatpush.msra.mxu0 %v2277
    %4645 = vmatpush.msra.mxu0 %v2271
    %4646 = vmatpush.msra.mxu0 %v2265
    %4647 = vmatpush.msra.mxu0 %v2259
    %4648 = vmatpush.msra.mxu0 %v2253
    %4649 = vmatpush.msra.mxu0 %v2247
    %4650 = vmatpush.msra.mxu0 %v2241
    %4651 = vmatpush.msra.mxu0 %v2235
    %4652 = vmatpush.msra.mxu0 %v2229
    %4653 = vmatpush.msra.mxu0 %v2223
    %4654 = vmatmul.f32.gmra.mxu0 %v198
    %v4655 = vpop.f32.mrf.mxu0
    %v4656 = vadd.f32 %v4269, %v4655
    %4657 = vdwg.mxu0
    %4658 = vmatpush.msra.mxu0 %v2409
    %4659 = vmatpush.msra.mxu0 %v2403
    %4660 = vmatpush.msra.mxu0 %v2397
    %4661 = vmatpush.msra.mxu0 %v2391
    %4662 = vmatpush.msra.mxu0 %v2385
    %4663 = vmatpush.msra.mxu0 %v2379
    %4664 = vmatpush.msra.mxu0 %v2373
    %4665 = vmatpush.msra.mxu0 %v2367
    %4666 = vmatpush.msra.mxu0 %v2361
    %4667 = vmatpush.msra.mxu0 %v2355
    %4668 = vmatpush.msra.mxu0 %v2349
    %4669 = vmatpush.msra.mxu0 %v2343
    %4670 = vmatpush.msra.mxu0 %v2337
    %4671 = vmatpush.msra.mxu0 %v2331
    %4672 = vmatpush.msra.mxu0 %v2325
    %4673 = vmatpush.msra.mxu0 %v2319
    %4674 = vmatmul.f32.gmra.mxu0 %v199
    %v4675 = vpop.f32.mrf.mxu0
    %v4676 = vadd.f32 %v4656, %v4675
    %4677 = vdwg.mxu0
    %4678 = vmatpush.msra.mxu0 %v2505
    %4679 = vmatpush.msra.mxu0 %v2499
    %4680 = vmatpush.msra.mxu0 %v2493
    %4681 = vmatpush.msra.mxu0 %v2487
    %4682 = vmatpush.msra.mxu0 %v2481
    %4683 = vmatpush.msra.mxu0 %v2475
    %4684 = vmatpush.msra.mxu0 %v2469
    %4685 = vmatpush.msra.mxu0 %v2463
    %4686 = vmatpush.msra.mxu0 %v2457
    %4687 = vmatpush.msra.mxu0 %v2451
    %4688 = vmatpush.msra.mxu0 %v2445
    %4689 = vmatpush.msra.mxu0 %v2439
    %4690 = vmatpush.msra.mxu0 %v2433
    %4691 = vmatpush.msra.mxu0 %v2427
    %4692 = vmatpush.msra.mxu0 %v2421
    %4693 = vmatpush.msra.mxu0 %v2415
    %4694 = vmatmul.f32.gmra.mxu0 %v200
    %v4695 = vpop.f32.mrf.mxu0
    %v4696 = vadd.f32 %v4676, %v4695
    %4697 = vdwg.mxu0
    %4698 = vmatpush.msra.mxu0 %v2601
    %4699 = vmatpush.msra.mxu0 %v2595
    %4700 = vmatpush.msra.mxu0 %v2589
    %4701 = vmatpush.msra.mxu0 %v2583
    %4702 = vmatpush.msra.mxu0 %v2577
    %4703 = vmatpush.msra.mxu0 %v2571
    %4704 = vmatpush.msra.mxu0 %v2565
    %4705 = vmatpush.msra.mxu0 %v2559
    %4706 = vmatpush.msra.mxu0 %v2553
    %4707 = vmatpush.msra.mxu0 %v2547
    %4708 = vmatpush.msra.mxu0 %v2541
    %4709 = vmatpush.msra.mxu0 %v2535
    %4710 = vmatpush.msra.mxu0 %v2529
    %4711 = vmatpush.msra.mxu0 %v2523
    %4712 = vmatpush.msra.mxu0 %v2517
    %4713 = vmatpush.msra.mxu0 %v2511
    %4714 = vmatmul.f32.gmra.mxu0 %v201
    %v4715 = vpop.f32.mrf.mxu0
    %v4716 = vadd.f32 %v4696, %v4715
    %4717 = vdwg.mxu0
    %4718 = vmatpush.msra.mxu0 %v2697
    %4719 = vmatpush.msra.mxu0 %v2691
    %4720 = vmatpush.msra.mxu0 %v2685
    %4721 = vmatpush.msra.mxu0 %v2679
    %4722 = vmatpush.msra.mxu0 %v2673
    %4723 = vmatpush.msra.mxu0 %v2667
    %4724 = vmatpush.msra.mxu0 %v2661
    %4725 = vmatpush.msra.mxu0 %v2655
    %4726 = vmatpush.msra.mxu0 %v2649
    %4727 = vmatpush.msra.mxu0 %v2643
    %4728 = vmatpush.msra.mxu0 %v2637
    %4729 = vmatpush.msra.mxu0 %v2631
    %4730 = vmatpush.msra.mxu0 %v2625
    %4731 = vmatpush.msra.mxu0 %v2619
    %4732 = vmatpush.msra.mxu0 %v2613
    %4733 = vmatpush.msra.mxu0 %v2607
    %4734 = vmatmul.f32.gmra.mxu0 %v202
    %v4735 = vpop.f32.mrf.mxu0
    %v4736 = vadd.f32 %v4716, %v4735
    %4737 = vdwg.mxu0
    %4738 = vmatpush.msra.mxu0 %v2793
    %4739 = vmatpush.msra.mxu0 %v2787
    %4740 = vmatpush.msra.mxu0 %v2781
    %4741 = vmatpush.msra.mxu0 %v2775
    %4742 = vmatpush.msra.mxu0 %v2769
    %4743 = vmatpush.msra.mxu0 %v2763
    %4744 = vmatpush.msra.mxu0 %v2757
    %4745 = vmatpush.msra.mxu0 %v2751
    %4746 = vmatpush.msra.mxu0 %v2745
    %4747 = vmatpush.msra.mxu0 %v2739
    %4748 = vmatpush.msra.mxu0 %v2733
    %4749 = vmatpush.msra.mxu0 %v2727
    %4750 = vmatpush.msra.mxu0 %v2721
    %4751 = vmatpush.msra.mxu0 %v2715
    %4752 = vmatpush.msra.mxu0 %v2709
    %4753 = vmatpush.msra.mxu0 %v2703
    %4754 = vmatmul.f32.gmra.mxu0 %v203
    %v4755 = vpop.f32.mrf.mxu0
    %v4756 = vadd.f32 %v4736, %v4755
    %4757 = vdwg.mxu0
    %4758 = vmatpush.msra.mxu0 %v2314
    %4759 = vmatpush.msra.mxu0 %v2308
    %4760 = vmatpush.msra.mxu0 %v2302
    %4761 = vmatpush.msra.mxu0 %v2296
    %4762 = vmatpush.msra.mxu0 %v2290
    %4763 = vmatpush.msra.mxu0 %v2284
    %4764 = vmatpush.msra.mxu0 %v2278
    %4765 = vmatpush.msra.mxu0 %v2272
    %4766 = vmatpush.msra.mxu0 %v2266
    %4767 = vmatpush.msra.mxu0 %v2260
    %4768 = vmatpush.msra.mxu0 %v2254
    %4769 = vmatpush.msra.mxu0 %v2248
    %4770 = vmatpush.msra.mxu0 %v2242
    %4771 = vmatpush.msra.mxu0 %v2236
    %4772 = vmatpush.msra.mxu0 %v2230
    %4773 = vmatpush.msra.mxu0 %v2224
    %4774 = vmatmul.f32.gmra.mxu0 %v198
    %v4775 = vpop.f32.mrf.mxu0
    %v4776 = vadd.f32 %v4270, %v4775
    %4777 = vdwg.mxu0
    %4778 = vmatpush.msra.mxu0 %v2410
    %4779 = vmatpush.msra.mxu0 %v2404
    %4780 = vmatpush.msra.mxu0 %v2398
    %4781 = vmatpush.msra.mxu0 %v2392
    %4782 = vmatpush.msra.mxu0 %v2386
    %4783 = vmatpush.msra.mxu0 %v2380
    %4784 = vmatpush.msra.mxu0 %v2374
    %4785 = vmatpush.msra.mxu0 %v2368
    %4786 = vmatpush.msra.mxu0 %v2362
    %4787 = vmatpush.msra.mxu0 %v2356
    %4788 = vmatpush.msra.mxu0 %v2350
    %4789 = vmatpush.msra.mxu0 %v2344
    %4790 = vmatpush.msra.mxu0 %v2338
    %4791 = vmatpush.msra.mxu0 %v2332
    %4792 = vmatpush.msra.mxu0 %v2326
    %4793 = vmatpush.msra.mxu0 %v2320
    %4794 = vmatmul.f32.gmra.mxu0 %v199
    %v4795 = vpop.f32.mrf.mxu0
    %v4796 = vadd.f32 %v4776, %v4795
    %4797 = vdwg.mxu0
    %4798 = vmatpush.msra.mxu0 %v2506
    %4799 = vmatpush.msra.mxu0 %v2500
    %4800 = vmatpush.msra.mxu0 %v2494
    %4801 = vmatpush.msra.mxu0 %v2488
    %4802 = vmatpush.msra.mxu0 %v2482
    %4803 = vmatpush.msra.mxu0 %v2476
    %4804 = vmatpush.msra.mxu0 %v2470
    %4805 = vmatpush.msra.mxu0 %v2464
    %4806 = vmatpush.msra.mxu0 %v2458
    %4807 = vmatpush.msra.mxu0 %v2452
    %4808 = vmatpush.msra.mxu0 %v2446
    %4809 = vmatpush.msra.mxu0 %v2440
    %4810 = vmatpush.msra.mxu0 %v2434
    %4811 = vmatpush.msra.mxu0 %v2428
    %4812 = vmatpush.msra.mxu0 %v2422
    %4813 = vmatpush.msra.mxu0 %v2416
    %4814 = vmatmul.f32.gmra.mxu0 %v200
    %v4815 = vpop.f32.mrf.mxu0
    %v4816 = vadd.f32 %v4796, %v4815
    %4817 = vdwg.mxu0
    %4818 = vmatpush.msra.mxu0 %v2602
    %4819 = vmatpush.msra.mxu0 %v2596
    %4820 = vmatpush.msra.mxu0 %v2590
    %4821 = vmatpush.msra.mxu0 %v2584
    %4822 = vmatpush.msra.mxu0 %v2578
    %4823 = vmatpush.msra.mxu0 %v2572
    %4824 = vmatpush.msra.mxu0 %v2566
    %4825 = vmatpush.msra.mxu0 %v2560
    %4826 = vmatpush.msra.mxu0 %v2554
    %4827 = vmatpush.msra.mxu0 %v2548
    %4828 = vmatpush.msra.mxu0 %v2542
    %4829 = vmatpush.msra.mxu0 %v2536
    %4830 = vmatpush.msra.mxu0 %v2530
    %4831 = vmatpush.msra.mxu0 %v2524
    %4832 = vmatpush.msra.mxu0 %v2518
    %4833 = vmatpush.msra.mxu0 %v2512
    %4834 = vmatmul.f32.gmra.mxu0 %v201
    %v4835 = vpop.f32.mrf.mxu0
    %v4836 = vadd.f32 %v4816, %v4835
    %4837 = vdwg.mxu0
    %4838 = vmatpush.msra.mxu0 %v2698
    %4839 = vmatpush.msra.mxu0 %v2692
    %4840 = vmatpush.msra.mxu0 %v2686
    %4841 = vmatpush.msra.mxu0 %v2680
    %4842 = vmatpush.msra.mxu0 %v2674
    %4843 = vmatpush.msra.mxu0 %v2668
    %4844 = vmatpush.msra.mxu0 %v2662
    %4845 = vmatpush.msra.mxu0 %v2656
    %4846 = vmatpush.msra.mxu0 %v2650
    %4847 = vmatpush.msra.mxu0 %v2644
    %4848 = vmatpush.msra.mxu0 %v2638
    %4849 = vmatpush.msra.mxu0 %v2632
    %4850 = vmatpush.msra.mxu0 %v2626
    %4851 = vmatpush.msra.mxu0 %v2620
    %4852 = vmatpush.msra.mxu0 %v2614
    %4853 = vmatpush.msra.mxu0 %v2608
    %4854 = vmatmul.f32.gmra.mxu0 %v202
    %v4855 = vpop.f32.mrf.mxu0
    %v4856 = vadd.f32 %v4836, %v4855
    %4857 = vdwg.mxu0
    %4858 = vmatpush.msra.mxu0 %v2794
    %4859 = vmatpush.msra.mxu0 %v2788
    %4860 = vmatpush.msra.mxu0 %v2782
    %4861 = vmatpush.msra.mxu0 %v2776
    %4862 = vmatpush.msra.mxu0 %v2770
    %4863 = vmatpush.msra.mxu0 %v2764
    %4864 = vmatpush.msra.mxu0 %v2758
    %4865 = vmatpush.msra.mxu0 %v2752
    %4866 = vmatpush.msra.mxu0 %v2746
    %4867 = vmatpush.msra.mxu0 %v2740
    %4868 = vmatpush.msra.mxu0 %v2734
    %4869 = vmatpush.msra.mxu0 %v2728
    %4870 = vmatpush.msra.mxu0 %v2722
    %4871 = vmatpush.msra.mxu0 %v2716
    %4872 = vmatpush.msra.mxu0 %v2710
    %4873 = vmatpush.msra.mxu0 %v2704
    %4874 = vmatmul.f32.gmra.mxu0 %v203
    %v4875 = vpop.f32.mrf.mxu0
    %v4876 = vadd.f32 %v4856, %v4875
    %4877 = vdwg.mxu0
    %4878 = vmatpush.msra.mxu0 %v2315
    %4879 = vmatpush.msra.mxu0 %v2309
    %4880 = vmatpush.msra.mxu0 %v2303
    %4881 = vmatpush.msra.mxu0 %v2297
    %4882 = vmatpush.msra.mxu0 %v2291
    %4883 = vmatpush.msra.mxu0 %v2285
    %4884 = vmatpush.msra.mxu0 %v2279
    %4885 = vmatpush.msra.mxu0 %v2273
    %4886 = vmatpush.msra.mxu0 %v2267
    %4887 = vmatpush.msra.mxu0 %v2261
    %4888 = vmatpush.msra.mxu0 %v2255
    %4889 = vmatpush.msra.mxu0 %v2249
    %4890 = vmatpush.msra.mxu0 %v2243
    %4891 = vmatpush.msra.mxu0 %v2237
    %4892 = vmatpush.msra.mxu0 %v2231
    %4893 = vmatpush.msra.mxu0 %v2225
    %4894 = vmatmul.f32.gmra.mxu0 %v198
    %v4895 = vpop.f32.mrf.mxu0
    %v4896 = vadd.f32 %v4271, %v4895
    %4897 = vdwg.mxu0
    %4898 = vmatpush.msra.mxu0 %v2411
    %4899 = vmatpush.msra.mxu0 %v2405
    %4900 = vmatpush.msra.mxu0 %v2399
    %4901 = vmatpush.msra.mxu0 %v2393
    %4902 = vmatpush.msra.mxu0 %v2387
    %4903 = vmatpush.msra.mxu0 %v2381
    %4904 = vmatpush.msra.mxu0 %v2375
    %4905 = vmatpush.msra.mxu0 %v2369
    %4906 = vmatpush.msra.mxu0 %v2363
    %4907 = vmatpush.msra.mxu0 %v2357
    %4908 = vmatpush.msra.mxu0 %v2351
    %4909 = vmatpush.msra.mxu0 %v2345
    %4910 = vmatpush.msra.mxu0 %v2339
    %4911 = vmatpush.msra.mxu0 %v2333
    %4912 = vmatpush.msra.mxu0 %v2327
    %4913 = vmatpush.msra.mxu0 %v2321
    %4914 = vmatmul.f32.gmra.mxu0 %v199
    %v4915 = vpop.f32.mrf.mxu0
    %v4916 = vadd.f32 %v4896, %v4915
    %4917 = vdwg.mxu0
    %4918 = vmatpush.msra.mxu0 %v2507
    %4919 = vmatpush.msra.mxu0 %v2501
    %4920 = vmatpush.msra.mxu0 %v2495
    %4921 = vmatpush.msra.mxu0 %v2489
    %4922 = vmatpush.msra.mxu0 %v2483
    %4923 = vmatpush.msra.mxu0 %v2477
    %4924 = vmatpush.msra.mxu0 %v2471
    %4925 = vmatpush.msra.mxu0 %v2465
    %4926 = vmatpush.msra.mxu0 %v2459
    %4927 = vmatpush.msra.mxu0 %v2453
    %4928 = vmatpush.msra.mxu0 %v2447
    %4929 = vmatpush.msra.mxu0 %v2441
    %4930 = vmatpush.msra.mxu0 %v2435
    %4931 = vmatpush.msra.mxu0 %v2429
    %4932 = vmatpush.msra.mxu0 %v2423
    %4933 = vmatpush.msra.mxu0 %v2417
    %4934 = vmatmul.f32.gmra.mxu0 %v200
    %v4935 = vpop.f32.mrf.mxu0
    %v4936 = vadd.f32 %v4916, %v4935
    %4937 = vdwg.mxu0
    %4938 = vmatpush.msra.mxu0 %v2603
    %4939 = vmatpush.msra.mxu0 %v2597
    %4940 = vmatpush.msra.mxu0 %v2591
    %4941 = vmatpush.msra.mxu0 %v2585
    %4942 = vmatpush.msra.mxu0 %v2579
    %4943 = vmatpush.msra.mxu0 %v2573
    %4944 = vmatpush.msra.mxu0 %v2567
    %4945 = vmatpush.msra.mxu0 %v2561
    %4946 = vmatpush.msra.mxu0 %v2555
    %4947 = vmatpush.msra.mxu0 %v2549
    %4948 = vmatpush.msra.mxu0 %v2543
    %4949 = vmatpush.msra.mxu0 %v2537
    %4950 = vmatpush.msra.mxu0 %v2531
    %4951 = vmatpush.msra.mxu0 %v2525
    %4952 = vmatpush.msra.mxu0 %v2519
    %4953 = vmatpush.msra.mxu0 %v2513
    %4954 = vmatmul.f32.gmra.mxu0 %v201
    %v4955 = vpop.f32.mrf.mxu0
    %v4956 = vadd.f32 %v4936, %v4955
    %4957 = vdwg.mxu0
    %4958 = vmatpush.msra.mxu0 %v2699
    %4959 = vmatpush.msra.mxu0 %v2693
    %4960 = vmatpush.msra.mxu0 %v2687
    %4961 = vmatpush.msra.mxu0 %v2681
    %4962 = vmatpush.msra.mxu0 %v2675
    %4963 = vmatpush.msra.mxu0 %v2669
    %4964 = vmatpush.msra.mxu0 %v2663
    %4965 = vmatpush.msra.mxu0 %v2657
    %4966 = vmatpush.msra.mxu0 %v2651
    %4967 = vmatpush.msra.mxu0 %v2645
    %4968 = vmatpush.msra.mxu0 %v2639
    %4969 = vmatpush.msra.mxu0 %v2633
    %4970 = vmatpush.msra.mxu0 %v2627
    %4971 = vmatpush.msra.mxu0 %v2621
    %4972 = vmatpush.msra.mxu0 %v2615
    %4973 = vmatpush.msra.mxu0 %v2609
    %4974 = vmatmul.f32.gmra.mxu0 %v202
    %v4975 = vpop.f32.mrf.mxu0
    %v4976 = vadd.f32 %v4956, %v4975
    %4977 = vdwg.mxu0
    %4978 = vmatpush.msra.mxu0 %v2795
    %4979 = vmatpush.msra.mxu0 %v2789
    %4980 = vmatpush.msra.mxu0 %v2783
    %4981 = vmatpush.msra.mxu0 %v2777
    %4982 = vmatpush.msra.mxu0 %v2771
    %4983 = vmatpush.msra.mxu0 %v2765
    %4984 = vmatpush.msra.mxu0 %v2759
    %4985 = vmatpush.msra.mxu0 %v2753
    %4986 = vmatpush.msra.mxu0 %v2747
    %4987 = vmatpush.msra.mxu0 %v2741
    %4988 = vmatpush.msra.mxu0 %v2735
    %4989 = vmatpush.msra.mxu0 %v2729
    %4990 = vmatpush.msra.mxu0 %v2723
    %4991 = vmatpush.msra.mxu0 %v2717
    %4992 = vmatpush.msra.mxu0 %v2711
    %4993 = vmatpush.msra.mxu0 %v2705
    %4994 = vmatmul.f32.gmra.mxu0 %v203
    %v4995 = vpop.f32.mrf.mxu0
    %v4996 = vadd.f32 %v4976, %v4995
    %4997 = vdwg.mxu0
    %vm4998 = vcmask 523264
    %v5000 = vsel %vm4998, %v2928, 0
    %v5003 = vsel %vm4998, %v3662, 0
    %5005 = vmatpush.xpose.msra.mxu0 0.0
    %5006 = vmatpush.xpose.msra.mxu0 0.0
    %5007 = vmatpush.xpose.msra.mxu0 0.0
    %5008 = vmatpush.xpose.msra.mxu0 0.0
    %5009 = vmatpush.xpose.msra.mxu0 0.0
    %5010 = vmatpush.xpose.msra.mxu0 0.0
    %5011 = vmatpush.xpose.msra.mxu0 0.0
    %5012 = vmatpush.xpose.msra.mxu0 0.0
    %5013 = vmatpush.xpose.msra.mxu0 0.0
    %5014 = vmatpush.xpose.msra.mxu0 0.0
    %5015 = vmatpush.xpose.msra.mxu0 0.0
    %5016 = vmatpush.xpose.msra.mxu0 0.0
    %5017 = vmatpush.xpose.msra.mxu0 0.0
    %5018 = vmatpush.xpose.msra.mxu0 0.0
    %5019 = vmatpush.xpose.msra.mxu0 0.0
    %5020 = vmatpush.xpose.msra.mxu0 %v5003
    %5021 = vmatmul.f32.gmra.mxu0 %v5000
    %v5022 = vpop.f32.mrf.mxu0
    %v5023 = vadd.f32 0.0, %v5022
    %5024 = vdwg.mxu0
    %vm5025 = vcmask 64512
    %v5026 = vsel %vm5025, %v5023, -inf
    %5027 = vmax.xlane.f32.xlu0 %v5026
    %v5028 = vpop.xlane.xlu0 %5027
    %v5029 = vsub.f32 %v5023, %v5028
    %v5030 = vmul.f32 %v5029, 1.442695
    %v5031 = vpow.pop %v5030
    %v5032 = vsel %vm5025, %v5031, 0.0
    %5033 = vadd.xlane.f32.xlu0 %v5032
    %v5034 = vpop.xlane.xlu0 %5033
    %v5035 = vrcp.pop %v5034
    %v5036 = vmul.f32 %v5031, %v5035
    %v5038 = vsel %vm5025, %v5036, 0
    %5040 = vmatpush.msra.mxu0 0.0
    %5041 = vmatpush.msra.mxu0 0.0
    %5042 = vmatpush.msra.mxu0 0.0
    %5043 = vmatpush.msra.mxu0 0.0
    %5044 = vmatpush.msra.mxu0 0.0
    %5045 = vmatpush.msra.mxu0 0.0
    %5046 = vmatpush.msra.mxu0 0.0
    %5047 = vmatpush.msra.mxu0 0.0
    %5048 = vmatpush.msra.mxu0 0.0
    %5049 = vmatpush.msra.mxu0 0.0
    %5050 = vmatpush.msra.mxu0 0.0
    %5051 = vmatpush.msra.mxu0 0.0
    %5052 = vmatpush.msra.mxu0 0.0
    %5053 = vmatpush.msra.mxu0 0.0
    %5054 = vmatpush.msra.mxu0 0.0
    %5055 = vmatpush.msra.mxu0 %v4396
    %5056 = vmatmul.f32.gmra.mxu0 %v5038
    %v5057 = vpop.f32.mrf.mxu0
    %v5058 = vadd.f32 0.0, %v5057
    %5059 = vdwg.mxu0
    %5060 = vrot.lane.b32.xlu0 %v2928, 64
    %v5061 = vpop.permute.xlu0 %5060
    %5062 = vrot.lane.b32.xlu0 %v3662, 64
    %v5063 = vpop.permute.xlu0 %5062
    %v5064 = vsel %vm4998, %v5061, 0
    %v5066 = vsel %vm4998, %v5063, 0
    %5068 = vmatpush.xpose.msra.mxu0 0.0
    %5069 = vmatpush.xpose.msra.mxu0 0.0
    %5070 = vmatpush.xpose.msra.mxu0 0.0
    %5071 = vmatpush.xpose.msra.mxu0 0.0
    %5072 = vmatpush.xpose.msra.mxu0 0.0
    %5073 = vmatpush.xpose.msra.mxu0 0.0
    %5074 = vmatpush.xpose.msra.mxu0 0.0
    %5075 = vmatpush.xpose.msra.mxu0 0.0
    %5076 = vmatpush.xpose.msra.mxu0 0.0
    %5077 = vmatpush.xpose.msra.mxu0 0.0
    %5078 = vmatpush.xpose.msra.mxu0 0.0
    %5079 = vmatpush.xpose.msra.mxu0 0.0
    %5080 = vmatpush.xpose.msra.mxu0 0.0
    %5081 = vmatpush.xpose.msra.mxu0 0.0
    %5082 = vmatpush.xpose.msra.mxu0 0.0
    %5083 = vmatpush.xpose.msra.mxu0 %v5066
    %5084 = vmatmul.f32.gmra.mxu0 %v5064
    %v5085 = vpop.f32.mrf.mxu0
    %v5086 = vadd.f32 0.0, %v5085
    %5087 = vdwg.mxu0
    %v5088 = vsel %vm5025, %v5086, -inf
    %5089 = vmax.xlane.f32.xlu0 %v5088
    %v5090 = vpop.xlane.xlu0 %5089
    %v5091 = vsub.f32 %v5086, %v5090
    %v5092 = vmul.f32 %v5091, 1.442695
    %v5093 = vpow.pop %v5092
    %v5094 = vsel %vm5025, %v5093, 0.0
    %5095 = vadd.xlane.f32.xlu0 %v5094
    %v5096 = vpop.xlane.xlu0 %5095
    %v5097 = vrcp.pop %v5096
    %v5098 = vmul.f32 %v5093, %v5097
    %5100 = vrot.lane.b32.xlu0 %v4396, 64
    %v5101 = vpop.permute.xlu0 %5100
    %v5104 = vsel %vm5025, %v5098, 0
    %5106 = vmatpush.msra.mxu0 0.0
    %5107 = vmatpush.msra.mxu0 0.0
    %5108 = vmatpush.msra.mxu0 0.0
    %5109 = vmatpush.msra.mxu0 0.0
    %5110 = vmatpush.msra.mxu0 0.0
    %5111 = vmatpush.msra.mxu0 0.0
    %5112 = vmatpush.msra.mxu0 0.0
    %5113 = vmatpush.msra.mxu0 0.0
    %5114 = vmatpush.msra.mxu0 0.0
    %5115 = vmatpush.msra.mxu0 0.0
    %5116 = vmatpush.msra.mxu0 0.0
    %5117 = vmatpush.msra.mxu0 0.0
    %5118 = vmatpush.msra.mxu0 0.0
    %5119 = vmatpush.msra.mxu0 0.0
    %5120 = vmatpush.msra.mxu0 0.0
    %5121 = vmatpush.msra.mxu0 %v5101
    %5122 = vmatmul.f32.gmra.mxu0 %v5104
    %v5123 = vpop.f32.mrf.mxu0
    %v5124 = vadd.f32 0.0, %v5123
    %5125 = vdwg.mxu0
    %v5127 = vsel %vm4998, %v3048, 0
    %v5130 = vsel %vm4998, %v3782, 0
    %5132 = vmatpush.xpose.msra.mxu0 0.0
    %5133 = vmatpush.xpose.msra.mxu0 0.0
    %5134 = vmatpush.xpose.msra.mxu0 0.0
    %5135 = vmatpush.xpose.msra.mxu0 0.0
    %5136 = vmatpush.xpose.msra.mxu0 0.0
    %5137 = vmatpush.xpose.msra.mxu0 0.0
    %5138 = vmatpush.xpose.msra.mxu0 0.0
    %5139 = vmatpush.xpose.msra.mxu0 0.0
    %5140 = vmatpush.xpose.msra.mxu0 0.0
    %5141 = vmatpush.xpose.msra.mxu0 0.0
    %5142 = vmatpush.xpose.msra.mxu0 0.0
    %5143 = vmatpush.xpose.msra.mxu0 0.0
    %5144 = vmatpush.xpose.msra.mxu0 0.0
    %5145 = vmatpush.xpose.msra.mxu0 0.0
    %5146 = vmatpush.xpose.msra.mxu0 0.0
    %5147 = vmatpush.xpose.msra.mxu0 %v5130
    %5148 = vmatmul.f32.gmra.mxu0 %v5127
    %v5149 = vpop.f32.mrf.mxu0
    %v5150 = vadd.f32 0.0, %v5149
    %5151 = vdwg.mxu0
    %v5152 = vsel %vm5025, %v5150, -inf
    %5153 = vmax.xlane.f32.xlu0 %v5152
    %v5154 = vpop.xlane.xlu0 %5153
    %v5155 = vsub.f32 %v5150, %v5154
    %v5156 = vmul.f32 %v5155, 1.442695
    %v5157 = vpow.pop %v5156
    %v5158 = vsel %vm5025, %v5157, 0.0
    %5159 = vadd.xlane.f32.xlu0 %v5158
    %v5160 = vpop.xlane.xlu0 %5159
    %v5161 = vrcp.pop %v5160
    %v5162 = vmul.f32 %v5157, %v5161
    %v5164 = vsel %vm5025, %v5162, 0
    %5166 = vmatpush.msra.mxu0 0.0
    %5167 = vmatpush.msra.mxu0 0.0
    %5168 = vmatpush.msra.mxu0 0.0
    %5169 = vmatpush.msra.mxu0 0.0
    %5170 = vmatpush.msra.mxu0 0.0
    %5171 = vmatpush.msra.mxu0 0.0
    %5172 = vmatpush.msra.mxu0 0.0
    %5173 = vmatpush.msra.mxu0 0.0
    %5174 = vmatpush.msra.mxu0 0.0
    %5175 = vmatpush.msra.mxu0 0.0
    %5176 = vmatpush.msra.mxu0 0.0
    %5177 = vmatpush.msra.mxu0 0.0
    %5178 = vmatpush.msra.mxu0 0.0
    %5179 = vmatpush.msra.mxu0 0.0
    %5180 = vmatpush.msra.mxu0 0.0
    %5181 = vmatpush.msra.mxu0 %v4516
    %5182 = vmatmul.f32.gmra.mxu0 %v5164
    %v5183 = vpop.f32.mrf.mxu0
    %v5184 = vadd.f32 0.0, %v5183
    %5185 = vdwg.mxu0
    %5186 = vrot.lane.b32.xlu0 %v3048, 64
    %v5187 = vpop.permute.xlu0 %5186
    %5188 = vrot.lane.b32.xlu0 %v3782, 64
    %v5189 = vpop.permute.xlu0 %5188
    %v5190 = vsel %vm4998, %v5187, 0
    %v5192 = vsel %vm4998, %v5189, 0
    %5194 = vmatpush.xpose.msra.mxu0 0.0
    %5195 = vmatpush.xpose.msra.mxu0 0.0
    %5196 = vmatpush.xpose.msra.mxu0 0.0
    %5197 = vmatpush.xpose.msra.mxu0 0.0
    %5198 = vmatpush.xpose.msra.mxu0 0.0
    %5199 = vmatpush.xpose.msra.mxu0 0.0
    %5200 = vmatpush.xpose.msra.mxu0 0.0
    %5201 = vmatpush.xpose.msra.mxu0 0.0
    %5202 = vmatpush.xpose.msra.mxu0 0.0
    %5203 = vmatpush.xpose.msra.mxu0 0.0
    %5204 = vmatpush.xpose.msra.mxu0 0.0
    %5205 = vmatpush.xpose.msra.mxu0 0.0
    %5206 = vmatpush.xpose.msra.mxu0 0.0
    %5207 = vmatpush.xpose.msra.mxu0 0.0
    %5208 = vmatpush.xpose.msra.mxu0 0.0
    %5209 = vmatpush.xpose.msra.mxu0 %v5192
    %5210 = vmatmul.f32.gmra.mxu0 %v5190
    %v5211 = vpop.f32.mrf.mxu0
    %v5212 = vadd.f32 0.0, %v5211
    %5213 = vdwg.mxu0
    %v5214 = vsel %vm5025, %v5212, -inf
    %5215 = vmax.xlane.f32.xlu0 %v5214
    %v5216 = vpop.xlane.xlu0 %5215
    %v5217 = vsub.f32 %v5212, %v5216
    %v5218 = vmul.f32 %v5217, 1.442695
    %v5219 = vpow.pop %v5218
    %v5220 = vsel %vm5025, %v5219, 0.0
    %5221 = vadd.xlane.f32.xlu0 %v5220
    %v5222 = vpop.xlane.xlu0 %5221
    %v5223 = vrcp.pop %v5222
    %v5224 = vmul.f32 %v5219, %v5223
    %5226 = vrot.lane.b32.xlu0 %v4516, 64
    %v5227 = vpop.permute.xlu0 %5226
    %v5230 = vsel %vm5025, %v5224, 0
    %5232 = vmatpush.msra.mxu0 0.0
    %5233 = vmatpush.msra.mxu0 0.0
    %5234 = vmatpush.msra.mxu0 0.0
    %5235 = vmatpush.msra.mxu0 0.0
    %5236 = vmatpush.msra.mxu0 0.0
    %5237 = vmatpush.msra.mxu0 0.0
    %5238 = vmatpush.msra.mxu0 0.0
    %5239 = vmatpush.msra.mxu0 0.0
    %5240 = vmatpush.msra.mxu0 0.0
    %5241 = vmatpush.msra.mxu0 0.0
    %5242 = vmatpush.msra.mxu0 0.0
    %5243 = vmatpush.msra.mxu0 0.0
    %5244 = vmatpush.msra.mxu0 0.0
    %5245 = vmatpush.msra.mxu0 0.0
    %5246 = vmatpush.msra.mxu0 0.0
    %5247 = vmatpush.msra.mxu0 %v5227
    %5248 = vmatmul.f32.gmra.mxu0 %v5230
    %v5249 = vpop.f32.mrf.mxu0
    %v5250 = vadd.f32 0.0, %v5249
    %5251 = vdwg.mxu0
    %v5253 = vsel %vm4998, %v3168, 0
    %v5256 = vsel %vm4998, %v3902, 0
    %5258 = vmatpush.xpose.msra.mxu0 0.0
    %5259 = vmatpush.xpose.msra.mxu0 0.0
    %5260 = vmatpush.xpose.msra.mxu0 0.0
    %5261 = vmatpush.xpose.msra.mxu0 0.0
    %5262 = vmatpush.xpose.msra.mxu0 0.0
    %5263 = vmatpush.xpose.msra.mxu0 0.0
    %5264 = vmatpush.xpose.msra.mxu0 0.0
    %5265 = vmatpush.xpose.msra.mxu0 0.0
    %5266 = vmatpush.xpose.msra.mxu0 0.0
    %5267 = vmatpush.xpose.msra.mxu0 0.0
    %5268 = vmatpush.xpose.msra.mxu0 0.0
    %5269 = vmatpush.xpose.msra.mxu0 0.0
    %5270 = vmatpush.xpose.msra.mxu0 0.0
    %5271 = vmatpush.xpose.msra.mxu0 0.0
    %5272 = vmatpush.xpose.msra.mxu0 0.0
    %5273 = vmatpush.xpose.msra.mxu0 %v5256
    %5274 = vmatmul.f32.gmra.mxu0 %v5253
    %v5275 = vpop.f32.mrf.mxu0
    %v5276 = vadd.f32 0.0, %v5275
    %5277 = vdwg.mxu0
    %v5278 = vsel %vm5025, %v5276, -inf
    %5279 = vmax.xlane.f32.xlu0 %v5278
    %v5280 = vpop.xlane.xlu0 %5279
    %v5281 = vsub.f32 %v5276, %v5280
    %v5282 = vmul.f32 %v5281, 1.442695
    %v5283 = vpow.pop %v5282
    %v5284 = vsel %vm5025, %v5283, 0.0
    %5285 = vadd.xlane.f32.xlu0 %v5284
    %v5286 = vpop.xlane.xlu0 %5285
    %v5287 = vrcp.pop %v5286
    %v5288 = vmul.f32 %v5283, %v5287
    %v5290 = vsel %vm5025, %v5288, 0
    %5292 = vmatpush.msra.mxu0 0.0
    %5293 = vmatpush.msra.mxu0 0.0
    %5294 = vmatpush.msra.mxu0 0.0
    %5295 = vmatpush.msra.mxu0 0.0
    %5296 = vmatpush.msra.mxu0 0.0
    %5297 = vmatpush.msra.mxu0 0.0
    %5298 = vmatpush.msra.mxu0 0.0
    %5299 = vmatpush.msra.mxu0 0.0
    %5300 = vmatpush.msra.mxu0 0.0
    %5301 = vmatpush.msra.mxu0 0.0
    %5302 = vmatpush.msra.mxu0 0.0
    %5303 = vmatpush.msra.mxu0 0.0
    %5304 = vmatpush.msra.mxu0 0.0
    %5305 = vmatpush.msra.mxu0 0.0
    %5306 = vmatpush.msra.mxu0 0.0
    %5307 = vmatpush.msra.mxu0 %v4636
    %5308 = vmatmul.f32.gmra.mxu0 %v5290
    %v5309 = vpop.f32.mrf.mxu0
    %v5310 = vadd.f32 0.0, %v5309
    %5311 = vdwg.mxu0
    %5312 = vrot.lane.b32.xlu0 %v3168, 64
    %v5313 = vpop.permute.xlu0 %5312
    %5314 = vrot.lane.b32.xlu0 %v3902, 64
    %v5315 = vpop.permute.xlu0 %5314
    %v5316 = vsel %vm4998, %v5313, 0
    %v5318 = vsel %vm4998, %v5315, 0
    %5320 = vmatpush.xpose.msra.mxu0 0.0
    %5321 = vmatpush.xpose.msra.mxu0 0.0
    %5322 = vmatpush.xpose.msra.mxu0 0.0
    %5323 = vmatpush.xpose.msra.mxu0 0.0
    %5324 = vmatpush.xpose.msra.mxu0 0.0
    %5325 = vmatpush.xpose.msra.mxu0 0.0
    %5326 = vmatpush.xpose.msra.mxu0 0.0
    %5327 = vmatpush.xpose.msra.mxu0 0.0
    %5328 = vmatpush.xpose.msra.mxu0 0.0
    %5329 = vmatpush.xpose.msra.mxu0 0.0
    %5330 = vmatpush.xpose.msra.mxu0 0.0
    %5331 = vmatpush.xpose.msra.mxu0 0.0
    %5332 = vmatpush.xpose.msra.mxu0 0.0
    %5333 = vmatpush.xpose.msra.mxu0 0.0
    %5334 = vmatpush.xpose.msra.mxu0 0.0
    %5335 = vmatpush.xpose.msra.mxu0 %v5318
    %5336 = vmatmul.f32.gmra.mxu0 %v5316
    %v5337 = vpop.f32.mrf.mxu0
    %v5338 = vadd.f32 0.0, %v5337
    %5339 = vdwg.mxu0
    %v5340 = vsel %vm5025, %v5338, -inf
    %5341 = vmax.xlane.f32.xlu0 %v5340
    %v5342 = vpop.xlane.xlu0 %5341
    %v5343 = vsub.f32 %v5338, %v5342
    %v5344 = vmul.f32 %v5343, 1.442695
    %v5345 = vpow.pop %v5344
    %v5346 = vsel %vm5025, %v5345, 0.0
    %5347 = vadd.xlane.f32.xlu0 %v5346
    %v5348 = vpop.xlane.xlu0 %5347
    %v5349 = vrcp.pop %v5348
    %v5350 = vmul.f32 %v5345, %v5349
    %5352 = vrot.lane.b32.xlu0 %v4636, 64
    %v5353 = vpop.permute.xlu0 %5352
    %v5356 = vsel %vm5025, %v5350, 0
    %5358 = vmatpush.msra.mxu0 0.0
    %5359 = vmatpush.msra.mxu0 0.0
    %5360 = vmatpush.msra.mxu0 0.0
    %5361 = vmatpush.msra.mxu0 0.0
    %5362 = vmatpush.msra.mxu0 0.0
    %5363 = vmatpush.msra.mxu0 0.0
    %5364 = vmatpush.msra.mxu0 0.0
    %5365 = vmatpush.msra.mxu0 0.0
    %5366 = vmatpush.msra.mxu0 0.0
    %5367 = vmatpush.msra.mxu0 0.0
    %5368 = vmatpush.msra.mxu0 0.0
    %5369 = vmatpush.msra.mxu0 0.0
    %5370 = vmatpush.msra.mxu0 0.0
    %5371 = vmatpush.msra.mxu0 0.0
    %5372 = vmatpush.msra.mxu0 0.0
    %5373 = vmatpush.msra.mxu0 %v5353
    %5374 = vmatmul.f32.gmra.mxu0 %v5356
    %v5375 = vpop.f32.mrf.mxu0
    %v5376 = vadd.f32 0.0, %v5375
    %5377 = vdwg.mxu0
    %v5379 = vsel %vm4998, %v3288, 0
    %v5382 = vsel %vm4998, %v4022, 0
    %5384 = vmatpush.xpose.msra.mxu0 0.0
    %5385 = vmatpush.xpose.msra.mxu0 0.0
    %5386 = vmatpush.xpose.msra.mxu0 0.0
    %5387 = vmatpush.xpose.msra.mxu0 0.0
    %5388 = vmatpush.xpose.msra.mxu0 0.0
    %5389 = vmatpush.xpose.msra.mxu0 0.0
    %5390 = vmatpush.xpose.msra.mxu0 0.0
    %5391 = vmatpush.xpose.msra.mxu0 0.0
    %5392 = vmatpush.xpose.msra.mxu0 0.0
    %5393 = vmatpush.xpose.msra.mxu0 0.0
    %5394 = vmatpush.xpose.msra.mxu0 0.0
    %5395 = vmatpush.xpose.msra.mxu0 0.0
    %5396 = vmatpush.xpose.msra.mxu0 0.0
    %5397 = vmatpush.xpose.msra.mxu0 0.0
    %5398 = vmatpush.xpose.msra.mxu0 0.0
    %5399 = vmatpush.xpose.msra.mxu0 %v5382
    %5400 = vmatmul.f32.gmra.mxu0 %v5379
    %v5401 = vpop.f32.mrf.mxu0
    %v5402 = vadd.f32 0.0, %v5401
    %5403 = vdwg.mxu0
    %v5404 = vsel %vm5025, %v5402, -inf
    %5405 = vmax.xlane.f32.xlu0 %v5404
    %v5406 = vpop.xlane.xlu0 %5405
    %v5407 = vsub.f32 %v5402, %v5406
    %v5408 = vmul.f32 %v5407, 1.442695
    %v5409 = vpow.pop %v5408
    %v5410 = vsel %vm5025, %v5409, 0.0
    %5411 = vadd.xlane.f32.xlu0 %v5410
    %v5412 = vpop.xlane.xlu0 %5411
    %v5413 = vrcp.pop %v5412
    %v5414 = vmul.f32 %v5409, %v5413
    %v5416 = vsel %vm5025, %v5414, 0
    %5418 = vmatpush.msra.mxu0 0.0
    %5419 = vmatpush.msra.mxu0 0.0
    %5420 = vmatpush.msra.mxu0 0.0
    %5421 = vmatpush.msra.mxu0 0.0
    %5422 = vmatpush.msra.mxu0 0.0
    %5423 = vmatpush.msra.mxu0 0.0
    %5424 = vmatpush.msra.mxu0 0.0
    %5425 = vmatpush.msra.mxu0 0.0
    %5426 = vmatpush.msra.mxu0 0.0
    %5427 = vmatpush.msra.mxu0 0.0
    %5428 = vmatpush.msra.mxu0 0.0
    %5429 = vmatpush.msra.mxu0 0.0
    %5430 = vmatpush.msra.mxu0 0.0
    %5431 = vmatpush.msra.mxu0 0.0
    %5432 = vmatpush.msra.mxu0 0.0
    %5433 = vmatpush.msra.mxu0 %v4756
    %5434 = vmatmul.f32.gmra.mxu0 %v5416
    %v5435 = vpop.f32.mrf.mxu0
    %v5436 = vadd.f32 0.0, %v5435
    %5437 = vdwg.mxu0
    %5438 = vrot.lane.b32.xlu0 %v3288, 64
    %v5439 = vpop.permute.xlu0 %5438
    %5440 = vrot.lane.b32.xlu0 %v4022, 64
    %v5441 = vpop.permute.xlu0 %5440
    %v5442 = vsel %vm4998, %v5439, 0
    %v5444 = vsel %vm4998, %v5441, 0
    %5446 = vmatpush.xpose.msra.mxu0 0.0
    %5447 = vmatpush.xpose.msra.mxu0 0.0
    %5448 = vmatpush.xpose.msra.mxu0 0.0
    %5449 = vmatpush.xpose.msra.mxu0 0.0
    %5450 = vmatpush.xpose.msra.mxu0 0.0
    %5451 = vmatpush.xpose.msra.mxu0 0.0
    %5452 = vmatpush.xpose.msra.mxu0 0.0
    %5453 = vmatpush.xpose.msra.mxu0 0.0
    %5454 = vmatpush.xpose.msra.mxu0 0.0
    %5455 = vmatpush.xpose.msra.mxu0 0.0
    %5456 = vmatpush.xpose.msra.mxu0 0.0
    %5457 = vmatpush.xpose.msra.mxu0 0.0
    %5458 = vmatpush.xpose.msra.mxu0 0.0
    %5459 = vmatpush.xpose.msra.mxu0 0.0
    %5460 = vmatpush.xpose.msra.mxu0 0.0
    %5461 = vmatpush.xpose.msra.mxu0 %v5444
    %5462 = vmatmul.f32.gmra.mxu0 %v5442
    %v5463 = vpop.f32.mrf.mxu0
    %v5464 = vadd.f32 0.0, %v5463
    %5465 = vdwg.mxu0
    %v5466 = vsel %vm5025, %v5464, -inf
    %5467 = vmax.xlane.f32.xlu0 %v5466
    %v5468 = vpop.xlane.xlu0 %5467
    %v5469 = vsub.f32 %v5464, %v5468
    %v5470 = vmul.f32 %v5469, 1.442695
    %v5471 = vpow.pop %v5470
    %v5472 = vsel %vm5025, %v5471, 0.0
    %5473 = vadd.xlane.f32.xlu0 %v5472
    %v5474 = vpop.xlane.xlu0 %5473
    %v5475 = vrcp.pop %v5474
    %v5476 = vmul.f32 %v5471, %v5475
    %5478 = vrot.lane.b32.xlu0 %v4756, 64
    %v5479 = vpop.permute.xlu0 %5478
    %v5482 = vsel %vm5025, %v5476, 0
    %5484 = vmatpush.msra.mxu0 0.0
    %5485 = vmatpush.msra.mxu0 0.0
    %5486 = vmatpush.msra.mxu0 0.0
    %5487 = vmatpush.msra.mxu0 0.0
    %5488 = vmatpush.msra.mxu0 0.0
    %5489 = vmatpush.msra.mxu0 0.0
    %5490 = vmatpush.msra.mxu0 0.0
    %5491 = vmatpush.msra.mxu0 0.0
    %5492 = vmatpush.msra.mxu0 0.0
    %5493 = vmatpush.msra.mxu0 0.0
    %5494 = vmatpush.msra.mxu0 0.0
    %5495 = vmatpush.msra.mxu0 0.0
    %5496 = vmatpush.msra.mxu0 0.0
    %5497 = vmatpush.msra.mxu0 0.0
    %5498 = vmatpush.msra.mxu0 0.0
    %5499 = vmatpush.msra.mxu0 %v5479
    %5500 = vmatmul.f32.gmra.mxu0 %v5482
    %v5501 = vpop.f32.mrf.mxu0
    %v5502 = vadd.f32 0.0, %v5501
    %5503 = vdwg.mxu0
    %v5505 = vsel %vm4998, %v3408, 0
    %v5508 = vsel %vm4998, %v4142, 0
    %5510 = vmatpush.xpose.msra.mxu0 0.0
    %5511 = vmatpush.xpose.msra.mxu0 0.0
    %5512 = vmatpush.xpose.msra.mxu0 0.0
    %5513 = vmatpush.xpose.msra.mxu0 0.0
    %5514 = vmatpush.xpose.msra.mxu0 0.0
    %5515 = vmatpush.xpose.msra.mxu0 0.0
    %5516 = vmatpush.xpose.msra.mxu0 0.0
    %5517 = vmatpush.xpose.msra.mxu0 0.0
    %5518 = vmatpush.xpose.msra.mxu0 0.0
    %5519 = vmatpush.xpose.msra.mxu0 0.0
    %5520 = vmatpush.xpose.msra.mxu0 0.0
    %5521 = vmatpush.xpose.msra.mxu0 0.0
    %5522 = vmatpush.xpose.msra.mxu0 0.0
    %5523 = vmatpush.xpose.msra.mxu0 0.0
    %5524 = vmatpush.xpose.msra.mxu0 0.0
    %5525 = vmatpush.xpose.msra.mxu0 %v5508
    %5526 = vmatmul.f32.gmra.mxu0 %v5505
    %v5527 = vpop.f32.mrf.mxu0
    %v5528 = vadd.f32 0.0, %v5527
    %5529 = vdwg.mxu0
    %v5530 = vsel %vm5025, %v5528, -inf
    %5531 = vmax.xlane.f32.xlu0 %v5530
    %v5532 = vpop.xlane.xlu0 %5531
    %v5533 = vsub.f32 %v5528, %v5532
    %v5534 = vmul.f32 %v5533, 1.442695
    %v5535 = vpow.pop %v5534
    %v5536 = vsel %vm5025, %v5535, 0.0
    %5537 = vadd.xlane.f32.xlu0 %v5536
    %v5538 = vpop.xlane.xlu0 %5537
    %v5539 = vrcp.pop %v5538
    %v5540 = vmul.f32 %v5535, %v5539
    %v5542 = vsel %vm5025, %v5540, 0
    %5544 = vmatpush.msra.mxu0 0.0
    %5545 = vmatpush.msra.mxu0 0.0
    %5546 = vmatpush.msra.mxu0 0.0
    %5547 = vmatpush.msra.mxu0 0.0
    %5548 = vmatpush.msra.mxu0 0.0
    %5549 = vmatpush.msra.mxu0 0.0
    %5550 = vmatpush.msra.mxu0 0.0
    %5551 = vmatpush.msra.mxu0 0.0
    %5552 = vmatpush.msra.mxu0 0.0
    %5553 = vmatpush.msra.mxu0 0.0
    %5554 = vmatpush.msra.mxu0 0.0
    %5555 = vmatpush.msra.mxu0 0.0
    %5556 = vmatpush.msra.mxu0 0.0
    %5557 = vmatpush.msra.mxu0 0.0
    %5558 = vmatpush.msra.mxu0 0.0
    %5559 = vmatpush.msra.mxu0 %v4876
    %5560 = vmatmul.f32.gmra.mxu0 %v5542
    %v5561 = vpop.f32.mrf.mxu0
    %v5562 = vadd.f32 0.0, %v5561
    %5563 = vdwg.mxu0
    %5564 = vrot.lane.b32.xlu0 %v3408, 64
    %v5565 = vpop.permute.xlu0 %5564
    %5566 = vrot.lane.b32.xlu0 %v4142, 64
    %v5567 = vpop.permute.xlu0 %5566
    %v5568 = vsel %vm4998, %v5565, 0
    %v5570 = vsel %vm4998, %v5567, 0
    %5572 = vmatpush.xpose.msra.mxu0 0.0
    %5573 = vmatpush.xpose.msra.mxu0 0.0
    %5574 = vmatpush.xpose.msra.mxu0 0.0
    %5575 = vmatpush.xpose.msra.mxu0 0.0
    %5576 = vmatpush.xpose.msra.mxu0 0.0
    %5577 = vmatpush.xpose.msra.mxu0 0.0
    %5578 = vmatpush.xpose.msra.mxu0 0.0
    %5579 = vmatpush.xpose.msra.mxu0 0.0
    %5580 = vmatpush.xpose.msra.mxu0 0.0
    %5581 = vmatpush.xpose.msra.mxu0 0.0
    %5582 = vmatpush.xpose.msra.mxu0 0.0
    %5583 = vmatpush.xpose.msra.mxu0 0.0
    %5584 = vmatpush.xpose.msra.mxu0 0.0
    %5585 = vmatpush.xpose.msra.mxu0 0.0
    %5586 = vmatpush.xpose.msra.mxu0 0.0
    %5587 = vmatpush.xpose.msra.mxu0 %v5570
    %5588 = vmatmul.f32.gmra.mxu0 %v5568
    %v5589 = vpop.f32.mrf.mxu0
    %v5590 = vadd.f32 0.0, %v5589
    %5591 = vdwg.mxu0
    %v5592 = vsel %vm5025, %v5590, -inf
    %5593 = vmax.xlane.f32.xlu0 %v5592
    %v5594 = vpop.xlane.xlu0 %5593
    %v5595 = vsub.f32 %v5590, %v5594
    %v5596 = vmul.f32 %v5595, 1.442695
    %v5597 = vpow.pop %v5596
    %v5598 = vsel %vm5025, %v5597, 0.0
    %5599 = vadd.xlane.f32.xlu0 %v5598
    %v5600 = vpop.xlane.xlu0 %5599
    %v5601 = vrcp.pop %v5600
    %v5602 = vmul.f32 %v5597, %v5601
    %5604 = vrot.lane.b32.xlu0 %v4876, 64
    %v5605 = vpop.permute.xlu0 %5604
    %v5608 = vsel %vm5025, %v5602, 0
    %5610 = vmatpush.msra.mxu0 0.0
    %5611 = vmatpush.msra.mxu0 0.0
    %5612 = vmatpush.msra.mxu0 0.0
    %5613 = vmatpush.msra.mxu0 0.0
    %5614 = vmatpush.msra.mxu0 0.0
    %5615 = vmatpush.msra.mxu0 0.0
    %5616 = vmatpush.msra.mxu0 0.0
    %5617 = vmatpush.msra.mxu0 0.0
    %5618 = vmatpush.msra.mxu0 0.0
    %5619 = vmatpush.msra.mxu0 0.0
    %5620 = vmatpush.msra.mxu0 0.0
    %5621 = vmatpush.msra.mxu0 0.0
    %5622 = vmatpush.msra.mxu0 0.0
    %5623 = vmatpush.msra.mxu0 0.0
    %5624 = vmatpush.msra.mxu0 0.0
    %5625 = vmatpush.msra.mxu0 %v5605
    %5626 = vmatmul.f32.gmra.mxu0 %v5608
    %v5627 = vpop.f32.mrf.mxu0
    %v5628 = vadd.f32 0.0, %v5627
    %5629 = vdwg.mxu0
    %v5631 = vsel %vm4998, %v3528, 0
    %v5634 = vsel %vm4998, %v4262, 0
    %5636 = vmatpush.xpose.msra.mxu0 0.0
    %5637 = vmatpush.xpose.msra.mxu0 0.0
    %5638 = vmatpush.xpose.msra.mxu0 0.0
    %5639 = vmatpush.xpose.msra.mxu0 0.0
    %5640 = vmatpush.xpose.msra.mxu0 0.0
    %5641 = vmatpush.xpose.msra.mxu0 0.0
    %5642 = vmatpush.xpose.msra.mxu0 0.0
    %5643 = vmatpush.xpose.msra.mxu0 0.0
    %5644 = vmatpush.xpose.msra.mxu0 0.0
    %5645 = vmatpush.xpose.msra.mxu0 0.0
    %5646 = vmatpush.xpose.msra.mxu0 0.0
    %5647 = vmatpush.xpose.msra.mxu0 0.0
    %5648 = vmatpush.xpose.msra.mxu0 0.0
    %5649 = vmatpush.xpose.msra.mxu0 0.0
    %5650 = vmatpush.xpose.msra.mxu0 0.0
    %5651 = vmatpush.xpose.msra.mxu0 %v5634
    %5652 = vmatmul.f32.gmra.mxu0 %v5631
    %v5653 = vpop.f32.mrf.mxu0
    %v5654 = vadd.f32 0.0, %v5653
    %5655 = vdwg.mxu0
    %v5656 = vsel %vm5025, %v5654, -inf
    %5657 = vmax.xlane.f32.xlu0 %v5656
    %v5658 = vpop.xlane.xlu0 %5657
    %v5659 = vsub.f32 %v5654, %v5658
    %v5660 = vmul.f32 %v5659, 1.442695
    %v5661 = vpow.pop %v5660
    %v5662 = vsel %vm5025, %v5661, 0.0
    %5663 = vadd.xlane.f32.xlu0 %v5662
    %v5664 = vpop.xlane.xlu0 %5663
    %v5665 = vrcp.pop %v5664
    %v5666 = vmul.f32 %v5661, %v5665
    %v5668 = vsel %vm5025, %v5666, 0
    %5670 = vmatpush.msra.mxu0 0.0
    %5671 = vmatpush.msra.mxu0 0.0
    %5672 = vmatpush.msra.mxu0 0.0
    %5673 = vmatpush.msra.mxu0 0.0
    %5674 = vmatpush.msra.mxu0 0.0
    %5675 = vmatpush.msra.mxu0 0.0
    %5676 = vmatpush.msra.mxu0 0.0
    %5677 = vmatpush.msra.mxu0 0.0
    %5678 = vmatpush.msra.mxu0 0.0
    %5679 = vmatpush.msra.mxu0 0.0
    %5680 = vmatpush.msra.mxu0 0.0
    %5681 = vmatpush.msra.mxu0 0.0
    %5682 = vmatpush.msra.mxu0 0.0
    %5683 = vmatpush.msra.mxu0 0.0
    %5684 = vmatpush.msra.mxu0 0.0
    %5685 = vmatpush.msra.mxu0 %v4996
    %5686 = vmatmul.f32.gmra.mxu0 %v5668
    %v5687 = vpop.f32.mrf.mxu0
    %v5688 = vadd.f32 0.0, %v5687
    %5689 = vdwg.mxu0
    %5690 = vrot.lane.b32.xlu0 %v3528, 64
    %v5691 = vpop.permute.xlu0 %5690
    %5692 = vrot.lane.b32.xlu0 %v4262, 64
    %v5693 = vpop.permute.xlu0 %5692
    %v5694 = vsel %vm4998, %v5691, 0
    %v5696 = vsel %vm4998, %v5693, 0
    %5698 = vmatpush.xpose.msra.mxu0 0.0
    %5699 = vmatpush.xpose.msra.mxu0 0.0
    %5700 = vmatpush.xpose.msra.mxu0 0.0
    %5701 = vmatpush.xpose.msra.mxu0 0.0
    %5702 = vmatpush.xpose.msra.mxu0 0.0
    %5703 = vmatpush.xpose.msra.mxu0 0.0
    %5704 = vmatpush.xpose.msra.mxu0 0.0
    %5705 = vmatpush.xpose.msra.mxu0 0.0
    %5706 = vmatpush.xpose.msra.mxu0 0.0
    %5707 = vmatpush.xpose.msra.mxu0 0.0
    %5708 = vmatpush.xpose.msra.mxu0 0.0
    %5709 = vmatpush.xpose.msra.mxu0 0.0
    %5710 = vmatpush.xpose.msra.mxu0 0.0
    %5711 = vmatpush.xpose.msra.mxu0 0.0
    %5712 = vmatpush.xpose.msra.mxu0 0.0
    %5713 = vmatpush.xpose.msra.mxu0 %v5696
    %5714 = vmatmul.f32.gmra.mxu0 %v5694
    %v5715 = vpop.f32.mrf.mxu0
    %v5716 = vadd.f32 0.0, %v5715
    %5717 = vdwg.mxu0
    %v5718 = vsel %vm5025, %v5716, -inf
    %5719 = vmax.xlane.f32.xlu0 %v5718
    %v5720 = vpop.xlane.xlu0 %5719
    %v5721 = vsub.f32 %v5716, %v5720
    %v5722 = vmul.f32 %v5721, 1.442695
    %v5723 = vpow.pop %v5722
    %v5724 = vsel %vm5025, %v5723, 0.0
    %5725 = vadd.xlane.f32.xlu0 %v5724
    %v5726 = vpop.xlane.xlu0 %5725
    %v5727 = vrcp.pop %v5726
    %v5728 = vmul.f32 %v5723, %v5727
    %5730 = vrot.lane.b32.xlu0 %v4996, 64
    %v5731 = vpop.permute.xlu0 %5730
    %v5734 = vsel %vm5025, %v5728, 0
    %5736 = vmatpush.msra.mxu0 0.0
    %5737 = vmatpush.msra.mxu0 0.0
    %5738 = vmatpush.msra.mxu0 0.0
    %5739 = vmatpush.msra.mxu0 0.0
    %5740 = vmatpush.msra.mxu0 0.0
    %5741 = vmatpush.msra.mxu0 0.0
    %5742 = vmatpush.msra.mxu0 0.0
    %5743 = vmatpush.msra.mxu0 0.0
    %5744 = vmatpush.msra.mxu0 0.0
    %5745 = vmatpush.msra.mxu0 0.0
    %5746 = vmatpush.msra.mxu0 0.0
    %5747 = vmatpush.msra.mxu0 0.0
    %5748 = vmatpush.msra.mxu0 0.0
    %5749 = vmatpush.msra.mxu0 0.0
    %5750 = vmatpush.msra.mxu0 0.0
    %5751 = vmatpush.msra.mxu0 %v5731
    %5752 = vmatmul.f32.gmra.mxu0 %v5734
    %v5753 = vpop.f32.mrf.mxu0
    %v5754 = vadd.f32 0.0, %v5753
    %5755 = vdwg.mxu0
    %5757 = vrot.lane.b32.xlu0 %v5124, 64
    %v5758 = vpop.permute.xlu0 %5757
    %5761 = vrot.lane.b32.xlu0 %v5250, 64
    %v5762 = vpop.permute.xlu0 %5761
    %5765 = vrot.lane.b32.xlu0 %v5376, 64
    %v5766 = vpop.permute.xlu0 %5765
    %5769 = vrot.lane.b32.xlu0 %v5502, 64
    %v5770 = vpop.permute.xlu0 %5769
    %5773 = vrot.lane.b32.xlu0 %v5628, 64
    %v5774 = vpop.permute.xlu0 %5773
    %5777 = vrot.lane.b32.xlu0 %v5754, 64
    %v5778 = vpop.permute.xlu0 %5777
    %v5780 = vsel %vm4998, %v5058, %v5758
    %v5781 = vsel %vm4998, %v5184, %v5762
    %v5782 = vsel %vm4998, %v5310, %v5766
    %v5783 = vsel %vm4998, %v5436, %v5770
    %v5784 = vsel %vm4998, %v5562, %v5774
    %v5785 = vsel %vm4998, %v5688, %v5778
    %v5786 = vadd.f32 %v5780, %v198
    %v5787 = vadd.f32 %v5781, %v199
    %v5788 = vadd.f32 %v5782, %v200
    %v5789 = vadd.f32 %v5783, %v201
    %v5790 = vadd.f32 %v5784, %v202
    %v5791 = vadd.f32 %v5785, %v203
    %v5792 = vld [vmem:[#allocation14] sm:$0xff]
    %v5793 = vld [vmem:[#allocation14 + $0x8] sm:$0xff]
    %v5794 = vld [vmem:[#allocation14 + $0x10] sm:$0xff]
    %v5795 = vld [vmem:[#allocation14 + $0x18] sm:$0xff]
    %v5796 = vld [vmem:[#allocation14 + $0x20] sm:$0xff]
    %v5797 = vld [vmem:[#allocation14 + $0x28] sm:$0xff]
    %v5798 = vld [vmem:[#allocation14 + $0x30] sm:$0xff]
    %v5799 = vld [vmem:[#allocation14 + $0x38] sm:$0xff]
    %v5800 = vld [vmem:[#allocation14 + $0x40] sm:$0xff]
    %v5801 = vld [vmem:[#allocation14 + $0x48] sm:$0xff]
    %v5802 = vld [vmem:[#allocation14 + $0x50] sm:$0xff]
    %v5803 = vld [vmem:[#allocation14 + $0x58] sm:$0xff]
    %v5804 = vld [vmem:[#allocation14 + $0x60] sm:$0xff]
    %v5805 = vld [vmem:[#allocation14 + $0x68] sm:$0xff]
    %v5806 = vld [vmem:[#allocation14 + $0x70] sm:$0xff]
    %v5807 = vld [vmem:[#allocation14 + $0x78] sm:$0xff]
    %v5808 = vld [vmem:[#allocation14 + $0x80] sm:$0xff]
    %v5809 = vld [vmem:[#allocation14 + $0x88] sm:$0xff]
    %v5810 = vld [vmem:[#allocation14 + $0x90] sm:$0xff]
    %v5811 = vld [vmem:[#allocation14 + $0x98] sm:$0xff]
    %v5812 = vld [vmem:[#allocation14 + $0xa0] sm:$0xff]
    %v5813 = vld [vmem:[#allocation14 + $0xa8] sm:$0xff]
    %v5814 = vld [vmem:[#allocation14 + $0xb0] sm:$0xff]
    %v5815 = vld [vmem:[#allocation14 + $0xb8] sm:$0xff]
    %v5816 = vld [vmem:[#allocation14 + $0xc0] sm:$0xff]
    %v5817 = vld [vmem:[#allocation14 + $0xc8] sm:$0xff]
    %v5818 = vld [vmem:[#allocation14 + $0xd0] sm:$0xff]
    %v5819 = vld [vmem:[#allocation14 + $0xd8] sm:$0xff]
    %v5820 = vld [vmem:[#allocation14 + $0xe0] sm:$0xff]
    %v5821 = vld [vmem:[#allocation14 + $0xe8] sm:$0xff]
    %v5822 = vld [vmem:[#allocation14 + $0xf0] sm:$0xff]
    %v5823 = vld [vmem:[#allocation14 + $0xf8] sm:$0xff]
    %v5824 = vld [vmem:[#allocation14 + $0x100] sm:$0xff]
    %v5825 = vld [vmem:[#allocation14 + $0x108] sm:$0xff]
    %v5826 = vld [vmem:[#allocation14 + $0x110] sm:$0xff]
    %v5827 = vld [vmem:[#allocation14 + $0x118] sm:$0xff]
    %v5828 = vld [vmem:[#allocation14 + $0x120] sm:$0xff]
    %v5829 = vld [vmem:[#allocation14 + $0x128] sm:$0xff]
    %v5830 = vld [vmem:[#allocation14 + $0x130] sm:$0xff]
    %v5831 = vld [vmem:[#allocation14 + $0x138] sm:$0xff]
    %v5832 = vld [vmem:[#allocation14 + $0x140] sm:$0xff]
    %v5833 = vld [vmem:[#allocation14 + $0x148] sm:$0xff]
    %v5834 = vld [vmem:[#allocation14 + $0x150] sm:$0xff]
    %v5835 = vld [vmem:[#allocation14 + $0x158] sm:$0xff]
    %v5836 = vld [vmem:[#allocation14 + $0x160] sm:$0xff]
    %v5837 = vld [vmem:[#allocation14 + $0x168] sm:$0xff]
    %v5838 = vld [vmem:[#allocation14 + $0x170] sm:$0xff]
    %v5839 = vld [vmem:[#allocation14 + $0x178] sm:$0xff]
    %v5840 = vld [vmem:[#allocation14 + $0x180] sm:$0xff]
    %v5841 = vld [vmem:[#allocation14 + $0x188] sm:$0xff]
    %v5842 = vld [vmem:[#allocation14 + $0x190] sm:$0xff]
    %v5843 = vld [vmem:[#allocation14 + $0x198] sm:$0xff]
    %v5844 = vld [vmem:[#allocation14 + $0x1a0] sm:$0xff]
    %v5845 = vld [vmem:[#allocation14 + $0x1a8] sm:$0xff]
    %v5846 = vld [vmem:[#allocation14 + $0x1b0] sm:$0xff]
    %v5847 = vld [vmem:[#allocation14 + $0x1b8] sm:$0xff]
    %v5848 = vld [vmem:[#allocation14 + $0x1c0] sm:$0xff]
    %v5849 = vld [vmem:[#allocation14 + $0x1c8] sm:$0xff]
    %v5850 = vld [vmem:[#allocation14 + $0x1d0] sm:$0xff]
    %v5851 = vld [vmem:[#allocation14 + $0x1d8] sm:$0xff]
    %v5852 = vld [vmem:[#allocation14 + $0x1e0] sm:$0xff]
    %v5853 = vld [vmem:[#allocation14 + $0x1e8] sm:$0xff]
    %v5854 = vld [vmem:[#allocation14 + $0x1f0] sm:$0xff]
    %v5855 = vld [vmem:[#allocation14 + $0x1f8] sm:$0xff]
    %v5856 = vld [vmem:[#allocation14 + $0x200] sm:$0xff]
    %v5857 = vld [vmem:[#allocation14 + $0x208] sm:$0xff]
    %v5858 = vld [vmem:[#allocation14 + $0x210] sm:$0xff]
    %v5859 = vld [vmem:[#allocation14 + $0x218] sm:$0xff]
    %v5860 = vld [vmem:[#allocation14 + $0x220] sm:$0xff]
    %v5861 = vld [vmem:[#allocation14 + $0x228] sm:$0xff]
    %v5862 = vld [vmem:[#allocation14 + $0x230] sm:$0xff]
    %v5863 = vld [vmem:[#allocation14 + $0x238] sm:$0xff]
    %v5864 = vld [vmem:[#allocation14 + $0x240] sm:$0xff]
    %v5865 = vld [vmem:[#allocation14 + $0x248] sm:$0xff]
    %v5866 = vld [vmem:[#allocation14 + $0x250] sm:$0xff]
    %v5867 = vld [vmem:[#allocation14 + $0x258] sm:$0xff]
    %v5868 = vld [vmem:[#allocation14 + $0x260] sm:$0xff]
    %v5869 = vld [vmem:[#allocation14 + $0x268] sm:$0xff]
    %v5870 = vld [vmem:[#allocation14 + $0x270] sm:$0xff]
    %v5871 = vld [vmem:[#allocation14 + $0x278] sm:$0xff]
    %v5872 = vld [vmem:[#allocation14 + $0x280] sm:$0xff]
    %v5873 = vld [vmem:[#allocation14 + $0x288] sm:$0xff]
    %v5874 = vld [vmem:[#allocation14 + $0x290] sm:$0xff]
    %v5875 = vld [vmem:[#allocation14 + $0x298] sm:$0xff]
    %v5876 = vld [vmem:[#allocation14 + $0x2a0] sm:$0xff]
    %v5877 = vld [vmem:[#allocation14 + $0x2a8] sm:$0xff]
    %v5878 = vld [vmem:[#allocation14 + $0x2b0] sm:$0xff]
    %v5879 = vld [vmem:[#allocation14 + $0x2b8] sm:$0xff]
    %v5880 = vld [vmem:[#allocation14 + $0x2c0] sm:$0xff]
    %v5881 = vld [vmem:[#allocation14 + $0x2c8] sm:$0xff]
    %v5882 = vld [vmem:[#allocation14 + $0x2d0] sm:$0xff]
    %v5883 = vld [vmem:[#allocation14 + $0x2d8] sm:$0xff]
    %v5884 = vld [vmem:[#allocation14 + $0x2e0] sm:$0xff]
    %v5885 = vld [vmem:[#allocation14 + $0x2e8] sm:$0xff]
    %v5886 = vld [vmem:[#allocation14 + $0x2f0] sm:$0xff]
    %v5887 = vld [vmem:[#allocation14 + $0x2f8] sm:$0xff]
    %v5888 = vld [vmem:[#allocation14 + $0x300] sm:$0xff]
    %v5889 = vld [vmem:[#allocation14 + $0x308] sm:$0xff]
    %v5890 = vld [vmem:[#allocation14 + $0x310] sm:$0xff]
    %v5891 = vld [vmem:[#allocation14 + $0x318] sm:$0xff]
    %v5892 = vld [vmem:[#allocation14 + $0x320] sm:$0xff]
    %v5893 = vld [vmem:[#allocation14 + $0x328] sm:$0xff]
    %v5894 = vld [vmem:[#allocation14 + $0x330] sm:$0xff]
    %v5895 = vld [vmem:[#allocation14 + $0x338] sm:$0xff]
    %v5896 = vld [vmem:[#allocation14 + $0x340] sm:$0xff]
    %v5897 = vld [vmem:[#allocation14 + $0x348] sm:$0xff]
    %v5898 = vld [vmem:[#allocation14 + $0x350] sm:$0xff]
    %v5899 = vld [vmem:[#allocation14 + $0x358] sm:$0xff]
    %v5900 = vld [vmem:[#allocation14 + $0x360] sm:$0xff]
    %v5901 = vld [vmem:[#allocation14 + $0x368] sm:$0xff]
    %v5902 = vld [vmem:[#allocation14 + $0x370] sm:$0xff]
    %v5903 = vld [vmem:[#allocation14 + $0x378] sm:$0xff]
    %v5904 = vld [vmem:[#allocation14 + $0x380] sm:$0xff]
    %v5905 = vld [vmem:[#allocation14 + $0x388] sm:$0xff]
    %v5906 = vld [vmem:[#allocation14 + $0x390] sm:$0xff]
    %v5907 = vld [vmem:[#allocation14 + $0x398] sm:$0xff]
    %v5908 = vld [vmem:[#allocation14 + $0x3a0] sm:$0xff]
    %v5909 = vld [vmem:[#allocation14 + $0x3a8] sm:$0xff]
    %v5910 = vld [vmem:[#allocation14 + $0x3b0] sm:$0xff]
    %v5911 = vld [vmem:[#allocation14 + $0x3b8] sm:$0xff]
    %v5912 = vld [vmem:[#allocation14 + $0x3c0] sm:$0xff]
    %v5913 = vld [vmem:[#allocation14 + $0x3c8] sm:$0xff]
    %v5914 = vld [vmem:[#allocation14 + $0x3d0] sm:$0xff]
    %v5915 = vld [vmem:[#allocation14 + $0x3d8] sm:$0xff]
    %v5916 = vld [vmem:[#allocation14 + $0x3e0] sm:$0xff]
    %v5917 = vld [vmem:[#allocation14 + $0x3e8] sm:$0xff]
    %v5918 = vld [vmem:[#allocation14 + $0x3f0] sm:$0xff]
    %v5919 = vld [vmem:[#allocation14 + $0x3f8] sm:$0xff]
    %v5920 = vld [vmem:[#allocation14 + $0x400] sm:$0xff]
    %v5921 = vld [vmem:[#allocation14 + $0x408] sm:$0xff]
    %v5922 = vld [vmem:[#allocation14 + $0x410] sm:$0xff]
    %v5923 = vld [vmem:[#allocation14 + $0x418] sm:$0xff]
    %v5924 = vld [vmem:[#allocation14 + $0x420] sm:$0xff]
    %v5925 = vld [vmem:[#allocation14 + $0x428] sm:$0xff]
    %v5926 = vld [vmem:[#allocation14 + $0x430] sm:$0xff]
    %v5927 = vld [vmem:[#allocation14 + $0x438] sm:$0xff]
    %v5928 = vld [vmem:[#allocation14 + $0x440] sm:$0xff]
    %v5929 = vld [vmem:[#allocation14 + $0x448] sm:$0xff]
    %v5930 = vld [vmem:[#allocation14 + $0x450] sm:$0xff]
    %v5931 = vld [vmem:[#allocation14 + $0x458] sm:$0xff]
    %v5932 = vld [vmem:[#allocation14 + $0x460] sm:$0xff]
    %v5933 = vld [vmem:[#allocation14 + $0x468] sm:$0xff]
    %v5934 = vld [vmem:[#allocation14 + $0x470] sm:$0xff]
    %v5935 = vld [vmem:[#allocation14 + $0x478] sm:$0xff]
    %v5936 = vld [vmem:[#allocation14 + $0x480] sm:$0xff]
    %v5937 = vld [vmem:[#allocation14 + $0x488] sm:$0xff]
    %v5938 = vld [vmem:[#allocation14 + $0x490] sm:$0xff]
    %v5939 = vld [vmem:[#allocation14 + $0x498] sm:$0xff]
    %v5940 = vld [vmem:[#allocation14 + $0x4a0] sm:$0xff]
    %v5941 = vld [vmem:[#allocation14 + $0x4a8] sm:$0xff]
    %v5942 = vld [vmem:[#allocation14 + $0x4b0] sm:$0xff]
    %v5943 = vld [vmem:[#allocation14 + $0x4b8] sm:$0xff]
    %v5944 = vld [vmem:[#allocation14 + $0x4c0] sm:$0xff]
    %v5945 = vld [vmem:[#allocation14 + $0x4c8] sm:$0xff]
    %v5946 = vld [vmem:[#allocation14 + $0x4d0] sm:$0xff]
    %v5947 = vld [vmem:[#allocation14 + $0x4d8] sm:$0xff]
    %v5948 = vld [vmem:[#allocation14 + $0x4e0] sm:$0xff]
    %v5949 = vld [vmem:[#allocation14 + $0x4e8] sm:$0xff]
    %v5950 = vld [vmem:[#allocation14 + $0x4f0] sm:$0xff]
    %v5951 = vld [vmem:[#allocation14 + $0x4f8] sm:$0xff]
    %v5952 = vld [vmem:[#allocation14 + $0x500] sm:$0xff]
    %v5953 = vld [vmem:[#allocation14 + $0x508] sm:$0xff]
    %v5954 = vld [vmem:[#allocation14 + $0x510] sm:$0xff]
    %v5955 = vld [vmem:[#allocation14 + $0x518] sm:$0xff]
    %v5956 = vld [vmem:[#allocation14 + $0x520] sm:$0xff]
    %v5957 = vld [vmem:[#allocation14 + $0x528] sm:$0xff]
    %v5958 = vld [vmem:[#allocation14 + $0x530] sm:$0xff]
    %v5959 = vld [vmem:[#allocation14 + $0x538] sm:$0xff]
    %v5960 = vld [vmem:[#allocation14 + $0x540] sm:$0xff]
    %v5961 = vld [vmem:[#allocation14 + $0x548] sm:$0xff]
    %v5962 = vld [vmem:[#allocation14 + $0x550] sm:$0xff]
    %v5963 = vld [vmem:[#allocation14 + $0x558] sm:$0xff]
    %v5964 = vld [vmem:[#allocation14 + $0x560] sm:$0xff]
    %v5965 = vld [vmem:[#allocation14 + $0x568] sm:$0xff]
    %v5966 = vld [vmem:[#allocation14 + $0x570] sm:$0xff]
    %v5967 = vld [vmem:[#allocation14 + $0x578] sm:$0xff]
    %v5968 = vld [vmem:[#allocation14 + $0x580] sm:$0xff]
    %v5969 = vld [vmem:[#allocation14 + $0x588] sm:$0xff]
    %v5970 = vld [vmem:[#allocation14 + $0x590] sm:$0xff]
    %v5971 = vld [vmem:[#allocation14 + $0x598] sm:$0xff]
    %v5972 = vld [vmem:[#allocation14 + $0x5a0] sm:$0xff]
    %v5973 = vld [vmem:[#allocation14 + $0x5a8] sm:$0xff]
    %v5974 = vld [vmem:[#allocation14 + $0x5b0] sm:$0xff]
    %v5975 = vld [vmem:[#allocation14 + $0x5b8] sm:$0xff]
    %v5976 = vld [vmem:[#allocation14 + $0x5c0] sm:$0xff]
    %v5977 = vld [vmem:[#allocation14 + $0x5c8] sm:$0xff]
    %v5978 = vld [vmem:[#allocation14 + $0x5d0] sm:$0xff]
    %v5979 = vld [vmem:[#allocation14 + $0x5d8] sm:$0xff]
    %v5980 = vld [vmem:[#allocation14 + $0x5e0] sm:$0xff]
    %v5981 = vld [vmem:[#allocation14 + $0x5e8] sm:$0xff]
    %v5982 = vld [vmem:[#allocation14 + $0x5f0] sm:$0xff]
    %v5983 = vld [vmem:[#allocation14 + $0x5f8] sm:$0xff]
    %v5984 = vld [vmem:[#allocation14 + $0x600] sm:$0xff]
    %v5985 = vld [vmem:[#allocation14 + $0x608] sm:$0xff]
    %v5986 = vld [vmem:[#allocation14 + $0x610] sm:$0xff]
    %v5987 = vld [vmem:[#allocation14 + $0x618] sm:$0xff]
    %v5988 = vld [vmem:[#allocation14 + $0x620] sm:$0xff]
    %v5989 = vld [vmem:[#allocation14 + $0x628] sm:$0xff]
    %v5990 = vld [vmem:[#allocation14 + $0x630] sm:$0xff]
    %v5991 = vld [vmem:[#allocation14 + $0x638] sm:$0xff]
    %v5992 = vld [vmem:[#allocation14 + $0x640] sm:$0xff]
    %v5993 = vld [vmem:[#allocation14 + $0x648] sm:$0xff]
    %v5994 = vld [vmem:[#allocation14 + $0x650] sm:$0xff]
    %v5995 = vld [vmem:[#allocation14 + $0x658] sm:$0xff]
    %v5996 = vld [vmem:[#allocation14 + $0x660] sm:$0xff]
    %v5997 = vld [vmem:[#allocation14 + $0x668] sm:$0xff]
    %v5998 = vld [vmem:[#allocation14 + $0x670] sm:$0xff]
    %v5999 = vld [vmem:[#allocation14 + $0x678] sm:$0xff]
    %v6000 = vld [vmem:[#allocation14 + $0x680] sm:$0xff]
    %v6001 = vld [vmem:[#allocation14 + $0x688] sm:$0xff]
    %v6002 = vld [vmem:[#allocation14 + $0x690] sm:$0xff]
    %v6003 = vld [vmem:[#allocation14 + $0x698] sm:$0xff]
    %v6004 = vld [vmem:[#allocation14 + $0x6a0] sm:$0xff]
    %v6005 = vld [vmem:[#allocation14 + $0x6a8] sm:$0xff]
    %v6006 = vld [vmem:[#allocation14 + $0x6b0] sm:$0xff]
    %v6007 = vld [vmem:[#allocation14 + $0x6b8] sm:$0xff]
    %v6008 = vld [vmem:[#allocation14 + $0x6c0] sm:$0xff]
    %v6009 = vld [vmem:[#allocation14 + $0x6c8] sm:$0xff]
    %v6010 = vld [vmem:[#allocation14 + $0x6d0] sm:$0xff]
    %v6011 = vld [vmem:[#allocation14 + $0x6d8] sm:$0xff]
    %v6012 = vld [vmem:[#allocation14 + $0x6e0] sm:$0xff]
    %v6013 = vld [vmem:[#allocation14 + $0x6e8] sm:$0xff]
    %v6014 = vld [vmem:[#allocation14 + $0x6f0] sm:$0xff]
    %v6015 = vld [vmem:[#allocation14 + $0x6f8] sm:$0xff]
    %v6016 = vld [vmem:[#allocation14 + $0x700] sm:$0xff]
    %v6017 = vld [vmem:[#allocation14 + $0x708] sm:$0xff]
    %v6018 = vld [vmem:[#allocation14 + $0x710] sm:$0xff]
    %v6019 = vld [vmem:[#allocation14 + $0x718] sm:$0xff]
    %v6020 = vld [vmem:[#allocation14 + $0x720] sm:$0xff]
    %v6021 = vld [vmem:[#allocation14 + $0x728] sm:$0xff]
    %v6022 = vld [vmem:[#allocation14 + $0x730] sm:$0xff]
    %v6023 = vld [vmem:[#allocation14 + $0x738] sm:$0xff]
    %v6024 = vld [vmem:[#allocation14 + $0x740] sm:$0xff]
    %v6025 = vld [vmem:[#allocation14 + $0x748] sm:$0xff]
    %v6026 = vld [vmem:[#allocation14 + $0x750] sm:$0xff]
    %v6027 = vld [vmem:[#allocation14 + $0x758] sm:$0xff]
    %v6028 = vld [vmem:[#allocation14 + $0x760] sm:$0xff]
    %v6029 = vld [vmem:[#allocation14 + $0x768] sm:$0xff]
    %v6030 = vld [vmem:[#allocation14 + $0x770] sm:$0xff]
    %v6031 = vld [vmem:[#allocation14 + $0x778] sm:$0xff]
    %v6032 = vld [vmem:[#allocation14 + $0x780] sm:$0xff]
    %v6033 = vld [vmem:[#allocation14 + $0x788] sm:$0xff]
    %v6034 = vld [vmem:[#allocation14 + $0x790] sm:$0xff]
    %v6035 = vld [vmem:[#allocation14 + $0x798] sm:$0xff]
    %v6036 = vld [vmem:[#allocation14 + $0x7a0] sm:$0xff]
    %v6037 = vld [vmem:[#allocation14 + $0x7a8] sm:$0xff]
    %v6038 = vld [vmem:[#allocation14 + $0x7b0] sm:$0xff]
    %v6039 = vld [vmem:[#allocation14 + $0x7b8] sm:$0xff]
    %v6040 = vld [vmem:[#allocation14 + $0x7c0] sm:$0xff]
    %v6041 = vld [vmem:[#allocation14 + $0x7c8] sm:$0xff]
    %v6042 = vld [vmem:[#allocation14 + $0x7d0] sm:$0xff]
    %v6043 = vld [vmem:[#allocation14 + $0x7d8] sm:$0xff]
    %v6044 = vld [vmem:[#allocation14 + $0x7e0] sm:$0xff]
    %v6045 = vld [vmem:[#allocation14 + $0x7e8] sm:$0xff]
    %v6046 = vld [vmem:[#allocation14 + $0x7f0] sm:$0xff]
    %v6047 = vld [vmem:[#allocation14 + $0x7f8] sm:$0xff]
    %v6048 = vld [vmem:[#allocation14 + $0x800] sm:$0xff]
    %v6049 = vld [vmem:[#allocation14 + $0x808] sm:$0xff]
    %v6050 = vld [vmem:[#allocation14 + $0x810] sm:$0xff]
    %v6051 = vld [vmem:[#allocation14 + $0x818] sm:$0xff]
    %v6052 = vld [vmem:[#allocation14 + $0x820] sm:$0xff]
    %v6053 = vld [vmem:[#allocation14 + $0x828] sm:$0xff]
    %v6054 = vld [vmem:[#allocation14 + $0x830] sm:$0xff]
    %v6055 = vld [vmem:[#allocation14 + $0x838] sm:$0xff]
    %v6056 = vld [vmem:[#allocation14 + $0x840] sm:$0xff]
    %v6057 = vld [vmem:[#allocation14 + $0x848] sm:$0xff]
    %v6058 = vld [vmem:[#allocation14 + $0x850] sm:$0xff]
    %v6059 = vld [vmem:[#allocation14 + $0x858] sm:$0xff]
    %v6060 = vld [vmem:[#allocation14 + $0x860] sm:$0xff]
    %v6061 = vld [vmem:[#allocation14 + $0x868] sm:$0xff]
    %v6062 = vld [vmem:[#allocation14 + $0x870] sm:$0xff]
    %v6063 = vld [vmem:[#allocation14 + $0x878] sm:$0xff]
    %v6064 = vld [vmem:[#allocation14 + $0x880] sm:$0xff]
    %v6065 = vld [vmem:[#allocation14 + $0x888] sm:$0xff]
    %v6066 = vld [vmem:[#allocation14 + $0x890] sm:$0xff]
    %v6067 = vld [vmem:[#allocation14 + $0x898] sm:$0xff]
    %v6068 = vld [vmem:[#allocation14 + $0x8a0] sm:$0xff]
    %v6069 = vld [vmem:[#allocation14 + $0x8a8] sm:$0xff]
    %v6070 = vld [vmem:[#allocation14 + $0x8b0] sm:$0xff]
    %v6071 = vld [vmem:[#allocation14 + $0x8b8] sm:$0xff]
    %v6072 = vld [vmem:[#allocation14 + $0x8c0] sm:$0xff]
    %v6073 = vld [vmem:[#allocation14 + $0x8c8] sm:$0xff]
    %v6074 = vld [vmem:[#allocation14 + $0x8d0] sm:$0xff]
    %v6075 = vld [vmem:[#allocation14 + $0x8d8] sm:$0xff]
    %v6076 = vld [vmem:[#allocation14 + $0x8e0] sm:$0xff]
    %v6077 = vld [vmem:[#allocation14 + $0x8e8] sm:$0xff]
    %v6078 = vld [vmem:[#allocation14 + $0x8f0] sm:$0xff]
    %v6079 = vld [vmem:[#allocation14 + $0x8f8] sm:$0xff]
    %v6080 = vld [vmem:[#allocation14 + $0x900] sm:$0xff]
    %v6081 = vld [vmem:[#allocation14 + $0x908] sm:$0xff]
    %v6082 = vld [vmem:[#allocation14 + $0x910] sm:$0xff]
    %v6083 = vld [vmem:[#allocation14 + $0x918] sm:$0xff]
    %v6084 = vld [vmem:[#allocation14 + $0x920] sm:$0xff]
    %v6085 = vld [vmem:[#allocation14 + $0x928] sm:$0xff]
    %v6086 = vld [vmem:[#allocation14 + $0x930] sm:$0xff]
    %v6087 = vld [vmem:[#allocation14 + $0x938] sm:$0xff]
    %v6088 = vld [vmem:[#allocation14 + $0x940] sm:$0xff]
    %v6089 = vld [vmem:[#allocation14 + $0x948] sm:$0xff]
    %v6090 = vld [vmem:[#allocation14 + $0x950] sm:$0xff]
    %v6091 = vld [vmem:[#allocation14 + $0x958] sm:$0xff]
    %v6092 = vld [vmem:[#allocation14 + $0x960] sm:$0xff]
    %v6093 = vld [vmem:[#allocation14 + $0x968] sm:$0xff]
    %v6094 = vld [vmem:[#allocation14 + $0x970] sm:$0xff]
    %v6095 = vld [vmem:[#allocation14 + $0x978] sm:$0xff]
    %v6096 = vld [vmem:[#allocation14 + $0x980] sm:$0xff]
    %v6097 = vld [vmem:[#allocation14 + $0x988] sm:$0xff]
    %v6098 = vld [vmem:[#allocation14 + $0x990] sm:$0xff]
    %v6099 = vld [vmem:[#allocation14 + $0x998] sm:$0xff]
    %v6100 = vld [vmem:[#allocation14 + $0x9a0] sm:$0xff]
    %v6101 = vld [vmem:[#allocation14 + $0x9a8] sm:$0xff]
    %v6102 = vld [vmem:[#allocation14 + $0x9b0] sm:$0xff]
    %v6103 = vld [vmem:[#allocation14 + $0x9b8] sm:$0xff]
    %v6104 = vld [vmem:[#allocation14 + $0x9c0] sm:$0xff]
    %v6105 = vld [vmem:[#allocation14 + $0x9c8] sm:$0xff]
    %v6106 = vld [vmem:[#allocation14 + $0x9d0] sm:$0xff]
    %v6107 = vld [vmem:[#allocation14 + $0x9d8] sm:$0xff]
    %v6108 = vld [vmem:[#allocation14 + $0x9e0] sm:$0xff]
    %v6109 = vld [vmem:[#allocation14 + $0x9e8] sm:$0xff]
    %v6110 = vld [vmem:[#allocation14 + $0x9f0] sm:$0xff]
    %v6111 = vld [vmem:[#allocation14 + $0x9f8] sm:$0xff]
    %v6112 = vld [vmem:[#allocation14 + $0xa00] sm:$0xff]
    %v6113 = vld [vmem:[#allocation14 + $0xa08] sm:$0xff]
    %v6114 = vld [vmem:[#allocation14 + $0xa10] sm:$0xff]
    %v6115 = vld [vmem:[#allocation14 + $0xa18] sm:$0xff]
    %v6116 = vld [vmem:[#allocation14 + $0xa20] sm:$0xff]
    %v6117 = vld [vmem:[#allocation14 + $0xa28] sm:$0xff]
    %v6118 = vld [vmem:[#allocation14 + $0xa30] sm:$0xff]
    %v6119 = vld [vmem:[#allocation14 + $0xa38] sm:$0xff]
    %v6120 = vld [vmem:[#allocation14 + $0xa40] sm:$0xff]
    %v6121 = vld [vmem:[#allocation14 + $0xa48] sm:$0xff]
    %v6122 = vld [vmem:[#allocation14 + $0xa50] sm:$0xff]
    %v6123 = vld [vmem:[#allocation14 + $0xa58] sm:$0xff]
    %v6124 = vld [vmem:[#allocation14 + $0xa60] sm:$0xff]
    %v6125 = vld [vmem:[#allocation14 + $0xa68] sm:$0xff]
    %v6126 = vld [vmem:[#allocation14 + $0xa70] sm:$0xff]
    %v6127 = vld [vmem:[#allocation14 + $0xa78] sm:$0xff]
    %v6128 = vld [vmem:[#allocation14 + $0xa80] sm:$0xff]
    %v6129 = vld [vmem:[#allocation14 + $0xa88] sm:$0xff]
    %v6130 = vld [vmem:[#allocation14 + $0xa90] sm:$0xff]
    %v6131 = vld [vmem:[#allocation14 + $0xa98] sm:$0xff]
    %v6132 = vld [vmem:[#allocation14 + $0xaa0] sm:$0xff]
    %v6133 = vld [vmem:[#allocation14 + $0xaa8] sm:$0xff]
    %v6134 = vld [vmem:[#allocation14 + $0xab0] sm:$0xff]
    %v6135 = vld [vmem:[#allocation14 + $0xab8] sm:$0xff]
    %v6136 = vld [vmem:[#allocation14 + $0xac0] sm:$0xff]
    %v6137 = vld [vmem:[#allocation14 + $0xac8] sm:$0xff]
    %v6138 = vld [vmem:[#allocation14 + $0xad0] sm:$0xff]
    %v6139 = vld [vmem:[#allocation14 + $0xad8] sm:$0xff]
    %v6140 = vld [vmem:[#allocation14 + $0xae0] sm:$0xff]
    %v6141 = vld [vmem:[#allocation14 + $0xae8] sm:$0xff]
    %v6142 = vld [vmem:[#allocation14 + $0xaf0] sm:$0xff]
    %v6143 = vld [vmem:[#allocation14 + $0xaf8] sm:$0xff]
    %v6144 = vld [vmem:[#allocation14 + $0xb00] sm:$0xff]
    %v6145 = vld [vmem:[#allocation14 + $0xb08] sm:$0xff]
    %v6146 = vld [vmem:[#allocation14 + $0xb10] sm:$0xff]
    %v6147 = vld [vmem:[#allocation14 + $0xb18] sm:$0xff]
    %v6148 = vld [vmem:[#allocation14 + $0xb20] sm:$0xff]
    %v6149 = vld [vmem:[#allocation14 + $0xb28] sm:$0xff]
    %v6150 = vld [vmem:[#allocation14 + $0xb30] sm:$0xff]
    %v6151 = vld [vmem:[#allocation14 + $0xb38] sm:$0xff]
    %v6152 = vld [vmem:[#allocation14 + $0xb40] sm:$0xff]
    %v6153 = vld [vmem:[#allocation14 + $0xb48] sm:$0xff]
    %v6154 = vld [vmem:[#allocation14 + $0xb50] sm:$0xff]
    %v6155 = vld [vmem:[#allocation14 + $0xb58] sm:$0xff]
    %v6156 = vld [vmem:[#allocation14 + $0xb60] sm:$0xff]
    %v6157 = vld [vmem:[#allocation14 + $0xb68] sm:$0xff]
    %v6158 = vld [vmem:[#allocation14 + $0xb70] sm:$0xff]
    %v6159 = vld [vmem:[#allocation14 + $0xb78] sm:$0xff]
    %v6160 = vld [vmem:[#allocation14 + $0xb80] sm:$0xff]
    %v6161 = vld [vmem:[#allocation14 + $0xb88] sm:$0xff]
    %v6162 = vld [vmem:[#allocation14 + $0xb90] sm:$0xff]
    %v6163 = vld [vmem:[#allocation14 + $0xb98] sm:$0xff]
    %v6164 = vld [vmem:[#allocation14 + $0xba0] sm:$0xff]
    %v6165 = vld [vmem:[#allocation14 + $0xba8] sm:$0xff]
    %v6166 = vld [vmem:[#allocation14 + $0xbb0] sm:$0xff]
    %v6167 = vld [vmem:[#allocation14 + $0xbb8] sm:$0xff]
    %v6168 = vld [vmem:[#allocation14 + $0xbc0] sm:$0xff]
    %v6169 = vld [vmem:[#allocation14 + $0xbc8] sm:$0xff]
    %v6170 = vld [vmem:[#allocation14 + $0xbd0] sm:$0xff]
    %v6171 = vld [vmem:[#allocation14 + $0xbd8] sm:$0xff]
    %v6172 = vld [vmem:[#allocation14 + $0xbe0] sm:$0xff]
    %v6173 = vld [vmem:[#allocation14 + $0xbe8] sm:$0xff]
    %v6174 = vld [vmem:[#allocation14 + $0xbf0] sm:$0xff]
    %v6175 = vld [vmem:[#allocation14 + $0xbf8] sm:$0xff]
    %v6176 = vld [vmem:[#allocation14 + $0xc00] sm:$0xff]
    %v6177 = vld [vmem:[#allocation14 + $0xc08] sm:$0xff]
    %v6178 = vld [vmem:[#allocation14 + $0xc10] sm:$0xff]
    %v6179 = vld [vmem:[#allocation14 + $0xc18] sm:$0xff]
    %v6180 = vld [vmem:[#allocation14 + $0xc20] sm:$0xff]
    %v6181 = vld [vmem:[#allocation14 + $0xc28] sm:$0xff]
    %v6182 = vld [vmem:[#allocation14 + $0xc30] sm:$0xff]
    %v6183 = vld [vmem:[#allocation14 + $0xc38] sm:$0xff]
    %v6184 = vld [vmem:[#allocation14 + $0xc40] sm:$0xff]
    %v6185 = vld [vmem:[#allocation14 + $0xc48] sm:$0xff]
    %v6186 = vld [vmem:[#allocation14 + $0xc50] sm:$0xff]
    %v6187 = vld [vmem:[#allocation14 + $0xc58] sm:$0xff]
    %v6188 = vld [vmem:[#allocation14 + $0xc60] sm:$0xff]
    %v6189 = vld [vmem:[#allocation14 + $0xc68] sm:$0xff]
    %v6190 = vld [vmem:[#allocation14 + $0xc70] sm:$0xff]
    %v6191 = vld [vmem:[#allocation14 + $0xc78] sm:$0xff]
    %v6192 = vld [vmem:[#allocation14 + $0xc80] sm:$0xff]
    %v6193 = vld [vmem:[#allocation14 + $0xc88] sm:$0xff]
    %v6194 = vld [vmem:[#allocation14 + $0xc90] sm:$0xff]
    %v6195 = vld [vmem:[#allocation14 + $0xc98] sm:$0xff]
    %v6196 = vld [vmem:[#allocation14 + $0xca0] sm:$0xff]
    %v6197 = vld [vmem:[#allocation14 + $0xca8] sm:$0xff]
    %v6198 = vld [vmem:[#allocation14 + $0xcb0] sm:$0xff]
    %v6199 = vld [vmem:[#allocation14 + $0xcb8] sm:$0xff]
    %v6200 = vld [vmem:[#allocation14 + $0xcc0] sm:$0xff]
    %v6201 = vld [vmem:[#allocation14 + $0xcc8] sm:$0xff]
    %v6202 = vld [vmem:[#allocation14 + $0xcd0] sm:$0xff]
    %v6203 = vld [vmem:[#allocation14 + $0xcd8] sm:$0xff]
    %v6204 = vld [vmem:[#allocation14 + $0xce0] sm:$0xff]
    %v6205 = vld [vmem:[#allocation14 + $0xce8] sm:$0xff]
    %v6206 = vld [vmem:[#allocation14 + $0xcf0] sm:$0xff]
    %v6207 = vld [vmem:[#allocation14 + $0xcf8] sm:$0xff]
    %v6208 = vld [vmem:[#allocation14 + $0xd00] sm:$0xff]
    %v6209 = vld [vmem:[#allocation14 + $0xd08] sm:$0xff]
    %v6210 = vld [vmem:[#allocation14 + $0xd10] sm:$0xff]
    %v6211 = vld [vmem:[#allocation14 + $0xd18] sm:$0xff]
    %v6212 = vld [vmem:[#allocation14 + $0xd20] sm:$0xff]
    %v6213 = vld [vmem:[#allocation14 + $0xd28] sm:$0xff]
    %v6214 = vld [vmem:[#allocation14 + $0xd30] sm:$0xff]
    %v6215 = vld [vmem:[#allocation14 + $0xd38] sm:$0xff]
    %v6216 = vld [vmem:[#allocation14 + $0xd40] sm:$0xff]
    %v6217 = vld [vmem:[#allocation14 + $0xd48] sm:$0xff]
    %v6218 = vld [vmem:[#allocation14 + $0xd50] sm:$0xff]
    %v6219 = vld [vmem:[#allocation14 + $0xd58] sm:$0xff]
    %v6220 = vld [vmem:[#allocation14 + $0xd60] sm:$0xff]
    %v6221 = vld [vmem:[#allocation14 + $0xd68] sm:$0xff]
    %v6222 = vld [vmem:[#allocation14 + $0xd70] sm:$0xff]
    %v6223 = vld [vmem:[#allocation14 + $0xd78] sm:$0xff]
    %v6224 = vld [vmem:[#allocation14 + $0xd80] sm:$0xff]
    %v6225 = vld [vmem:[#allocation14 + $0xd88] sm:$0xff]
    %v6226 = vld [vmem:[#allocation14 + $0xd90] sm:$0xff]
    %v6227 = vld [vmem:[#allocation14 + $0xd98] sm:$0xff]
    %v6228 = vld [vmem:[#allocation14 + $0xda0] sm:$0xff]
    %v6229 = vld [vmem:[#allocation14 + $0xda8] sm:$0xff]
    %v6230 = vld [vmem:[#allocation14 + $0xdb0] sm:$0xff]
    %v6231 = vld [vmem:[#allocation14 + $0xdb8] sm:$0xff]
    %v6232 = vld [vmem:[#allocation14 + $0xdc0] sm:$0xff]
    %v6233 = vld [vmem:[#allocation14 + $0xdc8] sm:$0xff]
    %v6234 = vld [vmem:[#allocation14 + $0xdd0] sm:$0xff]
    %v6235 = vld [vmem:[#allocation14 + $0xdd8] sm:$0xff]
    %v6236 = vld [vmem:[#allocation14 + $0xde0] sm:$0xff]
    %v6237 = vld [vmem:[#allocation14 + $0xde8] sm:$0xff]
    %v6238 = vld [vmem:[#allocation14 + $0xdf0] sm:$0xff]
    %v6239 = vld [vmem:[#allocation14 + $0xdf8] sm:$0xff]
    %v6240 = vld [vmem:[#allocation14 + $0xe00] sm:$0xff]
    %v6241 = vld [vmem:[#allocation14 + $0xe08] sm:$0xff]
    %v6242 = vld [vmem:[#allocation14 + $0xe10] sm:$0xff]
    %v6243 = vld [vmem:[#allocation14 + $0xe18] sm:$0xff]
    %v6244 = vld [vmem:[#allocation14 + $0xe20] sm:$0xff]
    %v6245 = vld [vmem:[#allocation14 + $0xe28] sm:$0xff]
    %v6246 = vld [vmem:[#allocation14 + $0xe30] sm:$0xff]
    %v6247 = vld [vmem:[#allocation14 + $0xe38] sm:$0xff]
    %v6248 = vld [vmem:[#allocation14 + $0xe40] sm:$0xff]
    %v6249 = vld [vmem:[#allocation14 + $0xe48] sm:$0xff]
    %v6250 = vld [vmem:[#allocation14 + $0xe50] sm:$0xff]
    %v6251 = vld [vmem:[#allocation14 + $0xe58] sm:$0xff]
    %v6252 = vld [vmem:[#allocation14 + $0xe60] sm:$0xff]
    %v6253 = vld [vmem:[#allocation14 + $0xe68] sm:$0xff]
    %v6254 = vld [vmem:[#allocation14 + $0xe70] sm:$0xff]
    %v6255 = vld [vmem:[#allocation14 + $0xe78] sm:$0xff]
    %v6256 = vld [vmem:[#allocation14 + $0xe80] sm:$0xff]
    %v6257 = vld [vmem:[#allocation14 + $0xe88] sm:$0xff]
    %v6258 = vld [vmem:[#allocation14 + $0xe90] sm:$0xff]
    %v6259 = vld [vmem:[#allocation14 + $0xe98] sm:$0xff]
    %v6260 = vld [vmem:[#allocation14 + $0xea0] sm:$0xff]
    %v6261 = vld [vmem:[#allocation14 + $0xea8] sm:$0xff]
    %v6262 = vld [vmem:[#allocation14 + $0xeb0] sm:$0xff]
    %v6263 = vld [vmem:[#allocation14 + $0xeb8] sm:$0xff]
    %v6264 = vld [vmem:[#allocation14 + $0xec0] sm:$0xff]
    %v6265 = vld [vmem:[#allocation14 + $0xec8] sm:$0xff]
    %v6266 = vld [vmem:[#allocation14 + $0xed0] sm:$0xff]
    %v6267 = vld [vmem:[#allocation14 + $0xed8] sm:$0xff]
    %v6268 = vld [vmem:[#allocation14 + $0xee0] sm:$0xff]
    %v6269 = vld [vmem:[#allocation14 + $0xee8] sm:$0xff]
    %v6270 = vld [vmem:[#allocation14 + $0xef0] sm:$0xff]
    %v6271 = vld [vmem:[#allocation14 + $0xef8] sm:$0xff]
    %v6272 = vld [vmem:[#allocation14 + $0xf00] sm:$0xff]
    %v6273 = vld [vmem:[#allocation14 + $0xf08] sm:$0xff]
    %v6274 = vld [vmem:[#allocation14 + $0xf10] sm:$0xff]
    %v6275 = vld [vmem:[#allocation14 + $0xf18] sm:$0xff]
    %v6276 = vld [vmem:[#allocation14 + $0xf20] sm:$0xff]
    %v6277 = vld [vmem:[#allocation14 + $0xf28] sm:$0xff]
    %v6278 = vld [vmem:[#allocation14 + $0xf30] sm:$0xff]
    %v6279 = vld [vmem:[#allocation14 + $0xf38] sm:$0xff]
    %v6280 = vld [vmem:[#allocation14 + $0xf40] sm:$0xff]
    %v6281 = vld [vmem:[#allocation14 + $0xf48] sm:$0xff]
    %v6282 = vld [vmem:[#allocation14 + $0xf50] sm:$0xff]
    %v6283 = vld [vmem:[#allocation14 + $0xf58] sm:$0xff]
    %v6284 = vld [vmem:[#allocation14 + $0xf60] sm:$0xff]
    %v6285 = vld [vmem:[#allocation14 + $0xf68] sm:$0xff]
    %v6286 = vld [vmem:[#allocation14 + $0xf70] sm:$0xff]
    %v6287 = vld [vmem:[#allocation14 + $0xf78] sm:$0xff]
    %v6288 = vld [vmem:[#allocation14 + $0xf80] sm:$0xff]
    %v6289 = vld [vmem:[#allocation14 + $0xf88] sm:$0xff]
    %v6290 = vld [vmem:[#allocation14 + $0xf90] sm:$0xff]
    %v6291 = vld [vmem:[#allocation14 + $0xf98] sm:$0xff]
    %v6292 = vld [vmem:[#allocation14 + $0xfa0] sm:$0xff]
    %v6293 = vld [vmem:[#allocation14 + $0xfa8] sm:$0xff]
    %v6294 = vld [vmem:[#allocation14 + $0xfb0] sm:$0xff]
    %v6295 = vld [vmem:[#allocation14 + $0xfb8] sm:$0xff]
    %v6296 = vld [vmem:[#allocation14 + $0xfc0] sm:$0xff]
    %v6297 = vld [vmem:[#allocation14 + $0xfc8] sm:$0xff]
    %v6298 = vld [vmem:[#allocation14 + $0xfd0] sm:$0xff]
    %v6299 = vld [vmem:[#allocation14 + $0xfd8] sm:$0xff]
    %v6300 = vld [vmem:[#allocation14 + $0xfe0] sm:$0xff]
    %v6301 = vld [vmem:[#allocation14 + $0xfe8] sm:$0xff]
    %v6302 = vld [vmem:[#allocation14 + $0xff0] sm:$0xff]
    %v6303 = vld [vmem:[#allocation14 + $0xff8] sm:$0xff]
    %v6304 = vld [vmem:[#allocation14 + $0x1000] sm:$0xff]
    %v6305 = vld [vmem:[#allocation14 + $0x1008] sm:$0xff]
    %v6306 = vld [vmem:[#allocation14 + $0x1010] sm:$0xff]
    %v6307 = vld [vmem:[#allocation14 + $0x1018] sm:$0xff]
    %v6308 = vld [vmem:[#allocation14 + $0x1020] sm:$0xff]
    %v6309 = vld [vmem:[#allocation14 + $0x1028] sm:$0xff]
    %v6310 = vld [vmem:[#allocation14 + $0x1030] sm:$0xff]
    %v6311 = vld [vmem:[#allocation14 + $0x1038] sm:$0xff]
    %v6312 = vld [vmem:[#allocation14 + $0x1040] sm:$0xff]
    %v6313 = vld [vmem:[#allocation14 + $0x1048] sm:$0xff]
    %v6314 = vld [vmem:[#allocation14 + $0x1050] sm:$0xff]
    %v6315 = vld [vmem:[#allocation14 + $0x1058] sm:$0xff]
    %v6316 = vld [vmem:[#allocation14 + $0x1060] sm:$0xff]
    %v6317 = vld [vmem:[#allocation14 + $0x1068] sm:$0xff]
    %v6318 = vld [vmem:[#allocation14 + $0x1070] sm:$0xff]
    %v6319 = vld [vmem:[#allocation14 + $0x1078] sm:$0xff]
    %v6320 = vld [vmem:[#allocation14 + $0x1080] sm:$0xff]
    %v6321 = vld [vmem:[#allocation14 + $0x1088] sm:$0xff]
    %v6322 = vld [vmem:[#allocation14 + $0x1090] sm:$0xff]
    %v6323 = vld [vmem:[#allocation14 + $0x1098] sm:$0xff]
    %v6324 = vld [vmem:[#allocation14 + $0x10a0] sm:$0xff]
    %v6325 = vld [vmem:[#allocation14 + $0x10a8] sm:$0xff]
    %v6326 = vld [vmem:[#allocation14 + $0x10b0] sm:$0xff]
    %v6327 = vld [vmem:[#allocation14 + $0x10b8] sm:$0xff]
    %v6328 = vld [vmem:[#allocation14 + $0x10c0] sm:$0xff]
    %v6329 = vld [vmem:[#allocation14 + $0x10c8] sm:$0xff]
    %v6330 = vld [vmem:[#allocation14 + $0x10d0] sm:$0xff]
    %v6331 = vld [vmem:[#allocation14 + $0x10d8] sm:$0xff]
    %v6332 = vld [vmem:[#allocation14 + $0x10e0] sm:$0xff]
    %v6333 = vld [vmem:[#allocation14 + $0x10e8] sm:$0xff]
    %v6334 = vld [vmem:[#allocation14 + $0x10f0] sm:$0xff]
    %v6335 = vld [vmem:[#allocation14 + $0x10f8] sm:$0xff]
    %v6336 = vld [vmem:[#allocation14 + $0x1100] sm:$0xff]
    %v6337 = vld [vmem:[#allocation14 + $0x1108] sm:$0xff]
    %v6338 = vld [vmem:[#allocation14 + $0x1110] sm:$0xff]
    %v6339 = vld [vmem:[#allocation14 + $0x1118] sm:$0xff]
    %v6340 = vld [vmem:[#allocation14 + $0x1120] sm:$0xff]
    %v6341 = vld [vmem:[#allocation14 + $0x1128] sm:$0xff]
    %v6342 = vld [vmem:[#allocation14 + $0x1130] sm:$0xff]
    %v6343 = vld [vmem:[#allocation14 + $0x1138] sm:$0xff]
    %v6344 = vld [vmem:[#allocation14 + $0x1140] sm:$0xff]
    %v6345 = vld [vmem:[#allocation14 + $0x1148] sm:$0xff]
    %v6346 = vld [vmem:[#allocation14 + $0x1150] sm:$0xff]
    %v6347 = vld [vmem:[#allocation14 + $0x1158] sm:$0xff]
    %v6348 = vld [vmem:[#allocation14 + $0x1160] sm:$0xff]
    %v6349 = vld [vmem:[#allocation14 + $0x1168] sm:$0xff]
    %v6350 = vld [vmem:[#allocation14 + $0x1170] sm:$0xff]
    %v6351 = vld [vmem:[#allocation14 + $0x1178] sm:$0xff]
    %v6352 = vld [vmem:[#allocation14 + $0x1180] sm:$0xff]
    %v6353 = vld [vmem:[#allocation14 + $0x1188] sm:$0xff]
    %v6354 = vld [vmem:[#allocation14 + $0x1190] sm:$0xff]
    %v6355 = vld [vmem:[#allocation14 + $0x1198] sm:$0xff]
    %v6356 = vld [vmem:[#allocation14 + $0x11a0] sm:$0xff]
    %v6357 = vld [vmem:[#allocation14 + $0x11a8] sm:$0xff]
    %v6358 = vld [vmem:[#allocation14 + $0x11b0] sm:$0xff]
    %v6359 = vld [vmem:[#allocation14 + $0x11b8] sm:$0xff]
    %v6360 = vld [vmem:[#allocation14 + $0x11c0] sm:$0xff]
    %v6361 = vld [vmem:[#allocation14 + $0x11c8] sm:$0xff]
    %v6362 = vld [vmem:[#allocation14 + $0x11d0] sm:$0xff]
    %v6363 = vld [vmem:[#allocation14 + $0x11d8] sm:$0xff]
    %v6364 = vld [vmem:[#allocation14 + $0x11e0] sm:$0xff]
    %v6365 = vld [vmem:[#allocation14 + $0x11e8] sm:$0xff]
    %v6366 = vld [vmem:[#allocation14 + $0x11f0] sm:$0xff]
    %v6367 = vld [vmem:[#allocation14 + $0x11f8] sm:$0xff]
    %v6368 = vld [vmem:[#allocation16] sm:$0x3f]
    %v6370 = vperm.slane %v6368, 0
    %v6371 = vperm.slane %v6368, 1
    %v6372 = vperm.slane %v6368, 2
    %v6373 = vperm.slane %v6368, 3
    %v6374 = vperm.slane %v6368, 4
    %v6375 = vperm.slane %v6368, 5
    %6382 = vmatpush.msra.mxu0 %v5882
    %6383 = vmatpush.msra.mxu0 %v5876
    %6384 = vmatpush.msra.mxu0 %v5870
    %6385 = vmatpush.msra.mxu0 %v5864
    %6386 = vmatpush.msra.mxu0 %v5858
    %6387 = vmatpush.msra.mxu0 %v5852
    %6388 = vmatpush.msra.mxu0 %v5846
    %6389 = vmatpush.msra.mxu0 %v5840
    %6390 = vmatpush.msra.mxu0 %v5834
    %6391 = vmatpush.msra.mxu0 %v5828
    %6392 = vmatpush.msra.mxu0 %v5822
    %6393 = vmatpush.msra.mxu0 %v5816
    %6394 = vmatpush.msra.mxu0 %v5810
    %6395 = vmatpush.msra.mxu0 %v5804
    %6396 = vmatpush.msra.mxu0 %v5798
    %6397 = vmatpush.msra.mxu0 %v5792
    %6398 = vmatmul.f32.gmra.mxu0 %v5786
    %v6399 = vpop.f32.mrf.mxu0
    %v6400 = vadd.f32 %v6370, %v6399
    %6401 = vdwg.mxu0
    %6402 = vmatpush.msra.mxu0 %v5978
    %6403 = vmatpush.msra.mxu0 %v5972
    %6404 = vmatpush.msra.mxu0 %v5966
    %6405 = vmatpush.msra.mxu0 %v5960
    %6406 = vmatpush.msra.mxu0 %v5954
    %6407 = vmatpush.msra.mxu0 %v5948
    %6408 = vmatpush.msra.mxu0 %v5942
    %6409 = vmatpush.msra.mxu0 %v5936
    %6410 = vmatpush.msra.mxu0 %v5930
    %6411 = vmatpush.msra.mxu0 %v5924
    %6412 = vmatpush.msra.mxu0 %v5918
    %6413 = vmatpush.msra.mxu0 %v5912
    %6414 = vmatpush.msra.mxu0 %v5906
    %6415 = vmatpush.msra.mxu0 %v5900
    %6416 = vmatpush.msra.mxu0 %v5894
    %6417 = vmatpush.msra.mxu0 %v5888
    %6418 = vmatmul.f32.gmra.mxu0 %v5787
    %v6419 = vpop.f32.mrf.mxu0
    %v6420 = vadd.f32 %v6400, %v6419
    %6421 = vdwg.mxu0
    %6422 = vmatpush.msra.mxu0 %v6074
    %6423 = vmatpush.msra.mxu0 %v6068
    %6424 = vmatpush.msra.mxu0 %v6062
    %6425 = vmatpush.msra.mxu0 %v6056
    %6426 = vmatpush.msra.mxu0 %v6050
    %6427 = vmatpush.msra.mxu0 %v6044
    %6428 = vmatpush.msra.mxu0 %v6038
    %6429 = vmatpush.msra.mxu0 %v6032
    %6430 = vmatpush.msra.mxu0 %v6026
    %6431 = vmatpush.msra.mxu0 %v6020
    %6432 = vmatpush.msra.mxu0 %v6014
    %6433 = vmatpush.msra.mxu0 %v6008
    %6434 = vmatpush.msra.mxu0 %v6002
    %6435 = vmatpush.msra.mxu0 %v5996
    %6436 = vmatpush.msra.mxu0 %v5990
    %6437 = vmatpush.msra.mxu0 %v5984
    %6438 = vmatmul.f32.gmra.mxu0 %v5788
    %v6439 = vpop.f32.mrf.mxu0
    %v6440 = vadd.f32 %v6420, %v6439
    %6441 = vdwg.mxu0
    %6442 = vmatpush.msra.mxu0 %v6170
    %6443 = vmatpush.msra.mxu0 %v6164
    %6444 = vmatpush.msra.mxu0 %v6158
    %6445 = vmatpush.msra.mxu0 %v6152
    %6446 = vmatpush.msra.mxu0 %v6146
    %6447 = vmatpush.msra.mxu0 %v6140
    %6448 = vmatpush.msra.mxu0 %v6134
    %6449 = vmatpush.msra.mxu0 %v6128
    %6450 = vmatpush.msra.mxu0 %v6122
    %6451 = vmatpush.msra.mxu0 %v6116
    %6452 = vmatpush.msra.mxu0 %v6110
    %6453 = vmatpush.msra.mxu0 %v6104
    %6454 = vmatpush.msra.mxu0 %v6098
    %6455 = vmatpush.msra.mxu0 %v6092
    %6456 = vmatpush.msra.mxu0 %v6086
    %6457 = vmatpush.msra.mxu0 %v6080
    %6458 = vmatmul.f32.gmra.mxu0 %v5789
    %v6459 = vpop.f32.mrf.mxu0
    %v6460 = vadd.f32 %v6440, %v6459
    %6461 = vdwg.mxu0
    %6462 = vmatpush.msra.mxu0 %v6266
    %6463 = vmatpush.msra.mxu0 %v6260
    %6464 = vmatpush.msra.mxu0 %v6254
    %6465 = vmatpush.msra.mxu0 %v6248
    %6466 = vmatpush.msra.mxu0 %v6242
    %6467 = vmatpush.msra.mxu0 %v6236
    %6468 = vmatpush.msra.mxu0 %v6230
    %6469 = vmatpush.msra.mxu0 %v6224
    %6470 = vmatpush.msra.mxu0 %v6218
    %6471 = vmatpush.msra.mxu0 %v6212
    %6472 = vmatpush.msra.mxu0 %v6206
    %6473 = vmatpush.msra.mxu0 %v6200
    %6474 = vmatpush.msra.mxu0 %v6194
    %6475 = vmatpush.msra.mxu0 %v6188
    %6476 = vmatpush.msra.mxu0 %v6182
    %6477 = vmatpush.msra.mxu0 %v6176
    %6478 = vmatmul.f32.gmra.mxu0 %v5790
    %v6479 = vpop.f32.mrf.mxu0
    %v6480 = vadd.f32 %v6460, %v6479
    %6481 = vdwg.mxu0
    %6482 = vmatpush.msra.mxu0 %v6362
    %6483 = vmatpush.msra.mxu0 %v6356
    %6484 = vmatpush.msra.mxu0 %v6350
    %6485 = vmatpush.msra.mxu0 %v6344
    %6486 = vmatpush.msra.mxu0 %v6338
    %6487 = vmatpush.msra.mxu0 %v6332
    %6488 = vmatpush.msra.mxu0 %v6326
    %6489 = vmatpush.msra.mxu0 %v6320
    %6490 = vmatpush.msra.mxu0 %v6314
    %6491 = vmatpush.msra.mxu0 %v6308
    %6492 = vmatpush.msra.mxu0 %v6302
    %6493 = vmatpush.msra.mxu0 %v6296
    %6494 = vmatpush.msra.mxu0 %v6290
    %6495 = vmatpush.msra.mxu0 %v6284
    %6496 = vmatpush.msra.mxu0 %v6278
    %6497 = vmatpush.msra.mxu0 %v6272
    %6498 = vmatmul.f32.gmra.mxu0 %v5791
    %v6499 = vpop.f32.mrf.mxu0
    %v6500 = vadd.f32 %v6480, %v6499
    %6501 = vdwg.mxu0
    %6502 = vmatpush.msra.mxu0 %v5883
    %6503 = vmatpush.msra.mxu0 %v5877
    %6504 = vmatpush.msra.mxu0 %v5871
    %6505 = vmatpush.msra.mxu0 %v5865
    %6506 = vmatpush.msra.mxu0 %v5859
    %6507 = vmatpush.msra.mxu0 %v5853
    %6508 = vmatpush.msra.mxu0 %v5847
    %6509 = vmatpush.msra.mxu0 %v5841
    %6510 = vmatpush.msra.mxu0 %v5835
    %6511 = vmatpush.msra.mxu0 %v5829
    %6512 = vmatpush.msra.mxu0 %v5823
    %6513 = vmatpush.msra.mxu0 %v5817
    %6514 = vmatpush.msra.mxu0 %v5811
    %6515 = vmatpush.msra.mxu0 %v5805
    %6516 = vmatpush.msra.mxu0 %v5799
    %6517 = vmatpush.msra.mxu0 %v5793
    %6518 = vmatmul.f32.gmra.mxu0 %v5786
    %v6519 = vpop.f32.mrf.mxu0
    %v6520 = vadd.f32 %v6371, %v6519
    %6521 = vdwg.mxu0
    %6522 = vmatpush.msra.mxu0 %v5979
    %6523 = vmatpush.msra.mxu0 %v5973
    %6524 = vmatpush.msra.mxu0 %v5967
    %6525 = vmatpush.msra.mxu0 %v5961
    %6526 = vmatpush.msra.mxu0 %v5955
    %6527 = vmatpush.msra.mxu0 %v5949
    %6528 = vmatpush.msra.mxu0 %v5943
    %6529 = vmatpush.msra.mxu0 %v5937
    %6530 = vmatpush.msra.mxu0 %v5931
    %6531 = vmatpush.msra.mxu0 %v5925
    %6532 = vmatpush.msra.mxu0 %v5919
    %6533 = vmatpush.msra.mxu0 %v5913
    %6534 = vmatpush.msra.mxu0 %v5907
    %6535 = vmatpush.msra.mxu0 %v5901
    %6536 = vmatpush.msra.mxu0 %v5895
    %6537 = vmatpush.msra.mxu0 %v5889
    %6538 = vmatmul.f32.gmra.mxu0 %v5787
    %v6539 = vpop.f32.mrf.mxu0
    %v6540 = vadd.f32 %v6520, %v6539
    %6541 = vdwg.mxu0
    %6542 = vmatpush.msra.mxu0 %v6075
    %6543 = vmatpush.msra.mxu0 %v6069
    %6544 = vmatpush.msra.mxu0 %v6063
    %6545 = vmatpush.msra.mxu0 %v6057
    %6546 = vmatpush.msra.mxu0 %v6051
    %6547 = vmatpush.msra.mxu0 %v6045
    %6548 = vmatpush.msra.mxu0 %v6039
    %6549 = vmatpush.msra.mxu0 %v6033
    %6550 = vmatpush.msra.mxu0 %v6027
    %6551 = vmatpush.msra.mxu0 %v6021
    %6552 = vmatpush.msra.mxu0 %v6015
    %6553 = vmatpush.msra.mxu0 %v6009
    %6554 = vmatpush.msra.mxu0 %v6003
    %6555 = vmatpush.msra.mxu0 %v5997
    %6556 = vmatpush.msra.mxu0 %v5991
    %6557 = vmatpush.msra.mxu0 %v5985
    %6558 = vmatmul.f32.gmra.mxu0 %v5788
    %v6559 = vpop.f32.mrf.mxu0
    %v6560 = vadd.f32 %v6540, %v6559
    %6561 = vdwg.mxu0
    %6562 = vmatpush.msra.mxu0 %v6171
    %6563 = vmatpush.msra.mxu0 %v6165
    %6564 = vmatpush.msra.mxu0 %v6159
    %6565 = vmatpush.msra.mxu0 %v6153
    %6566 = vmatpush.msra.mxu0 %v6147
    %6567 = vmatpush.msra.mxu0 %v6141
    %6568 = vmatpush.msra.mxu0 %v6135
    %6569 = vmatpush.msra.mxu0 %v6129
    %6570 = vmatpush.msra.mxu0 %v6123
    %6571 = vmatpush.msra.mxu0 %v6117
    %6572 = vmatpush.msra.mxu0 %v6111
    %6573 = vmatpush.msra.mxu0 %v6105
    %6574 = vmatpush.msra.mxu0 %v6099
    %6575 = vmatpush.msra.mxu0 %v6093
    %6576 = vmatpush.msra.mxu0 %v6087
    %6577 = vmatpush.msra.mxu0 %v6081
    %6578 = vmatmul.f32.gmra.mxu0 %v5789
    %v6579 = vpop.f32.mrf.mxu0
    %v6580 = vadd.f32 %v6560, %v6579
    %6581 = vdwg.mxu0
    %6582 = vmatpush.msra.mxu0 %v6267
    %6583 = vmatpush.msra.mxu0 %v6261
    %6584 = vmatpush.msra.mxu0 %v6255
    %6585 = vmatpush.msra.mxu0 %v6249
    %6586 = vmatpush.msra.mxu0 %v6243
    %6587 = vmatpush.msra.mxu0 %v6237
    %6588 = vmatpush.msra.mxu0 %v6231
    %6589 = vmatpush.msra.mxu0 %v6225
    %6590 = vmatpush.msra.mxu0 %v6219
    %6591 = vmatpush.msra.mxu0 %v6213
    %6592 = vmatpush.msra.mxu0 %v6207
    %6593 = vmatpush.msra.mxu0 %v6201
    %6594 = vmatpush.msra.mxu0 %v6195
    %6595 = vmatpush.msra.mxu0 %v6189
    %6596 = vmatpush.msra.mxu0 %v6183
    %6597 = vmatpush.msra.mxu0 %v6177
    %6598 = vmatmul.f32.gmra.mxu0 %v5790
    %v6599 = vpop.f32.mrf.mxu0
    %v6600 = vadd.f32 %v6580, %v6599
    %6601 = vdwg.mxu0
    %6602 = vmatpush.msra.mxu0 %v6363
    %6603 = vmatpush.msra.mxu0 %v6357
    %6604 = vmatpush.msra.mxu0 %v6351
    %6605 = vmatpush.msra.mxu0 %v6345
    %6606 = vmatpush.msra.mxu0 %v6339
    %6607 = vmatpush.msra.mxu0 %v6333
    %6608 = vmatpush.msra.mxu0 %v6327
    %6609 = vmatpush.msra.mxu0 %v6321
    %6610 = vmatpush.msra.mxu0 %v6315
    %6611 = vmatpush.msra.mxu0 %v6309
    %6612 = vmatpush.msra.mxu0 %v6303
    %6613 = vmatpush.msra.mxu0 %v6297
    %6614 = vmatpush.msra.mxu0 %v6291
    %6615 = vmatpush.msra.mxu0 %v6285
    %6616 = vmatpush.msra.mxu0 %v6279
    %6617 = vmatpush.msra.mxu0 %v6273
    %6618 = vmatmul.f32.gmra.mxu0 %v5791
    %v6619 = vpop.f32.mrf.mxu0
    %v6620 = vadd.f32 %v6600, %v6619
    %6621 = vdwg.mxu0
    %6622 = vmatpush.msra.mxu0 %v5884
    %6623 = vmatpush.msra.mxu0 %v5878
    %6624 = vmatpush.msra.mxu0 %v5872
    %6625 = vmatpush.msra.mxu0 %v5866
    %6626 = vmatpush.msra.mxu0 %v5860
    %6627 = vmatpush.msra.mxu0 %v5854
    %6628 = vmatpush.msra.mxu0 %v5848
    %6629 = vmatpush.msra.mxu0 %v5842
    %6630 = vmatpush.msra.mxu0 %v5836
    %6631 = vmatpush.msra.mxu0 %v5830
    %6632 = vmatpush.msra.mxu0 %v5824
    %6633 = vmatpush.msra.mxu0 %v5818
    %6634 = vmatpush.msra.mxu0 %v5812
    %6635 = vmatpush.msra.mxu0 %v5806
    %6636 = vmatpush.msra.mxu0 %v5800
    %6637 = vmatpush.msra.mxu0 %v5794
    %6638 = vmatmul.f32.gmra.mxu0 %v5786
    %v6639 = vpop.f32.mrf.mxu0
    %v6640 = vadd.f32 %v6372, %v6639
    %6641 = vdwg.mxu0
    %6642 = vmatpush.msra.mxu0 %v5980
    %6643 = vmatpush.msra.mxu0 %v5974
    %6644 = vmatpush.msra.mxu0 %v5968
    %6645 = vmatpush.msra.mxu0 %v5962
    %6646 = vmatpush.msra.mxu0 %v5956
    %6647 = vmatpush.msra.mxu0 %v5950
    %6648 = vmatpush.msra.mxu0 %v5944
    %6649 = vmatpush.msra.mxu0 %v5938
    %6650 = vmatpush.msra.mxu0 %v5932
    %6651 = vmatpush.msra.mxu0 %v5926
    %6652 = vmatpush.msra.mxu0 %v5920
    %6653 = vmatpush.msra.mxu0 %v5914
    %6654 = vmatpush.msra.mxu0 %v5908
    %6655 = vmatpush.msra.mxu0 %v5902
    %6656 = vmatpush.msra.mxu0 %v5896
    %6657 = vmatpush.msra.mxu0 %v5890
    %6658 = vmatmul.f32.gmra.mxu0 %v5787
    %v6659 = vpop.f32.mrf.mxu0
    %v6660 = vadd.f32 %v6640, %v6659
    %6661 = vdwg.mxu0
    %6662 = vmatpush.msra.mxu0 %v6076
    %6663 = vmatpush.msra.mxu0 %v6070
    %6664 = vmatpush.msra.mxu0 %v6064
    %6665 = vmatpush.msra.mxu0 %v6058
    %6666 = vmatpush.msra.mxu0 %v6052
    %6667 = vmatpush.msra.mxu0 %v6046
    %6668 = vmatpush.msra.mxu0 %v6040
    %6669 = vmatpush.msra.mxu0 %v6034
    %6670 = vmatpush.msra.mxu0 %v6028
    %6671 = vmatpush.msra.mxu0 %v6022
    %6672 = vmatpush.msra.mxu0 %v6016
    %6673 = vmatpush.msra.mxu0 %v6010
    %6674 = vmatpush.msra.mxu0 %v6004
    %6675 = vmatpush.msra.mxu0 %v5998
    %6676 = vmatpush.msra.mxu0 %v5992
    %6677 = vmatpush.msra.mxu0 %v5986
    %6678 = vmatmul.f32.gmra.mxu0 %v5788
    %v6679 = vpop.f32.mrf.mxu0
    %v6680 = vadd.f32 %v6660, %v6679
    %6681 = vdwg.mxu0
    %6682 = vmatpush.msra.mxu0 %v6172
    %6683 = vmatpush.msra.mxu0 %v6166
    %6684 = vmatpush.msra.mxu0 %v6160
    %6685 = vmatpush.msra.mxu0 %v6154
    %6686 = vmatpush.msra.mxu0 %v6148
    %6687 = vmatpush.msra.mxu0 %v6142
    %6688 = vmatpush.msra.mxu0 %v6136
    %6689 = vmatpush.msra.mxu0 %v6130
    %6690 = vmatpush.msra.mxu0 %v6124
    %6691 = vmatpush.msra.mxu0 %v6118
    %6692 = vmatpush.msra.mxu0 %v6112
    %6693 = vmatpush.msra.mxu0 %v6106
    %6694 = vmatpush.msra.mxu0 %v6100
    %6695 = vmatpush.msra.mxu0 %v6094
    %6696 = vmatpush.msra.mxu0 %v6088
    %6697 = vmatpush.msra.mxu0 %v6082
    %6698 = vmatmul.f32.gmra.mxu0 %v5789
    %v6699 = vpop.f32.mrf.mxu0
    %v6700 = vadd.f32 %v6680, %v6699
    %6701 = vdwg.mxu0
    %6702 = vmatpush.msra.mxu0 %v6268
    %6703 = vmatpush.msra.mxu0 %v6262
    %6704 = vmatpush.msra.mxu0 %v6256
    %6705 = vmatpush.msra.mxu0 %v6250
    %6706 = vmatpush.msra.mxu0 %v6244
    %6707 = vmatpush.msra.mxu0 %v6238
    %6708 = vmatpush.msra.mxu0 %v6232
    %6709 = vmatpush.msra.mxu0 %v6226
    %6710 = vmatpush.msra.mxu0 %v6220
    %6711 = vmatpush.msra.mxu0 %v6214
    %6712 = vmatpush.msra.mxu0 %v6208
    %6713 = vmatpush.msra.mxu0 %v6202
    %6714 = vmatpush.msra.mxu0 %v6196
    %6715 = vmatpush.msra.mxu0 %v6190
    %6716 = vmatpush.msra.mxu0 %v6184
    %6717 = vmatpush.msra.mxu0 %v6178
    %6718 = vmatmul.f32.gmra.mxu0 %v5790
    %v6719 = vpop.f32.mrf.mxu0
    %v6720 = vadd.f32 %v6700, %v6719
    %6721 = vdwg.mxu0
    %6722 = vmatpush.msra.mxu0 %v6364
    %6723 = vmatpush.msra.mxu0 %v6358
    %6724 = vmatpush.msra.mxu0 %v6352
    %6725 = vmatpush.msra.mxu0 %v6346
    %6726 = vmatpush.msra.mxu0 %v6340
    %6727 = vmatpush.msra.mxu0 %v6334
    %6728 = vmatpush.msra.mxu0 %v6328
    %6729 = vmatpush.msra.mxu0 %v6322
    %6730 = vmatpush.msra.mxu0 %v6316
    %6731 = vmatpush.msra.mxu0 %v6310
    %6732 = vmatpush.msra.mxu0 %v6304
    %6733 = vmatpush.msra.mxu0 %v6298
    %6734 = vmatpush.msra.mxu0 %v6292
    %6735 = vmatpush.msra.mxu0 %v6286
    %6736 = vmatpush.msra.mxu0 %v6280
    %6737 = vmatpush.msra.mxu0 %v6274
    %6738 = vmatmul.f32.gmra.mxu0 %v5791
    %v6739 = vpop.f32.mrf.mxu0
    %v6740 = vadd.f32 %v6720, %v6739
    %6741 = vdwg.mxu0
    %6742 = vmatpush.msra.mxu0 %v5885
    %6743 = vmatpush.msra.mxu0 %v5879
    %6744 = vmatpush.msra.mxu0 %v5873
    %6745 = vmatpush.msra.mxu0 %v5867
    %6746 = vmatpush.msra.mxu0 %v5861
    %6747 = vmatpush.msra.mxu0 %v5855
    %6748 = vmatpush.msra.mxu0 %v5849
    %6749 = vmatpush.msra.mxu0 %v5843
    %6750 = vmatpush.msra.mxu0 %v5837
    %6751 = vmatpush.msra.mxu0 %v5831
    %6752 = vmatpush.msra.mxu0 %v5825
    %6753 = vmatpush.msra.mxu0 %v5819
    %6754 = vmatpush.msra.mxu0 %v5813
    %6755 = vmatpush.msra.mxu0 %v5807
    %6756 = vmatpush.msra.mxu0 %v5801
    %6757 = vmatpush.msra.mxu0 %v5795
    %6758 = vmatmul.f32.gmra.mxu0 %v5786
    %v6759 = vpop.f32.mrf.mxu0
    %v6760 = vadd.f32 %v6373, %v6759
    %6761 = vdwg.mxu0
    %6762 = vmatpush.msra.mxu0 %v5981
    %6763 = vmatpush.msra.mxu0 %v5975
    %6764 = vmatpush.msra.mxu0 %v5969
    %6765 = vmatpush.msra.mxu0 %v5963
    %6766 = vmatpush.msra.mxu0 %v5957
    %6767 = vmatpush.msra.mxu0 %v5951
    %6768 = vmatpush.msra.mxu0 %v5945
    %6769 = vmatpush.msra.mxu0 %v5939
    %6770 = vmatpush.msra.mxu0 %v5933
    %6771 = vmatpush.msra.mxu0 %v5927
    %6772 = vmatpush.msra.mxu0 %v5921
    %6773 = vmatpush.msra.mxu0 %v5915
    %6774 = vmatpush.msra.mxu0 %v5909
    %6775 = vmatpush.msra.mxu0 %v5903
    %6776 = vmatpush.msra.mxu0 %v5897
    %6777 = vmatpush.msra.mxu0 %v5891
    %6778 = vmatmul.f32.gmra.mxu0 %v5787
    %v6779 = vpop.f32.mrf.mxu0
    %v6780 = vadd.f32 %v6760, %v6779
    %6781 = vdwg.mxu0
    %6782 = vmatpush.msra.mxu0 %v6077
    %6783 = vmatpush.msra.mxu0 %v6071
    %6784 = vmatpush.msra.mxu0 %v6065
    %6785 = vmatpush.msra.mxu0 %v6059
    %6786 = vmatpush.msra.mxu0 %v6053
    %6787 = vmatpush.msra.mxu0 %v6047
    %6788 = vmatpush.msra.mxu0 %v6041
    %6789 = vmatpush.msra.mxu0 %v6035
    %6790 = vmatpush.msra.mxu0 %v6029
    %6791 = vmatpush.msra.mxu0 %v6023
    %6792 = vmatpush.msra.mxu0 %v6017
    %6793 = vmatpush.msra.mxu0 %v6011
    %6794 = vmatpush.msra.mxu0 %v6005
    %6795 = vmatpush.msra.mxu0 %v5999
    %6796 = vmatpush.msra.mxu0 %v5993
    %6797 = vmatpush.msra.mxu0 %v5987
    %6798 = vmatmul.f32.gmra.mxu0 %v5788
    %v6799 = vpop.f32.mrf.mxu0
    %v6800 = vadd.f32 %v6780, %v6799
    %6801 = vdwg.mxu0
    %6802 = vmatpush.msra.mxu0 %v6173
    %6803 = vmatpush.msra.mxu0 %v6167
    %6804 = vmatpush.msra.mxu0 %v6161
    %6805 = vmatpush.msra.mxu0 %v6155
    %6806 = vmatpush.msra.mxu0 %v6149
    %6807 = vmatpush.msra.mxu0 %v6143
    %6808 = vmatpush.msra.mxu0 %v6137
    %6809 = vmatpush.msra.mxu0 %v6131
    %6810 = vmatpush.msra.mxu0 %v6125
    %6811 = vmatpush.msra.mxu0 %v6119
    %6812 = vmatpush.msra.mxu0 %v6113
    %6813 = vmatpush.msra.mxu0 %v6107
    %6814 = vmatpush.msra.mxu0 %v6101
    %6815 = vmatpush.msra.mxu0 %v6095
    %6816 = vmatpush.msra.mxu0 %v6089
    %6817 = vmatpush.msra.mxu0 %v6083
    %6818 = vmatmul.f32.gmra.mxu0 %v5789
    %v6819 = vpop.f32.mrf.mxu0
    %v6820 = vadd.f32 %v6800, %v6819
    %6821 = vdwg.mxu0
    %6822 = vmatpush.msra.mxu0 %v6269
    %6823 = vmatpush.msra.mxu0 %v6263
    %6824 = vmatpush.msra.mxu0 %v6257
    %6825 = vmatpush.msra.mxu0 %v6251
    %6826 = vmatpush.msra.mxu0 %v6245
    %6827 = vmatpush.msra.mxu0 %v6239
    %6828 = vmatpush.msra.mxu0 %v6233
    %6829 = vmatpush.msra.mxu0 %v6227
    %6830 = vmatpush.msra.mxu0 %v6221
    %6831 = vmatpush.msra.mxu0 %v6215
    %6832 = vmatpush.msra.mxu0 %v6209
    %6833 = vmatpush.msra.mxu0 %v6203
    %6834 = vmatpush.msra.mxu0 %v6197
    %6835 = vmatpush.msra.mxu0 %v6191
    %6836 = vmatpush.msra.mxu0 %v6185
    %6837 = vmatpush.msra.mxu0 %v6179
    %6838 = vmatmul.f32.gmra.mxu0 %v5790
    %v6839 = vpop.f32.mrf.mxu0
    %v6840 = vadd.f32 %v6820, %v6839
    %6841 = vdwg.mxu0
    %6842 = vmatpush.msra.mxu0 %v6365
    %6843 = vmatpush.msra.mxu0 %v6359
    %6844 = vmatpush.msra.mxu0 %v6353
    %6845 = vmatpush.msra.mxu0 %v6347
    %6846 = vmatpush.msra.mxu0 %v6341
    %6847 = vmatpush.msra.mxu0 %v6335
    %6848 = vmatpush.msra.mxu0 %v6329
    %6849 = vmatpush.msra.mxu0 %v6323
    %6850 = vmatpush.msra.mxu0 %v6317
    %6851 = vmatpush.msra.mxu0 %v6311
    %6852 = vmatpush.msra.mxu0 %v6305
    %6853 = vmatpush.msra.mxu0 %v6299
    %6854 = vmatpush.msra.mxu0 %v6293
    %6855 = vmatpush.msra.mxu0 %v6287
    %6856 = vmatpush.msra.mxu0 %v6281
    %6857 = vmatpush.msra.mxu0 %v6275
    %6858 = vmatmul.f32.gmra.mxu0 %v5791
    %v6859 = vpop.f32.mrf.mxu0
    %v6860 = vadd.f32 %v6840, %v6859
    %6861 = vdwg.mxu0
    %6862 = vmatpush.msra.mxu0 %v5886
    %6863 = vmatpush.msra.mxu0 %v5880
    %6864 = vmatpush.msra.mxu0 %v5874
    %6865 = vmatpush.msra.mxu0 %v5868
    %6866 = vmatpush.msra.mxu0 %v5862
    %6867 = vmatpush.msra.mxu0 %v5856
    %6868 = vmatpush.msra.mxu0 %v5850
    %6869 = vmatpush.msra.mxu0 %v5844
    %6870 = vmatpush.msra.mxu0 %v5838
    %6871 = vmatpush.msra.mxu0 %v5832
    %6872 = vmatpush.msra.mxu0 %v5826
    %6873 = vmatpush.msra.mxu0 %v5820
    %6874 = vmatpush.msra.mxu0 %v5814
    %6875 = vmatpush.msra.mxu0 %v5808
    %6876 = vmatpush.msra.mxu0 %v5802
    %6877 = vmatpush.msra.mxu0 %v5796
    %6878 = vmatmul.f32.gmra.mxu0 %v5786
    %v6879 = vpop.f32.mrf.mxu0
    %v6880 = vadd.f32 %v6374, %v6879
    %6881 = vdwg.mxu0
    %6882 = vmatpush.msra.mxu0 %v5982
    %6883 = vmatpush.msra.mxu0 %v5976
    %6884 = vmatpush.msra.mxu0 %v5970
    %6885 = vmatpush.msra.mxu0 %v5964
    %6886 = vmatpush.msra.mxu0 %v5958
    %6887 = vmatpush.msra.mxu0 %v5952
    %6888 = vmatpush.msra.mxu0 %v5946
    %6889 = vmatpush.msra.mxu0 %v5940
    %6890 = vmatpush.msra.mxu0 %v5934
    %6891 = vmatpush.msra.mxu0 %v5928
    %6892 = vmatpush.msra.mxu0 %v5922
    %6893 = vmatpush.msra.mxu0 %v5916
    %6894 = vmatpush.msra.mxu0 %v5910
    %6895 = vmatpush.msra.mxu0 %v5904
    %6896 = vmatpush.msra.mxu0 %v5898
    %6897 = vmatpush.msra.mxu0 %v5892
    %6898 = vmatmul.f32.gmra.mxu0 %v5787
    %v6899 = vpop.f32.mrf.mxu0
    %v6900 = vadd.f32 %v6880, %v6899
    %6901 = vdwg.mxu0
    %6902 = vmatpush.msra.mxu0 %v6078
    %6903 = vmatpush.msra.mxu0 %v6072
    %6904 = vmatpush.msra.mxu0 %v6066
    %6905 = vmatpush.msra.mxu0 %v6060
    %6906 = vmatpush.msra.mxu0 %v6054
    %6907 = vmatpush.msra.mxu0 %v6048
    %6908 = vmatpush.msra.mxu0 %v6042
    %6909 = vmatpush.msra.mxu0 %v6036
    %6910 = vmatpush.msra.mxu0 %v6030
    %6911 = vmatpush.msra.mxu0 %v6024
    %6912 = vmatpush.msra.mxu0 %v6018
    %6913 = vmatpush.msra.mxu0 %v6012
    %6914 = vmatpush.msra.mxu0 %v6006
    %6915 = vmatpush.msra.mxu0 %v6000
    %6916 = vmatpush.msra.mxu0 %v5994
    %6917 = vmatpush.msra.mxu0 %v5988
    %6918 = vmatmul.f32.gmra.mxu0 %v5788
    %v6919 = vpop.f32.mrf.mxu0
    %v6920 = vadd.f32 %v6900, %v6919
    %6921 = vdwg.mxu0
    %6922 = vmatpush.msra.mxu0 %v6174
    %6923 = vmatpush.msra.mxu0 %v6168
    %6924 = vmatpush.msra.mxu0 %v6162
    %6925 = vmatpush.msra.mxu0 %v6156
    %6926 = vmatpush.msra.mxu0 %v6150
    %6927 = vmatpush.msra.mxu0 %v6144
    %6928 = vmatpush.msra.mxu0 %v6138
    %6929 = vmatpush.msra.mxu0 %v6132
    %6930 = vmatpush.msra.mxu0 %v6126
    %6931 = vmatpush.msra.mxu0 %v6120
    %6932 = vmatpush.msra.mxu0 %v6114
    %6933 = vmatpush.msra.mxu0 %v6108
    %6934 = vmatpush.msra.mxu0 %v6102
    %6935 = vmatpush.msra.mxu0 %v6096
    %6936 = vmatpush.msra.mxu0 %v6090
    %6937 = vmatpush.msra.mxu0 %v6084
    %6938 = vmatmul.f32.gmra.mxu0 %v5789
    %v6939 = vpop.f32.mrf.mxu0
    %v6940 = vadd.f32 %v6920, %v6939
    %6941 = vdwg.mxu0
    %6942 = vmatpush.msra.mxu0 %v6270
    %6943 = vmatpush.msra.mxu0 %v6264
    %6944 = vmatpush.msra.mxu0 %v6258
    %6945 = vmatpush.msra.mxu0 %v6252
    %6946 = vmatpush.msra.mxu0 %v6246
    %6947 = vmatpush.msra.mxu0 %v6240
    %6948 = vmatpush.msra.mxu0 %v6234
    %6949 = vmatpush.msra.mxu0 %v6228
    %6950 = vmatpush.msra.mxu0 %v6222
    %6951 = vmatpush.msra.mxu0 %v6216
    %6952 = vmatpush.msra.mxu0 %v6210
    %6953 = vmatpush.msra.mxu0 %v6204
    %6954 = vmatpush.msra.mxu0 %v6198
    %6955 = vmatpush.msra.mxu0 %v6192
    %6956 = vmatpush.msra.mxu0 %v6186
    %6957 = vmatpush.msra.mxu0 %v6180
    %6958 = vmatmul.f32.gmra.mxu0 %v5790
    %v6959 = vpop.f32.mrf.mxu0
    %v6960 = vadd.f32 %v6940, %v6959
    %6961 = vdwg.mxu0
    %6962 = vmatpush.msra.mxu0 %v6366
    %6963 = vmatpush.msra.mxu0 %v6360
    %6964 = vmatpush.msra.mxu0 %v6354
    %6965 = vmatpush.msra.mxu0 %v6348
    %6966 = vmatpush.msra.mxu0 %v6342
    %6967 = vmatpush.msra.mxu0 %v6336
    %6968 = vmatpush.msra.mxu0 %v6330
    %6969 = vmatpush.msra.mxu0 %v6324
    %6970 = vmatpush.msra.mxu0 %v6318
    %6971 = vmatpush.msra.mxu0 %v6312
    %6972 = vmatpush.msra.mxu0 %v6306
    %6973 = vmatpush.msra.mxu0 %v6300
    %6974 = vmatpush.msra.mxu0 %v6294
    %6975 = vmatpush.msra.mxu0 %v6288
    %6976 = vmatpush.msra.mxu0 %v6282
    %6977 = vmatpush.msra.mxu0 %v6276
    %6978 = vmatmul.f32.gmra.mxu0 %v5791
    %v6979 = vpop.f32.mrf.mxu0
    %v6980 = vadd.f32 %v6960, %v6979
    %6981 = vdwg.mxu0
    %6982 = vmatpush.msra.mxu0 %v5887
    %6983 = vmatpush.msra.mxu0 %v5881
    %6984 = vmatpush.msra.mxu0 %v5875
    %6985 = vmatpush.msra.mxu0 %v5869
    %6986 = vmatpush.msra.mxu0 %v5863
    %6987 = vmatpush.msra.mxu0 %v5857
    %6988 = vmatpush.msra.mxu0 %v5851
    %6989 = vmatpush.msra.mxu0 %v5845
    %6990 = vmatpush.msra.mxu0 %v5839
    %6991 = vmatpush.msra.mxu0 %v5833
    %6992 = vmatpush.msra.mxu0 %v5827
    %6993 = vmatpush.msra.mxu0 %v5821
    %6994 = vmatpush.msra.mxu0 %v5815
    %6995 = vmatpush.msra.mxu0 %v5809
    %6996 = vmatpush.msra.mxu0 %v5803
    %6997 = vmatpush.msra.mxu0 %v5797
    %6998 = vmatmul.f32.gmra.mxu0 %v5786
    %v6999 = vpop.f32.mrf.mxu0
    %v7000 = vadd.f32 %v6375, %v6999
    %7001 = vdwg.mxu0
    %7002 = vmatpush.msra.mxu0 %v5983
    %7003 = vmatpush.msra.mxu0 %v5977
    %7004 = vmatpush.msra.mxu0 %v5971
    %7005 = vmatpush.msra.mxu0 %v5965
    %7006 = vmatpush.msra.mxu0 %v5959
    %7007 = vmatpush.msra.mxu0 %v5953
    %7008 = vmatpush.msra.mxu0 %v5947
    %7009 = vmatpush.msra.mxu0 %v5941
    %7010 = vmatpush.msra.mxu0 %v5935
    %7011 = vmatpush.msra.mxu0 %v5929
    %7012 = vmatpush.msra.mxu0 %v5923
    %7013 = vmatpush.msra.mxu0 %v5917
    %7014 = vmatpush.msra.mxu0 %v5911
    %7015 = vmatpush.msra.mxu0 %v5905
    %7016 = vmatpush.msra.mxu0 %v5899
    %7017 = vmatpush.msra.mxu0 %v5893
    %7018 = vmatmul.f32.gmra.mxu0 %v5787
    %v7019 = vpop.f32.mrf.mxu0
    %v7020 = vadd.f32 %v7000, %v7019
    %7021 = vdwg.mxu0
    %7022 = vmatpush.msra.mxu0 %v6079
    %7023 = vmatpush.msra.mxu0 %v6073
    %7024 = vmatpush.msra.mxu0 %v6067
    %7025 = vmatpush.msra.mxu0 %v6061
    %7026 = vmatpush.msra.mxu0 %v6055
    %7027 = vmatpush.msra.mxu0 %v6049
    %7028 = vmatpush.msra.mxu0 %v6043
    %7029 = vmatpush.msra.mxu0 %v6037
    %7030 = vmatpush.msra.mxu0 %v6031
    %7031 = vmatpush.msra.mxu0 %v6025
    %7032 = vmatpush.msra.mxu0 %v6019
    %7033 = vmatpush.msra.mxu0 %v6013
    %7034 = vmatpush.msra.mxu0 %v6007
    %7035 = vmatpush.msra.mxu0 %v6001
    %7036 = vmatpush.msra.mxu0 %v5995
    %7037 = vmatpush.msra.mxu0 %v5989
    %7038 = vmatmul.f32.gmra.mxu0 %v5788
    %v7039 = vpop.f32.mrf.mxu0
    %v7040 = vadd.f32 %v7020, %v7039
    %7041 = vdwg.mxu0
    %7042 = vmatpush.msra.mxu0 %v6175
    %7043 = vmatpush.msra.mxu0 %v6169
    %7044 = vmatpush.msra.mxu0 %v6163
    %7045 = vmatpush.msra.mxu0 %v6157
    %7046 = vmatpush.msra.mxu0 %v6151
    %7047 = vmatpush.msra.mxu0 %v6145
    %7048 = vmatpush.msra.mxu0 %v6139
    %7049 = vmatpush.msra.mxu0 %v6133
    %7050 = vmatpush.msra.mxu0 %v6127
    %7051 = vmatpush.msra.mxu0 %v6121
    %7052 = vmatpush.msra.mxu0 %v6115
    %7053 = vmatpush.msra.mxu0 %v6109
    %7054 = vmatpush.msra.mxu0 %v6103
    %7055 = vmatpush.msra.mxu0 %v6097
    %7056 = vmatpush.msra.mxu0 %v6091
    %7057 = vmatpush.msra.mxu0 %v6085
    %7058 = vmatmul.f32.gmra.mxu0 %v5789
    %v7059 = vpop.f32.mrf.mxu0
    %v7060 = vadd.f32 %v7040, %v7059
    %7061 = vdwg.mxu0
    %7062 = vmatpush.msra.mxu0 %v6271
    %7063 = vmatpush.msra.mxu0 %v6265
    %7064 = vmatpush.msra.mxu0 %v6259
    %7065 = vmatpush.msra.mxu0 %v6253
    %7066 = vmatpush.msra.mxu0 %v6247
    %7067 = vmatpush.msra.mxu0 %v6241
    %7068 = vmatpush.msra.mxu0 %v6235
    %7069 = vmatpush.msra.mxu0 %v6229
    %7070 = vmatpush.msra.mxu0 %v6223
    %7071 = vmatpush.msra.mxu0 %v6217
    %7072 = vmatpush.msra.mxu0 %v6211
    %7073 = vmatpush.msra.mxu0 %v6205
    %7074 = vmatpush.msra.mxu0 %v6199
    %7075 = vmatpush.msra.mxu0 %v6193
    %7076 = vmatpush.msra.mxu0 %v6187
    %7077 = vmatpush.msra.mxu0 %v6181
    %7078 = vmatmul.f32.gmra.mxu0 %v5790
    %v7079 = vpop.f32.mrf.mxu0
    %v7080 = vadd.f32 %v7060, %v7079
    %7081 = vdwg.mxu0
    %7082 = vmatpush.msra.mxu0 %v6367
    %7083 = vmatpush.msra.mxu0 %v6361
    %7084 = vmatpush.msra.mxu0 %v6355
    %7085 = vmatpush.msra.mxu0 %v6349
    %7086 = vmatpush.msra.mxu0 %v6343
    %7087 = vmatpush.msra.mxu0 %v6337
    %7088 = vmatpush.msra.mxu0 %v6331
    %7089 = vmatpush.msra.mxu0 %v6325
    %7090 = vmatpush.msra.mxu0 %v6319
    %7091 = vmatpush.msra.mxu0 %v6313
    %7092 = vmatpush.msra.mxu0 %v6307
    %7093 = vmatpush.msra.mxu0 %v6301
    %7094 = vmatpush.msra.mxu0 %v6295
    %7095 = vmatpush.msra.mxu0 %v6289
    %7096 = vmatpush.msra.mxu0 %v6283
    %7097 = vmatpush.msra.mxu0 %v6277
    %7098 = vmatmul.f32.gmra.mxu0 %v5791
    %v7099 = vpop.f32.mrf.mxu0
    %v7100 = vadd.f32 %v7080, %v7099
    %7101 = vdwg.mxu0
    %v7102 = vmax.f32 %v6500, 0.0
    %v7103 = vmax.f32 %v6620, 0.0
    %v7104 = vmax.f32 %v6740, 0.0
    %v7105 = vmax.f32 %v6860, 0.0
    %v7106 = vmax.f32 %v6980, 0.0
    %v7107 = vmax.f32 %v7100, 0.0
    %v7108 = vld [vmem:[#allocation17] sm:$0xff]
    %v7109 = vld [vmem:[#allocation17 + $0x8] sm:$0xff]
    %v7110 = vld [vmem:[#allocation17 + $0x10] sm:$0xff]
    %v7111 = vld [vmem:[#allocation17 + $0x18] sm:$0xff]
    %v7112 = vld [vmem:[#allocation17 + $0x20] sm:$0xff]
    %v7113 = vld [vmem:[#allocation17 + $0x28] sm:$0xff]
    %v7114 = vld [vmem:[#allocation17 + $0x30] sm:$0xff]
    %v7115 = vld [vmem:[#allocation17 + $0x38] sm:$0xff]
    %v7116 = vld [vmem:[#allocation17 + $0x40] sm:$0xff]
    %v7117 = vld [vmem:[#allocation17 + $0x48] sm:$0xff]
    %v7118 = vld [vmem:[#allocation17 + $0x50] sm:$0xff]
    %v7119 = vld [vmem:[#allocation17 + $0x58] sm:$0xff]
    %v7120 = vld [vmem:[#allocation17 + $0x60] sm:$0xff]
    %v7121 = vld [vmem:[#allocation17 + $0x68] sm:$0xff]
    %v7122 = vld [vmem:[#allocation17 + $0x70] sm:$0xff]
    %v7123 = vld [vmem:[#allocation17 + $0x78] sm:$0xff]
    %v7124 = vld [vmem:[#allocation17 + $0x80] sm:$0xff]
    %v7125 = vld [vmem:[#allocation17 + $0x88] sm:$0xff]
    %v7126 = vld [vmem:[#allocation17 + $0x90] sm:$0xff]
    %v7127 = vld [vmem:[#allocation17 + $0x98] sm:$0xff]
    %v7128 = vld [vmem:[#allocation17 + $0xa0] sm:$0xff]
    %v7129 = vld [vmem:[#allocation17 + $0xa8] sm:$0xff]
    %v7130 = vld [vmem:[#allocation17 + $0xb0] sm:$0xff]
    %v7131 = vld [vmem:[#allocation17 + $0xb8] sm:$0xff]
    %v7132 = vld [vmem:[#allocation17 + $0xc0] sm:$0xff]
    %v7133 = vld [vmem:[#allocation17 + $0xc8] sm:$0xff]
    %v7134 = vld [vmem:[#allocation17 + $0xd0] sm:$0xff]
    %v7135 = vld [vmem:[#allocation17 + $0xd8] sm:$0xff]
    %v7136 = vld [vmem:[#allocation17 + $0xe0] sm:$0xff]
    %v7137 = vld [vmem:[#allocation17 + $0xe8] sm:$0xff]
    %v7138 = vld [vmem:[#allocation17 + $0xf0] sm:$0xff]
    %v7139 = vld [vmem:[#allocation17 + $0xf8] sm:$0xff]
    %v7140 = vld [vmem:[#allocation17 + $0x100] sm:$0xff]
    %v7141 = vld [vmem:[#allocation17 + $0x108] sm:$0xff]
    %v7142 = vld [vmem:[#allocation17 + $0x110] sm:$0xff]
    %v7143 = vld [vmem:[#allocation17 + $0x118] sm:$0xff]
    %v7144 = vld [vmem:[#allocation17 + $0x120] sm:$0xff]
    %v7145 = vld [vmem:[#allocation17 + $0x128] sm:$0xff]
    %v7146 = vld [vmem:[#allocation17 + $0x130] sm:$0xff]
    %v7147 = vld [vmem:[#allocation17 + $0x138] sm:$0xff]
    %v7148 = vld [vmem:[#allocation17 + $0x140] sm:$0xff]
    %v7149 = vld [vmem:[#allocation17 + $0x148] sm:$0xff]
    %v7150 = vld [vmem:[#allocation17 + $0x150] sm:$0xff]
    %v7151 = vld [vmem:[#allocation17 + $0x158] sm:$0xff]
    %v7152 = vld [vmem:[#allocation17 + $0x160] sm:$0xff]
    %v7153 = vld [vmem:[#allocation17 + $0x168] sm:$0xff]
    %v7154 = vld [vmem:[#allocation17 + $0x170] sm:$0xff]
    %v7155 = vld [vmem:[#allocation17 + $0x178] sm:$0xff]
    %v7156 = vld [vmem:[#allocation17 + $0x180] sm:$0xff]
    %v7157 = vld [vmem:[#allocation17 + $0x188] sm:$0xff]
    %v7158 = vld [vmem:[#allocation17 + $0x190] sm:$0xff]
    %v7159 = vld [vmem:[#allocation17 + $0x198] sm:$0xff]
    %v7160 = vld [vmem:[#allocation17 + $0x1a0] sm:$0xff]
    %v7161 = vld [vmem:[#allocation17 + $0x1a8] sm:$0xff]
    %v7162 = vld [vmem:[#allocation17 + $0x1b0] sm:$0xff]
    %v7163 = vld [vmem:[#allocation17 + $0x1b8] sm:$0xff]
    %v7164 = vld [vmem:[#allocation17 + $0x1c0] sm:$0xff]
    %v7165 = vld [vmem:[#allocation17 + $0x1c8] sm:$0xff]
    %v7166 = vld [vmem:[#allocation17 + $0x1d0] sm:$0xff]
    %v7167 = vld [vmem:[#allocation17 + $0x1d8] sm:$0xff]
    %v7168 = vld [vmem:[#allocation17 + $0x1e0] sm:$0xff]
    %v7169 = vld [vmem:[#allocation17 + $0x1e8] sm:$0xff]
    %v7170 = vld [vmem:[#allocation17 + $0x1f0] sm:$0xff]
    %v7171 = vld [vmem:[#allocation17 + $0x1f8] sm:$0xff]
    %v7172 = vld [vmem:[#allocation17 + $0x200] sm:$0xff]
    %v7173 = vld [vmem:[#allocation17 + $0x208] sm:$0xff]
    %v7174 = vld [vmem:[#allocation17 + $0x210] sm:$0xff]
    %v7175 = vld [vmem:[#allocation17 + $0x218] sm:$0xff]
    %v7176 = vld [vmem:[#allocation17 + $0x220] sm:$0xff]
    %v7177 = vld [vmem:[#allocation17 + $0x228] sm:$0xff]
    %v7178 = vld [vmem:[#allocation17 + $0x230] sm:$0xff]
    %v7179 = vld [vmem:[#allocation17 + $0x238] sm:$0xff]
    %v7180 = vld [vmem:[#allocation17 + $0x240] sm:$0xff]
    %v7181 = vld [vmem:[#allocation17 + $0x248] sm:$0xff]
    %v7182 = vld [vmem:[#allocation17 + $0x250] sm:$0xff]
    %v7183 = vld [vmem:[#allocation17 + $0x258] sm:$0xff]
    %v7184 = vld [vmem:[#allocation17 + $0x260] sm:$0xff]
    %v7185 = vld [vmem:[#allocation17 + $0x268] sm:$0xff]
    %v7186 = vld [vmem:[#allocation17 + $0x270] sm:$0xff]
    %v7187 = vld [vmem:[#allocation17 + $0x278] sm:$0xff]
    %v7188 = vld [vmem:[#allocation17 + $0x280] sm:$0xff]
    %v7189 = vld [vmem:[#allocation17 + $0x288] sm:$0xff]
    %v7190 = vld [vmem:[#allocation17 + $0x290] sm:$0xff]
    %v7191 = vld [vmem:[#allocation17 + $0x298] sm:$0xff]
    %v7192 = vld [vmem:[#allocation17 + $0x2a0] sm:$0xff]
    %v7193 = vld [vmem:[#allocation17 + $0x2a8] sm:$0xff]
    %v7194 = vld [vmem:[#allocation17 + $0x2b0] sm:$0xff]
    %v7195 = vld [vmem:[#allocation17 + $0x2b8] sm:$0xff]
    %v7196 = vld [vmem:[#allocation17 + $0x2c0] sm:$0xff]
    %v7197 = vld [vmem:[#allocation17 + $0x2c8] sm:$0xff]
    %v7198 = vld [vmem:[#allocation17 + $0x2d0] sm:$0xff]
    %v7199 = vld [vmem:[#allocation17 + $0x2d8] sm:$0xff]
    %v7200 = vld [vmem:[#allocation17 + $0x2e0] sm:$0xff]
    %v7201 = vld [vmem:[#allocation17 + $0x2e8] sm:$0xff]
    %v7202 = vld [vmem:[#allocation17 + $0x2f0] sm:$0xff]
    %v7203 = vld [vmem:[#allocation17 + $0x2f8] sm:$0xff]
    %v7204 = vld [vmem:[#allocation17 + $0x300] sm:$0xff]
    %v7205 = vld [vmem:[#allocation17 + $0x308] sm:$0xff]
    %v7206 = vld [vmem:[#allocation17 + $0x310] sm:$0xff]
    %v7207 = vld [vmem:[#allocation17 + $0x318] sm:$0xff]
    %v7208 = vld [vmem:[#allocation17 + $0x320] sm:$0xff]
    %v7209 = vld [vmem:[#allocation17 + $0x328] sm:$0xff]
    %v7210 = vld [vmem:[#allocation17 + $0x330] sm:$0xff]
    %v7211 = vld [vmem:[#allocation17 + $0x338] sm:$0xff]
    %v7212 = vld [vmem:[#allocation17 + $0x340] sm:$0xff]
    %v7213 = vld [vmem:[#allocation17 + $0x348] sm:$0xff]
    %v7214 = vld [vmem:[#allocation17 + $0x350] sm:$0xff]
    %v7215 = vld [vmem:[#allocation17 + $0x358] sm:$0xff]
    %v7216 = vld [vmem:[#allocation17 + $0x360] sm:$0xff]
    %v7217 = vld [vmem:[#allocation17 + $0x368] sm:$0xff]
    %v7218 = vld [vmem:[#allocation17 + $0x370] sm:$0xff]
    %v7219 = vld [vmem:[#allocation17 + $0x378] sm:$0xff]
    %v7220 = vld [vmem:[#allocation17 + $0x380] sm:$0xff]
    %v7221 = vld [vmem:[#allocation17 + $0x388] sm:$0xff]
    %v7222 = vld [vmem:[#allocation17 + $0x390] sm:$0xff]
    %v7223 = vld [vmem:[#allocation17 + $0x398] sm:$0xff]
    %v7224 = vld [vmem:[#allocation17 + $0x3a0] sm:$0xff]
    %v7225 = vld [vmem:[#allocation17 + $0x3a8] sm:$0xff]
    %v7226 = vld [vmem:[#allocation17 + $0x3b0] sm:$0xff]
    %v7227 = vld [vmem:[#allocation17 + $0x3b8] sm:$0xff]
    %v7228 = vld [vmem:[#allocation17 + $0x3c0] sm:$0xff]
    %v7229 = vld [vmem:[#allocation17 + $0x3c8] sm:$0xff]
    %v7230 = vld [vmem:[#allocation17 + $0x3d0] sm:$0xff]
    %v7231 = vld [vmem:[#allocation17 + $0x3d8] sm:$0xff]
    %v7232 = vld [vmem:[#allocation17 + $0x3e0] sm:$0xff]
    %v7233 = vld [vmem:[#allocation17 + $0x3e8] sm:$0xff]
    %v7234 = vld [vmem:[#allocation17 + $0x3f0] sm:$0xff]
    %v7235 = vld [vmem:[#allocation17 + $0x3f8] sm:$0xff]
    %v7236 = vld [vmem:[#allocation17 + $0x400] sm:$0xff]
    %v7237 = vld [vmem:[#allocation17 + $0x408] sm:$0xff]
    %v7238 = vld [vmem:[#allocation17 + $0x410] sm:$0xff]
    %v7239 = vld [vmem:[#allocation17 + $0x418] sm:$0xff]
    %v7240 = vld [vmem:[#allocation17 + $0x420] sm:$0xff]
    %v7241 = vld [vmem:[#allocation17 + $0x428] sm:$0xff]
    %v7242 = vld [vmem:[#allocation17 + $0x430] sm:$0xff]
    %v7243 = vld [vmem:[#allocation17 + $0x438] sm:$0xff]
    %v7244 = vld [vmem:[#allocation17 + $0x440] sm:$0xff]
    %v7245 = vld [vmem:[#allocation17 + $0x448] sm:$0xff]
    %v7246 = vld [vmem:[#allocation17 + $0x450] sm:$0xff]
    %v7247 = vld [vmem:[#allocation17 + $0x458] sm:$0xff]
    %v7248 = vld [vmem:[#allocation17 + $0x460] sm:$0xff]
    %v7249 = vld [vmem:[#allocation17 + $0x468] sm:$0xff]
    %v7250 = vld [vmem:[#allocation17 + $0x470] sm:$0xff]
    %v7251 = vld [vmem:[#allocation17 + $0x478] sm:$0xff]
    %v7252 = vld [vmem:[#allocation17 + $0x480] sm:$0xff]
    %v7253 = vld [vmem:[#allocation17 + $0x488] sm:$0xff]
    %v7254 = vld [vmem:[#allocation17 + $0x490] sm:$0xff]
    %v7255 = vld [vmem:[#allocation17 + $0x498] sm:$0xff]
    %v7256 = vld [vmem:[#allocation17 + $0x4a0] sm:$0xff]
    %v7257 = vld [vmem:[#allocation17 + $0x4a8] sm:$0xff]
    %v7258 = vld [vmem:[#allocation17 + $0x4b0] sm:$0xff]
    %v7259 = vld [vmem:[#allocation17 + $0x4b8] sm:$0xff]
    %v7260 = vld [vmem:[#allocation17 + $0x4c0] sm:$0xff]
    %v7261 = vld [vmem:[#allocation17 + $0x4c8] sm:$0xff]
    %v7262 = vld [vmem:[#allocation17 + $0x4d0] sm:$0xff]
    %v7263 = vld [vmem:[#allocation17 + $0x4d8] sm:$0xff]
    %v7264 = vld [vmem:[#allocation17 + $0x4e0] sm:$0xff]
    %v7265 = vld [vmem:[#allocation17 + $0x4e8] sm:$0xff]
    %v7266 = vld [vmem:[#allocation17 + $0x4f0] sm:$0xff]
    %v7267 = vld [vmem:[#allocation17 + $0x4f8] sm:$0xff]
    %v7268 = vld [vmem:[#allocation17 + $0x500] sm:$0xff]
    %v7269 = vld [vmem:[#allocation17 + $0x508] sm:$0xff]
    %v7270 = vld [vmem:[#allocation17 + $0x510] sm:$0xff]
    %v7271 = vld [vmem:[#allocation17 + $0x518] sm:$0xff]
    %v7272 = vld [vmem:[#allocation17 + $0x520] sm:$0xff]
    %v7273 = vld [vmem:[#allocation17 + $0x528] sm:$0xff]
    %v7274 = vld [vmem:[#allocation17 + $0x530] sm:$0xff]
    %v7275 = vld [vmem:[#allocation17 + $0x538] sm:$0xff]
    %v7276 = vld [vmem:[#allocation17 + $0x540] sm:$0xff]
    %v7277 = vld [vmem:[#allocation17 + $0x548] sm:$0xff]
    %v7278 = vld [vmem:[#allocation17 + $0x550] sm:$0xff]
    %v7279 = vld [vmem:[#allocation17 + $0x558] sm:$0xff]
    %v7280 = vld [vmem:[#allocation17 + $0x560] sm:$0xff]
    %v7281 = vld [vmem:[#allocation17 + $0x568] sm:$0xff]
    %v7282 = vld [vmem:[#allocation17 + $0x570] sm:$0xff]
    %v7283 = vld [vmem:[#allocation17 + $0x578] sm:$0xff]
    %v7284 = vld [vmem:[#allocation17 + $0x580] sm:$0xff]
    %v7285 = vld [vmem:[#allocation17 + $0x588] sm:$0xff]
    %v7286 = vld [vmem:[#allocation17 + $0x590] sm:$0xff]
    %v7287 = vld [vmem:[#allocation17 + $0x598] sm:$0xff]
    %v7288 = vld [vmem:[#allocation17 + $0x5a0] sm:$0xff]
    %v7289 = vld [vmem:[#allocation17 + $0x5a8] sm:$0xff]
    %v7290 = vld [vmem:[#allocation17 + $0x5b0] sm:$0xff]
    %v7291 = vld [vmem:[#allocation17 + $0x5b8] sm:$0xff]
    %v7292 = vld [vmem:[#allocation17 + $0x5c0] sm:$0xff]
    %v7293 = vld [vmem:[#allocation17 + $0x5c8] sm:$0xff]
    %v7294 = vld [vmem:[#allocation17 + $0x5d0] sm:$0xff]
    %v7295 = vld [vmem:[#allocation17 + $0x5d8] sm:$0xff]
    %v7296 = vld [vmem:[#allocation17 + $0x5e0] sm:$0xff]
    %v7297 = vld [vmem:[#allocation17 + $0x5e8] sm:$0xff]
    %v7298 = vld [vmem:[#allocation17 + $0x5f0] sm:$0xff]
    %v7299 = vld [vmem:[#allocation17 + $0x5f8] sm:$0xff]
    %v7300 = vld [vmem:[#allocation17 + $0x600] sm:$0xff]
    %v7301 = vld [vmem:[#allocation17 + $0x608] sm:$0xff]
    %v7302 = vld [vmem:[#allocation17 + $0x610] sm:$0xff]
    %v7303 = vld [vmem:[#allocation17 + $0x618] sm:$0xff]
    %v7304 = vld [vmem:[#allocation17 + $0x620] sm:$0xff]
    %v7305 = vld [vmem:[#allocation17 + $0x628] sm:$0xff]
    %v7306 = vld [vmem:[#allocation17 + $0x630] sm:$0xff]
    %v7307 = vld [vmem:[#allocation17 + $0x638] sm:$0xff]
    %v7308 = vld [vmem:[#allocation17 + $0x640] sm:$0xff]
    %v7309 = vld [vmem:[#allocation17 + $0x648] sm:$0xff]
    %v7310 = vld [vmem:[#allocation17 + $0x650] sm:$0xff]
    %v7311 = vld [vmem:[#allocation17 + $0x658] sm:$0xff]
    %v7312 = vld [vmem:[#allocation17 + $0x660] sm:$0xff]
    %v7313 = vld [vmem:[#allocation17 + $0x668] sm:$0xff]
    %v7314 = vld [vmem:[#allocation17 + $0x670] sm:$0xff]
    %v7315 = vld [vmem:[#allocation17 + $0x678] sm:$0xff]
    %v7316 = vld [vmem:[#allocation17 + $0x680] sm:$0xff]
    %v7317 = vld [vmem:[#allocation17 + $0x688] sm:$0xff]
    %v7318 = vld [vmem:[#allocation17 + $0x690] sm:$0xff]
    %v7319 = vld [vmem:[#allocation17 + $0x698] sm:$0xff]
    %v7320 = vld [vmem:[#allocation17 + $0x6a0] sm:$0xff]
    %v7321 = vld [vmem:[#allocation17 + $0x6a8] sm:$0xff]
    %v7322 = vld [vmem:[#allocation17 + $0x6b0] sm:$0xff]
    %v7323 = vld [vmem:[#allocation17 + $0x6b8] sm:$0xff]
    %v7324 = vld [vmem:[#allocation17 + $0x6c0] sm:$0xff]
    %v7325 = vld [vmem:[#allocation17 + $0x6c8] sm:$0xff]
    %v7326 = vld [vmem:[#allocation17 + $0x6d0] sm:$0xff]
    %v7327 = vld [vmem:[#allocation17 + $0x6d8] sm:$0xff]
    %v7328 = vld [vmem:[#allocation17 + $0x6e0] sm:$0xff]
    %v7329 = vld [vmem:[#allocation17 + $0x6e8] sm:$0xff]
    %v7330 = vld [vmem:[#allocation17 + $0x6f0] sm:$0xff]
    %v7331 = vld [vmem:[#allocation17 + $0x6f8] sm:$0xff]
    %v7332 = vld [vmem:[#allocation17 + $0x700] sm:$0xff]
    %v7333 = vld [vmem:[#allocation17 + $0x708] sm:$0xff]
    %v7334 = vld [vmem:[#allocation17 + $0x710] sm:$0xff]
    %v7335 = vld [vmem:[#allocation17 + $0x718] sm:$0xff]
    %v7336 = vld [vmem:[#allocation17 + $0x720] sm:$0xff]
    %v7337 = vld [vmem:[#allocation17 + $0x728] sm:$0xff]
    %v7338 = vld [vmem:[#allocation17 + $0x730] sm:$0xff]
    %v7339 = vld [vmem:[#allocation17 + $0x738] sm:$0xff]
    %v7340 = vld [vmem:[#allocation17 + $0x740] sm:$0xff]
    %v7341 = vld [vmem:[#allocation17 + $0x748] sm:$0xff]
    %v7342 = vld [vmem:[#allocation17 + $0x750] sm:$0xff]
    %v7343 = vld [vmem:[#allocation17 + $0x758] sm:$0xff]
    %v7344 = vld [vmem:[#allocation17 + $0x760] sm:$0xff]
    %v7345 = vld [vmem:[#allocation17 + $0x768] sm:$0xff]
    %v7346 = vld [vmem:[#allocation17 + $0x770] sm:$0xff]
    %v7347 = vld [vmem:[#allocation17 + $0x778] sm:$0xff]
    %v7348 = vld [vmem:[#allocation17 + $0x780] sm:$0xff]
    %v7349 = vld [vmem:[#allocation17 + $0x788] sm:$0xff]
    %v7350 = vld [vmem:[#allocation17 + $0x790] sm:$0xff]
    %v7351 = vld [vmem:[#allocation17 + $0x798] sm:$0xff]
    %v7352 = vld [vmem:[#allocation17 + $0x7a0] sm:$0xff]
    %v7353 = vld [vmem:[#allocation17 + $0x7a8] sm:$0xff]
    %v7354 = vld [vmem:[#allocation17 + $0x7b0] sm:$0xff]
    %v7355 = vld [vmem:[#allocation17 + $0x7b8] sm:$0xff]
    %v7356 = vld [vmem:[#allocation17 + $0x7c0] sm:$0xff]
    %v7357 = vld [vmem:[#allocation17 + $0x7c8] sm:$0xff]
    %v7358 = vld [vmem:[#allocation17 + $0x7d0] sm:$0xff]
    %v7359 = vld [vmem:[#allocation17 + $0x7d8] sm:$0xff]
    %v7360 = vld [vmem:[#allocation17 + $0x7e0] sm:$0xff]
    %v7361 = vld [vmem:[#allocation17 + $0x7e8] sm:$0xff]
    %v7362 = vld [vmem:[#allocation17 + $0x7f0] sm:$0xff]
    %v7363 = vld [vmem:[#allocation17 + $0x7f8] sm:$0xff]
    %v7364 = vld [vmem:[#allocation17 + $0x800] sm:$0xff]
    %v7365 = vld [vmem:[#allocation17 + $0x808] sm:$0xff]
    %v7366 = vld [vmem:[#allocation17 + $0x810] sm:$0xff]
    %v7367 = vld [vmem:[#allocation17 + $0x818] sm:$0xff]
    %v7368 = vld [vmem:[#allocation17 + $0x820] sm:$0xff]
    %v7369 = vld [vmem:[#allocation17 + $0x828] sm:$0xff]
    %v7370 = vld [vmem:[#allocation17 + $0x830] sm:$0xff]
    %v7371 = vld [vmem:[#allocation17 + $0x838] sm:$0xff]
    %v7372 = vld [vmem:[#allocation17 + $0x840] sm:$0xff]
    %v7373 = vld [vmem:[#allocation17 + $0x848] sm:$0xff]
    %v7374 = vld [vmem:[#allocation17 + $0x850] sm:$0xff]
    %v7375 = vld [vmem:[#allocation17 + $0x858] sm:$0xff]
    %v7376 = vld [vmem:[#allocation17 + $0x860] sm:$0xff]
    %v7377 = vld [vmem:[#allocation17 + $0x868] sm:$0xff]
    %v7378 = vld [vmem:[#allocation17 + $0x870] sm:$0xff]
    %v7379 = vld [vmem:[#allocation17 + $0x878] sm:$0xff]
    %v7380 = vld [vmem:[#allocation17 + $0x880] sm:$0xff]
    %v7381 = vld [vmem:[#allocation17 + $0x888] sm:$0xff]
    %v7382 = vld [vmem:[#allocation17 + $0x890] sm:$0xff]
    %v7383 = vld [vmem:[#allocation17 + $0x898] sm:$0xff]
    %v7384 = vld [vmem:[#allocation17 + $0x8a0] sm:$0xff]
    %v7385 = vld [vmem:[#allocation17 + $0x8a8] sm:$0xff]
    %v7386 = vld [vmem:[#allocation17 + $0x8b0] sm:$0xff]
    %v7387 = vld [vmem:[#allocation17 + $0x8b8] sm:$0xff]
    %v7388 = vld [vmem:[#allocation17 + $0x8c0] sm:$0xff]
    %v7389 = vld [vmem:[#allocation17 + $0x8c8] sm:$0xff]
    %v7390 = vld [vmem:[#allocation17 + $0x8d0] sm:$0xff]
    %v7391 = vld [vmem:[#allocation17 + $0x8d8] sm:$0xff]
    %v7392 = vld [vmem:[#allocation17 + $0x8e0] sm:$0xff]
    %v7393 = vld [vmem:[#allocation17 + $0x8e8] sm:$0xff]
    %v7394 = vld [vmem:[#allocation17 + $0x8f0] sm:$0xff]
    %v7395 = vld [vmem:[#allocation17 + $0x8f8] sm:$0xff]
    %v7396 = vunpack.c.l.bf16 %v7108
    %v7397 = vunpack.c.h.bf16 %v7108
    %v7398 = vunpack.c.l.bf16 %v7109
    %v7399 = vunpack.c.h.bf16 %v7109
    %v7400 = vunpack.c.l.bf16 %v7110
    %v7401 = vunpack.c.h.bf16 %v7110
    %v7402 = vunpack.c.l.bf16 %v7111
    %v7403 = vunpack.c.h.bf16 %v7111
    %v7404 = vunpack.c.l.bf16 %v7112
    %v7405 = vunpack.c.h.bf16 %v7112
    %v7406 = vunpack.c.l.bf16 %v7113
    %v7407 = vunpack.c.h.bf16 %v7113
    %v7408 = vunpack.c.l.bf16 %v7114
    %v7409 = vunpack.c.h.bf16 %v7114
    %v7410 = vunpack.c.l.bf16 %v7115
    %v7411 = vunpack.c.h.bf16 %v7115
    %v7412 = vunpack.c.l.bf16 %v7116
    %v7413 = vunpack.c.h.bf16 %v7116
    %v7414 = vunpack.c.l.bf16 %v7117
    %v7415 = vunpack.c.h.bf16 %v7117
    %v7416 = vunpack.c.l.bf16 %v7118
    %v7417 = vunpack.c.h.bf16 %v7118
    %v7418 = vunpack.c.l.bf16 %v7119
    %v7419 = vunpack.c.h.bf16 %v7119
    %v7420 = vunpack.c.l.bf16 %v7120
    %v7421 = vunpack.c.h.bf16 %v7120
    %v7422 = vunpack.c.l.bf16 %v7121
    %v7423 = vunpack.c.h.bf16 %v7121
    %v7424 = vunpack.c.l.bf16 %v7122
    %v7425 = vunpack.c.h.bf16 %v7122
    %v7426 = vunpack.c.l.bf16 %v7123
    %v7427 = vunpack.c.h.bf16 %v7123
    %v7428 = vunpack.c.l.bf16 %v7124
    %v7429 = vunpack.c.h.bf16 %v7124
    %v7430 = vunpack.c.l.bf16 %v7125
    %v7431 = vunpack.c.h.bf16 %v7125
    %v7432 = vunpack.c.l.bf16 %v7126
    %v7433 = vunpack.c.h.bf16 %v7126
    %v7434 = vunpack.c.l.bf16 %v7127
    %v7435 = vunpack.c.h.bf16 %v7127
    %v7436 = vunpack.c.l.bf16 %v7128
    %v7437 = vunpack.c.h.bf16 %v7128
    %v7438 = vunpack.c.l.bf16 %v7129
    %v7439 = vunpack.c.h.bf16 %v7129
    %v7440 = vunpack.c.l.bf16 %v7130
    %v7441 = vunpack.c.h.bf16 %v7130
    %v7442 = vunpack.c.l.bf16 %v7131
    %v7443 = vunpack.c.h.bf16 %v7131
    %v7444 = vunpack.c.l.bf16 %v7132
    %v7445 = vunpack.c.h.bf16 %v7132
    %v7446 = vunpack.c.l.bf16 %v7133
    %v7447 = vunpack.c.h.bf16 %v7133
    %v7448 = vunpack.c.l.bf16 %v7134
    %v7449 = vunpack.c.h.bf16 %v7134
    %v7450 = vunpack.c.l.bf16 %v7135
    %v7451 = vunpack.c.h.bf16 %v7135
    %v7452 = vunpack.c.l.bf16 %v7136
    %v7453 = vunpack.c.h.bf16 %v7136
    %v7454 = vunpack.c.l.bf16 %v7137
    %v7455 = vunpack.c.h.bf16 %v7137
    %v7456 = vunpack.c.l.bf16 %v7138
    %v7457 = vunpack.c.h.bf16 %v7138
    %v7458 = vunpack.c.l.bf16 %v7139
    %v7459 = vunpack.c.h.bf16 %v7139
    %v7460 = vunpack.c.l.bf16 %v7140
    %v7461 = vunpack.c.h.bf16 %v7140
    %v7462 = vunpack.c.l.bf16 %v7141
    %v7463 = vunpack.c.h.bf16 %v7141
    %v7464 = vunpack.c.l.bf16 %v7142
    %v7465 = vunpack.c.h.bf16 %v7142
    %v7466 = vunpack.c.l.bf16 %v7143
    %v7467 = vunpack.c.h.bf16 %v7143
    %v7468 = vunpack.c.l.bf16 %v7144
    %v7469 = vunpack.c.h.bf16 %v7144
    %v7470 = vunpack.c.l.bf16 %v7145
    %v7471 = vunpack.c.h.bf16 %v7145
    %v7472 = vunpack.c.l.bf16 %v7146
    %v7473 = vunpack.c.h.bf16 %v7146
    %v7474 = vunpack.c.l.bf16 %v7147
    %v7475 = vunpack.c.h.bf16 %v7147
    %v7476 = vunpack.c.l.bf16 %v7148
    %v7477 = vunpack.c.h.bf16 %v7148
    %v7478 = vunpack.c.l.bf16 %v7149
    %v7479 = vunpack.c.h.bf16 %v7149
    %v7480 = vunpack.c.l.bf16 %v7150
    %v7481 = vunpack.c.h.bf16 %v7150
    %v7482 = vunpack.c.l.bf16 %v7151
    %v7483 = vunpack.c.h.bf16 %v7151
    %v7484 = vunpack.c.l.bf16 %v7152
    %v7485 = vunpack.c.h.bf16 %v7152
    %v7486 = vunpack.c.l.bf16 %v7153
    %v7487 = vunpack.c.h.bf16 %v7153
    %v7488 = vunpack.c.l.bf16 %v7154
    %v7489 = vunpack.c.h.bf16 %v7154
    %v7490 = vunpack.c.l.bf16 %v7155
    %v7491 = vunpack.c.h.bf16 %v7155
    %v7492 = vunpack.c.l.bf16 %v7156
    %v7493 = vunpack.c.h.bf16 %v7156
    %v7494 = vunpack.c.l.bf16 %v7157
    %v7495 = vunpack.c.h.bf16 %v7157
    %v7496 = vunpack.c.l.bf16 %v7158
    %v7497 = vunpack.c.h.bf16 %v7158
    %v7498 = vunpack.c.l.bf16 %v7159
    %v7499 = vunpack.c.h.bf16 %v7159
    %v7500 = vunpack.c.l.bf16 %v7160
    %v7501 = vunpack.c.h.bf16 %v7160
    %v7502 = vunpack.c.l.bf16 %v7161
    %v7503 = vunpack.c.h.bf16 %v7161
    %v7504 = vunpack.c.l.bf16 %v7162
    %v7505 = vunpack.c.h.bf16 %v7162
    %v7506 = vunpack.c.l.bf16 %v7163
    %v7507 = vunpack.c.h.bf16 %v7163
    %v7508 = vunpack.c.l.bf16 %v7164
    %v7509 = vunpack.c.h.bf16 %v7164
    %v7510 = vunpack.c.l.bf16 %v7165
    %v7511 = vunpack.c.h.bf16 %v7165
    %v7512 = vunpack.c.l.bf16 %v7166
    %v7513 = vunpack.c.h.bf16 %v7166
    %v7514 = vunpack.c.l.bf16 %v7167
    %v7515 = vunpack.c.h.bf16 %v7167
    %v7516 = vunpack.c.l.bf16 %v7168
    %v7517 = vunpack.c.h.bf16 %v7168
    %v7518 = vunpack.c.l.bf16 %v7169
    %v7519 = vunpack.c.h.bf16 %v7169
    %v7520 = vunpack.c.l.bf16 %v7170
    %v7521 = vunpack.c.h.bf16 %v7170
    %v7522 = vunpack.c.l.bf16 %v7171
    %v7523 = vunpack.c.h.bf16 %v7171
    %v7524 = vunpack.c.l.bf16 %v7172
    %v7525 = vunpack.c.h.bf16 %v7172
    %v7526 = vunpack.c.l.bf16 %v7173
    %v7527 = vunpack.c.h.bf16 %v7173
    %v7528 = vunpack.c.l.bf16 %v7174
    %v7529 = vunpack.c.h.bf16 %v7174
    %v7530 = vunpack.c.l.bf16 %v7175
    %v7531 = vunpack.c.h.bf16 %v7175
    %v7532 = vunpack.c.l.bf16 %v7176
    %v7533 = vunpack.c.h.bf16 %v7176
    %v7534 = vunpack.c.l.bf16 %v7177
    %v7535 = vunpack.c.h.bf16 %v7177
    %v7536 = vunpack.c.l.bf16 %v7178
    %v7537 = vunpack.c.h.bf16 %v7178
    %v7538 = vunpack.c.l.bf16 %v7179
    %v7539 = vunpack.c.h.bf16 %v7179
    %v7540 = vunpack.c.l.bf16 %v7180
    %v7541 = vunpack.c.h.bf16 %v7180
    %v7542 = vunpack.c.l.bf16 %v7181
    %v7543 = vunpack.c.h.bf16 %v7181
    %v7544 = vunpack.c.l.bf16 %v7182
    %v7545 = vunpack.c.h.bf16 %v7182
    %v7546 = vunpack.c.l.bf16 %v7183
    %v7547 = vunpack.c.h.bf16 %v7183
    %v7548 = vunpack.c.l.bf16 %v7184
    %v7549 = vunpack.c.h.bf16 %v7184
    %v7550 = vunpack.c.l.bf16 %v7185
    %v7551 = vunpack.c.h.bf16 %v7185
    %v7552 = vunpack.c.l.bf16 %v7186
    %v7553 = vunpack.c.h.bf16 %v7186
    %v7554 = vunpack.c.l.bf16 %v7187
    %v7555 = vunpack.c.h.bf16 %v7187
    %v7556 = vunpack.c.l.bf16 %v7188
    %v7557 = vunpack.c.h.bf16 %v7188
    %v7558 = vunpack.c.l.bf16 %v7189
    %v7559 = vunpack.c.h.bf16 %v7189
    %v7560 = vunpack.c.l.bf16 %v7190
    %v7561 = vunpack.c.h.bf16 %v7190
    %v7562 = vunpack.c.l.bf16 %v7191
    %v7563 = vunpack.c.h.bf16 %v7191
    %v7564 = vunpack.c.l.bf16 %v7192
    %v7565 = vunpack.c.h.bf16 %v7192
    %v7566 = vunpack.c.l.bf16 %v7193
    %v7567 = vunpack.c.h.bf16 %v7193
    %v7568 = vunpack.c.l.bf16 %v7194
    %v7569 = vunpack.c.h.bf16 %v7194
    %v7570 = vunpack.c.l.bf16 %v7195
    %v7571 = vunpack.c.h.bf16 %v7195
    %v7572 = vunpack.c.l.bf16 %v7196
    %v7573 = vunpack.c.h.bf16 %v7196
    %v7574 = vunpack.c.l.bf16 %v7197
    %v7575 = vunpack.c.h.bf16 %v7197
    %v7576 = vunpack.c.l.bf16 %v7198
    %v7577 = vunpack.c.h.bf16 %v7198
    %v7578 = vunpack.c.l.bf16 %v7199
    %v7579 = vunpack.c.h.bf16 %v7199
    %v7580 = vunpack.c.l.bf16 %v7200
    %v7581 = vunpack.c.h.bf16 %v7200
    %v7582 = vunpack.c.l.bf16 %v7201
    %v7583 = vunpack.c.h.bf16 %v7201
    %v7584 = vunpack.c.l.bf16 %v7202
    %v7585 = vunpack.c.h.bf16 %v7202
    %v7586 = vunpack.c.l.bf16 %v7203
    %v7587 = vunpack.c.h.bf16 %v7203
    %v7588 = vunpack.c.l.bf16 %v7204
    %v7589 = vunpack.c.h.bf16 %v7204
    %v7590 = vunpack.c.l.bf16 %v7205
    %v7591 = vunpack.c.h.bf16 %v7205
    %v7592 = vunpack.c.l.bf16 %v7206
    %v7593 = vunpack.c.h.bf16 %v7206
    %v7594 = vunpack.c.l.bf16 %v7207
    %v7595 = vunpack.c.h.bf16 %v7207
    %v7596 = vunpack.c.l.bf16 %v7208
    %v7597 = vunpack.c.h.bf16 %v7208
    %v7598 = vunpack.c.l.bf16 %v7209
    %v7599 = vunpack.c.h.bf16 %v7209
    %v7600 = vunpack.c.l.bf16 %v7210
    %v7601 = vunpack.c.h.bf16 %v7210
    %v7602 = vunpack.c.l.bf16 %v7211
    %v7603 = vunpack.c.h.bf16 %v7211
    %v7604 = vunpack.c.l.bf16 %v7212
    %v7605 = vunpack.c.h.bf16 %v7212
    %v7606 = vunpack.c.l.bf16 %v7213
    %v7607 = vunpack.c.h.bf16 %v7213
    %v7608 = vunpack.c.l.bf16 %v7214
    %v7609 = vunpack.c.h.bf16 %v7214
    %v7610 = vunpack.c.l.bf16 %v7215
    %v7611 = vunpack.c.h.bf16 %v7215
    %v7612 = vunpack.c.l.bf16 %v7216
    %v7613 = vunpack.c.h.bf16 %v7216
    %v7614 = vunpack.c.l.bf16 %v7217
    %v7615 = vunpack.c.h.bf16 %v7217
    %v7616 = vunpack.c.l.bf16 %v7218
    %v7617 = vunpack.c.h.bf16 %v7218
    %v7618 = vunpack.c.l.bf16 %v7219
    %v7619 = vunpack.c.h.bf16 %v7219
    %v7620 = vunpack.c.l.bf16 %v7220
    %v7621 = vunpack.c.h.bf16 %v7220
    %v7622 = vunpack.c.l.bf16 %v7221
    %v7623 = vunpack.c.h.bf16 %v7221
    %v7624 = vunpack.c.l.bf16 %v7222
    %v7625 = vunpack.c.h.bf16 %v7222
    %v7626 = vunpack.c.l.bf16 %v7223
    %v7627 = vunpack.c.h.bf16 %v7223
    %v7628 = vunpack.c.l.bf16 %v7224
    %v7629 = vunpack.c.h.bf16 %v7224
    %v7630 = vunpack.c.l.bf16 %v7225
    %v7631 = vunpack.c.h.bf16 %v7225
    %v7632 = vunpack.c.l.bf16 %v7226
    %v7633 = vunpack.c.h.bf16 %v7226
    %v7634 = vunpack.c.l.bf16 %v7227
    %v7635 = vunpack.c.h.bf16 %v7227
    %v7636 = vunpack.c.l.bf16 %v7228
    %v7637 = vunpack.c.h.bf16 %v7228
    %v7638 = vunpack.c.l.bf16 %v7229
    %v7639 = vunpack.c.h.bf16 %v7229
    %v7640 = vunpack.c.l.bf16 %v7230
    %v7641 = vunpack.c.h.bf16 %v7230
    %v7642 = vunpack.c.l.bf16 %v7231
    %v7643 = vunpack.c.h.bf16 %v7231
    %v7644 = vunpack.c.l.bf16 %v7232
    %v7645 = vunpack.c.h.bf16 %v7232
    %v7646 = vunpack.c.l.bf16 %v7233
    %v7647 = vunpack.c.h.bf16 %v7233
    %v7648 = vunpack.c.l.bf16 %v7234
    %v7649 = vunpack.c.h.bf16 %v7234
    %v7650 = vunpack.c.l.bf16 %v7235
    %v7651 = vunpack.c.h.bf16 %v7235
    %v7652 = vunpack.c.l.bf16 %v7236
    %v7653 = vunpack.c.h.bf16 %v7236
    %v7654 = vunpack.c.l.bf16 %v7237
    %v7655 = vunpack.c.h.bf16 %v7237
    %v7656 = vunpack.c.l.bf16 %v7238
    %v7657 = vunpack.c.h.bf16 %v7238
    %v7658 = vunpack.c.l.bf16 %v7239
    %v7659 = vunpack.c.h.bf16 %v7239
    %v7660 = vunpack.c.l.bf16 %v7240
    %v7661 = vunpack.c.h.bf16 %v7240
    %v7662 = vunpack.c.l.bf16 %v7241
    %v7663 = vunpack.c.h.bf16 %v7241
    %v7664 = vunpack.c.l.bf16 %v7242
    %v7665 = vunpack.c.h.bf16 %v7242
    %v7666 = vunpack.c.l.bf16 %v7243
    %v7667 = vunpack.c.h.bf16 %v7243
    %v7668 = vunpack.c.l.bf16 %v7244
    %v7669 = vunpack.c.h.bf16 %v7244
    %v7670 = vunpack.c.l.bf16 %v7245
    %v7671 = vunpack.c.h.bf16 %v7245
    %v7672 = vunpack.c.l.bf16 %v7246
    %v7673 = vunpack.c.h.bf16 %v7246
    %v7674 = vunpack.c.l.bf16 %v7247
    %v7675 = vunpack.c.h.bf16 %v7247
    %v7676 = vunpack.c.l.bf16 %v7248
    %v7677 = vunpack.c.h.bf16 %v7248
    %v7678 = vunpack.c.l.bf16 %v7249
    %v7679 = vunpack.c.h.bf16 %v7249
    %v7680 = vunpack.c.l.bf16 %v7250
    %v7681 = vunpack.c.h.bf16 %v7250
    %v7682 = vunpack.c.l.bf16 %v7251
    %v7683 = vunpack.c.h.bf16 %v7251
    %v7684 = vunpack.c.l.bf16 %v7252
    %v7685 = vunpack.c.h.bf16 %v7252
    %v7686 = vunpack.c.l.bf16 %v7253
    %v7687 = vunpack.c.h.bf16 %v7253
    %v7688 = vunpack.c.l.bf16 %v7254
    %v7689 = vunpack.c.h.bf16 %v7254
    %v7690 = vunpack.c.l.bf16 %v7255
    %v7691 = vunpack.c.h.bf16 %v7255
    %v7692 = vunpack.c.l.bf16 %v7256
    %v7693 = vunpack.c.h.bf16 %v7256
    %v7694 = vunpack.c.l.bf16 %v7257
    %v7695 = vunpack.c.h.bf16 %v7257
    %v7696 = vunpack.c.l.bf16 %v7258
    %v7697 = vunpack.c.h.bf16 %v7258
    %v7698 = vunpack.c.l.bf16 %v7259
    %v7699 = vunpack.c.h.bf16 %v7259
    %v7700 = vunpack.c.l.bf16 %v7260
    %v7701 = vunpack.c.h.bf16 %v7260
    %v7702 = vunpack.c.l.bf16 %v7261
    %v7703 = vunpack.c.h.bf16 %v7261
    %v7704 = vunpack.c.l.bf16 %v7262
    %v7705 = vunpack.c.h.bf16 %v7262
    %v7706 = vunpack.c.l.bf16 %v7263
    %v7707 = vunpack.c.h.bf16 %v7263
    %v7708 = vunpack.c.l.bf16 %v7264
    %v7709 = vunpack.c.h.bf16 %v7264
    %v7710 = vunpack.c.l.bf16 %v7265
    %v7711 = vunpack.c.h.bf16 %v7265
    %v7712 = vunpack.c.l.bf16 %v7266
    %v7713 = vunpack.c.h.bf16 %v7266
    %v7714 = vunpack.c.l.bf16 %v7267
    %v7715 = vunpack.c.h.bf16 %v7267
    %v7716 = vunpack.c.l.bf16 %v7268
    %v7717 = vunpack.c.h.bf16 %v7268
    %v7718 = vunpack.c.l.bf16 %v7269
    %v7719 = vunpack.c.h.bf16 %v7269
    %v7720 = vunpack.c.l.bf16 %v7270
    %v7721 = vunpack.c.h.bf16 %v7270
    %v7722 = vunpack.c.l.bf16 %v7271
    %v7723 = vunpack.c.h.bf16 %v7271
    %v7724 = vunpack.c.l.bf16 %v7272
    %v7725 = vunpack.c.h.bf16 %v7272
    %v7726 = vunpack.c.l.bf16 %v7273
    %v7727 = vunpack.c.h.bf16 %v7273
    %v7728 = vunpack.c.l.bf16 %v7274
    %v7729 = vunpack.c.h.bf16 %v7274
    %v7730 = vunpack.c.l.bf16 %v7275
    %v7731 = vunpack.c.h.bf16 %v7275
    %v7732 = vunpack.c.l.bf16 %v7276
    %v7733 = vunpack.c.h.bf16 %v7276
    %v7734 = vunpack.c.l.bf16 %v7277
    %v7735 = vunpack.c.h.bf16 %v7277
    %v7736 = vunpack.c.l.bf16 %v7278
    %v7737 = vunpack.c.h.bf16 %v7278
    %v7738 = vunpack.c.l.bf16 %v7279
    %v7739 = vunpack.c.h.bf16 %v7279
    %v7740 = vunpack.c.l.bf16 %v7280
    %v7741 = vunpack.c.h.bf16 %v7280
    %v7742 = vunpack.c.l.bf16 %v7281
    %v7743 = vunpack.c.h.bf16 %v7281
    %v7744 = vunpack.c.l.bf16 %v7282
    %v7745 = vunpack.c.h.bf16 %v7282
    %v7746 = vunpack.c.l.bf16 %v7283
    %v7747 = vunpack.c.h.bf16 %v7283
    %v7748 = vunpack.c.l.bf16 %v7284
    %v7749 = vunpack.c.h.bf16 %v7284
    %v7750 = vunpack.c.l.bf16 %v7285
    %v7751 = vunpack.c.h.bf16 %v7285
    %v7752 = vunpack.c.l.bf16 %v7286
    %v7753 = vunpack.c.h.bf16 %v7286
    %v7754 = vunpack.c.l.bf16 %v7287
    %v7755 = vunpack.c.h.bf16 %v7287
    %v7756 = vunpack.c.l.bf16 %v7288
    %v7757 = vunpack.c.h.bf16 %v7288
    %v7758 = vunpack.c.l.bf16 %v7289
    %v7759 = vunpack.c.h.bf16 %v7289
    %v7760 = vunpack.c.l.bf16 %v7290
    %v7761 = vunpack.c.h.bf16 %v7290
    %v7762 = vunpack.c.l.bf16 %v7291
    %v7763 = vunpack.c.h.bf16 %v7291
    %v7764 = vunpack.c.l.bf16 %v7292
    %v7765 = vunpack.c.h.bf16 %v7292
    %v7766 = vunpack.c.l.bf16 %v7293
    %v7767 = vunpack.c.h.bf16 %v7293
    %v7768 = vunpack.c.l.bf16 %v7294
    %v7769 = vunpack.c.h.bf16 %v7294
    %v7770 = vunpack.c.l.bf16 %v7295
    %v7771 = vunpack.c.h.bf16 %v7295
    %v7772 = vunpack.c.l.bf16 %v7296
    %v7773 = vunpack.c.h.bf16 %v7296
    %v7774 = vunpack.c.l.bf16 %v7297
    %v7775 = vunpack.c.h.bf16 %v7297
    %v7776 = vunpack.c.l.bf16 %v7298
    %v7777 = vunpack.c.h.bf16 %v7298
    %v7778 = vunpack.c.l.bf16 %v7299
    %v7779 = vunpack.c.h.bf16 %v7299
    %v7780 = vunpack.c.l.bf16 %v7300
    %v7781 = vunpack.c.h.bf16 %v7300
    %v7782 = vunpack.c.l.bf16 %v7301
    %v7783 = vunpack.c.h.bf16 %v7301
    %v7784 = vunpack.c.l.bf16 %v7302
    %v7785 = vunpack.c.h.bf16 %v7302
    %v7786 = vunpack.c.l.bf16 %v7303
    %v7787 = vunpack.c.h.bf16 %v7303
    %v7788 = vunpack.c.l.bf16 %v7304
    %v7789 = vunpack.c.h.bf16 %v7304
    %v7790 = vunpack.c.l.bf16 %v7305
    %v7791 = vunpack.c.h.bf16 %v7305
    %v7792 = vunpack.c.l.bf16 %v7306
    %v7793 = vunpack.c.h.bf16 %v7306
    %v7794 = vunpack.c.l.bf16 %v7307
    %v7795 = vunpack.c.h.bf16 %v7307
    %v7796 = vunpack.c.l.bf16 %v7308
    %v7797 = vunpack.c.h.bf16 %v7308
    %v7798 = vunpack.c.l.bf16 %v7309
    %v7799 = vunpack.c.h.bf16 %v7309
    %v7800 = vunpack.c.l.bf16 %v7310
    %v7801 = vunpack.c.h.bf16 %v7310
    %v7802 = vunpack.c.l.bf16 %v7311
    %v7803 = vunpack.c.h.bf16 %v7311
    %v7804 = vunpack.c.l.bf16 %v7312
    %v7805 = vunpack.c.h.bf16 %v7312
    %v7806 = vunpack.c.l.bf16 %v7313
    %v7807 = vunpack.c.h.bf16 %v7313
    %v7808 = vunpack.c.l.bf16 %v7314
    %v7809 = vunpack.c.h.bf16 %v7314
    %v7810 = vunpack.c.l.bf16 %v7315
    %v7811 = vunpack.c.h.bf16 %v7315
    %v7812 = vunpack.c.l.bf16 %v7316
    %v7813 = vunpack.c.h.bf16 %v7316
    %v7814 = vunpack.c.l.bf16 %v7317
    %v7815 = vunpack.c.h.bf16 %v7317
    %v7816 = vunpack.c.l.bf16 %v7318
    %v7817 = vunpack.c.h.bf16 %v7318
    %v7818 = vunpack.c.l.bf16 %v7319
    %v7819 = vunpack.c.h.bf16 %v7319
    %v7820 = vunpack.c.l.bf16 %v7320
    %v7821 = vunpack.c.h.bf16 %v7320
    %v7822 = vunpack.c.l.bf16 %v7321
    %v7823 = vunpack.c.h.bf16 %v7321
    %v7824 = vunpack.c.l.bf16 %v7322
    %v7825 = vunpack.c.h.bf16 %v7322
    %v7826 = vunpack.c.l.bf16 %v7323
    %v7827 = vunpack.c.h.bf16 %v7323
    %v7828 = vunpack.c.l.bf16 %v7324
    %v7829 = vunpack.c.h.bf16 %v7324
    %v7830 = vunpack.c.l.bf16 %v7325
    %v7831 = vunpack.c.h.bf16 %v7325
    %v7832 = vunpack.c.l.bf16 %v7326
    %v7833 = vunpack.c.h.bf16 %v7326
    %v7834 = vunpack.c.l.bf16 %v7327
    %v7835 = vunpack.c.h.bf16 %v7327
    %v7836 = vunpack.c.l.bf16 %v7328
    %v7837 = vunpack.c.h.bf16 %v7328
    %v7838 = vunpack.c.l.bf16 %v7329
    %v7839 = vunpack.c.h.bf16 %v7329
    %v7840 = vunpack.c.l.bf16 %v7330
    %v7841 = vunpack.c.h.bf16 %v7330
    %v7842 = vunpack.c.l.bf16 %v7331
    %v7843 = vunpack.c.h.bf16 %v7331
    %v7844 = vunpack.c.l.bf16 %v7332
    %v7845 = vunpack.c.h.bf16 %v7332
    %v7846 = vunpack.c.l.bf16 %v7333
    %v7847 = vunpack.c.h.bf16 %v7333
    %v7848 = vunpack.c.l.bf16 %v7334
    %v7849 = vunpack.c.h.bf16 %v7334
    %v7850 = vunpack.c.l.bf16 %v7335
    %v7851 = vunpack.c.h.bf16 %v7335
    %v7852 = vunpack.c.l.bf16 %v7336
    %v7853 = vunpack.c.h.bf16 %v7336
    %v7854 = vunpack.c.l.bf16 %v7337
    %v7855 = vunpack.c.h.bf16 %v7337
    %v7856 = vunpack.c.l.bf16 %v7338
    %v7857 = vunpack.c.h.bf16 %v7338
    %v7858 = vunpack.c.l.bf16 %v7339
    %v7859 = vunpack.c.h.bf16 %v7339
    %v7860 = vunpack.c.l.bf16 %v7340
    %v7861 = vunpack.c.h.bf16 %v7340
    %v7862 = vunpack.c.l.bf16 %v7341
    %v7863 = vunpack.c.h.bf16 %v7341
    %v7864 = vunpack.c.l.bf16 %v7342
    %v7865 = vunpack.c.h.bf16 %v7342
    %v7866 = vunpack.c.l.bf16 %v7343
    %v7867 = vunpack.c.h.bf16 %v7343
    %v7868 = vunpack.c.l.bf16 %v7344
    %v7869 = vunpack.c.h.bf16 %v7344
    %v7870 = vunpack.c.l.bf16 %v7345
    %v7871 = vunpack.c.h.bf16 %v7345
    %v7872 = vunpack.c.l.bf16 %v7346
    %v7873 = vunpack.c.h.bf16 %v7346
    %v7874 = vunpack.c.l.bf16 %v7347
    %v7875 = vunpack.c.h.bf16 %v7347
    %v7876 = vunpack.c.l.bf16 %v7348
    %v7877 = vunpack.c.h.bf16 %v7348
    %v7878 = vunpack.c.l.bf16 %v7349
    %v7879 = vunpack.c.h.bf16 %v7349
    %v7880 = vunpack.c.l.bf16 %v7350
    %v7881 = vunpack.c.h.bf16 %v7350
    %v7882 = vunpack.c.l.bf16 %v7351
    %v7883 = vunpack.c.h.bf16 %v7351
    %v7884 = vunpack.c.l.bf16 %v7352
    %v7885 = vunpack.c.h.bf16 %v7352
    %v7886 = vunpack.c.l.bf16 %v7353
    %v7887 = vunpack.c.h.bf16 %v7353
    %v7888 = vunpack.c.l.bf16 %v7354
    %v7889 = vunpack.c.h.bf16 %v7354
    %v7890 = vunpack.c.l.bf16 %v7355
    %v7891 = vunpack.c.h.bf16 %v7355
    %v7892 = vunpack.c.l.bf16 %v7356
    %v7893 = vunpack.c.h.bf16 %v7356
    %v7894 = vunpack.c.l.bf16 %v7357
    %v7895 = vunpack.c.h.bf16 %v7357
    %v7896 = vunpack.c.l.bf16 %v7358
    %v7897 = vunpack.c.h.bf16 %v7358
    %v7898 = vunpack.c.l.bf16 %v7359
    %v7899 = vunpack.c.h.bf16 %v7359
    %v7900 = vunpack.c.l.bf16 %v7360
    %v7901 = vunpack.c.h.bf16 %v7360
    %v7902 = vunpack.c.l.bf16 %v7361
    %v7903 = vunpack.c.h.bf16 %v7361
    %v7904 = vunpack.c.l.bf16 %v7362
    %v7905 = vunpack.c.h.bf16 %v7362
    %v7906 = vunpack.c.l.bf16 %v7363
    %v7907 = vunpack.c.h.bf16 %v7363
    %v7908 = vunpack.c.l.bf16 %v7364
    %v7909 = vunpack.c.h.bf16 %v7364
    %v7910 = vunpack.c.l.bf16 %v7365
    %v7911 = vunpack.c.h.bf16 %v7365
    %v7912 = vunpack.c.l.bf16 %v7366
    %v7913 = vunpack.c.h.bf16 %v7366
    %v7914 = vunpack.c.l.bf16 %v7367
    %v7915 = vunpack.c.h.bf16 %v7367
    %v7916 = vunpack.c.l.bf16 %v7368
    %v7917 = vunpack.c.h.bf16 %v7368
    %v7918 = vunpack.c.l.bf16 %v7369
    %v7919 = vunpack.c.h.bf16 %v7369
    %v7920 = vunpack.c.l.bf16 %v7370
    %v7921 = vunpack.c.h.bf16 %v7370
    %v7922 = vunpack.c.l.bf16 %v7371
    %v7923 = vunpack.c.h.bf16 %v7371
    %v7924 = vunpack.c.l.bf16 %v7372
    %v7925 = vunpack.c.h.bf16 %v7372
    %v7926 = vunpack.c.l.bf16 %v7373
    %v7927 = vunpack.c.h.bf16 %v7373
    %v7928 = vunpack.c.l.bf16 %v7374
    %v7929 = vunpack.c.h.bf16 %v7374
    %v7930 = vunpack.c.l.bf16 %v7375
    %v7931 = vunpack.c.h.bf16 %v7375
    %v7932 = vunpack.c.l.bf16 %v7376
    %v7933 = vunpack.c.h.bf16 %v7376
    %v7934 = vunpack.c.l.bf16 %v7377
    %v7935 = vunpack.c.h.bf16 %v7377
    %v7936 = vunpack.c.l.bf16 %v7378
    %v7937 = vunpack.c.h.bf16 %v7378
    %v7938 = vunpack.c.l.bf16 %v7379
    %v7939 = vunpack.c.h.bf16 %v7379
    %v7940 = vunpack.c.l.bf16 %v7380
    %v7941 = vunpack.c.h.bf16 %v7380
    %v7942 = vunpack.c.l.bf16 %v7381
    %v7943 = vunpack.c.h.bf16 %v7381
    %v7944 = vunpack.c.l.bf16 %v7382
    %v7945 = vunpack.c.h.bf16 %v7382
    %v7946 = vunpack.c.l.bf16 %v7383
    %v7947 = vunpack.c.h.bf16 %v7383
    %v7948 = vunpack.c.l.bf16 %v7384
    %v7949 = vunpack.c.h.bf16 %v7384
    %v7950 = vunpack.c.l.bf16 %v7385
    %v7951 = vunpack.c.h.bf16 %v7385
    %v7952 = vunpack.c.l.bf16 %v7386
    %v7953 = vunpack.c.h.bf16 %v7386
    %v7954 = vunpack.c.l.bf16 %v7387
    %v7955 = vunpack.c.h.bf16 %v7387
    %v7956 = vunpack.c.l.bf16 %v7388
    %v7957 = vunpack.c.h.bf16 %v7388
    %v7958 = vunpack.c.l.bf16 %v7389
    %v7959 = vunpack.c.h.bf16 %v7389
    %v7960 = vunpack.c.l.bf16 %v7390
    %v7961 = vunpack.c.h.bf16 %v7390
    %v7962 = vunpack.c.l.bf16 %v7391
    %v7963 = vunpack.c.h.bf16 %v7391
    %v7964 = vunpack.c.l.bf16 %v7392
    %v7965 = vunpack.c.h.bf16 %v7392
    %v7966 = vunpack.c.l.bf16 %v7393
    %v7967 = vunpack.c.h.bf16 %v7393
    %v7968 = vunpack.c.l.bf16 %v7394
    %v7969 = vunpack.c.h.bf16 %v7394
    %v7970 = vunpack.c.l.bf16 %v7395
    %v7971 = vunpack.c.h.bf16 %v7395
    %v7972 = vld [vmem:[#allocation19] sm:$0x3f]
    %v7974 = vperm.slane %v7972, 0
    %v7975 = vperm.slane %v7972, 1
    %v7976 = vperm.slane %v7972, 2
    %v7977 = vperm.slane %v7972, 3
    %v7978 = vperm.slane %v7972, 4
    %v7979 = vperm.slane %v7972, 5
    %7986 = vmatpush.msra.mxu0 %v7486
    %7987 = vmatpush.msra.mxu0 %v7480
    %7988 = vmatpush.msra.mxu0 %v7474
    %7989 = vmatpush.msra.mxu0 %v7468
    %7990 = vmatpush.msra.mxu0 %v7462
    %7991 = vmatpush.msra.mxu0 %v7456
    %7992 = vmatpush.msra.mxu0 %v7450
    %7993 = vmatpush.msra.mxu0 %v7444
    %7994 = vmatpush.msra.mxu0 %v7438
    %7995 = vmatpush.msra.mxu0 %v7432
    %7996 = vmatpush.msra.mxu0 %v7426
    %7997 = vmatpush.msra.mxu0 %v7420
    %7998 = vmatpush.msra.mxu0 %v7414
    %7999 = vmatpush.msra.mxu0 %v7408
    %8000 = vmatpush.msra.mxu0 %v7402
    %8001 = vmatpush.msra.mxu0 %v7396
    %8002 = vmatmul.f32.gmra.mxu0 %v7102
    %v8003 = vpop.f32.mrf.mxu0
    %v8004 = vadd.f32 %v7974, %v8003
    %8005 = vdwg.mxu0
    %8006 = vmatpush.msra.mxu0 %v7582
    %8007 = vmatpush.msra.mxu0 %v7576
    %8008 = vmatpush.msra.mxu0 %v7570
    %8009 = vmatpush.msra.mxu0 %v7564
    %8010 = vmatpush.msra.mxu0 %v7558
    %8011 = vmatpush.msra.mxu0 %v7552
    %8012 = vmatpush.msra.mxu0 %v7546
    %8013 = vmatpush.msra.mxu0 %v7540
    %8014 = vmatpush.msra.mxu0 %v7534
    %8015 = vmatpush.msra.mxu0 %v7528
    %8016 = vmatpush.msra.mxu0 %v7522
    %8017 = vmatpush.msra.mxu0 %v7516
    %8018 = vmatpush.msra.mxu0 %v7510
    %8019 = vmatpush.msra.mxu0 %v7504
    %8020 = vmatpush.msra.mxu0 %v7498
    %8021 = vmatpush.msra.mxu0 %v7492
    %8022 = vmatmul.f32.gmra.mxu0 %v7103
    %v8023 = vpop.f32.mrf.mxu0
    %v8024 = vadd.f32 %v8004, %v8023
    %8025 = vdwg.mxu0
    %8026 = vmatpush.msra.mxu0 %v7678
    %8027 = vmatpush.msra.mxu0 %v7672
    %8028 = vmatpush.msra.mxu0 %v7666
    %8029 = vmatpush.msra.mxu0 %v7660
    %8030 = vmatpush.msra.mxu0 %v7654
    %8031 = vmatpush.msra.mxu0 %v7648
    %8032 = vmatpush.msra.mxu0 %v7642
    %8033 = vmatpush.msra.mxu0 %v7636
    %8034 = vmatpush.msra.mxu0 %v7630
    %8035 = vmatpush.msra.mxu0 %v7624
    %8036 = vmatpush.msra.mxu0 %v7618
    %8037 = vmatpush.msra.mxu0 %v7612
    %8038 = vmatpush.msra.mxu0 %v7606
    %8039 = vmatpush.msra.mxu0 %v7600
    %8040 = vmatpush.msra.mxu0 %v7594
    %8041 = vmatpush.msra.mxu0 %v7588
    %8042 = vmatmul.f32.gmra.mxu0 %v7104
    %v8043 = vpop.f32.mrf.mxu0
    %v8044 = vadd.f32 %v8024, %v8043
    %8045 = vdwg.mxu0
    %8046 = vmatpush.msra.mxu0 %v7774
    %8047 = vmatpush.msra.mxu0 %v7768
    %8048 = vmatpush.msra.mxu0 %v7762
    %8049 = vmatpush.msra.mxu0 %v7756
    %8050 = vmatpush.msra.mxu0 %v7750
    %8051 = vmatpush.msra.mxu0 %v7744
    %8052 = vmatpush.msra.mxu0 %v7738
    %8053 = vmatpush.msra.mxu0 %v7732
    %8054 = vmatpush.msra.mxu0 %v7726
    %8055 = vmatpush.msra.mxu0 %v7720
    %8056 = vmatpush.msra.mxu0 %v7714
    %8057 = vmatpush.msra.mxu0 %v7708
    %8058 = vmatpush.msra.mxu0 %v7702
    %8059 = vmatpush.msra.mxu0 %v7696
    %8060 = vmatpush.msra.mxu0 %v7690
    %8061 = vmatpush.msra.mxu0 %v7684
    %8062 = vmatmul.f32.gmra.mxu0 %v7105
    %v8063 = vpop.f32.mrf.mxu0
    %v8064 = vadd.f32 %v8044, %v8063
    %8065 = vdwg.mxu0
    %8066 = vmatpush.msra.mxu0 %v7870
    %8067 = vmatpush.msra.mxu0 %v7864
    %8068 = vmatpush.msra.mxu0 %v7858
    %8069 = vmatpush.msra.mxu0 %v7852
    %8070 = vmatpush.msra.mxu0 %v7846
    %8071 = vmatpush.msra.mxu0 %v7840
    %8072 = vmatpush.msra.mxu0 %v7834
    %8073 = vmatpush.msra.mxu0 %v7828
    %8074 = vmatpush.msra.mxu0 %v7822
    %8075 = vmatpush.msra.mxu0 %v7816
    %8076 = vmatpush.msra.mxu0 %v7810
    %8077 = vmatpush.msra.mxu0 %v7804
    %8078 = vmatpush.msra.mxu0 %v7798
    %8079 = vmatpush.msra.mxu0 %v7792
    %8080 = vmatpush.msra.mxu0 %v7786
    %8081 = vmatpush.msra.mxu0 %v7780
    %8082 = vmatmul.f32.gmra.mxu0 %v7106
    %v8083 = vpop.f32.mrf.mxu0
    %v8084 = vadd.f32 %v8064, %v8083
    %8085 = vdwg.mxu0
    %8086 = vmatpush.msra.mxu0 %v7966
    %8087 = vmatpush.msra.mxu0 %v7960
    %8088 = vmatpush.msra.mxu0 %v7954
    %8089 = vmatpush.msra.mxu0 %v7948
    %8090 = vmatpush.msra.mxu0 %v7942
    %8091 = vmatpush.msra.mxu0 %v7936
    %8092 = vmatpush.msra.mxu0 %v7930
    %8093 = vmatpush.msra.mxu0 %v7924
    %8094 = vmatpush.msra.mxu0 %v7918
    %8095 = vmatpush.msra.mxu0 %v7912
    %8096 = vmatpush.msra.mxu0 %v7906
    %8097 = vmatpush.msra.mxu0 %v7900
    %8098 = vmatpush.msra.mxu0 %v7894
    %8099 = vmatpush.msra.mxu0 %v7888
    %8100 = vmatpush.msra.mxu0 %v7882
    %8101 = vmatpush.msra.mxu0 %v7876
    %8102 = vmatmul.f32.gmra.mxu0 %v7107
    %v8103 = vpop.f32.mrf.mxu0
    %v8104 = vadd.f32 %v8084, %v8103
    %8105 = vdwg.mxu0
    %8106 = vmatpush.msra.mxu0 %v7487
    %8107 = vmatpush.msra.mxu0 %v7481
    %8108 = vmatpush.msra.mxu0 %v7475
    %8109 = vmatpush.msra.mxu0 %v7469
    %8110 = vmatpush.msra.mxu0 %v7463
    %8111 = vmatpush.msra.mxu0 %v7457
    %8112 = vmatpush.msra.mxu0 %v7451
    %8113 = vmatpush.msra.mxu0 %v7445
    %8114 = vmatpush.msra.mxu0 %v7439
    %8115 = vmatpush.msra.mxu0 %v7433
    %8116 = vmatpush.msra.mxu0 %v7427
    %8117 = vmatpush.msra.mxu0 %v7421
    %8118 = vmatpush.msra.mxu0 %v7415
    %8119 = vmatpush.msra.mxu0 %v7409
    %8120 = vmatpush.msra.mxu0 %v7403
    %8121 = vmatpush.msra.mxu0 %v7397
    %8122 = vmatmul.f32.gmra.mxu0 %v7102
    %v8123 = vpop.f32.mrf.mxu0
    %v8124 = vadd.f32 %v7975, %v8123
    %8125 = vdwg.mxu0
    %8126 = vmatpush.msra.mxu0 %v7583
    %8127 = vmatpush.msra.mxu0 %v7577
    %8128 = vmatpush.msra.mxu0 %v7571
    %8129 = vmatpush.msra.mxu0 %v7565
    %8130 = vmatpush.msra.mxu0 %v7559
    %8131 = vmatpush.msra.mxu0 %v7553
    %8132 = vmatpush.msra.mxu0 %v7547
    %8133 = vmatpush.msra.mxu0 %v7541
    %8134 = vmatpush.msra.mxu0 %v7535
    %8135 = vmatpush.msra.mxu0 %v7529
    %8136 = vmatpush.msra.mxu0 %v7523
    %8137 = vmatpush.msra.mxu0 %v7517
    %8138 = vmatpush.msra.mxu0 %v7511
    %8139 = vmatpush.msra.mxu0 %v7505
    %8140 = vmatpush.msra.mxu0 %v7499
    %8141 = vmatpush.msra.mxu0 %v7493
    %8142 = vmatmul.f32.gmra.mxu0 %v7103
    %v8143 = vpop.f32.mrf.mxu0
    %v8144 = vadd.f32 %v8124, %v8143
    %8145 = vdwg.mxu0
    %8146 = vmatpush.msra.mxu0 %v7679
    %8147 = vmatpush.msra.mxu0 %v7673
    %8148 = vmatpush.msra.mxu0 %v7667
    %8149 = vmatpush.msra.mxu0 %v7661
    %8150 = vmatpush.msra.mxu0 %v7655
    %8151 = vmatpush.msra.mxu0 %v7649
    %8152 = vmatpush.msra.mxu0 %v7643
    %8153 = vmatpush.msra.mxu0 %v7637
    %8154 = vmatpush.msra.mxu0 %v7631
    %8155 = vmatpush.msra.mxu0 %v7625
    %8156 = vmatpush.msra.mxu0 %v7619
    %8157 = vmatpush.msra.mxu0 %v7613
    %8158 = vmatpush.msra.mxu0 %v7607
    %8159 = vmatpush.msra.mxu0 %v7601
    %8160 = vmatpush.msra.mxu0 %v7595
    %8161 = vmatpush.msra.mxu0 %v7589
    %8162 = vmatmul.f32.gmra.mxu0 %v7104
    %v8163 = vpop.f32.mrf.mxu0
    %v8164 = vadd.f32 %v8144, %v8163
    %8165 = vdwg.mxu0
    %8166 = vmatpush.msra.mxu0 %v7775
    %8167 = vmatpush.msra.mxu0 %v7769
    %8168 = vmatpush.msra.mxu0 %v7763
    %8169 = vmatpush.msra.mxu0 %v7757
    %8170 = vmatpush.msra.mxu0 %v7751
    %8171 = vmatpush.msra.mxu0 %v7745
    %8172 = vmatpush.msra.mxu0 %v7739
    %8173 = vmatpush.msra.mxu0 %v7733
    %8174 = vmatpush.msra.mxu0 %v7727
    %8175 = vmatpush.msra.mxu0 %v7721
    %8176 = vmatpush.msra.mxu0 %v7715
    %8177 = vmatpush.msra.mxu0 %v7709
    %8178 = vmatpush.msra.mxu0 %v7703
    %8179 = vmatpush.msra.mxu0 %v7697
    %8180 = vmatpush.msra.mxu0 %v7691
    %8181 = vmatpush.msra.mxu0 %v7685
    %8182 = vmatmul.f32.gmra.mxu0 %v7105
    %v8183 = vpop.f32.mrf.mxu0
    %v8184 = vadd.f32 %v8164, %v8183
    %8185 = vdwg.mxu0
    %8186 = vmatpush.msra.mxu0 %v7871
    %8187 = vmatpush.msra.mxu0 %v7865
    %8188 = vmatpush.msra.mxu0 %v7859
    %8189 = vmatpush.msra.mxu0 %v7853
    %8190 = vmatpush.msra.mxu0 %v7847
    %8191 = vmatpush.msra.mxu0 %v7841
    %8192 = vmatpush.msra.mxu0 %v7835
    %8193 = vmatpush.msra.mxu0 %v7829
    %8194 = vmatpush.msra.mxu0 %v7823
    %8195 = vmatpush.msra.mxu0 %v7817
    %8196 = vmatpush.msra.mxu0 %v7811
    %8197 = vmatpush.msra.mxu0 %v7805
    %8198 = vmatpush.msra.mxu0 %v7799
    %8199 = vmatpush.msra.mxu0 %v7793
    %8200 = vmatpush.msra.mxu0 %v7787
    %8201 = vmatpush.msra.mxu0 %v7781
    %8202 = vmatmul.f32.gmra.mxu0 %v7106
    %v8203 = vpop.f32.mrf.mxu0
    %v8204 = vadd.f32 %v8184, %v8203
    %8205 = vdwg.mxu0
    %8206 = vmatpush.msra.mxu0 %v7967
    %8207 = vmatpush.msra.mxu0 %v7961
    %8208 = vmatpush.msra.mxu0 %v7955
    %8209 = vmatpush.msra.mxu0 %v7949
    %8210 = vmatpush.msra.mxu0 %v7943
    %8211 = vmatpush.msra.mxu0 %v7937
    %8212 = vmatpush.msra.mxu0 %v7931
    %8213 = vmatpush.msra.mxu0 %v7925
    %8214 = vmatpush.msra.mxu0 %v7919
    %8215 = vmatpush.msra.mxu0 %v7913
    %8216 = vmatpush.msra.mxu0 %v7907
    %8217 = vmatpush.msra.mxu0 %v7901
    %8218 = vmatpush.msra.mxu0 %v7895
    %8219 = vmatpush.msra.mxu0 %v7889
    %8220 = vmatpush.msra.mxu0 %v7883
    %8221 = vmatpush.msra.mxu0 %v7877
    %8222 = vmatmul.f32.gmra.mxu0 %v7107
    %v8223 = vpop.f32.mrf.mxu0
    %v8224 = vadd.f32 %v8204, %v8223
    %8225 = vdwg.mxu0
    %8226 = vmatpush.msra.mxu0 %v7488
    %8227 = vmatpush.msra.mxu0 %v7482
    %8228 = vmatpush.msra.mxu0 %v7476
    %8229 = vmatpush.msra.mxu0 %v7470
    %8230 = vmatpush.msra.mxu0 %v7464
    %8231 = vmatpush.msra.mxu0 %v7458
    %8232 = vmatpush.msra.mxu0 %v7452
    %8233 = vmatpush.msra.mxu0 %v7446
    %8234 = vmatpush.msra.mxu0 %v7440
    %8235 = vmatpush.msra.mxu0 %v7434
    %8236 = vmatpush.msra.mxu0 %v7428
    %8237 = vmatpush.msra.mxu0 %v7422
    %8238 = vmatpush.msra.mxu0 %v7416
    %8239 = vmatpush.msra.mxu0 %v7410
    %8240 = vmatpush.msra.mxu0 %v7404
    %8241 = vmatpush.msra.mxu0 %v7398
    %8242 = vmatmul.f32.gmra.mxu0 %v7102
    %v8243 = vpop.f32.mrf.mxu0
    %v8244 = vadd.f32 %v7976, %v8243
    %8245 = vdwg.mxu0
    %8246 = vmatpush.msra.mxu0 %v7584
    %8247 = vmatpush.msra.mxu0 %v7578
    %8248 = vmatpush.msra.mxu0 %v7572
    %8249 = vmatpush.msra.mxu0 %v7566
    %8250 = vmatpush.msra.mxu0 %v7560
    %8251 = vmatpush.msra.mxu0 %v7554
    %8252 = vmatpush.msra.mxu0 %v7548
    %8253 = vmatpush.msra.mxu0 %v7542
    %8254 = vmatpush.msra.mxu0 %v7536
    %8255 = vmatpush.msra.mxu0 %v7530
    %8256 = vmatpush.msra.mxu0 %v7524
    %8257 = vmatpush.msra.mxu0 %v7518
    %8258 = vmatpush.msra.mxu0 %v7512
    %8259 = vmatpush.msra.mxu0 %v7506
    %8260 = vmatpush.msra.mxu0 %v7500
    %8261 = vmatpush.msra.mxu0 %v7494
    %8262 = vmatmul.f32.gmra.mxu0 %v7103
    %v8263 = vpop.f32.mrf.mxu0
    %v8264 = vadd.f32 %v8244, %v8263
    %8265 = vdwg.mxu0
    %8266 = vmatpush.msra.mxu0 %v7680
    %8267 = vmatpush.msra.mxu0 %v7674
    %8268 = vmatpush.msra.mxu0 %v7668
    %8269 = vmatpush.msra.mxu0 %v7662
    %8270 = vmatpush.msra.mxu0 %v7656
    %8271 = vmatpush.msra.mxu0 %v7650
    %8272 = vmatpush.msra.mxu0 %v7644
    %8273 = vmatpush.msra.mxu0 %v7638
    %8274 = vmatpush.msra.mxu0 %v7632
    %8275 = vmatpush.msra.mxu0 %v7626
    %8276 = vmatpush.msra.mxu0 %v7620
    %8277 = vmatpush.msra.mxu0 %v7614
    %8278 = vmatpush.msra.mxu0 %v7608
    %8279 = vmatpush.msra.mxu0 %v7602
    %8280 = vmatpush.msra.mxu0 %v7596
    %8281 = vmatpush.msra.mxu0 %v7590
    %8282 = vmatmul.f32.gmra.mxu0 %v7104
    %v8283 = vpop.f32.mrf.mxu0
    %v8284 = vadd.f32 %v8264, %v8283
    %8285 = vdwg.mxu0
    %8286 = vmatpush.msra.mxu0 %v7776
    %8287 = vmatpush.msra.mxu0 %v7770
    %8288 = vmatpush.msra.mxu0 %v7764
    %8289 = vmatpush.msra.mxu0 %v7758
    %8290 = vmatpush.msra.mxu0 %v7752
    %8291 = vmatpush.msra.mxu0 %v7746
    %8292 = vmatpush.msra.mxu0 %v7740
    %8293 = vmatpush.msra.mxu0 %v7734
    %8294 = vmatpush.msra.mxu0 %v7728
    %8295 = vmatpush.msra.mxu0 %v7722
    %8296 = vmatpush.msra.mxu0 %v7716
    %8297 = vmatpush.msra.mxu0 %v7710
    %8298 = vmatpush.msra.mxu0 %v7704
    %8299 = vmatpush.msra.mxu0 %v7698
    %8300 = vmatpush.msra.mxu0 %v7692
    %8301 = vmatpush.msra.mxu0 %v7686
    %8302 = vmatmul.f32.gmra.mxu0 %v7105
    %v8303 = vpop.f32.mrf.mxu0
    %v8304 = vadd.f32 %v8284, %v8303
    %8305 = vdwg.mxu0
    %8306 = vmatpush.msra.mxu0 %v7872
    %8307 = vmatpush.msra.mxu0 %v7866
    %8308 = vmatpush.msra.mxu0 %v7860
    %8309 = vmatpush.msra.mxu0 %v7854
    %8310 = vmatpush.msra.mxu0 %v7848
    %8311 = vmatpush.msra.mxu0 %v7842
    %8312 = vmatpush.msra.mxu0 %v7836
    %8313 = vmatpush.msra.mxu0 %v7830
    %8314 = vmatpush.msra.mxu0 %v7824
    %8315 = vmatpush.msra.mxu0 %v7818
    %8316 = vmatpush.msra.mxu0 %v7812
    %8317 = vmatpush.msra.mxu0 %v7806
    %8318 = vmatpush.msra.mxu0 %v7800
    %8319 = vmatpush.msra.mxu0 %v7794
    %8320 = vmatpush.msra.mxu0 %v7788
    %8321 = vmatpush.msra.mxu0 %v7782
    %8322 = vmatmul.f32.gmra.mxu0 %v7106
    %v8323 = vpop.f32.mrf.mxu0
    %v8324 = vadd.f32 %v8304, %v8323
    %8325 = vdwg.mxu0
    %8326 = vmatpush.msra.mxu0 %v7968
    %8327 = vmatpush.msra.mxu0 %v7962
    %8328 = vmatpush.msra.mxu0 %v7956
    %8329 = vmatpush.msra.mxu0 %v7950
    %8330 = vmatpush.msra.mxu0 %v7944
    %8331 = vmatpush.msra.mxu0 %v7938
    %8332 = vmatpush.msra.mxu0 %v7932
    %8333 = vmatpush.msra.mxu0 %v7926
    %8334 = vmatpush.msra.mxu0 %v7920
    %8335 = vmatpush.msra.mxu0 %v7914
    %8336 = vmatpush.msra.mxu0 %v7908
    %8337 = vmatpush.msra.mxu0 %v7902
    %8338 = vmatpush.msra.mxu0 %v7896
    %8339 = vmatpush.msra.mxu0 %v7890
    %8340 = vmatpush.msra.mxu0 %v7884
    %8341 = vmatpush.msra.mxu0 %v7878
    %8342 = vmatmul.f32.gmra.mxu0 %v7107
    %v8343 = vpop.f32.mrf.mxu0
    %v8344 = vadd.f32 %v8324, %v8343
    %8345 = vdwg.mxu0
    %8346 = vmatpush.msra.mxu0 %v7489
    %8347 = vmatpush.msra.mxu0 %v7483
    %8348 = vmatpush.msra.mxu0 %v7477
    %8349 = vmatpush.msra.mxu0 %v7471
    %8350 = vmatpush.msra.mxu0 %v7465
    %8351 = vmatpush.msra.mxu0 %v7459
    %8352 = vmatpush.msra.mxu0 %v7453
    %8353 = vmatpush.msra.mxu0 %v7447
    %8354 = vmatpush.msra.mxu0 %v7441
    %8355 = vmatpush.msra.mxu0 %v7435
    %8356 = vmatpush.msra.mxu0 %v7429
    %8357 = vmatpush.msra.mxu0 %v7423
    %8358 = vmatpush.msra.mxu0 %v7417
    %8359 = vmatpush.msra.mxu0 %v7411
    %8360 = vmatpush.msra.mxu0 %v7405
    %8361 = vmatpush.msra.mxu0 %v7399
    %8362 = vmatmul.f32.gmra.mxu0 %v7102
    %v8363 = vpop.f32.mrf.mxu0
    %v8364 = vadd.f32 %v7977, %v8363
    %8365 = vdwg.mxu0
    %8366 = vmatpush.msra.mxu0 %v7585
    %8367 = vmatpush.msra.mxu0 %v7579
    %8368 = vmatpush.msra.mxu0 %v7573
    %8369 = vmatpush.msra.mxu0 %v7567
    %8370 = vmatpush.msra.mxu0 %v7561
    %8371 = vmatpush.msra.mxu0 %v7555
    %8372 = vmatpush.msra.mxu0 %v7549
    %8373 = vmatpush.msra.mxu0 %v7543
    %8374 = vmatpush.msra.mxu0 %v7537
    %8375 = vmatpush.msra.mxu0 %v7531
    %8376 = vmatpush.msra.mxu0 %v7525
    %8377 = vmatpush.msra.mxu0 %v7519
    %8378 = vmatpush.msra.mxu0 %v7513
    %8379 = vmatpush.msra.mxu0 %v7507
    %8380 = vmatpush.msra.mxu0 %v7501
    %8381 = vmatpush.msra.mxu0 %v7495
    %8382 = vmatmul.f32.gmra.mxu0 %v7103
    %v8383 = vpop.f32.mrf.mxu0
    %v8384 = vadd.f32 %v8364, %v8383
    %8385 = vdwg.mxu0
    %8386 = vmatpush.msra.mxu0 %v7681
    %8387 = vmatpush.msra.mxu0 %v7675
    %8388 = vmatpush.msra.mxu0 %v7669
    %8389 = vmatpush.msra.mxu0 %v7663
    %8390 = vmatpush.msra.mxu0 %v7657
    %8391 = vmatpush.msra.mxu0 %v7651
    %8392 = vmatpush.msra.mxu0 %v7645
    %8393 = vmatpush.msra.mxu0 %v7639
    %8394 = vmatpush.msra.mxu0 %v7633
    %8395 = vmatpush.msra.mxu0 %v7627
    %8396 = vmatpush.msra.mxu0 %v7621
    %8397 = vmatpush.msra.mxu0 %v7615
    %8398 = vmatpush.msra.mxu0 %v7609
    %8399 = vmatpush.msra.mxu0 %v7603
    %8400 = vmatpush.msra.mxu0 %v7597
    %8401 = vmatpush.msra.mxu0 %v7591
    %8402 = vmatmul.f32.gmra.mxu0 %v7104
    %v8403 = vpop.f32.mrf.mxu0
    %v8404 = vadd.f32 %v8384, %v8403
    %8405 = vdwg.mxu0
    %8406 = vmatpush.msra.mxu0 %v7777
    %8407 = vmatpush.msra.mxu0 %v7771
    %8408 = vmatpush.msra.mxu0 %v7765
    %8409 = vmatpush.msra.mxu0 %v7759
    %8410 = vmatpush.msra.mxu0 %v7753
    %8411 = vmatpush.msra.mxu0 %v7747
    %8412 = vmatpush.msra.mxu0 %v7741
    %8413 = vmatpush.msra.mxu0 %v7735
    %8414 = vmatpush.msra.mxu0 %v7729
    %8415 = vmatpush.msra.mxu0 %v7723
    %8416 = vmatpush.msra.mxu0 %v7717
    %8417 = vmatpush.msra.mxu0 %v7711
    %8418 = vmatpush.msra.mxu0 %v7705
    %8419 = vmatpush.msra.mxu0 %v7699
    %8420 = vmatpush.msra.mxu0 %v7693
    %8421 = vmatpush.msra.mxu0 %v7687
    %8422 = vmatmul.f32.gmra.mxu0 %v7105
    %v8423 = vpop.f32.mrf.mxu0
    %v8424 = vadd.f32 %v8404, %v8423
    %8425 = vdwg.mxu0
    %8426 = vmatpush.msra.mxu0 %v7873
    %8427 = vmatpush.msra.mxu0 %v7867
    %8428 = vmatpush.msra.mxu0 %v7861
    %8429 = vmatpush.msra.mxu0 %v7855
    %8430 = vmatpush.msra.mxu0 %v7849
    %8431 = vmatpush.msra.mxu0 %v7843
    %8432 = vmatpush.msra.mxu0 %v7837
    %8433 = vmatpush.msra.mxu0 %v7831
    %8434 = vmatpush.msra.mxu0 %v7825
    %8435 = vmatpush.msra.mxu0 %v7819
    %8436 = vmatpush.msra.mxu0 %v7813
    %8437 = vmatpush.msra.mxu0 %v7807
    %8438 = vmatpush.msra.mxu0 %v7801
    %8439 = vmatpush.msra.mxu0 %v7795
    %8440 = vmatpush.msra.mxu0 %v7789
    %8441 = vmatpush.msra.mxu0 %v7783
    %8442 = vmatmul.f32.gmra.mxu0 %v7106
    %v8443 = vpop.f32.mrf.mxu0
    %v8444 = vadd.f32 %v8424, %v8443
    %8445 = vdwg.mxu0
    %8446 = vmatpush.msra.mxu0 %v7969
    %8447 = vmatpush.msra.mxu0 %v7963
    %8448 = vmatpush.msra.mxu0 %v7957
    %8449 = vmatpush.msra.mxu0 %v7951
    %8450 = vmatpush.msra.mxu0 %v7945
    %8451 = vmatpush.msra.mxu0 %v7939
    %8452 = vmatpush.msra.mxu0 %v7933
    %8453 = vmatpush.msra.mxu0 %v7927
    %8454 = vmatpush.msra.mxu0 %v7921
    %8455 = vmatpush.msra.mxu0 %v7915
    %8456 = vmatpush.msra.mxu0 %v7909
    %8457 = vmatpush.msra.mxu0 %v7903
    %8458 = vmatpush.msra.mxu0 %v7897
    %8459 = vmatpush.msra.mxu0 %v7891
    %8460 = vmatpush.msra.mxu0 %v7885
    %8461 = vmatpush.msra.mxu0 %v7879
    %8462 = vmatmul.f32.gmra.mxu0 %v7107
    %v8463 = vpop.f32.mrf.mxu0
    %v8464 = vadd.f32 %v8444, %v8463
    %8465 = vdwg.mxu0
    %8466 = vmatpush.msra.mxu0 %v7490
    %8467 = vmatpush.msra.mxu0 %v7484
    %8468 = vmatpush.msra.mxu0 %v7478
    %8469 = vmatpush.msra.mxu0 %v7472
    %8470 = vmatpush.msra.mxu0 %v7466
    %8471 = vmatpush.msra.mxu0 %v7460
    %8472 = vmatpush.msra.mxu0 %v7454
    %8473 = vmatpush.msra.mxu0 %v7448
    %8474 = vmatpush.msra.mxu0 %v7442
    %8475 = vmatpush.msra.mxu0 %v7436
    %8476 = vmatpush.msra.mxu0 %v7430
    %8477 = vmatpush.msra.mxu0 %v7424
    %8478 = vmatpush.msra.mxu0 %v7418
    %8479 = vmatpush.msra.mxu0 %v7412
    %8480 = vmatpush.msra.mxu0 %v7406
    %8481 = vmatpush.msra.mxu0 %v7400
    %8482 = vmatmul.f32.gmra.mxu0 %v7102
    %v8483 = vpop.f32.mrf.mxu0
    %v8484 = vadd.f32 %v7978, %v8483
    %8485 = vdwg.mxu0
    %8486 = vmatpush.msra.mxu0 %v7586
    %8487 = vmatpush.msra.mxu0 %v7580
    %8488 = vmatpush.msra.mxu0 %v7574
    %8489 = vmatpush.msra.mxu0 %v7568
    %8490 = vmatpush.msra.mxu0 %v7562
    %8491 = vmatpush.msra.mxu0 %v7556
    %8492 = vmatpush.msra.mxu0 %v7550
    %8493 = vmatpush.msra.mxu0 %v7544
    %8494 = vmatpush.msra.mxu0 %v7538
    %8495 = vmatpush.msra.mxu0 %v7532
    %8496 = vmatpush.msra.mxu0 %v7526
    %8497 = vmatpush.msra.mxu0 %v7520
    %8498 = vmatpush.msra.mxu0 %v7514
    %8499 = vmatpush.msra.mxu0 %v7508
    %8500 = vmatpush.msra.mxu0 %v7502
    %8501 = vmatpush.msra.mxu0 %v7496
    %8502 = vmatmul.f32.gmra.mxu0 %v7103
    %v8503 = vpop.f32.mrf.mxu0
    %v8504 = vadd.f32 %v8484, %v8503
    %8505 = vdwg.mxu0
    %8506 = vmatpush.msra.mxu0 %v7682
    %8507 = vmatpush.msra.mxu0 %v7676
    %8508 = vmatpush.msra.mxu0 %v7670
    %8509 = vmatpush.msra.mxu0 %v7664
    %8510 = vmatpush.msra.mxu0 %v7658
    %8511 = vmatpush.msra.mxu0 %v7652
    %8512 = vmatpush.msra.mxu0 %v7646
    %8513 = vmatpush.msra.mxu0 %v7640
    %8514 = vmatpush.msra.mxu0 %v7634
    %8515 = vmatpush.msra.mxu0 %v7628
    %8516 = vmatpush.msra.mxu0 %v7622
    %8517 = vmatpush.msra.mxu0 %v7616
    %8518 = vmatpush.msra.mxu0 %v7610
    %8519 = vmatpush.msra.mxu0 %v7604
    %8520 = vmatpush.msra.mxu0 %v7598
    %8521 = vmatpush.msra.mxu0 %v7592
    %8522 = vmatmul.f32.gmra.mxu0 %v7104
    %v8523 = vpop.f32.mrf.mxu0
    %v8524 = vadd.f32 %v8504, %v8523
    %8525 = vdwg.mxu0
    %8526 = vmatpush.msra.mxu0 %v7778
    %8527 = vmatpush.msra.mxu0 %v7772
    %8528 = vmatpush.msra.mxu0 %v7766
    %8529 = vmatpush.msra.mxu0 %v7760
    %8530 = vmatpush.msra.mxu0 %v7754
    %8531 = vmatpush.msra.mxu0 %v7748
    %8532 = vmatpush.msra.mxu0 %v7742
    %8533 = vmatpush.msra.mxu0 %v7736
    %8534 = vmatpush.msra.mxu0 %v7730
    %8535 = vmatpush.msra.mxu0 %v7724
    %8536 = vmatpush.msra.mxu0 %v7718
    %8537 = vmatpush.msra.mxu0 %v7712
    %8538 = vmatpush.msra.mxu0 %v7706
    %8539 = vmatpush.msra.mxu0 %v7700
    %8540 = vmatpush.msra.mxu0 %v7694
    %8541 = vmatpush.msra.mxu0 %v7688
    %8542 = vmatmul.f32.gmra.mxu0 %v7105
    %v8543 = vpop.f32.mrf.mxu0
    %v8544 = vadd.f32 %v8524, %v8543
    %8545 = vdwg.mxu0
    %8546 = vmatpush.msra.mxu0 %v7874
    %8547 = vmatpush.msra.mxu0 %v7868
    %8548 = vmatpush.msra.mxu0 %v7862
    %8549 = vmatpush.msra.mxu0 %v7856
    %8550 = vmatpush.msra.mxu0 %v7850
    %8551 = vmatpush.msra.mxu0 %v7844
    %8552 = vmatpush.msra.mxu0 %v7838
    %8553 = vmatpush.msra.mxu0 %v7832
    %8554 = vmatpush.msra.mxu0 %v7826
    %8555 = vmatpush.msra.mxu0 %v7820
    %8556 = vmatpush.msra.mxu0 %v7814
    %8557 = vmatpush.msra.mxu0 %v7808
    %8558 = vmatpush.msra.mxu0 %v7802
    %8559 = vmatpush.msra.mxu0 %v7796
    %8560 = vmatpush.msra.mxu0 %v7790
    %8561 = vmatpush.msra.mxu0 %v7784
    %8562 = vmatmul.f32.gmra.mxu0 %v7106
    %v8563 = vpop.f32.mrf.mxu0
    %v8564 = vadd.f32 %v8544, %v8563
    %8565 = vdwg.mxu0
    %8566 = vmatpush.msra.mxu0 %v7970
    %8567 = vmatpush.msra.mxu0 %v7964
    %8568 = vmatpush.msra.mxu0 %v7958
    %8569 = vmatpush.msra.mxu0 %v7952
    %8570 = vmatpush.msra.mxu0 %v7946
    %8571 = vmatpush.msra.mxu0 %v7940
    %8572 = vmatpush.msra.mxu0 %v7934
    %8573 = vmatpush.msra.mxu0 %v7928
    %8574 = vmatpush.msra.mxu0 %v7922
    %8575 = vmatpush.msra.mxu0 %v7916
    %8576 = vmatpush.msra.mxu0 %v7910
    %8577 = vmatpush.msra.mxu0 %v7904
    %8578 = vmatpush.msra.mxu0 %v7898
    %8579 = vmatpush.msra.mxu0 %v7892
    %8580 = vmatpush.msra.mxu0 %v7886
    %8581 = vmatpush.msra.mxu0 %v7880
    %8582 = vmatmul.f32.gmra.mxu0 %v7107
    %v8583 = vpop.f32.mrf.mxu0
    %v8584 = vadd.f32 %v8564, %v8583
    %8585 = vdwg.mxu0
    %8586 = vmatpush.msra.mxu0 %v7491
    %8587 = vmatpush.msra.mxu0 %v7485
    %8588 = vmatpush.msra.mxu0 %v7479
    %8589 = vmatpush.msra.mxu0 %v7473
    %8590 = vmatpush.msra.mxu0 %v7467
    %8591 = vmatpush.msra.mxu0 %v7461
    %8592 = vmatpush.msra.mxu0 %v7455
    %8593 = vmatpush.msra.mxu0 %v7449
    %8594 = vmatpush.msra.mxu0 %v7443
    %8595 = vmatpush.msra.mxu0 %v7437
    %8596 = vmatpush.msra.mxu0 %v7431
    %8597 = vmatpush.msra.mxu0 %v7425
    %8598 = vmatpush.msra.mxu0 %v7419
    %8599 = vmatpush.msra.mxu0 %v7413
    %8600 = vmatpush.msra.mxu0 %v7407
    %8601 = vmatpush.msra.mxu0 %v7401
    %8602 = vmatmul.f32.gmra.mxu0 %v7102
    %v8603 = vpop.f32.mrf.mxu0
    %v8604 = vadd.f32 %v7979, %v8603
    %8605 = vdwg.mxu0
    %8606 = vmatpush.msra.mxu0 %v7587
    %8607 = vmatpush.msra.mxu0 %v7581
    %8608 = vmatpush.msra.mxu0 %v7575
    %8609 = vmatpush.msra.mxu0 %v7569
    %8610 = vmatpush.msra.mxu0 %v7563
    %8611 = vmatpush.msra.mxu0 %v7557
    %8612 = vmatpush.msra.mxu0 %v7551
    %8613 = vmatpush.msra.mxu0 %v7545
    %8614 = vmatpush.msra.mxu0 %v7539
    %8615 = vmatpush.msra.mxu0 %v7533
    %8616 = vmatpush.msra.mxu0 %v7527
    %8617 = vmatpush.msra.mxu0 %v7521
    %8618 = vmatpush.msra.mxu0 %v7515
    %8619 = vmatpush.msra.mxu0 %v7509
    %8620 = vmatpush.msra.mxu0 %v7503
    %8621 = vmatpush.msra.mxu0 %v7497
    %8622 = vmatmul.f32.gmra.mxu0 %v7103
    %v8623 = vpop.f32.mrf.mxu0
    %v8624 = vadd.f32 %v8604, %v8623
    %8625 = vdwg.mxu0
    %8626 = vmatpush.msra.mxu0 %v7683
    %8627 = vmatpush.msra.mxu0 %v7677
    %8628 = vmatpush.msra.mxu0 %v7671
    %8629 = vmatpush.msra.mxu0 %v7665
    %8630 = vmatpush.msra.mxu0 %v7659
    %8631 = vmatpush.msra.mxu0 %v7653
    %8632 = vmatpush.msra.mxu0 %v7647
    %8633 = vmatpush.msra.mxu0 %v7641
    %8634 = vmatpush.msra.mxu0 %v7635
    %8635 = vmatpush.msra.mxu0 %v7629
    %8636 = vmatpush.msra.mxu0 %v7623
    %8637 = vmatpush.msra.mxu0 %v7617
    %8638 = vmatpush.msra.mxu0 %v7611
    %8639 = vmatpush.msra.mxu0 %v7605
    %8640 = vmatpush.msra.mxu0 %v7599
    %8641 = vmatpush.msra.mxu0 %v7593
    %8642 = vmatmul.f32.gmra.mxu0 %v7104
    %v8643 = vpop.f32.mrf.mxu0
    %v8644 = vadd.f32 %v8624, %v8643
    %8645 = vdwg.mxu0
    %8646 = vmatpush.msra.mxu0 %v7779
    %8647 = vmatpush.msra.mxu0 %v7773
    %8648 = vmatpush.msra.mxu0 %v7767
    %8649 = vmatpush.msra.mxu0 %v7761
    %8650 = vmatpush.msra.mxu0 %v7755
    %8651 = vmatpush.msra.mxu0 %v7749
    %8652 = vmatpush.msra.mxu0 %v7743
    %8653 = vmatpush.msra.mxu0 %v7737
    %8654 = vmatpush.msra.mxu0 %v7731
    %8655 = vmatpush.msra.mxu0 %v7725
    %8656 = vmatpush.msra.mxu0 %v7719
    %8657 = vmatpush.msra.mxu0 %v7713
    %8658 = vmatpush.msra.mxu0 %v7707
    %8659 = vmatpush.msra.mxu0 %v7701
    %8660 = vmatpush.msra.mxu0 %v7695
    %8661 = vmatpush.msra.mxu0 %v7689
    %8662 = vmatmul.f32.gmra.mxu0 %v7105
    %v8663 = vpop.f32.mrf.mxu0
    %v8664 = vadd.f32 %v8644, %v8663
    %8665 = vdwg.mxu0
    %8666 = vmatpush.msra.mxu0 %v7875
    %8667 = vmatpush.msra.mxu0 %v7869
    %8668 = vmatpush.msra.mxu0 %v7863
    %8669 = vmatpush.msra.mxu0 %v7857
    %8670 = vmatpush.msra.mxu0 %v7851
    %8671 = vmatpush.msra.mxu0 %v7845
    %8672 = vmatpush.msra.mxu0 %v7839
    %8673 = vmatpush.msra.mxu0 %v7833
    %8674 = vmatpush.msra.mxu0 %v7827
    %8675 = vmatpush.msra.mxu0 %v7821
    %8676 = vmatpush.msra.mxu0 %v7815
    %8677 = vmatpush.msra.mxu0 %v7809
    %8678 = vmatpush.msra.mxu0 %v7803
    %8679 = vmatpush.msra.mxu0 %v7797
    %8680 = vmatpush.msra.mxu0 %v7791
    %8681 = vmatpush.msra.mxu0 %v7785
    %8682 = vmatmul.f32.gmra.mxu0 %v7106
    %v8683 = vpop.f32.mrf.mxu0
    %v8684 = vadd.f32 %v8664, %v8683
    %8685 = vdwg.mxu0
    %8686 = vmatpush.msra.mxu0 %v7971
    %8687 = vmatpush.msra.mxu0 %v7965
    %8688 = vmatpush.msra.mxu0 %v7959
    %8689 = vmatpush.msra.mxu0 %v7953
    %8690 = vmatpush.msra.mxu0 %v7947
    %8691 = vmatpush.msra.mxu0 %v7941
    %8692 = vmatpush.msra.mxu0 %v7935
    %8693 = vmatpush.msra.mxu0 %v7929
    %8694 = vmatpush.msra.mxu0 %v7923
    %8695 = vmatpush.msra.mxu0 %v7917
    %8696 = vmatpush.msra.mxu0 %v7911
    %8697 = vmatpush.msra.mxu0 %v7905
    %8698 = vmatpush.msra.mxu0 %v7899
    %8699 = vmatpush.msra.mxu0 %v7893
    %8700 = vmatpush.msra.mxu0 %v7887
    %8701 = vmatpush.msra.mxu0 %v7881
    %8702 = vmatmul.f32.gmra.mxu0 %v7107
    %v8703 = vpop.f32.mrf.mxu0
    %v8704 = vadd.f32 %v8684, %v8703
    %8705 = vdwg.mxu0
    %v8706 = vadd.f32 %v8104, %v5786
    %v8707 = vadd.f32 %v8224, %v5787
    %v8708 = vadd.f32 %v8344, %v5788
    %v8709 = vadd.f32 %v8464, %v5789
    %v8710 = vadd.f32 %v8584, %v5790
    %v8711 = vadd.f32 %v8704, %v5791
    %8712 = vst [vmem:[#allocation20] sm:$0xff] %v8706
    %8713 = vst [vmem:[#allocation20 + $0x8] sm:$0xff] %v8707
    %8714 = vst [vmem:[#allocation20 + $0x10] sm:$0xff] %v8708
    %8715 = vst [vmem:[#allocation20 + $0x18] sm:$0xff] %v8709
    %8716 = vst [vmem:[#allocation20 + $0x20] sm:$0xff] %v8710
    %8717 = vst [vmem:[#allocation20 + $0x28] sm:$0xff] %v8711
    // Predicated region
    $region90: #{reason_layer_forward.1} parent=1 // pred_check
      _
    $region91: #{reason_layer_forward.1} parent=1 // pred_check_branch
      %8719 = sbr.rel (0) target = $region93
    $region92: #{reason_layer_forward.1} parent=1 // pred_region
      %8721 = vsyncadd [#allocation4], 0
      %s8723 = sshll.u32 [#allocation20], 4
      %s8724 = int_to_ptr.vmem [resolvable:$true] %s8723
      %s8725 = sshll.u32 %s11, 4
      %s8726 = int_to_ptr.hbm [resolvable:$true] %s8725
      %8728 = dma.vmem_to_hbm [thread:$0]  %s8724, 768, %s8726, [#allocation4]
    $region93: #{reason_layer_forward.1} parent=1 // pred_fallthru
      _
    // Predicated region
    $region94: #{reason_layer_forward.1} parent=1 // pred_check
      _
    $region95: #{reason_layer_forward.1} parent=1 // pred_check_branch
      %8730 = sbr.rel (0) target = $region97
    $region96: #{reason_layer_forward.1} parent=1 // pred_region
      %8732 = dma.done [#allocation4], 768
    $region97: #{reason_layer_forward.1} parent=1 // pred_fallthru
      _
    %8733 = vsyncpa [#allocation3], 1
    %8734 = vsyncpa [#allocation6], 1
    %8735 = vsyncpa [#allocation9], 1
    %8736 = vsyncpa [#allocation12], 1
    %8737 = vsyncpa [#allocation15], 1
    %8738 = vsyncpa [#allocation18], 1
    %8739 = vsyncpa [#allocation4], 1

</llo_original>
